<compile_context>
chip_gen: v6e
topology: v6e:2x2x1
jax: 0.10.0
libtpu: 0.0.40
codegen_flags: <defaults>
</compile_context>

<pallas_src>
import functools

import jax
import jax.numpy as jnp
from jax import lax
from jax.experimental import pallas as pl
from jax.experimental.pallas import tpu as pltpu

C1 = 0.01 ** 2
C2 = 0.03 ** 2


# ----------------------------------------------------------------------------
# Pallas kernel: one stereo side per grid step
# ----------------------------------------------------------------------------
def _side_scale_loss_kernel(pred_ref, tgt_ref, disp_ref, dwarp_ref, out_ref):
    """Refs (per grid step / side):
         pred_ref / tgt_ref : (1, B, C, H, W)  warped prediction / pyramid target
         disp_ref           : (1, B, 1, H, W)  this side's predicted disparity
         dwarp_ref          : (1, B, 1, H, W)  other side's disparity warped here
         out_ref            : (1, 8, 128) f32  row 0, lanes 0..3 = [ssim, l1, lr, smooth_x]
    """
    x = pred_ref[0].astype(jnp.float32)            # (B, C, H, W)
    y = tgt_ref[0].astype(jnp.float32)
    d = disp_ref[0].astype(jnp.float32)            # (B, 1, H, W)
    dw = dwarp_ref[0].astype(jnp.float32)
    B, C, H, W = x.shape

    use_roll = (W % 128 == 0)                      # lane-exact widths -> XLU rotate

    def shift_lane(a, delta):
        # One-step wraparound shift along the last (lane) axis.  Downstream math only
        # relies on {+1,-1} being a consistent pair of opposite shifts, so it is
        # correct for either rotation-direction convention.
        if use_roll:
            a2 = a.reshape(-1, W)
            return pltpu.roll(a2, delta, axis=1).reshape(a.shape)
        if delta == 1:
            return jnp.concatenate([a[..., W - 1:W], a[..., :W - 1]], axis=-1)
        return jnp.concatenate([a[..., 1:], a[..., :1]], axis=-1)

    col = lax.broadcasted_iota(jnp.int32, (1, 1, 1, W), 3)        # hoisted masks
    first_col = col == 0
    last_col = col == (W - 1)

    def htap3(a):
        # Reflect-padded 3-tap sum along W on the UNPADDED array:
        #   interior: a[j-1]+a[j]+a[j+1];  j==0: a[0]+2a[1];  j==W-1: a[W-1]+2a[W-2].
        # roll(+1)+a+roll(-1) is direction-independent; the two edge corrections are
        # expressed via fixed element values, so they are too.
        s = shift_lane(a, 1) + a + shift_lane(a, -1)
        corr0 = a[..., 1:2] - a[..., W - 1:W]
        corrL = a[..., W - 2:W - 1] - a[..., 0:1]
        return (s + jnp.where(first_col, corr0, 0.0)
                + jnp.where(last_col, corrL, 0.0))

    def vtap3(a):
        # Reflect-padded 3-tap sum along H (sublane slices + concat).
        top = a[..., 0:1, :] + 2.0 * a[..., 1:2, :]
        bot = a[..., H - 1:H, :] + 2.0 * a[..., H - 2:H - 1, :]
        if H > 2:
            mid = a[..., 0:H - 2, :] + a[..., 1:H - 1, :] + a[..., 2:H, :]
            return jnp.concatenate([top, mid, bot], axis=-2)
        return jnp.concatenate([top, bot], axis=-2)

    def pool3(a):
        return vtap3(htap3(a)) * (1.0 / 9.0)

    # --- SSIM (merged sigma_x + sigma_y pool: only 4 pools per side) --------------
    mu_x = pool3(x)
    mu_y = pool3(y)
    sigma_sum = pool3(x * x + y * y) - mu_x * mu_x - mu_y * mu_y   # sigma_x + sigma_y
    sigma_xy = pool3(x * y) - mu_x * mu_y
    ssim_n = (2.0 * mu_x * mu_y + C1) * (2.0 * sigma_xy + C2)
    ssim_d = (mu_x * mu_x + mu_y * mu_y + C1) * (sigma_sum + C2)
    # ssim_d >= C1*C2 > 0, so the approximate EUP reciprocal is safe.
    ssim_map = jnp.clip((1.0 - ssim_n * pl.reciprocal(ssim_d, approx=True)) * 0.5,
                        0.0, 1.0)
    ssim_mean = jnp.mean(ssim_map)

    # --- L1 reconstruction + residual weights -------------------------------------
    diff = jnp.abs(x - y)
    l1_mean = jnp.mean(diff)
    inv_l1 = 1.0 / (l1_mean + 1e-12)               # hoisted scalar divide (eps: pred==tgt)
    res_w = jnp.exp(2.0 * (1.0 - diff * inv_l1))

    # --- LR consistency: mean over (B,C,H,W) of res_w * |disp_warped - disp| ------
    lr_abs = jnp.abs(dw - d)                                       # (B, 1, H, W)
    lr_loss = jnp.sum(res_w * lr_abs) * (1.0 / float(B * C * H * W))

    # --- Edge-aware x-smoothness (only the x term contributes in the torch loss) --
    dm = d[:, 0]                                                   # (B, H, W)
    dn = shift_lane(dm, -1)
    yn = shift_lane(y, -1)
    ga = jnp.abs(y - yn)                                           # (B, C, H, W)
    gsum = ga[:, 0]
    for c in range(1, C):                                          # tiny static C
        gsum = gsum + ga[:, c]
    wgt = jnp.exp(-(gsum * (1.0 / float(C))))                      # (B, H, W)
    sm_sum = jnp.sum(jnp.abs(dm - dn) * wgt)
    # Subtract the single wraparound pair per row; its value is identical for either
    # roll direction, so this stays convention-independent.
    d_wrap = jnp.abs(dm[..., W - 1:W] - dm[..., 0:1])              # (B, H, 1)
    gw = jnp.abs(y[..., W - 1:W] - y[..., 0:1])                    # (B, C, H, 1)
    gwsum = gw[:, 0]
    for c in range(1, C):
        gwsum = gwsum + gw[:, c]
    w_wrap = jnp.exp(-(gwsum * (1.0 / float(C))))                  # (B, H, 1)
    sm_sum = sm_sum - jnp.sum(d_wrap * w_wrap)
    smooth_x = sm_sum * (1.0 / float(B * H * (W - 1)))

    # --- lane-aligned scalar output tile (unmasked (8,128) store) ------------------
    lane = lax.broadcasted_iota(jnp.int32, (8, 128), 1)
    sub = lax.broadcasted_iota(jnp.int32, (8, 128), 0)
    row0 = sub == 0
    tile = jnp.where(row0 & (lane == 0), ssim_mean, 0.0)
    tile = jnp.where(row0 & (lane == 1), l1_mean, tile)
    tile = jnp.where(row0 & (lane == 2), lr_loss, tile)
    tile = jnp.where(row0 & (lane == 3), smooth_x, tile)
    out_ref[0] = tile


def _fused_scale_losses(left_pred, left_tgt, right_pred, right_tgt,
                        disp_l, disp_r, disp_r2l, disp_l2r):
    """Returns (2, 4) f32: rows = (left, right), cols = [ssim, l1, lr, smooth_x]."""
    B, C, H, W = left_tgt.shape

    # bf16 image DMA (kernel upcasts to f32); disparities stay f32 for LR/smoothness.
    pred = jnp.stack([left_pred, right_pred]).astype(jnp.bfloat16)     # (2, B, C, H, W)
    tgt = jnp.stack([left_tgt, right_tgt]).astype(jnp.bfloat16)
    disp = jnp.stack([disp_l, disp_r]).astype(jnp.float32)             # (2, B, 1, H, W)
    dwarp = jnp.stack([disp_r2l, disp_l2r]).astype(jnp.float32)

    nbytes = sum(int(a.size) * a.dtype.itemsize for a in (pred, tgt, disp, dwarp))
    n = int(B * C * H * W)
    cost = pl.CostEstimate(
        flops=2 * 120 * n,                 # 4 separable pools + SSIM/L1/LR/smoothness, both sides
        transcendentals=2 * 2 * n,         # exp(res_w) + exp(edge weights), both sides
        bytes_accessed=nbytes + 2 * 8 * 128 * 4,
    )
    # Live per-step working set: double-buffered per-side inputs + ~18 f32 temporaries;
    # cap at 40 MiB so it stays safe inside v7x's 64 MiB physical VMEM.
    side_in_bytes = nbytes // 2
    f32_map = n * 4
    vmem_limit = int(min(40 * 1024 * 1024,
                         max(8 * 1024 * 1024, 4 * side_in_bytes + 18 * f32_map)))

    out = pl.pallas_call(
        _side_scale_loss_kernel,
        out_shape=jax.ShapeDtypeStruct((2, 8, 128), jnp.float32),
        grid=(2,),
        in_specs=[
            pl.BlockSpec((1, B, C, H, W), lambda s: (s, 0, 0, 0, 0)),
            pl.BlockSpec((1, B, C, H, W), lambda s: (s, 0, 0, 0, 0)),
            pl.BlockSpec((1, B, 1, H, W), lambda s: (s, 0, 0, 0, 0)),
            pl.BlockSpec((1, B, 1, H, W), lambda s: (s, 0, 0, 0, 0)),
        ],
        out_specs=pl.BlockSpec((1, 8, 128), lambda s: (s, 0, 0)),
        compiler_params=pltpu.CompilerParams(
            dimension_semantics=("parallel",),
            vmem_limit_bytes=vmem_limit),
        cost_estimate=cost,
    )(pred, tgt, disp, dwarp)
    return out[:, 0, :4]                                               # (2, 4)


# ----------------------------------------------------------------------------
# Plain-JAX glue (bilinear resize, grid_sample warp, pyramid)
# ----------------------------------------------------------------------------
def _resize_bilinear_nchw(img, nh, nw):
    """PyTorch F.interpolate(mode='bilinear', align_corners=False), downscale only."""
    B, C, H, W = img.shape
    if (nh, nw) == (H, W):
        return img

    def coords(n_out, n_in):
        s = n_in / n_out
        src = (jnp.arange(n_out, dtype=jnp.float32) + 0.5) * s - 0.5
        src = jnp.clip(src, 0.0, n_in - 1.0)
        i0 = jnp.floor(src).astype(jnp.int32)
        i1 = jnp.minimum(i0 + 1, n_in - 1)
        w1 = src - i0.astype(jnp.float32)
        return i0, i1, w1

    y0, y1, wy = coords(nh, H)
    x0, x1, wx = coords(nw, W)
    top = jnp.take(img, y0, axis=2)
    bot = jnp.take(img, y1, axis=2)
    rows = top * (1.0 - wy)[None, None, :, None] + bot * wy[None, None, :, None]
    lef = jnp.take(rows, x0, axis=3)
    rig = jnp.take(rows, x1, axis=3)
    return lef * (1.0 - wx)[None, None, None, :] + rig * wx[None, None, None, :]


def _scale_pyramid(img, num_scales):
    B, C, H, W = img.shape
    out = [img]
    for i in range(num_scales - 1):
        r = 2 ** (i + 1)
        out.append(_resize_bilinear_nchw(img, H // r, W // r))
    return out


def _grid_sample_bilinear_zeros(img, grid):
    """F.grid_sample(mode='bilinear', padding_mode='zeros', align_corners=False)."""
    B, C, H, W = img.shape
    gx = grid[..., 0]
    gy = grid[..., 1]
    ix = ((gx + 1.0) * W - 1.0) * 0.5
    iy = ((gy + 1.0) * H - 1.0) * 0.5
    x0 = jnp.floor(ix)
    y0 = jnp.floor(iy)
    x1 = x0 + 1.0
    y1 = y0 + 1.0
    wx1 = ix - x0
    wx0 = 1.0 - wx1
    wy1 = iy - y0
    wy0 = 1.0 - wy1

    img_hwc = jnp.transpose(img, (0, 2, 3, 1))        # (B, H, W, C)
    b_idx = jnp.arange(B)[:, None, None]

    def sample(xi, yi):
        valid = (xi >= 0) & (xi <= W - 1) & (yi >= 0) & (yi <= H - 1)
        xc = jnp.clip(xi, 0, W - 1).astype(jnp.int32)
        yc = jnp.clip(yi, 0, H - 1).astype(jnp.int32)
        v = img_hwc[b_idx, yc, xc]                    # (B, H, W, C)
        return v * valid[..., None].astype(img.dtype)

    out = (sample(x0, y0) * (wx0 * wy0)[..., None]
           + sample(x1, y0) * (wx1 * wy0)[..., None]
           + sample(x0, y1) * (wx0 * wy1)[..., None]
           + sample(x1, y1) * (wx1 * wy1)[..., None])
    return jnp.transpose(out, (0, 3, 1, 2))


def _apply_disparity(img, disp):
    B, _, H, W = img.shape
    x_base = jnp.linspace(0.0, 1.0, W, dtype=jnp.float32)[None, None, :]
    y_base = jnp.linspace(0.0, 1.0, H, dtype=jnp.float32)[None, :, None]
    gx = x_base + disp[:, 0, :, :]                    # (B, H, W)
    gy = jnp.broadcast_to(y_base, (B, H, W))
    grid = jnp.stack([gx, gy], axis=-1)               # (B, H, W, 2)
    return _grid_sample_bilinear_zeros(img, 2.0 * grid - 1.0)


# ----------------------------------------------------------------------------
# MyLoss.forward (mode='train')
# ----------------------------------------------------------------------------
def my_loss(left_img, right_img, disp_list, *, alpha_image_loss=0.85,
            disp_gradient_loss_weight=0.1, lr_loss_weight=1.0):
    num_scales = 4
    left_pyr = _scale_pyramid(left_img, num_scales)
    right_pyr = _scale_pyramid(right_img, num_scales)

    a = alpha_image_loss
    image_loss = jnp.float32(0.0)
    grad_loss = jnp.float32(0.0)
    lr_loss = jnp.float32(0.0)

    for i in range(num_scales):
        disp = disp_list[i].astype(jnp.float32)
        dl = disp[:, 0:1]                              # disp_left_pred[i]
        dr = disp[:, 1:2]                              # disp_right_pred[i]

        left_pred = _apply_disparity(right_pyr[i], -dl)
        right_pred = _apply_disparity(left_pyr[i], dr)
        d_r2l = _apply_disparity(dr, -dl)              # disp_right_to_left[i]
        d_l2r = _apply_disparity(dl, dr)               # disp_left_to_right[i]

        o = _fused_scale_losses(left_pred, left_pyr[i], right_pred, right_pyr[i],
                                dl, dr, d_r2l, d_l2r)
        ssim_l, l1_l, lr_l, sm_l = o[0, 0], o[0, 1], o[0, 2], o[0, 3]
        ssim_r, l1_r, lr_r, sm_r = o[1, 0], o[1, 1], o[1, 2], o[1, 3]

        image_loss = image_loss + a * (ssim_l + ssim_r) + (1.0 - a) * (l1_l + l1_r)
        grad_loss = grad_loss + (sm_l + sm_r) / (2.0 ** i)
        lr_loss = lr_loss + lr_l + lr_r

    return image_loss + disp_gradient_loss_weight * grad_loss + lr_loss_weight * lr_loss


if __name__ == "__main__":
    key = jax.random.PRNGKey(0)
    B, C, H, W = 2, 3, 16, 16
    k1, k2, k3, k4, k5, k6 = jax.random.split(key, 6)
    left = jax.random.uniform(k1, (B, C, H, W), jnp.float32)
    right = jax.random.uniform(k2, (B, C, H, W), jnp.float32)
    dkeys = [k3, k4, k5, k6]
    disp_list = tuple(
        0.3 * jax.random.uniform(dkeys[i], (B, 2, H // (2 ** i), W // (2 ** i)),
                                 jnp.float32)
        for i in range(4)
    )

    loss_fn = jax.jit(functools.partial(
        my_loss, alpha_image_loss=0.85,
        disp_gradient_loss_weight=0.1, lr_loss_weight=1.0))
    loss = loss_fn(left, right, disp_list)
    jax.block_until_ready(loss)
    assert loss.shape == () and bool(jnp.isfinite(loss))
    print("KERNEL_OK")
</pallas_src>

<mosaic_0001>
module attributes {stable_mosaic.version = 11 : i64} {
  func.func @_side_scale_loss_kernel(%arg0: i32, %arg1: memref<1x2x3x16x16xbf16, #tpu.memory_space<vmem>>, %arg2: memref<1x2x3x16x16xbf16, #tpu.memory_space<vmem>>, %arg3: memref<1x2x1x16x16xf32, #tpu.memory_space<vmem>>, %arg4: memref<1x2x1x16x16xf32, #tpu.memory_space<vmem>>, %arg5: memref<1x8x128xf32, #tpu.memory_space<vmem>>) attributes {dimension_semantics = [#tpu.dimension_semantics<parallel>], iteration_bounds = array<i64: 2>, scalar_prefetch = 0 : i64, scratch_operands = 0 : i64, tpu.core_type = #tpu.core_type<tc>, window_params = [{transform_indices = @transform_0, window_bounds = array<i64: 1, 2, 3, 16, 16>}, {transform_indices = @transform_1, window_bounds = array<i64: 1, 2, 3, 16, 16>}, {transform_indices = @transform_2, window_bounds = array<i64: 1, 2, 1, 16, 16>}, {transform_indices = @transform_3, window_bounds = array<i64: 1, 2, 1, 16, 16>}, {transform_indices = @transform_4, window_bounds = array<i64: 1, 8, 128>}]} {
    %c0 = arith.constant 0 : index
    %c0_0 = arith.constant 0 : index
    %c0_1 = arith.constant 0 : index
    %c0_2 = arith.constant 0 : index
    %c0_3 = arith.constant 0 : index
    %0 = vector.load %arg1[%c0, %c0_0, %c0_1, %c0_2, %c0_3] : memref<1x2x3x16x16xbf16, #tpu.memory_space<vmem>>, vector<1x2x3x16x16xbf16>
    %1 = vector.shape_cast %0 : vector<1x2x3x16x16xbf16> to vector<2x3x16x16xbf16>
    %2 = arith.extf %1 : vector<2x3x16x16xbf16> to vector<2x3x16x16xf32>
    %c0_4 = arith.constant 0 : index
    %c0_5 = arith.constant 0 : index
    %c0_6 = arith.constant 0 : index
    %c0_7 = arith.constant 0 : index
    %c0_8 = arith.constant 0 : index
    %3 = vector.load %arg2[%c0_4, %c0_5, %c0_6, %c0_7, %c0_8] : memref<1x2x3x16x16xbf16, #tpu.memory_space<vmem>>, vector<1x2x3x16x16xbf16>
    %4 = vector.shape_cast %3 : vector<1x2x3x16x16xbf16> to vector<2x3x16x16xbf16>
    %5 = arith.extf %4 : vector<2x3x16x16xbf16> to vector<2x3x16x16xf32>
    %c0_9 = arith.constant 0 : index
    %c0_10 = arith.constant 0 : index
    %c0_11 = arith.constant 0 : index
    %c0_12 = arith.constant 0 : index
    %c0_13 = arith.constant 0 : index
    %6 = vector.load %arg3[%c0_9, %c0_10, %c0_11, %c0_12, %c0_13] : memref<1x2x1x16x16xf32, #tpu.memory_space<vmem>>, vector<1x2x1x16x16xf32>
    %7 = vector.shape_cast %6 : vector<1x2x1x16x16xf32> to vector<2x1x16x16xf32>
    %c0_14 = arith.constant 0 : index
    %c0_15 = arith.constant 0 : index
    %c0_16 = arith.constant 0 : index
    %c0_17 = arith.constant 0 : index
    %c0_18 = arith.constant 0 : index
    %8 = vector.load %arg4[%c0_14, %c0_15, %c0_16, %c0_17, %c0_18] : memref<1x2x1x16x16xf32, #tpu.memory_space<vmem>>, vector<1x2x1x16x16xf32>
    %9 = vector.shape_cast %8 : vector<1x2x1x16x16xf32> to vector<2x1x16x16xf32>
    %10 = tpu.iota {dimensions = array<i32: 3>} : vector<1x1x1x16xi32>
    %c0_i32 = arith.constant 0 : i32
    %11 = vector.broadcast %c0_i32 : i32 to vector<1x1x1x16xi32>
    %12 = arith.cmpi eq, %10, %11 : vector<1x1x1x16xi32>
    %c15_i32 = arith.constant 15 : i32
    %13 = vector.broadcast %c15_i32 : i32 to vector<1x1x1x16xi32>
    %14 = arith.cmpi eq, %10, %13 : vector<1x1x1x16xi32>
    %15 = vector.extract_strided_slice %2 {offsets = [0, 0, 0, 15], sizes = [2, 3, 16, 1], strides = [1, 1, 1, 1]} : vector<2x3x16x16xf32> to vector<2x3x16x1xf32>
    %16 = vector.extract_strided_slice %2 {offsets = [0, 0, 0, 0], sizes = [2, 3, 16, 15], strides = [1, 1, 1, 1]} : vector<2x3x16x16xf32> to vector<2x3x16x15xf32>
    %17 = tpu.concatenate %15, %16 in 3 : vector<2x3x16x1xf32>, vector<2x3x16x15xf32> -> vector<2x3x16x16xf32>
    %18 = arith.addf %17, %2 : vector<2x3x16x16xf32>
    %19 = vector.extract_strided_slice %2 {offsets = [0, 0, 0, 1], sizes = [2, 3, 16, 15], strides = [1, 1, 1, 1]} : vector<2x3x16x16xf32> to vector<2x3x16x15xf32>
    %20 = vector.extract_strided_slice %2 {offsets = [0, 0, 0, 0], sizes = [2, 3, 16, 1], strides = [1, 1, 1, 1]} : vector<2x3x16x16xf32> to vector<2x3x16x1xf32>
    %21 = tpu.concatenate %19, %20 in 3 : vector<2x3x16x15xf32>, vector<2x3x16x1xf32> -> vector<2x3x16x16xf32>
    %22 = arith.addf %18, %21 : vector<2x3x16x16xf32>
    %23 = vector.extract_strided_slice %2 {offsets = [0, 0, 0, 1], sizes = [2, 3, 16, 1], strides = [1, 1, 1, 1]} : vector<2x3x16x16xf32> to vector<2x3x16x1xf32>
    %24 = vector.extract_strided_slice %2 {offsets = [0, 0, 0, 15], sizes = [2, 3, 16, 1], strides = [1, 1, 1, 1]} : vector<2x3x16x16xf32> to vector<2x3x16x1xf32>
    %25 = arith.subf %23, %24 : vector<2x3x16x1xf32>
    %26 = vector.extract_strided_slice %2 {offsets = [0, 0, 0, 14], sizes = [2, 3, 16, 1], strides = [1, 1, 1, 1]} : vector<2x3x16x16xf32> to vector<2x3x16x1xf32>
    %27 = vector.extract_strided_slice %2 {offsets = [0, 0, 0, 0], sizes = [2, 3, 16, 1], strides = [1, 1, 1, 1]} : vector<2x3x16x16xf32> to vector<2x3x16x1xf32>
    %28 = arith.subf %26, %27 : vector<2x3x16x1xf32>
    %cst = arith.constant 0.000000e+00 : f32
    %29 = vector.shape_cast %12 : vector<1x1x1x16xi1> to vector<1x1x1x16xi1>
    %30 = vector.broadcast %29 : vector<1x1x1x16xi1> to vector<2x3x16x16xi1>
    %31 = vector.shape_cast %25 : vector<2x3x16x1xf32> to vector<2x3x16x1xf32>
    %32 = vector.broadcast %31 : vector<2x3x16x1xf32> to vector<2x3x16x16xf32>
    %33 = vector.broadcast %cst : f32 to vector<2x3x16x16xf32>
    %34 = arith.select %30, %32, %33 : vector<2x3x16x16xi1>, vector<2x3x16x16xf32>
    %35 = arith.addf %22, %34 : vector<2x3x16x16xf32>
    %cst_19 = arith.constant 0.000000e+00 : f32
    %36 = vector.shape_cast %14 : vector<1x1x1x16xi1> to vector<1x1x1x16xi1>
    %37 = vector.broadcast %36 : vector<1x1x1x16xi1> to vector<2x3x16x16xi1>
    %38 = vector.shape_cast %28 : vector<2x3x16x1xf32> to vector<2x3x16x1xf32>
    %39 = vector.broadcast %38 : vector<2x3x16x1xf32> to vector<2x3x16x16xf32>
    %40 = vector.broadcast %cst_19 : f32 to vector<2x3x16x16xf32>
    %41 = arith.select %37, %39, %40 : vector<2x3x16x16xi1>, vector<2x3x16x16xf32>
    %42 = arith.addf %35, %41 : vector<2x3x16x16xf32>
    %43 = vector.extract_strided_slice %42 {offsets = [0, 0, 0, 0], sizes = [2, 3, 1, 16], strides = [1, 1, 1, 1]} : vector<2x3x16x16xf32> to vector<2x3x1x16xf32>
    %44 = vector.extract_strided_slice %42 {offsets = [0, 0, 1, 0], sizes = [2, 3, 1, 16], strides = [1, 1, 1, 1]} : vector<2x3x16x16xf32> to vector<2x3x1x16xf32>
    %cst_20 = arith.constant 2.000000e+00 : f32
    %45 = vector.broadcast %cst_20 : f32 to vector<2x3x1x16xf32>
    %46 = arith.mulf %45, %44 : vector<2x3x1x16xf32>
    %47 = arith.addf %43, %46 : vector<2x3x1x16xf32>
    %48 = vector.extract_strided_slice %42 {offsets = [0, 0, 15, 0], sizes = [2, 3, 1, 16], strides = [1, 1, 1, 1]} : vector<2x3x16x16xf32> to vector<2x3x1x16xf32>
    %49 = vector.extract_strided_slice %42 {offsets = [0, 0, 14, 0], sizes = [2, 3, 1, 16], strides = [1, 1, 1, 1]} : vector<2x3x16x16xf32> to vector<2x3x1x16xf32>
    %cst_21 = arith.constant 2.000000e+00 : f32
    %50 = vector.broadcast %cst_21 : f32 to vector<2x3x1x16xf32>
    %51 = arith.mulf %50, %49 : vector<2x3x1x16xf32>
    %52 = arith.addf %48, %51 : vector<2x3x1x16xf32>
    %53 = vector.extract_strided_slice %42 {offsets = [0, 0, 0, 0], sizes = [2, 3, 14, 16], strides = [1, 1, 1, 1]} : vector<2x3x16x16xf32> to vector<2x3x14x16xf32>
    %54 = vector.extract_strided_slice %42 {offsets = [0, 0, 1, 0], sizes = [2, 3, 14, 16], strides = [1, 1, 1, 1]} : vector<2x3x16x16xf32> to vector<2x3x14x16xf32>
    %55 = arith.addf %53, %54 : vector<2x3x14x16xf32>
    %56 = vector.extract_strided_slice %42 {offsets = [0, 0, 2, 0], sizes = [2, 3, 14, 16], strides = [1, 1, 1, 1]} : vector<2x3x16x16xf32> to vector<2x3x14x16xf32>
    %57 = arith.addf %55, %56 : vector<2x3x14x16xf32>
    %58 = tpu.concatenate %47, %57, %52 in 2 : vector<2x3x1x16xf32>, vector<2x3x14x16xf32>, vector<2x3x1x16xf32> -> vector<2x3x16x16xf32>
    %cst_22 = arith.constant 0.111111112 : f32
    %59 = vector.broadcast %cst_22 : f32 to vector<2x3x16x16xf32>
    %60 = arith.mulf %58, %59 : vector<2x3x16x16xf32>
    %61 = vector.extract_strided_slice %5 {offsets = [0, 0, 0, 15], sizes = [2, 3, 16, 1], strides = [1, 1, 1, 1]} : vector<2x3x16x16xf32> to vector<2x3x16x1xf32>
    %62 = vector.extract_strided_slice %5 {offsets = [0, 0, 0, 0], sizes = [2, 3, 16, 15], strides = [1, 1, 1, 1]} : vector<2x3x16x16xf32> to vector<2x3x16x15xf32>
    %63 = tpu.concatenate %61, %62 in 3 : vector<2x3x16x1xf32>, vector<2x3x16x15xf32> -> vector<2x3x16x16xf32>
    %64 = arith.addf %63, %5 : vector<2x3x16x16xf32>
    %65 = vector.extract_strided_slice %5 {offsets = [0, 0, 0, 1], sizes = [2, 3, 16, 15], strides = [1, 1, 1, 1]} : vector<2x3x16x16xf32> to vector<2x3x16x15xf32>
    %66 = vector.extract_strided_slice %5 {offsets = [0, 0, 0, 0], sizes = [2, 3, 16, 1], strides = [1, 1, 1, 1]} : vector<2x3x16x16xf32> to vector<2x3x16x1xf32>
    %67 = tpu.concatenate %65, %66 in 3 : vector<2x3x16x15xf32>, vector<2x3x16x1xf32> -> vector<2x3x16x16xf32>
    %68 = arith.addf %64, %67 : vector<2x3x16x16xf32>
    %69 = vector.extract_strided_slice %5 {offsets = [0, 0, 0, 1], sizes = [2, 3, 16, 1], strides = [1, 1, 1, 1]} : vector<2x3x16x16xf32> to vector<2x3x16x1xf32>
    %70 = vector.extract_strided_slice %5 {offsets = [0, 0, 0, 15], sizes = [2, 3, 16, 1], strides = [1, 1, 1, 1]} : vector<2x3x16x16xf32> to vector<2x3x16x1xf32>
    %71 = arith.subf %69, %70 : vector<2x3x16x1xf32>
    %72 = vector.extract_strided_slice %5 {offsets = [0, 0, 0, 14], sizes = [2, 3, 16, 1], strides = [1, 1, 1, 1]} : vector<2x3x16x16xf32> to vector<2x3x16x1xf32>
    %73 = vector.extract_strided_slice %5 {offsets = [0, 0, 0, 0], sizes = [2, 3, 16, 1], strides = [1, 1, 1, 1]} : vector<2x3x16x16xf32> to vector<2x3x16x1xf32>
    %74 = arith.subf %72, %73 : vector<2x3x16x1xf32>
    %cst_23 = arith.constant 0.000000e+00 : f32
    %75 = vector.shape_cast %12 : vector<1x1x1x16xi1> to vector<1x1x1x16xi1>
    %76 = vector.broadcast %75 : vector<1x1x1x16xi1> to vector<2x3x16x16xi1>
    %77 = vector.shape_cast %71 : vector<2x3x16x1xf32> to vector<2x3x16x1xf32>
    %78 = vector.broadcast %77 : vector<2x3x16x1xf32> to vector<2x3x16x16xf32>
    %79 = vector.broadcast %cst_23 : f32 to vector<2x3x16x16xf32>
    %80 = arith.select %76, %78, %79 : vector<2x3x16x16xi1>, vector<2x3x16x16xf32>
    %81 = arith.addf %68, %80 : vector<2x3x16x16xf32>
    %cst_24 = arith.constant 0.000000e+00 : f32
    %82 = vector.shape_cast %14 : vector<1x1x1x16xi1> to vector<1x1x1x16xi1>
    %83 = vector.broadcast %82 : vector<1x1x1x16xi1> to vector<2x3x16x16xi1>
    %84 = vector.shape_cast %74 : vector<2x3x16x1xf32> to vector<2x3x16x1xf32>
    %85 = vector.broadcast %84 : vector<2x3x16x1xf32> to vector<2x3x16x16xf32>
    %86 = vector.broadcast %cst_24 : f32 to vector<2x3x16x16xf32>
    %87 = arith.select %83, %85, %86 : vector<2x3x16x16xi1>, vector<2x3x16x16xf32>
    %88 = arith.addf %81, %87 : vector<2x3x16x16xf32>
    %89 = vector.extract_strided_slice %88 {offsets = [0, 0, 0, 0], sizes = [2, 3, 1, 16], strides = [1, 1, 1, 1]} : vector<2x3x16x16xf32> to vector<2x3x1x16xf32>
    %90 = vector.extract_strided_slice %88 {offsets = [0, 0, 1, 0], sizes = [2, 3, 1, 16], strides = [1, 1, 1, 1]} : vector<2x3x16x16xf32> to vector<2x3x1x16xf32>
    %cst_25 = arith.constant 2.000000e+00 : f32
    %91 = vector.broadcast %cst_25 : f32 to vector<2x3x1x16xf32>
    %92 = arith.mulf %91, %90 : vector<2x3x1x16xf32>
    %93 = arith.addf %89, %92 : vector<2x3x1x16xf32>
    %94 = vector.extract_strided_slice %88 {offsets = [0, 0, 15, 0], sizes = [2, 3, 1, 16], strides = [1, 1, 1, 1]} : vector<2x3x16x16xf32> to vector<2x3x1x16xf32>
    %95 = vector.extract_strided_slice %88 {offsets = [0, 0, 14, 0], sizes = [2, 3, 1, 16], strides = [1, 1, 1, 1]} : vector<2x3x16x16xf32> to vector<2x3x1x16xf32>
    %cst_26 = arith.constant 2.000000e+00 : f32
    %96 = vector.broadcast %cst_26 : f32 to vector<2x3x1x16xf32>
    %97 = arith.mulf %96, %95 : vector<2x3x1x16xf32>
    %98 = arith.addf %94, %97 : vector<2x3x1x16xf32>
    %99 = vector.extract_strided_slice %88 {offsets = [0, 0, 0, 0], sizes = [2, 3, 14, 16], strides = [1, 1, 1, 1]} : vector<2x3x16x16xf32> to vector<2x3x14x16xf32>
    %100 = vector.extract_strided_slice %88 {offsets = [0, 0, 1, 0], sizes = [2, 3, 14, 16], strides = [1, 1, 1, 1]} : vector<2x3x16x16xf32> to vector<2x3x14x16xf32>
    %101 = arith.addf %99, %100 : vector<2x3x14x16xf32>
    %102 = vector.extract_strided_slice %88 {offsets = [0, 0, 2, 0], sizes = [2, 3, 14, 16], strides = [1, 1, 1, 1]} : vector<2x3x16x16xf32> to vector<2x3x14x16xf32>
    %103 = arith.addf %101, %102 : vector<2x3x14x16xf32>
    %104 = tpu.concatenate %93, %103, %98 in 2 : vector<2x3x1x16xf32>, vector<2x3x14x16xf32>, vector<2x3x1x16xf32> -> vector<2x3x16x16xf32>
    %cst_27 = arith.constant 0.111111112 : f32
    %105 = vector.broadcast %cst_27 : f32 to vector<2x3x16x16xf32>
    %106 = arith.mulf %104, %105 : vector<2x3x16x16xf32>
    %107 = arith.mulf %2, %2 : vector<2x3x16x16xf32>
    %108 = arith.mulf %5, %5 : vector<2x3x16x16xf32>
    %109 = arith.addf %107, %108 : vector<2x3x16x16xf32>
    %110 = vector.extract_strided_slice %109 {offsets = [0, 0, 0, 15], sizes = [2, 3, 16, 1], strides = [1, 1, 1, 1]} : vector<2x3x16x16xf32> to vector<2x3x16x1xf32>
    %111 = vector.extract_strided_slice %109 {offsets = [0, 0, 0, 0], sizes = [2, 3, 16, 15], strides = [1, 1, 1, 1]} : vector<2x3x16x16xf32> to vector<2x3x16x15xf32>
    %112 = tpu.concatenate %110, %111 in 3 : vector<2x3x16x1xf32>, vector<2x3x16x15xf32> -> vector<2x3x16x16xf32>
    %113 = arith.addf %112, %109 : vector<2x3x16x16xf32>
    %114 = vector.extract_strided_slice %109 {offsets = [0, 0, 0, 1], sizes = [2, 3, 16, 15], strides = [1, 1, 1, 1]} : vector<2x3x16x16xf32> to vector<2x3x16x15xf32>
    %115 = vector.extract_strided_slice %109 {offsets = [0, 0, 0, 0], sizes = [2, 3, 16, 1], strides = [1, 1, 1, 1]} : vector<2x3x16x16xf32> to vector<2x3x16x1xf32>
    %116 = tpu.concatenate %114, %115 in 3 : vector<2x3x16x15xf32>, vector<2x3x16x1xf32> -> vector<2x3x16x16xf32>
    %117 = arith.addf %113, %116 : vector<2x3x16x16xf32>
    %118 = vector.extract_strided_slice %109 {offsets = [0, 0, 0, 1], sizes = [2, 3, 16, 1], strides = [1, 1, 1, 1]} : vector<2x3x16x16xf32> to vector<2x3x16x1xf32>
    %119 = vector.extract_strided_slice %109 {offsets = [0, 0, 0, 15], sizes = [2, 3, 16, 1], strides = [1, 1, 1, 1]} : vector<2x3x16x16xf32> to vector<2x3x16x1xf32>
    %120 = arith.subf %118, %119 : vector<2x3x16x1xf32>
    %121 = vector.extract_strided_slice %109 {offsets = [0, 0, 0, 14], sizes = [2, 3, 16, 1], strides = [1, 1, 1, 1]} : vector<2x3x16x16xf32> to vector<2x3x16x1xf32>
    %122 = vector.extract_strided_slice %109 {offsets = [0, 0, 0, 0], sizes = [2, 3, 16, 1], strides = [1, 1, 1, 1]} : vector<2x3x16x16xf32> to vector<2x3x16x1xf32>
    %123 = arith.subf %121, %122 : vector<2x3x16x1xf32>
    %cst_28 = arith.constant 0.000000e+00 : f32
    %124 = vector.shape_cast %12 : vector<1x1x1x16xi1> to vector<1x1x1x16xi1>
    %125 = vector.broadcast %124 : vector<1x1x1x16xi1> to vector<2x3x16x16xi1>
    %126 = vector.shape_cast %120 : vector<2x3x16x1xf32> to vector<2x3x16x1xf32>
    %127 = vector.broadcast %126 : vector<2x3x16x1xf32> to vector<2x3x16x16xf32>
    %128 = vector.broadcast %cst_28 : f32 to vector<2x3x16x16xf32>
    %129 = arith.select %125, %127, %128 : vector<2x3x16x16xi1>, vector<2x3x16x16xf32>
    %130 = arith.addf %117, %129 : vector<2x3x16x16xf32>
    %cst_29 = arith.constant 0.000000e+00 : f32
    %131 = vector.shape_cast %14 : vector<1x1x1x16xi1> to vector<1x1x1x16xi1>
    %132 = vector.broadcast %131 : vector<1x1x1x16xi1> to vector<2x3x16x16xi1>
    %133 = vector.shape_cast %123 : vector<2x3x16x1xf32> to vector<2x3x16x1xf32>
    %134 = vector.broadcast %133 : vector<2x3x16x1xf32> to vector<2x3x16x16xf32>
    %135 = vector.broadcast %cst_29 : f32 to vector<2x3x16x16xf32>
    %136 = arith.select %132, %134, %135 : vector<2x3x16x16xi1>, vector<2x3x16x16xf32>
    %137 = arith.addf %130, %136 : vector<2x3x16x16xf32>
    %138 = vector.extract_strided_slice %137 {offsets = [0, 0, 0, 0], sizes = [2, 3, 1, 16], strides = [1, 1, 1, 1]} : vector<2x3x16x16xf32> to vector<2x3x1x16xf32>
    %139 = vector.extract_strided_slice %137 {offsets = [0, 0, 1, 0], sizes = [2, 3, 1, 16], strides = [1, 1, 1, 1]} : vector<2x3x16x16xf32> to vector<2x3x1x16xf32>
    %cst_30 = arith.constant 2.000000e+00 : f32
    %140 = vector.broadcast %cst_30 : f32 to vector<2x3x1x16xf32>
    %141 = arith.mulf %140, %139 : vector<2x3x1x16xf32>
    %142 = arith.addf %138, %141 : vector<2x3x1x16xf32>
    %143 = vector.extract_strided_slice %137 {offsets = [0, 0, 15, 0], sizes = [2, 3, 1, 16], strides = [1, 1, 1, 1]} : vector<2x3x16x16xf32> to vector<2x3x1x16xf32>
    %144 = vector.extract_strided_slice %137 {offsets = [0, 0, 14, 0], sizes = [2, 3, 1, 16], strides = [1, 1, 1, 1]} : vector<2x3x16x16xf32> to vector<2x3x1x16xf32>
    %cst_31 = arith.constant 2.000000e+00 : f32
    %145 = vector.broadcast %cst_31 : f32 to vector<2x3x1x16xf32>
    %146 = arith.mulf %145, %144 : vector<2x3x1x16xf32>
    %147 = arith.addf %143, %146 : vector<2x3x1x16xf32>
    %148 = vector.extract_strided_slice %137 {offsets = [0, 0, 0, 0], sizes = [2, 3, 14, 16], strides = [1, 1, 1, 1]} : vector<2x3x16x16xf32> to vector<2x3x14x16xf32>
    %149 = vector.extract_strided_slice %137 {offsets = [0, 0, 1, 0], sizes = [2, 3, 14, 16], strides = [1, 1, 1, 1]} : vector<2x3x16x16xf32> to vector<2x3x14x16xf32>
    %150 = arith.addf %148, %149 : vector<2x3x14x16xf32>
    %151 = vector.extract_strided_slice %137 {offsets = [0, 0, 2, 0], sizes = [2, 3, 14, 16], strides = [1, 1, 1, 1]} : vector<2x3x16x16xf32> to vector<2x3x14x16xf32>
    %152 = arith.addf %150, %151 : vector<2x3x14x16xf32>
    %153 = tpu.concatenate %142, %152, %147 in 2 : vector<2x3x1x16xf32>, vector<2x3x14x16xf32>, vector<2x3x1x16xf32> -> vector<2x3x16x16xf32>
    %cst_32 = arith.constant 0.111111112 : f32
    %154 = vector.broadcast %cst_32 : f32 to vector<2x3x16x16xf32>
    %155 = arith.mulf %153, %154 : vector<2x3x16x16xf32>
    %156 = arith.mulf %60, %60 : vector<2x3x16x16xf32>
    %157 = arith.subf %155, %156 : vector<2x3x16x16xf32>
    %158 = arith.mulf %106, %106 : vector<2x3x16x16xf32>
    %159 = arith.subf %157, %158 : vector<2x3x16x16xf32>
    %160 = arith.mulf %2, %5 : vector<2x3x16x16xf32>
    %161 = vector.extract_strided_slice %160 {offsets = [0, 0, 0, 15], sizes = [2, 3, 16, 1], strides = [1, 1, 1, 1]} : vector<2x3x16x16xf32> to vector<2x3x16x1xf32>
    %162 = vector.extract_strided_slice %160 {offsets = [0, 0, 0, 0], sizes = [2, 3, 16, 15], strides = [1, 1, 1, 1]} : vector<2x3x16x16xf32> to vector<2x3x16x15xf32>
    %163 = tpu.concatenate %161, %162 in 3 : vector<2x3x16x1xf32>, vector<2x3x16x15xf32> -> vector<2x3x16x16xf32>
    %164 = arith.addf %163, %160 : vector<2x3x16x16xf32>
    %165 = vector.extract_strided_slice %160 {offsets = [0, 0, 0, 1], sizes = [2, 3, 16, 15], strides = [1, 1, 1, 1]} : vector<2x3x16x16xf32> to vector<2x3x16x15xf32>
    %166 = vector.extract_strided_slice %160 {offsets = [0, 0, 0, 0], sizes = [2, 3, 16, 1], strides = [1, 1, 1, 1]} : vector<2x3x16x16xf32> to vector<2x3x16x1xf32>
    %167 = tpu.concatenate %165, %166 in 3 : vector<2x3x16x15xf32>, vector<2x3x16x1xf32> -> vector<2x3x16x16xf32>
    %168 = arith.addf %164, %167 : vector<2x3x16x16xf32>
    %169 = vector.extract_strided_slice %160 {offsets = [0, 0, 0, 1], sizes = [2, 3, 16, 1], strides = [1, 1, 1, 1]} : vector<2x3x16x16xf32> to vector<2x3x16x1xf32>
    %170 = vector.extract_strided_slice %160 {offsets = [0, 0, 0, 15], sizes = [2, 3, 16, 1], strides = [1, 1, 1, 1]} : vector<2x3x16x16xf32> to vector<2x3x16x1xf32>
    %171 = arith.subf %169, %170 : vector<2x3x16x1xf32>
    %172 = vector.extract_strided_slice %160 {offsets = [0, 0, 0, 14], sizes = [2, 3, 16, 1], strides = [1, 1, 1, 1]} : vector<2x3x16x16xf32> to vector<2x3x16x1xf32>
    %173 = vector.extract_strided_slice %160 {offsets = [0, 0, 0, 0], sizes = [2, 3, 16, 1], strides = [1, 1, 1, 1]} : vector<2x3x16x16xf32> to vector<2x3x16x1xf32>
    %174 = arith.subf %172, %173 : vector<2x3x16x1xf32>
    %cst_33 = arith.constant 0.000000e+00 : f32
    %175 = vector.shape_cast %12 : vector<1x1x1x16xi1> to vector<1x1x1x16xi1>
    %176 = vector.broadcast %175 : vector<1x1x1x16xi1> to vector<2x3x16x16xi1>
    %177 = vector.shape_cast %171 : vector<2x3x16x1xf32> to vector<2x3x16x1xf32>
    %178 = vector.broadcast %177 : vector<2x3x16x1xf32> to vector<2x3x16x16xf32>
    %179 = vector.broadcast %cst_33 : f32 to vector<2x3x16x16xf32>
    %180 = arith.select %176, %178, %179 : vector<2x3x16x16xi1>, vector<2x3x16x16xf32>
    %181 = arith.addf %168, %180 : vector<2x3x16x16xf32>
    %cst_34 = arith.constant 0.000000e+00 : f32
    %182 = vector.shape_cast %14 : vector<1x1x1x16xi1> to vector<1x1x1x16xi1>
    %183 = vector.broadcast %182 : vector<1x1x1x16xi1> to vector<2x3x16x16xi1>
    %184 = vector.shape_cast %174 : vector<2x3x16x1xf32> to vector<2x3x16x1xf32>
    %185 = vector.broadcast %184 : vector<2x3x16x1xf32> to vector<2x3x16x16xf32>
    %186 = vector.broadcast %cst_34 : f32 to vector<2x3x16x16xf32>
    %187 = arith.select %183, %185, %186 : vector<2x3x16x16xi1>, vector<2x3x16x16xf32>
    %188 = arith.addf %181, %187 : vector<2x3x16x16xf32>
    %189 = vector.extract_strided_slice %188 {offsets = [0, 0, 0, 0], sizes = [2, 3, 1, 16], strides = [1, 1, 1, 1]} : vector<2x3x16x16xf32> to vector<2x3x1x16xf32>
    %190 = vector.extract_strided_slice %188 {offsets = [0, 0, 1, 0], sizes = [2, 3, 1, 16], strides = [1, 1, 1, 1]} : vector<2x3x16x16xf32> to vector<2x3x1x16xf32>
    %cst_35 = arith.constant 2.000000e+00 : f32
    %191 = vector.broadcast %cst_35 : f32 to vector<2x3x1x16xf32>
    %192 = arith.mulf %191, %190 : vector<2x3x1x16xf32>
    %193 = arith.addf %189, %192 : vector<2x3x1x16xf32>
    %194 = vector.extract_strided_slice %188 {offsets = [0, 0, 15, 0], sizes = [2, 3, 1, 16], strides = [1, 1, 1, 1]} : vector<2x3x16x16xf32> to vector<2x3x1x16xf32>
    %195 = vector.extract_strided_slice %188 {offsets = [0, 0, 14, 0], sizes = [2, 3, 1, 16], strides = [1, 1, 1, 1]} : vector<2x3x16x16xf32> to vector<2x3x1x16xf32>
    %cst_36 = arith.constant 2.000000e+00 : f32
    %196 = vector.broadcast %cst_36 : f32 to vector<2x3x1x16xf32>
    %197 = arith.mulf %196, %195 : vector<2x3x1x16xf32>
    %198 = arith.addf %194, %197 : vector<2x3x1x16xf32>
    %199 = vector.extract_strided_slice %188 {offsets = [0, 0, 0, 0], sizes = [2, 3, 14, 16], strides = [1, 1, 1, 1]} : vector<2x3x16x16xf32> to vector<2x3x14x16xf32>
    %200 = vector.extract_strided_slice %188 {offsets = [0, 0, 1, 0], sizes = [2, 3, 14, 16], strides = [1, 1, 1, 1]} : vector<2x3x16x16xf32> to vector<2x3x14x16xf32>
    %201 = arith.addf %199, %200 : vector<2x3x14x16xf32>
    %202 = vector.extract_strided_slice %188 {offsets = [0, 0, 2, 0], sizes = [2, 3, 14, 16], strides = [1, 1, 1, 1]} : vector<2x3x16x16xf32> to vector<2x3x14x16xf32>
    %203 = arith.addf %201, %202 : vector<2x3x14x16xf32>
    %204 = tpu.concatenate %193, %203, %198 in 2 : vector<2x3x1x16xf32>, vector<2x3x14x16xf32>, vector<2x3x1x16xf32> -> vector<2x3x16x16xf32>
    %cst_37 = arith.constant 0.111111112 : f32
    %205 = vector.broadcast %cst_37 : f32 to vector<2x3x16x16xf32>
    %206 = arith.mulf %204, %205 : vector<2x3x16x16xf32>
    %207 = arith.mulf %60, %106 : vector<2x3x16x16xf32>
    %208 = arith.subf %206, %207 : vector<2x3x16x16xf32>
    %cst_38 = arith.constant 2.000000e+00 : f32
    %209 = vector.broadcast %cst_38 : f32 to vector<2x3x16x16xf32>
    %210 = arith.mulf %209, %60 : vector<2x3x16x16xf32>
    %211 = arith.mulf %210, %106 : vector<2x3x16x16xf32>
    %cst_39 = arith.constant 9.99999974E-5 : f32
    %212 = vector.broadcast %cst_39 : f32 to vector<2x3x16x16xf32>
    %213 = arith.addf %211, %212 : vector<2x3x16x16xf32>
    %cst_40 = arith.constant 2.000000e+00 : f32
    %214 = vector.broadcast %cst_40 : f32 to vector<2x3x16x16xf32>
    %215 = arith.mulf %214, %208 : vector<2x3x16x16xf32>
    %cst_41 = arith.constant 8.99999984E-4 : f32
    %216 = vector.broadcast %cst_41 : f32 to vector<2x3x16x16xf32>
    %217 = arith.addf %215, %216 : vector<2x3x16x16xf32>
    %218 = arith.mulf %213, %217 : vector<2x3x16x16xf32>
    %219 = arith.mulf %60, %60 : vector<2x3x16x16xf32>
    %220 = arith.mulf %106, %106 : vector<2x3x16x16xf32>
    %221 = arith.addf %219, %220 : vector<2x3x16x16xf32>
    %cst_42 = arith.constant 9.99999974E-5 : f32
    %222 = vector.broadcast %cst_42 : f32 to vector<2x3x16x16xf32>
    %223 = arith.addf %221, %222 : vector<2x3x16x16xf32>
    %cst_43 = arith.constant 8.99999984E-4 : f32
    %224 = vector.broadcast %cst_43 : f32 to vector<2x3x16x16xf32>
    %225 = arith.addf %159, %224 : vector<2x3x16x16xf32>
    %226 = arith.mulf %223, %225 : vector<2x3x16x16xf32>
    %227 = tpu.reciprocal %226 {approx = true} : vector<2x3x16x16xf32> -> vector<2x3x16x16xf32>
    %228 = arith.mulf %218, %227 : vector<2x3x16x16xf32>
    %cst_44 = arith.constant 1.000000e+00 : f32
    %229 = vector.broadcast %cst_44 : f32 to vector<2x3x16x16xf32>
    %230 = arith.subf %229, %228 : vector<2x3x16x16xf32>
    %cst_45 = arith.constant 5.000000e-01 : f32
    %231 = vector.broadcast %cst_45 : f32 to vector<2x3x16x16xf32>
    %232 = arith.mulf %230, %231 : vector<2x3x16x16xf32>
    %cst_46 = arith.constant 0.000000e+00 : f32
    %cst_47 = arith.constant 1.000000e+00 : f32
    %233 = vector.broadcast %cst_46 : f32 to vector<2x3x16x16xf32>
    %234 = arith.maximumf %233, %232 : vector<2x3x16x16xf32>
    %235 = vector.broadcast %cst_47 : f32 to vector<2x3x16x16xf32>
    %236 = arith.minimumf %235, %234 : vector<2x3x16x16xf32>
    %237 = vector.shape_cast %236 : vector<2x3x16x16xf32> to vector<1x2x3x16x16xf32>
    %cst_48 = arith.constant dense<0.000000e+00> : vector<1xf32>
    %238 = vector.multi_reduction <add>, %237, %cst_48 [1, 2, 3, 4] : vector<1x2x3x16x16xf32> to vector<1xf32>
    %239 = vector.shape_cast %238 : vector<1xf32> to vector<1x1x1x1x1xf32>
    %240 = vector.extract %239[0, 0, 0, 0, 0] : f32 from vector<1x1x1x1x1xf32>
    %cst_49 = arith.constant 1.536000e+03 : f32
    %241 = arith.divf %240, %cst_49 : f32
    %242 = arith.subf %2, %5 : vector<2x3x16x16xf32>
    %243 = math.absf %242 : vector<2x3x16x16xf32>
    %244 = vector.shape_cast %243 : vector<2x3x16x16xf32> to vector<1x2x3x16x16xf32>
    %cst_50 = arith.constant dense<0.000000e+00> : vector<1xf32>
    %245 = vector.multi_reduction <add>, %244, %cst_50 [1, 2, 3, 4] : vector<1x2x3x16x16xf32> to vector<1xf32>
    %246 = vector.shape_cast %245 : vector<1xf32> to vector<1x1x1x1x1xf32>
    %247 = vector.extract %246[0, 0, 0, 0, 0] : f32 from vector<1x1x1x1x1xf32>
    %cst_51 = arith.constant 1.536000e+03 : f32
    %248 = arith.divf %247, %cst_51 : f32
    %cst_52 = arith.constant 9.99999996E-13 : f32
    %249 = arith.addf %248, %cst_52 : f32
    %cst_53 = arith.constant 1.000000e+00 : f32
    %250 = arith.divf %cst_53, %249 : f32
    %251 = vector.broadcast %250 : f32 to vector<2x3x16x16xf32>
    %252 = arith.mulf %243, %251 : vector<2x3x16x16xf32>
    %cst_54 = arith.constant 1.000000e+00 : f32
    %253 = vector.broadcast %cst_54 : f32 to vector<2x3x16x16xf32>
    %254 = arith.subf %253, %252 : vector<2x3x16x16xf32>
    %cst_55 = arith.constant 2.000000e+00 : f32
    %255 = vector.broadcast %cst_55 : f32 to vector<2x3x16x16xf32>
    %256 = arith.mulf %255, %254 : vector<2x3x16x16xf32>
    %257 = math.exp %256 : vector<2x3x16x16xf32>
    %258 = arith.subf %9, %7 : vector<2x1x16x16xf32>
    %259 = math.absf %258 : vector<2x1x16x16xf32>
    %260 = vector.broadcast %259 : vector<2x1x16x16xf32> to vector<2x3x16x16xf32>
    %261 = arith.mulf %257, %260 : vector<2x3x16x16xf32>
    %262 = vector.shape_cast %261 : vector<2x3x16x16xf32> to vector<1x2x3x16x16xf32>
    %cst_56 = arith.constant dense<0.000000e+00> : vector<1xf32>
    %263 = vector.multi_reduction <add>, %262, %cst_56 [1, 2, 3, 4] : vector<1x2x3x16x16xf32> to vector<1xf32>
    %264 = vector.shape_cast %263 : vector<1xf32> to vector<1x1x1x1x1xf32>
    %265 = vector.extract %264[0, 0, 0, 0, 0] : f32 from vector<1x1x1x1x1xf32>
    %cst_57 = arith.constant 6.51041686E-4 : f32
    %266 = arith.mulf %265, %cst_57 : f32
    %267 = vector.shape_cast %7 : vector<2x1x16x16xf32> to vector<2x16x16xf32>
    %268 = vector.extract_strided_slice %267 {offsets = [0, 0, 1], sizes = [2, 16, 15], strides = [1, 1, 1]} : vector<2x16x16xf32> to vector<2x16x15xf32>
    %269 = vector.extract_strided_slice %267 {offsets = [0, 0, 0], sizes = [2, 16, 1], strides = [1, 1, 1]} : vector<2x16x16xf32> to vector<2x16x1xf32>
    %270 = tpu.concatenate %268, %269 in 2 : vector<2x16x15xf32>, vector<2x16x1xf32> -> vector<2x16x16xf32>
    %271 = vector.extract_strided_slice %5 {offsets = [0, 0, 0, 1], sizes = [2, 3, 16, 15], strides = [1, 1, 1, 1]} : vector<2x3x16x16xf32> to vector<2x3x16x15xf32>
    %272 = vector.extract_strided_slice %5 {offsets = [0, 0, 0, 0], sizes = [2, 3, 16, 1], strides = [1, 1, 1, 1]} : vector<2x3x16x16xf32> to vector<2x3x16x1xf32>
    %273 = tpu.concatenate %271, %272 in 3 : vector<2x3x16x15xf32>, vector<2x3x16x1xf32> -> vector<2x3x16x16xf32>
    %274 = arith.subf %5, %273 : vector<2x3x16x16xf32>
    %275 = math.absf %274 : vector<2x3x16x16xf32>
    %276 = vector.extract_strided_slice %275 {offsets = [0, 0, 0, 0], sizes = [2, 1, 16, 16], strides = [1, 1, 1, 1]} : vector<2x3x16x16xf32> to vector<2x1x16x16xf32>
    %277 = vector.shape_cast %276 : vector<2x1x16x16xf32> to vector<2x16x16xf32>
    %278 = vector.extract_strided_slice %275 {offsets = [0, 1, 0, 0], sizes = [2, 1, 16, 16], strides = [1, 1, 1, 1]} : vector<2x3x16x16xf32> to vector<2x1x16x16xf32>
    %279 = vector.shape_cast %278 : vector<2x1x16x16xf32> to vector<2x16x16xf32>
    %280 = arith.addf %277, %279 : vector<2x16x16xf32>
    %281 = vector.extract_strided_slice %275 {offsets = [0, 2, 0, 0], sizes = [2, 1, 16, 16], strides = [1, 1, 1, 1]} : vector<2x3x16x16xf32> to vector<2x1x16x16xf32>
    %282 = vector.shape_cast %281 : vector<2x1x16x16xf32> to vector<2x16x16xf32>
    %283 = arith.addf %280, %282 : vector<2x16x16xf32>
    %cst_58 = arith.constant 0.333333343 : f32
    %284 = vector.broadcast %cst_58 : f32 to vector<2x16x16xf32>
    %285 = arith.mulf %283, %284 : vector<2x16x16xf32>
    %cst_59 = arith.constant 0.000000e+00 : f32
    %286 = vector.broadcast %cst_59 : f32 to vector<2x16x16xf32>
    %287 = arith.subf %286, %285 : vector<2x16x16xf32>
    %288 = math.exp %287 : vector<2x16x16xf32>
    %289 = arith.subf %267, %270 : vector<2x16x16xf32>
    %290 = math.absf %289 : vector<2x16x16xf32>
    %291 = arith.mulf %290, %288 : vector<2x16x16xf32>
    %292 = vector.shape_cast %291 : vector<2x16x16xf32> to vector<1x2x16x16xf32>
    %cst_60 = arith.constant dense<0.000000e+00> : vector<1xf32>
    %293 = vector.multi_reduction <add>, %292, %cst_60 [1, 2, 3] : vector<1x2x16x16xf32> to vector<1xf32>
    %294 = vector.shape_cast %293 : vector<1xf32> to vector<1x1x1x1xf32>
    %295 = vector.extract %294[0, 0, 0, 0] : f32 from vector<1x1x1x1xf32>
    %296 = vector.extract_strided_slice %267 {offsets = [0, 0, 15], sizes = [2, 16, 1], strides = [1, 1, 1]} : vector<2x16x16xf32> to vector<2x16x1xf32>
    %297 = vector.extract_strided_slice %267 {offsets = [0, 0, 0], sizes = [2, 16, 1], strides = [1, 1, 1]} : vector<2x16x16xf32> to vector<2x16x1xf32>
    %298 = arith.subf %296, %297 : vector<2x16x1xf32>
    %299 = math.absf %298 : vector<2x16x1xf32>
    %300 = vector.extract_strided_slice %5 {offsets = [0, 0, 0, 15], sizes = [2, 3, 16, 1], strides = [1, 1, 1, 1]} : vector<2x3x16x16xf32> to vector<2x3x16x1xf32>
    %301 = vector.extract_strided_slice %5 {offsets = [0, 0, 0, 0], sizes = [2, 3, 16, 1], strides = [1, 1, 1, 1]} : vector<2x3x16x16xf32> to vector<2x3x16x1xf32>
    %302 = arith.subf %300, %301 : vector<2x3x16x1xf32>
    %303 = math.absf %302 : vector<2x3x16x1xf32>
    %304 = vector.extract_strided_slice %303 {offsets = [0, 0, 0, 0], sizes = [2, 1, 16, 1], strides = [1, 1, 1, 1]} : vector<2x3x16x1xf32> to vector<2x1x16x1xf32>
    %305 = vector.shape_cast %304 : vector<2x1x16x1xf32> to vector<2x16x1xf32>
    %306 = vector.extract_strided_slice %303 {offsets = [0, 1, 0, 0], sizes = [2, 1, 16, 1], strides = [1, 1, 1, 1]} : vector<2x3x16x1xf32> to vector<2x1x16x1xf32>
    %307 = vector.shape_cast %306 : vector<2x1x16x1xf32> to vector<2x16x1xf32>
    %308 = arith.addf %305, %307 : vector<2x16x1xf32>
    %309 = vector.extract_strided_slice %303 {offsets = [0, 2, 0, 0], sizes = [2, 1, 16, 1], strides = [1, 1, 1, 1]} : vector<2x3x16x1xf32> to vector<2x1x16x1xf32>
    %310 = vector.shape_cast %309 : vector<2x1x16x1xf32> to vector<2x16x1xf32>
    %311 = arith.addf %308, %310 : vector<2x16x1xf32>
    %cst_61 = arith.constant 0.333333343 : f32
    %312 = vector.broadcast %cst_61 : f32 to vector<2x16x1xf32>
    %313 = arith.mulf %311, %312 : vector<2x16x1xf32>
    %cst_62 = arith.constant 0.000000e+00 : f32
    %314 = vector.broadcast %cst_62 : f32 to vector<2x16x1xf32>
    %315 = arith.subf %314, %313 : vector<2x16x1xf32>
    %316 = math.exp %315 : vector<2x16x1xf32>
    %317 = arith.mulf %299, %316 : vector<2x16x1xf32>
    %318 = vector.shape_cast %317 : vector<2x16x1xf32> to vector<1x2x16x1xf32>
    %cst_63 = arith.constant dense<0.000000e+00> : vector<1xf32>
    %319 = vector.multi_reduction <add>, %318, %cst_63 [1, 2, 3] : vector<1x2x16x1xf32> to vector<1xf32>
    %320 = vector.shape_cast %319 : vector<1xf32> to vector<1x1x1x1xf32>
    %321 = vector.extract %320[0, 0, 0, 0] : f32 from vector<1x1x1x1xf32>
    %322 = arith.subf %295, %321 : f32
    %cst_64 = arith.constant 0.00208333344 : f32
    %323 = arith.mulf %322, %cst_64 : f32
    %324 = tpu.iota {dimensions = array<i32: 1>} : vector<8x128xi32>
    %325 = tpu.iota {dimensions = array<i32: 0>} : vector<8x128xi32>
    %c0_i32_65 = arith.constant 0 : i32
    %326 = vector.broadcast %c0_i32_65 : i32 to vector<8x128xi32>
    %327 = arith.cmpi eq, %325, %326 : vector<8x128xi32>
    %c0_i32_66 = arith.constant 0 : i32
    %328 = vector.broadcast %c0_i32_66 : i32 to vector<8x128xi32>
    %329 = arith.cmpi eq, %324, %328 : vector<8x128xi32>
    %330 = arith.andi %327, %329 : vector<8x128xi1>
    %cst_67 = arith.constant 0.000000e+00 : f32
    %331 = vector.broadcast %241 : f32 to vector<8x128xf32>
    %332 = vector.broadcast %cst_67 : f32 to vector<8x128xf32>
    %333 = arith.select %330, %331, %332 : vector<8x128xi1>, vector<8x128xf32>
    %c1_i32 = arith.constant 1 : i32
    %334 = vector.broadcast %c1_i32 : i32 to vector<8x128xi32>
    %335 = arith.cmpi eq, %324, %334 : vector<8x128xi32>
    %336 = arith.andi %327, %335 : vector<8x128xi1>
    %337 = vector.broadcast %248 : f32 to vector<8x128xf32>
    %338 = arith.select %336, %337, %333 : vector<8x128xi1>, vector<8x128xf32>
    %c2_i32 = arith.constant 2 : i32
    %339 = vector.broadcast %c2_i32 : i32 to vector<8x128xi32>
    %340 = arith.cmpi eq, %324, %339 : vector<8x128xi32>
    %341 = arith.andi %327, %340 : vector<8x128xi1>
    %342 = vector.broadcast %266 : f32 to vector<8x128xf32>
    %343 = arith.select %341, %342, %338 : vector<8x128xi1>, vector<8x128xf32>
    %c3_i32 = arith.constant 3 : i32
    %344 = vector.broadcast %c3_i32 : i32 to vector<8x128xi32>
    %345 = arith.cmpi eq, %324, %344 : vector<8x128xi32>
    %346 = arith.andi %327, %345 : vector<8x128xi1>
    %347 = vector.broadcast %323 : f32 to vector<8x128xf32>
    %348 = arith.select %346, %347, %343 : vector<8x128xi1>, vector<8x128xf32>
    %c0_68 = arith.constant 0 : index
    %c0_69 = arith.constant 0 : index
    %c0_70 = arith.constant 0 : index
    %349 = vector.load %arg5[%c0_68, %c0_69, %c0_70] : memref<1x8x128xf32, #tpu.memory_space<vmem>>, vector<1x8x128xf32>
    %350 = vector.shape_cast %349 : vector<1x8x128xf32> to vector<8x128xf32>
    %351 = vector.shape_cast %348 : vector<8x128xf32> to vector<1x8x128xf32>
    tpu.vector_store %arg5[%c0_68, %c0_69, %c0_70], %351 {strides = array<i32>} : memref<1x8x128xf32, #tpu.memory_space<vmem>>, vector<1x8x128xf32>,
    return
  }
  func.func @transform_0(%arg0: i32) -> (i32, i32, i32, i32, i32) {
    %c0_i32 = arith.constant 0 : i32
    %c0_i32_0 = arith.constant 0 : i32
    %c0_i32_1 = arith.constant 0 : i32
    %c0_i32_2 = arith.constant 0 : i32
    %c0_i32_3 = arith.constant 0 : i32
    return %arg0, %c0_i32, %c0_i32_0, %c0_i32_1, %c0_i32_2 : i32, i32, i32, i32, i32
  }
  func.func @transform_1(%arg0: i32) -> (i32, i32, i32, i32, i32) {
    %c0_i32 = arith.constant 0 : i32
    %c0_i32_0 = arith.constant 0 : i32
    %c0_i32_1 = arith.constant 0 : i32
    %c0_i32_2 = arith.constant 0 : i32
    %c0_i32_3 = arith.constant 0 : i32
    return %arg0, %c0_i32, %c0_i32_0, %c0_i32_1, %c0_i32_2 : i32, i32, i32, i32, i32
  }
  func.func @transform_2(%arg0: i32) -> (i32, i32, i32, i32, i32) {
    %c0_i32 = arith.constant 0 : i32
    %c0_i32_0 = arith.constant 0 : i32
    %c0_i32_1 = arith.constant 0 : i32
    %c0_i32_2 = arith.constant 0 : i32
    %c0_i32_3 = arith.constant 0 : i32
    return %arg0, %c0_i32, %c0_i32_0, %c0_i32_1, %c0_i32_2 : i32, i32, i32, i32, i32
  }
  func.func @transform_3(%arg0: i32) -> (i32, i32, i32, i32, i32) {
    %c0_i32 = arith.constant 0 : i32
    %c0_i32_0 = arith.constant 0 : i32
    %c0_i32_1 = arith.constant 0 : i32
    %c0_i32_2 = arith.constant 0 : i32
    %c0_i32_3 = arith.constant 0 : i32
    return %arg0, %c0_i32, %c0_i32_0, %c0_i32_1, %c0_i32_2 : i32, i32, i32, i32, i32
  }
  func.func @transform_4(%arg0: i32) -> (i32, i32, i32) {
    %c0_i32 = arith.constant 0 : i32
    %c0_i32_0 = arith.constant 0 : i32
    %c0_i32_1 = arith.constant 0 : i32
    return %arg0, %c0_i32, %c0_i32_0 : i32, i32, i32
  }
}

module attributes {stable_mosaic.version = 11 : i64} {
  func.func @_side_scale_loss_kernel(%arg0: i32, %arg1: memref<1x2x3x8x8xbf16, #tpu.memory_space<vmem>>, %arg2: memref<1x2x3x8x8xbf16, #tpu.memory_space<vmem>>, %arg3: memref<1x2x1x8x8xf32, #tpu.memory_space<vmem>>, %arg4: memref<1x2x1x8x8xf32, #tpu.memory_space<vmem>>, %arg5: memref<1x8x128xf32, #tpu.memory_space<vmem>>) attributes {dimension_semantics = [#tpu.dimension_semantics<parallel>], iteration_bounds = array<i64: 2>, scalar_prefetch = 0 : i64, scratch_operands = 0 : i64, tpu.core_type = #tpu.core_type<tc>, window_params = [{transform_indices = @transform_0, window_bounds = array<i64: 1, 2, 3, 8, 8>}, {transform_indices = @transform_1, window_bounds = array<i64: 1, 2, 3, 8, 8>}, {transform_indices = @transform_2, window_bounds = array<i64: 1, 2, 1, 8, 8>}, {transform_indices = @transform_3, window_bounds = array<i64: 1, 2, 1, 8, 8>}, {transform_indices = @transform_4, window_bounds = array<i64: 1, 8, 128>}]} {
    %c0 = arith.constant 0 : index
    %c0_0 = arith.constant 0 : index
    %c0_1 = arith.constant 0 : index
    %c0_2 = arith.constant 0 : index
    %c0_3 = arith.constant 0 : index
    %0 = vector.load %arg1[%c0, %c0_0, %c0_1, %c0_2, %c0_3] : memref<1x2x3x8x8xbf16, #tpu.memory_space<vmem>>, vector<1x2x3x8x8xbf16>
    %1 = vector.shape_cast %0 : vector<1x2x3x8x8xbf16> to vector<2x3x8x8xbf16>
    %2 = arith.extf %1 : vector<2x3x8x8xbf16> to vector<2x3x8x8xf32>
    %c0_4 = arith.constant 0 : index
    %c0_5 = arith.constant 0 : index
    %c0_6 = arith.constant 0 : index
    %c0_7 = arith.constant 0 : index
    %c0_8 = arith.constant 0 : index
    %3 = vector.load %arg2[%c0_4, %c0_5, %c0_6, %c0_7, %c0_8] : memref<1x2x3x8x8xbf16, #tpu.memory_space<vmem>>, vector<1x2x3x8x8xbf16>
    %4 = vector.shape_cast %3 : vector<1x2x3x8x8xbf16> to vector<2x3x8x8xbf16>
    %5 = arith.extf %4 : vector<2x3x8x8xbf16> to vector<2x3x8x8xf32>
    %c0_9 = arith.constant 0 : index
    %c0_10 = arith.constant 0 : index
    %c0_11 = arith.constant 0 : index
    %c0_12 = arith.constant 0 : index
    %c0_13 = arith.constant 0 : index
    %6 = vector.load %arg3[%c0_9, %c0_10, %c0_11, %c0_12, %c0_13] : memref<1x2x1x8x8xf32, #tpu.memory_space<vmem>>, vector<1x2x1x8x8xf32>
    %7 = vector.shape_cast %6 : vector<1x2x1x8x8xf32> to vector<2x1x8x8xf32>
    %c0_14 = arith.constant 0 : index
    %c0_15 = arith.constant 0 : index
    %c0_16 = arith.constant 0 : index
    %c0_17 = arith.constant 0 : index
    %c0_18 = arith.constant 0 : index
    %8 = vector.load %arg4[%c0_14, %c0_15, %c0_16, %c0_17, %c0_18] : memref<1x2x1x8x8xf32, #tpu.memory_space<vmem>>, vector<1x2x1x8x8xf32>
    %9 = vector.shape_cast %8 : vector<1x2x1x8x8xf32> to vector<2x1x8x8xf32>
    %10 = tpu.iota {dimensions = array<i32: 3>} : vector<1x1x1x8xi32>
    %c0_i32 = arith.constant 0 : i32
    %11 = vector.broadcast %c0_i32 : i32 to vector<1x1x1x8xi32>
    %12 = arith.cmpi eq, %10, %11 : vector<1x1x1x8xi32>
    %c7_i32 = arith.constant 7 : i32
    %13 = vector.broadcast %c7_i32 : i32 to vector<1x1x1x8xi32>
    %14 = arith.cmpi eq, %10, %13 : vector<1x1x1x8xi32>
    %15 = vector.extract_strided_slice %2 {offsets = [0, 0, 0, 7], sizes = [2, 3, 8, 1], strides = [1, 1, 1, 1]} : vector<2x3x8x8xf32> to vector<2x3x8x1xf32>
    %16 = vector.extract_strided_slice %2 {offsets = [0, 0, 0, 0], sizes = [2, 3, 8, 7], strides = [1, 1, 1, 1]} : vector<2x3x8x8xf32> to vector<2x3x8x7xf32>
    %17 = tpu.concatenate %15, %16 in 3 : vector<2x3x8x1xf32>, vector<2x3x8x7xf32> -> vector<2x3x8x8xf32>
    %18 = arith.addf %17, %2 : vector<2x3x8x8xf32>
    %19 = vector.extract_strided_slice %2 {offsets = [0, 0, 0, 1], sizes = [2, 3, 8, 7], strides = [1, 1, 1, 1]} : vector<2x3x8x8xf32> to vector<2x3x8x7xf32>
    %20 = vector.extract_strided_slice %2 {offsets = [0, 0, 0, 0], sizes = [2, 3, 8, 1], strides = [1, 1, 1, 1]} : vector<2x3x8x8xf32> to vector<2x3x8x1xf32>
    %21 = tpu.concatenate %19, %20 in 3 : vector<2x3x8x7xf32>, vector<2x3x8x1xf32> -> vector<2x3x8x8xf32>
    %22 = arith.addf %18, %21 : vector<2x3x8x8xf32>
    %23 = vector.extract_strided_slice %2 {offsets = [0, 0, 0, 1], sizes = [2, 3, 8, 1], strides = [1, 1, 1, 1]} : vector<2x3x8x8xf32> to vector<2x3x8x1xf32>
    %24 = vector.extract_strided_slice %2 {offsets = [0, 0, 0, 7], sizes = [2, 3, 8, 1], strides = [1, 1, 1, 1]} : vector<2x3x8x8xf32> to vector<2x3x8x1xf32>
    %25 = arith.subf %23, %24 : vector<2x3x8x1xf32>
    %26 = vector.extract_strided_slice %2 {offsets = [0, 0, 0, 6], sizes = [2, 3, 8, 1], strides = [1, 1, 1, 1]} : vector<2x3x8x8xf32> to vector<2x3x8x1xf32>
    %27 = vector.extract_strided_slice %2 {offsets = [0, 0, 0, 0], sizes = [2, 3, 8, 1], strides = [1, 1, 1, 1]} : vector<2x3x8x8xf32> to vector<2x3x8x1xf32>
    %28 = arith.subf %26, %27 : vector<2x3x8x1xf32>
    %cst = arith.constant 0.000000e+00 : f32
    %29 = vector.shape_cast %12 : vector<1x1x1x8xi1> to vector<1x1x1x8xi1>
    %30 = vector.broadcast %29 : vector<1x1x1x8xi1> to vector<2x3x8x8xi1>
    %31 = vector.shape_cast %25 : vector<2x3x8x1xf32> to vector<2x3x8x1xf32>
    %32 = vector.broadcast %31 : vector<2x3x8x1xf32> to vector<2x3x8x8xf32>
    %33 = vector.broadcast %cst : f32 to vector<2x3x8x8xf32>
    %34 = arith.select %30, %32, %33 : vector<2x3x8x8xi1>, vector<2x3x8x8xf32>
    %35 = arith.addf %22, %34 : vector<2x3x8x8xf32>
    %cst_19 = arith.constant 0.000000e+00 : f32
    %36 = vector.shape_cast %14 : vector<1x1x1x8xi1> to vector<1x1x1x8xi1>
    %37 = vector.broadcast %36 : vector<1x1x1x8xi1> to vector<2x3x8x8xi1>
    %38 = vector.shape_cast %28 : vector<2x3x8x1xf32> to vector<2x3x8x1xf32>
    %39 = vector.broadcast %38 : vector<2x3x8x1xf32> to vector<2x3x8x8xf32>
    %40 = vector.broadcast %cst_19 : f32 to vector<2x3x8x8xf32>
    %41 = arith.select %37, %39, %40 : vector<2x3x8x8xi1>, vector<2x3x8x8xf32>
    %42 = arith.addf %35, %41 : vector<2x3x8x8xf32>
    %43 = vector.extract_strided_slice %42 {offsets = [0, 0, 0, 0], sizes = [2, 3, 1, 8], strides = [1, 1, 1, 1]} : vector<2x3x8x8xf32> to vector<2x3x1x8xf32>
    %44 = vector.extract_strided_slice %42 {offsets = [0, 0, 1, 0], sizes = [2, 3, 1, 8], strides = [1, 1, 1, 1]} : vector<2x3x8x8xf32> to vector<2x3x1x8xf32>
    %cst_20 = arith.constant 2.000000e+00 : f32
    %45 = vector.broadcast %cst_20 : f32 to vector<2x3x1x8xf32>
    %46 = arith.mulf %45, %44 : vector<2x3x1x8xf32>
    %47 = arith.addf %43, %46 : vector<2x3x1x8xf32>
    %48 = vector.extract_strided_slice %42 {offsets = [0, 0, 7, 0], sizes = [2, 3, 1, 8], strides = [1, 1, 1, 1]} : vector<2x3x8x8xf32> to vector<2x3x1x8xf32>
    %49 = vector.extract_strided_slice %42 {offsets = [0, 0, 6, 0], sizes = [2, 3, 1, 8], strides = [1, 1, 1, 1]} : vector<2x3x8x8xf32> to vector<2x3x1x8xf32>
    %cst_21 = arith.constant 2.000000e+00 : f32
    %50 = vector.broadcast %cst_21 : f32 to vector<2x3x1x8xf32>
    %51 = arith.mulf %50, %49 : vector<2x3x1x8xf32>
    %52 = arith.addf %48, %51 : vector<2x3x1x8xf32>
    %53 = vector.extract_strided_slice %42 {offsets = [0, 0, 0, 0], sizes = [2, 3, 6, 8], strides = [1, 1, 1, 1]} : vector<2x3x8x8xf32> to vector<2x3x6x8xf32>
    %54 = vector.extract_strided_slice %42 {offsets = [0, 0, 1, 0], sizes = [2, 3, 6, 8], strides = [1, 1, 1, 1]} : vector<2x3x8x8xf32> to vector<2x3x6x8xf32>
    %55 = arith.addf %53, %54 : vector<2x3x6x8xf32>
    %56 = vector.extract_strided_slice %42 {offsets = [0, 0, 2, 0], sizes = [2, 3, 6, 8], strides = [1, 1, 1, 1]} : vector<2x3x8x8xf32> to vector<2x3x6x8xf32>
    %57 = arith.addf %55, %56 : vector<2x3x6x8xf32>
    %58 = tpu.concatenate %47, %57, %52 in 2 : vector<2x3x1x8xf32>, vector<2x3x6x8xf32>, vector<2x3x1x8xf32> -> vector<2x3x8x8xf32>
    %cst_22 = arith.constant 0.111111112 : f32
    %59 = vector.broadcast %cst_22 : f32 to vector<2x3x8x8xf32>
    %60 = arith.mulf %58, %59 : vector<2x3x8x8xf32>
    %61 = vector.extract_strided_slice %5 {offsets = [0, 0, 0, 7], sizes = [2, 3, 8, 1], strides = [1, 1, 1, 1]} : vector<2x3x8x8xf32> to vector<2x3x8x1xf32>
    %62 = vector.extract_strided_slice %5 {offsets = [0, 0, 0, 0], sizes = [2, 3, 8, 7], strides = [1, 1, 1, 1]} : vector<2x3x8x8xf32> to vector<2x3x8x7xf32>
    %63 = tpu.concatenate %61, %62 in 3 : vector<2x3x8x1xf32>, vector<2x3x8x7xf32> -> vector<2x3x8x8xf32>
    %64 = arith.addf %63, %5 : vector<2x3x8x8xf32>
    %65 = vector.extract_strided_slice %5 {offsets = [0, 0, 0, 1], sizes = [2, 3, 8, 7], strides = [1, 1, 1, 1]} : vector<2x3x8x8xf32> to vector<2x3x8x7xf32>
    %66 = vector.extract_strided_slice %5 {offsets = [0, 0, 0, 0], sizes = [2, 3, 8, 1], strides = [1, 1, 1, 1]} : vector<2x3x8x8xf32> to vector<2x3x8x1xf32>
    %67 = tpu.concatenate %65, %66 in 3 : vector<2x3x8x7xf32>, vector<2x3x8x1xf32> -> vector<2x3x8x8xf32>
    %68 = arith.addf %64, %67 : vector<2x3x8x8xf32>
    %69 = vector.extract_strided_slice %5 {offsets = [0, 0, 0, 1], sizes = [2, 3, 8, 1], strides = [1, 1, 1, 1]} : vector<2x3x8x8xf32> to vector<2x3x8x1xf32>
    %70 = vector.extract_strided_slice %5 {offsets = [0, 0, 0, 7], sizes = [2, 3, 8, 1], strides = [1, 1, 1, 1]} : vector<2x3x8x8xf32> to vector<2x3x8x1xf32>
    %71 = arith.subf %69, %70 : vector<2x3x8x1xf32>
    %72 = vector.extract_strided_slice %5 {offsets = [0, 0, 0, 6], sizes = [2, 3, 8, 1], strides = [1, 1, 1, 1]} : vector<2x3x8x8xf32> to vector<2x3x8x1xf32>
    %73 = vector.extract_strided_slice %5 {offsets = [0, 0, 0, 0], sizes = [2, 3, 8, 1], strides = [1, 1, 1, 1]} : vector<2x3x8x8xf32> to vector<2x3x8x1xf32>
    %74 = arith.subf %72, %73 : vector<2x3x8x1xf32>
    %cst_23 = arith.constant 0.000000e+00 : f32
    %75 = vector.shape_cast %12 : vector<1x1x1x8xi1> to vector<1x1x1x8xi1>
    %76 = vector.broadcast %75 : vector<1x1x1x8xi1> to vector<2x3x8x8xi1>
    %77 = vector.shape_cast %71 : vector<2x3x8x1xf32> to vector<2x3x8x1xf32>
    %78 = vector.broadcast %77 : vector<2x3x8x1xf32> to vector<2x3x8x8xf32>
    %79 = vector.broadcast %cst_23 : f32 to vector<2x3x8x8xf32>
    %80 = arith.select %76, %78, %79 : vector<2x3x8x8xi1>, vector<2x3x8x8xf32>
    %81 = arith.addf %68, %80 : vector<2x3x8x8xf32>
    %cst_24 = arith.constant 0.000000e+00 : f32
    %82 = vector.shape_cast %14 : vector<1x1x1x8xi1> to vector<1x1x1x8xi1>
    %83 = vector.broadcast %82 : vector<1x1x1x8xi1> to vector<2x3x8x8xi1>
    %84 = vector.shape_cast %74 : vector<2x3x8x1xf32> to vector<2x3x8x1xf32>
    %85 = vector.broadcast %84 : vector<2x3x8x1xf32> to vector<2x3x8x8xf32>
    %86 = vector.broadcast %cst_24 : f32 to vector<2x3x8x8xf32>
    %87 = arith.select %83, %85, %86 : vector<2x3x8x8xi1>, vector<2x3x8x8xf32>
    %88 = arith.addf %81, %87 : vector<2x3x8x8xf32>
    %89 = vector.extract_strided_slice %88 {offsets = [0, 0, 0, 0], sizes = [2, 3, 1, 8], strides = [1, 1, 1, 1]} : vector<2x3x8x8xf32> to vector<2x3x1x8xf32>
    %90 = vector.extract_strided_slice %88 {offsets = [0, 0, 1, 0], sizes = [2, 3, 1, 8], strides = [1, 1, 1, 1]} : vector<2x3x8x8xf32> to vector<2x3x1x8xf32>
    %cst_25 = arith.constant 2.000000e+00 : f32
    %91 = vector.broadcast %cst_25 : f32 to vector<2x3x1x8xf32>
    %92 = arith.mulf %91, %90 : vector<2x3x1x8xf32>
    %93 = arith.addf %89, %92 : vector<2x3x1x8xf32>
    %94 = vector.extract_strided_slice %88 {offsets = [0, 0, 7, 0], sizes = [2, 3, 1, 8], strides = [1, 1, 1, 1]} : vector<2x3x8x8xf32> to vector<2x3x1x8xf32>
    %95 = vector.extract_strided_slice %88 {offsets = [0, 0, 6, 0], sizes = [2, 3, 1, 8], strides = [1, 1, 1, 1]} : vector<2x3x8x8xf32> to vector<2x3x1x8xf32>
    %cst_26 = arith.constant 2.000000e+00 : f32
    %96 = vector.broadcast %cst_26 : f32 to vector<2x3x1x8xf32>
    %97 = arith.mulf %96, %95 : vector<2x3x1x8xf32>
    %98 = arith.addf %94, %97 : vector<2x3x1x8xf32>
    %99 = vector.extract_strided_slice %88 {offsets = [0, 0, 0, 0], sizes = [2, 3, 6, 8], strides = [1, 1, 1, 1]} : vector<2x3x8x8xf32> to vector<2x3x6x8xf32>
    %100 = vector.extract_strided_slice %88 {offsets = [0, 0, 1, 0], sizes = [2, 3, 6, 8], strides = [1, 1, 1, 1]} : vector<2x3x8x8xf32> to vector<2x3x6x8xf32>
    %101 = arith.addf %99, %100 : vector<2x3x6x8xf32>
    %102 = vector.extract_strided_slice %88 {offsets = [0, 0, 2, 0], sizes = [2, 3, 6, 8], strides = [1, 1, 1, 1]} : vector<2x3x8x8xf32> to vector<2x3x6x8xf32>
    %103 = arith.addf %101, %102 : vector<2x3x6x8xf32>
    %104 = tpu.concatenate %93, %103, %98 in 2 : vector<2x3x1x8xf32>, vector<2x3x6x8xf32>, vector<2x3x1x8xf32> -> vector<2x3x8x8xf32>
    %cst_27 = arith.constant 0.111111112 : f32
    %105 = vector.broadcast %cst_27 : f32 to vector<2x3x8x8xf32>
    %106 = arith.mulf %104, %105 : vector<2x3x8x8xf32>
    %107 = arith.mulf %2, %2 : vector<2x3x8x8xf32>
    %108 = arith.mulf %5, %5 : vector<2x3x8x8xf32>
    %109 = arith.addf %107, %108 : vector<2x3x8x8xf32>
    %110 = vector.extract_strided_slice %109 {offsets = [0, 0, 0, 7], sizes = [2, 3, 8, 1], strides = [1, 1, 1, 1]} : vector<2x3x8x8xf32> to vector<2x3x8x1xf32>
    %111 = vector.extract_strided_slice %109 {offsets = [0, 0, 0, 0], sizes = [2, 3, 8, 7], strides = [1, 1, 1, 1]} : vector<2x3x8x8xf32> to vector<2x3x8x7xf32>
    %112 = tpu.concatenate %110, %111 in 3 : vector<2x3x8x1xf32>, vector<2x3x8x7xf32> -> vector<2x3x8x8xf32>
    %113 = arith.addf %112, %109 : vector<2x3x8x8xf32>
    %114 = vector.extract_strided_slice %109 {offsets = [0, 0, 0, 1], sizes = [2, 3, 8, 7], strides = [1, 1, 1, 1]} : vector<2x3x8x8xf32> to vector<2x3x8x7xf32>
    %115 = vector.extract_strided_slice %109 {offsets = [0, 0, 0, 0], sizes = [2, 3, 8, 1], strides = [1, 1, 1, 1]} : vector<2x3x8x8xf32> to vector<2x3x8x1xf32>
    %116 = tpu.concatenate %114, %115 in 3 : vector<2x3x8x7xf32>, vector<2x3x8x1xf32> -> vector<2x3x8x8xf32>
    %117 = arith.addf %113, %116 : vector<2x3x8x8xf32>
    %118 = vector.extract_strided_slice %109 {offsets = [0, 0, 0, 1], sizes = [2, 3, 8, 1], strides = [1, 1, 1, 1]} : vector<2x3x8x8xf32> to vector<2x3x8x1xf32>
    %119 = vector.extract_strided_slice %109 {offsets = [0, 0, 0, 7], sizes = [2, 3, 8, 1], strides = [1, 1, 1, 1]} : vector<2x3x8x8xf32> to vector<2x3x8x1xf32>
    %120 = arith.subf %118, %119 : vector<2x3x8x1xf32>
    %121 = vector.extract_strided_slice %109 {offsets = [0, 0, 0, 6], sizes = [2, 3, 8, 1], strides = [1, 1, 1, 1]} : vector<2x3x8x8xf32> to vector<2x3x8x1xf32>
    %122 = vector.extract_strided_slice %109 {offsets = [0, 0, 0, 0], sizes = [2, 3, 8, 1], strides = [1, 1, 1, 1]} : vector<2x3x8x8xf32> to vector<2x3x8x1xf32>
    %123 = arith.subf %121, %122 : vector<2x3x8x1xf32>
    %cst_28 = arith.constant 0.000000e+00 : f32
    %124 = vector.shape_cast %12 : vector<1x1x1x8xi1> to vector<1x1x1x8xi1>
    %125 = vector.broadcast %124 : vector<1x1x1x8xi1> to vector<2x3x8x8xi1>
    %126 = vector.shape_cast %120 : vector<2x3x8x1xf32> to vector<2x3x8x1xf32>
    %127 = vector.broadcast %126 : vector<2x3x8x1xf32> to vector<2x3x8x8xf32>
    %128 = vector.broadcast %cst_28 : f32 to vector<2x3x8x8xf32>
    %129 = arith.select %125, %127, %128 : vector<2x3x8x8xi1>, vector<2x3x8x8xf32>
    %130 = arith.addf %117, %129 : vector<2x3x8x8xf32>
    %cst_29 = arith.constant 0.000000e+00 : f32
    %131 = vector.shape_cast %14 : vector<1x1x1x8xi1> to vector<1x1x1x8xi1>
    %132 = vector.broadcast %131 : vector<1x1x1x8xi1> to vector<2x3x8x8xi1>
    %133 = vector.shape_cast %123 : vector<2x3x8x1xf32> to vector<2x3x8x1xf32>
    %134 = vector.broadcast %133 : vector<2x3x8x1xf32> to vector<2x3x8x8xf32>
    %135 = vector.broadcast %cst_29 : f32 to vector<2x3x8x8xf32>
    %136 = arith.select %132, %134, %135 : vector<2x3x8x8xi1>, vector<2x3x8x8xf32>
    %137 = arith.addf %130, %136 : vector<2x3x8x8xf32>
    %138 = vector.extract_strided_slice %137 {offsets = [0, 0, 0, 0], sizes = [2, 3, 1, 8], strides = [1, 1, 1, 1]} : vector<2x3x8x8xf32> to vector<2x3x1x8xf32>
    %139 = vector.extract_strided_slice %137 {offsets = [0, 0, 1, 0], sizes = [2, 3, 1, 8], strides = [1, 1, 1, 1]} : vector<2x3x8x8xf32> to vector<2x3x1x8xf32>
    %cst_30 = arith.constant 2.000000e+00 : f32
    %140 = vector.broadcast %cst_30 : f32 to vector<2x3x1x8xf32>
    %141 = arith.mulf %140, %139 : vector<2x3x1x8xf32>
    %142 = arith.addf %138, %141 : vector<2x3x1x8xf32>
    %143 = vector.extract_strided_slice %137 {offsets = [0, 0, 7, 0], sizes = [2, 3, 1, 8], strides = [1, 1, 1, 1]} : vector<2x3x8x8xf32> to vector<2x3x1x8xf32>
    %144 = vector.extract_strided_slice %137 {offsets = [0, 0, 6, 0], sizes = [2, 3, 1, 8], strides = [1, 1, 1, 1]} : vector<2x3x8x8xf32> to vector<2x3x1x8xf32>
    %cst_31 = arith.constant 2.000000e+00 : f32
    %145 = vector.broadcast %cst_31 : f32 to vector<2x3x1x8xf32>
    %146 = arith.mulf %145, %144 : vector<2x3x1x8xf32>
    %147 = arith.addf %143, %146 : vector<2x3x1x8xf32>
    %148 = vector.extract_strided_slice %137 {offsets = [0, 0, 0, 0], sizes = [2, 3, 6, 8], strides = [1, 1, 1, 1]} : vector<2x3x8x8xf32> to vector<2x3x6x8xf32>
    %149 = vector.extract_strided_slice %137 {offsets = [0, 0, 1, 0], sizes = [2, 3, 6, 8], strides = [1, 1, 1, 1]} : vector<2x3x8x8xf32> to vector<2x3x6x8xf32>
    %150 = arith.addf %148, %149 : vector<2x3x6x8xf32>
    %151 = vector.extract_strided_slice %137 {offsets = [0, 0, 2, 0], sizes = [2, 3, 6, 8], strides = [1, 1, 1, 1]} : vector<2x3x8x8xf32> to vector<2x3x6x8xf32>
    %152 = arith.addf %150, %151 : vector<2x3x6x8xf32>
    %153 = tpu.concatenate %142, %152, %147 in 2 : vector<2x3x1x8xf32>, vector<2x3x6x8xf32>, vector<2x3x1x8xf32> -> vector<2x3x8x8xf32>
    %cst_32 = arith.constant 0.111111112 : f32
    %154 = vector.broadcast %cst_32 : f32 to vector<2x3x8x8xf32>
    %155 = arith.mulf %153, %154 : vector<2x3x8x8xf32>
    %156 = arith.mulf %60, %60 : vector<2x3x8x8xf32>
    %157 = arith.subf %155, %156 : vector<2x3x8x8xf32>
    %158 = arith.mulf %106, %106 : vector<2x3x8x8xf32>
    %159 = arith.subf %157, %158 : vector<2x3x8x8xf32>
    %160 = arith.mulf %2, %5 : vector<2x3x8x8xf32>
    %161 = vector.extract_strided_slice %160 {offsets = [0, 0, 0, 7], sizes = [2, 3, 8, 1], strides = [1, 1, 1, 1]} : vector<2x3x8x8xf32> to vector<2x3x8x1xf32>
    %162 = vector.extract_strided_slice %160 {offsets = [0, 0, 0, 0], sizes = [2, 3, 8, 7], strides = [1, 1, 1, 1]} : vector<2x3x8x8xf32> to vector<2x3x8x7xf32>
    %163 = tpu.concatenate %161, %162 in 3 : vector<2x3x8x1xf32>, vector<2x3x8x7xf32> -> vector<2x3x8x8xf32>
    %164 = arith.addf %163, %160 : vector<2x3x8x8xf32>
    %165 = vector.extract_strided_slice %160 {offsets = [0, 0, 0, 1], sizes = [2, 3, 8, 7], strides = [1, 1, 1, 1]} : vector<2x3x8x8xf32> to vector<2x3x8x7xf32>
    %166 = vector.extract_strided_slice %160 {offsets = [0, 0, 0, 0], sizes = [2, 3, 8, 1], strides = [1, 1, 1, 1]} : vector<2x3x8x8xf32> to vector<2x3x8x1xf32>
    %167 = tpu.concatenate %165, %166 in 3 : vector<2x3x8x7xf32>, vector<2x3x8x1xf32> -> vector<2x3x8x8xf32>
    %168 = arith.addf %164, %167 : vector<2x3x8x8xf32>
    %169 = vector.extract_strided_slice %160 {offsets = [0, 0, 0, 1], sizes = [2, 3, 8, 1], strides = [1, 1, 1, 1]} : vector<2x3x8x8xf32> to vector<2x3x8x1xf32>
    %170 = vector.extract_strided_slice %160 {offsets = [0, 0, 0, 7], sizes = [2, 3, 8, 1], strides = [1, 1, 1, 1]} : vector<2x3x8x8xf32> to vector<2x3x8x1xf32>
    %171 = arith.subf %169, %170 : vector<2x3x8x1xf32>
    %172 = vector.extract_strided_slice %160 {offsets = [0, 0, 0, 6], sizes = [2, 3, 8, 1], strides = [1, 1, 1, 1]} : vector<2x3x8x8xf32> to vector<2x3x8x1xf32>
    %173 = vector.extract_strided_slice %160 {offsets = [0, 0, 0, 0], sizes = [2, 3, 8, 1], strides = [1, 1, 1, 1]} : vector<2x3x8x8xf32> to vector<2x3x8x1xf32>
    %174 = arith.subf %172, %173 : vector<2x3x8x1xf32>
    %cst_33 = arith.constant 0.000000e+00 : f32
    %175 = vector.shape_cast %12 : vector<1x1x1x8xi1> to vector<1x1x1x8xi1>
    %176 = vector.broadcast %175 : vector<1x1x1x8xi1> to vector<2x3x8x8xi1>
    %177 = vector.shape_cast %171 : vector<2x3x8x1xf32> to vector<2x3x8x1xf32>
    %178 = vector.broadcast %177 : vector<2x3x8x1xf32> to vector<2x3x8x8xf32>
    %179 = vector.broadcast %cst_33 : f32 to vector<2x3x8x8xf32>
    %180 = arith.select %176, %178, %179 : vector<2x3x8x8xi1>, vector<2x3x8x8xf32>
    %181 = arith.addf %168, %180 : vector<2x3x8x8xf32>
    %cst_34 = arith.constant 0.000000e+00 : f32
    %182 = vector.shape_cast %14 : vector<1x1x1x8xi1> to vector<1x1x1x8xi1>
    %183 = vector.broadcast %182 : vector<1x1x1x8xi1> to vector<2x3x8x8xi1>
    %184 = vector.shape_cast %174 : vector<2x3x8x1xf32> to vector<2x3x8x1xf32>
    %185 = vector.broadcast %184 : vector<2x3x8x1xf32> to vector<2x3x8x8xf32>
    %186 = vector.broadcast %cst_34 : f32 to vector<2x3x8x8xf32>
    %187 = arith.select %183, %185, %186 : vector<2x3x8x8xi1>, vector<2x3x8x8xf32>
    %188 = arith.addf %181, %187 : vector<2x3x8x8xf32>
    %189 = vector.extract_strided_slice %188 {offsets = [0, 0, 0, 0], sizes = [2, 3, 1, 8], strides = [1, 1, 1, 1]} : vector<2x3x8x8xf32> to vector<2x3x1x8xf32>
    %190 = vector.extract_strided_slice %188 {offsets = [0, 0, 1, 0], sizes = [2, 3, 1, 8], strides = [1, 1, 1, 1]} : vector<2x3x8x8xf32> to vector<2x3x1x8xf32>
    %cst_35 = arith.constant 2.000000e+00 : f32
    %191 = vector.broadcast %cst_35 : f32 to vector<2x3x1x8xf32>
    %192 = arith.mulf %191, %190 : vector<2x3x1x8xf32>
    %193 = arith.addf %189, %192 : vector<2x3x1x8xf32>
    %194 = vector.extract_strided_slice %188 {offsets = [0, 0, 7, 0], sizes = [2, 3, 1, 8], strides = [1, 1, 1, 1]} : vector<2x3x8x8xf32> to vector<2x3x1x8xf32>
    %195 = vector.extract_strided_slice %188 {offsets = [0, 0, 6, 0], sizes = [2, 3, 1, 8], strides = [1, 1, 1, 1]} : vector<2x3x8x8xf32> to vector<2x3x1x8xf32>
    %cst_36 = arith.constant 2.000000e+00 : f32
    %196 = vector.broadcast %cst_36 : f32 to vector<2x3x1x8xf32>
    %197 = arith.mulf %196, %195 : vector<2x3x1x8xf32>
    %198 = arith.addf %194, %197 : vector<2x3x1x8xf32>
    %199 = vector.extract_strided_slice %188 {offsets = [0, 0, 0, 0], sizes = [2, 3, 6, 8], strides = [1, 1, 1, 1]} : vector<2x3x8x8xf32> to vector<2x3x6x8xf32>
    %200 = vector.extract_strided_slice %188 {offsets = [0, 0, 1, 0], sizes = [2, 3, 6, 8], strides = [1, 1, 1, 1]} : vector<2x3x8x8xf32> to vector<2x3x6x8xf32>
    %201 = arith.addf %199, %200 : vector<2x3x6x8xf32>
    %202 = vector.extract_strided_slice %188 {offsets = [0, 0, 2, 0], sizes = [2, 3, 6, 8], strides = [1, 1, 1, 1]} : vector<2x3x8x8xf32> to vector<2x3x6x8xf32>
    %203 = arith.addf %201, %202 : vector<2x3x6x8xf32>
    %204 = tpu.concatenate %193, %203, %198 in 2 : vector<2x3x1x8xf32>, vector<2x3x6x8xf32>, vector<2x3x1x8xf32> -> vector<2x3x8x8xf32>
    %cst_37 = arith.constant 0.111111112 : f32
    %205 = vector.broadcast %cst_37 : f32 to vector<2x3x8x8xf32>
    %206 = arith.mulf %204, %205 : vector<2x3x8x8xf32>
    %207 = arith.mulf %60, %106 : vector<2x3x8x8xf32>
    %208 = arith.subf %206, %207 : vector<2x3x8x8xf32>
    %cst_38 = arith.constant 2.000000e+00 : f32
    %209 = vector.broadcast %cst_38 : f32 to vector<2x3x8x8xf32>
    %210 = arith.mulf %209, %60 : vector<2x3x8x8xf32>
    %211 = arith.mulf %210, %106 : vector<2x3x8x8xf32>
    %cst_39 = arith.constant 9.99999974E-5 : f32
    %212 = vector.broadcast %cst_39 : f32 to vector<2x3x8x8xf32>
    %213 = arith.addf %211, %212 : vector<2x3x8x8xf32>
    %cst_40 = arith.constant 2.000000e+00 : f32
    %214 = vector.broadcast %cst_40 : f32 to vector<2x3x8x8xf32>
    %215 = arith.mulf %214, %208 : vector<2x3x8x8xf32>
    %cst_41 = arith.constant 8.99999984E-4 : f32
    %216 = vector.broadcast %cst_41 : f32 to vector<2x3x8x8xf32>
    %217 = arith.addf %215, %216 : vector<2x3x8x8xf32>
    %218 = arith.mulf %213, %217 : vector<2x3x8x8xf32>
    %219 = arith.mulf %60, %60 : vector<2x3x8x8xf32>
    %220 = arith.mulf %106, %106 : vector<2x3x8x8xf32>
    %221 = arith.addf %219, %220 : vector<2x3x8x8xf32>
    %cst_42 = arith.constant 9.99999974E-5 : f32
    %222 = vector.broadcast %cst_42 : f32 to vector<2x3x8x8xf32>
    %223 = arith.addf %221, %222 : vector<2x3x8x8xf32>
    %cst_43 = arith.constant 8.99999984E-4 : f32
    %224 = vector.broadcast %cst_43 : f32 to vector<2x3x8x8xf32>
    %225 = arith.addf %159, %224 : vector<2x3x8x8xf32>
    %226 = arith.mulf %223, %225 : vector<2x3x8x8xf32>
    %227 = tpu.reciprocal %226 {approx = true} : vector<2x3x8x8xf32> -> vector<2x3x8x8xf32>
    %228 = arith.mulf %218, %227 : vector<2x3x8x8xf32>
    %cst_44 = arith.constant 1.000000e+00 : f32
    %229 = vector.broadcast %cst_44 : f32 to vector<2x3x8x8xf32>
    %230 = arith.subf %229, %228 : vector<2x3x8x8xf32>
    %cst_45 = arith.constant 5.000000e-01 : f32
    %231 = vector.broadcast %cst_45 : f32 to vector<2x3x8x8xf32>
    %232 = arith.mulf %230, %231 : vector<2x3x8x8xf32>
    %cst_46 = arith.constant 0.000000e+00 : f32
    %cst_47 = arith.constant 1.000000e+00 : f32
    %233 = vector.broadcast %cst_46 : f32 to vector<2x3x8x8xf32>
    %234 = arith.maximumf %233, %232 : vector<2x3x8x8xf32>
    %235 = vector.broadcast %cst_47 : f32 to vector<2x3x8x8xf32>
    %236 = arith.minimumf %235, %234 : vector<2x3x8x8xf32>
    %237 = vector.shape_cast %236 : vector<2x3x8x8xf32> to vector<1x2x3x8x8xf32>
    %cst_48 = arith.constant dense<0.000000e+00> : vector<1xf32>
    %238 = vector.multi_reduction <add>, %237, %cst_48 [1, 2, 3, 4] : vector<1x2x3x8x8xf32> to vector<1xf32>
    %239 = vector.shape_cast %238 : vector<1xf32> to vector<1x1x1x1x1xf32>
    %240 = vector.extract %239[0, 0, 0, 0, 0] : f32 from vector<1x1x1x1x1xf32>
    %cst_49 = arith.constant 3.840000e+02 : f32
    %241 = arith.divf %240, %cst_49 : f32
    %242 = arith.subf %2, %5 : vector<2x3x8x8xf32>
    %243 = math.absf %242 : vector<2x3x8x8xf32>
    %244 = vector.shape_cast %243 : vector<2x3x8x8xf32> to vector<1x2x3x8x8xf32>
    %cst_50 = arith.constant dense<0.000000e+00> : vector<1xf32>
    %245 = vector.multi_reduction <add>, %244, %cst_50 [1, 2, 3, 4] : vector<1x2x3x8x8xf32> to vector<1xf32>
    %246 = vector.shape_cast %245 : vector<1xf32> to vector<1x1x1x1x1xf32>
    %247 = vector.extract %246[0, 0, 0, 0, 0] : f32 from vector<1x1x1x1x1xf32>
    %cst_51 = arith.constant 3.840000e+02 : f32
    %248 = arith.divf %247, %cst_51 : f32
    %cst_52 = arith.constant 9.99999996E-13 : f32
    %249 = arith.addf %248, %cst_52 : f32
    %cst_53 = arith.constant 1.000000e+00 : f32
    %250 = arith.divf %cst_53, %249 : f32
    %251 = vector.broadcast %250 : f32 to vector<2x3x8x8xf32>
    %252 = arith.mulf %243, %251 : vector<2x3x8x8xf32>
    %cst_54 = arith.constant 1.000000e+00 : f32
    %253 = vector.broadcast %cst_54 : f32 to vector<2x3x8x8xf32>
    %254 = arith.subf %253, %252 : vector<2x3x8x8xf32>
    %cst_55 = arith.constant 2.000000e+00 : f32
    %255 = vector.broadcast %cst_55 : f32 to vector<2x3x8x8xf32>
    %256 = arith.mulf %255, %254 : vector<2x3x8x8xf32>
    %257 = math.exp %256 : vector<2x3x8x8xf32>
    %258 = arith.subf %9, %7 : vector<2x1x8x8xf32>
    %259 = math.absf %258 : vector<2x1x8x8xf32>
    %260 = vector.broadcast %259 : vector<2x1x8x8xf32> to vector<2x3x8x8xf32>
    %261 = arith.mulf %257, %260 : vector<2x3x8x8xf32>
    %262 = vector.shape_cast %261 : vector<2x3x8x8xf32> to vector<1x2x3x8x8xf32>
    %cst_56 = arith.constant dense<0.000000e+00> : vector<1xf32>
    %263 = vector.multi_reduction <add>, %262, %cst_56 [1, 2, 3, 4] : vector<1x2x3x8x8xf32> to vector<1xf32>
    %264 = vector.shape_cast %263 : vector<1xf32> to vector<1x1x1x1x1xf32>
    %265 = vector.extract %264[0, 0, 0, 0, 0] : f32 from vector<1x1x1x1x1xf32>
    %cst_57 = arith.constant 0.00260416674 : f32
    %266 = arith.mulf %265, %cst_57 : f32
    %267 = vector.shape_cast %7 : vector<2x1x8x8xf32> to vector<2x8x8xf32>
    %268 = vector.extract_strided_slice %267 {offsets = [0, 0, 1], sizes = [2, 8, 7], strides = [1, 1, 1]} : vector<2x8x8xf32> to vector<2x8x7xf32>
    %269 = vector.extract_strided_slice %267 {offsets = [0, 0, 0], sizes = [2, 8, 1], strides = [1, 1, 1]} : vector<2x8x8xf32> to vector<2x8x1xf32>
    %270 = tpu.concatenate %268, %269 in 2 : vector<2x8x7xf32>, vector<2x8x1xf32> -> vector<2x8x8xf32>
    %271 = vector.extract_strided_slice %5 {offsets = [0, 0, 0, 1], sizes = [2, 3, 8, 7], strides = [1, 1, 1, 1]} : vector<2x3x8x8xf32> to vector<2x3x8x7xf32>
    %272 = vector.extract_strided_slice %5 {offsets = [0, 0, 0, 0], sizes = [2, 3, 8, 1], strides = [1, 1, 1, 1]} : vector<2x3x8x8xf32> to vector<2x3x8x1xf32>
    %273 = tpu.concatenate %271, %272 in 3 : vector<2x3x8x7xf32>, vector<2x3x8x1xf32> -> vector<2x3x8x8xf32>
    %274 = arith.subf %5, %273 : vector<2x3x8x8xf32>
    %275 = math.absf %274 : vector<2x3x8x8xf32>
    %276 = vector.extract_strided_slice %275 {offsets = [0, 0, 0, 0], sizes = [2, 1, 8, 8], strides = [1, 1, 1, 1]} : vector<2x3x8x8xf32> to vector<2x1x8x8xf32>
    %277 = vector.shape_cast %276 : vector<2x1x8x8xf32> to vector<2x8x8xf32>
    %278 = vector.extract_strided_slice %275 {offsets = [0, 1, 0, 0], sizes = [2, 1, 8, 8], strides = [1, 1, 1, 1]} : vector<2x3x8x8xf32> to vector<2x1x8x8xf32>
    %279 = vector.shape_cast %278 : vector<2x1x8x8xf32> to vector<2x8x8xf32>
    %280 = arith.addf %277, %279 : vector<2x8x8xf32>
    %281 = vector.extract_strided_slice %275 {offsets = [0, 2, 0, 0], sizes = [2, 1, 8, 8], strides = [1, 1, 1, 1]} : vector<2x3x8x8xf32> to vector<2x1x8x8xf32>
    %282 = vector.shape_cast %281 : vector<2x1x8x8xf32> to vector<2x8x8xf32>
    %283 = arith.addf %280, %282 : vector<2x8x8xf32>
    %cst_58 = arith.constant 0.333333343 : f32
    %284 = vector.broadcast %cst_58 : f32 to vector<2x8x8xf32>
    %285 = arith.mulf %283, %284 : vector<2x8x8xf32>
    %cst_59 = arith.constant 0.000000e+00 : f32
    %286 = vector.broadcast %cst_59 : f32 to vector<2x8x8xf32>
    %287 = arith.subf %286, %285 : vector<2x8x8xf32>
    %288 = math.exp %287 : vector<2x8x8xf32>
    %289 = arith.subf %267, %270 : vector<2x8x8xf32>
    %290 = math.absf %289 : vector<2x8x8xf32>
    %291 = arith.mulf %290, %288 : vector<2x8x8xf32>
    %292 = vector.shape_cast %291 : vector<2x8x8xf32> to vector<1x2x8x8xf32>
    %cst_60 = arith.constant dense<0.000000e+00> : vector<1xf32>
    %293 = vector.multi_reduction <add>, %292, %cst_60 [1, 2, 3] : vector<1x2x8x8xf32> to vector<1xf32>
    %294 = vector.shape_cast %293 : vector<1xf32> to vector<1x1x1x1xf32>
    %295 = vector.extract %294[0, 0, 0, 0] : f32 from vector<1x1x1x1xf32>
    %296 = vector.extract_strided_slice %267 {offsets = [0, 0, 7], sizes = [2, 8, 1], strides = [1, 1, 1]} : vector<2x8x8xf32> to vector<2x8x1xf32>
    %297 = vector.extract_strided_slice %267 {offsets = [0, 0, 0], sizes = [2, 8, 1], strides = [1, 1, 1]} : vector<2x8x8xf32> to vector<2x8x1xf32>
    %298 = arith.subf %296, %297 : vector<2x8x1xf32>
    %299 = math.absf %298 : vector<2x8x1xf32>
    %300 = vector.extract_strided_slice %5 {offsets = [0, 0, 0, 7], sizes = [2, 3, 8, 1], strides = [1, 1, 1, 1]} : vector<2x3x8x8xf32> to vector<2x3x8x1xf32>
    %301 = vector.extract_strided_slice %5 {offsets = [0, 0, 0, 0], sizes = [2, 3, 8, 1], strides = [1, 1, 1, 1]} : vector<2x3x8x8xf32> to vector<2x3x8x1xf32>
    %302 = arith.subf %300, %301 : vector<2x3x8x1xf32>
    %303 = math.absf %302 : vector<2x3x8x1xf32>
    %304 = vector.extract_strided_slice %303 {offsets = [0, 0, 0, 0], sizes = [2, 1, 8, 1], strides = [1, 1, 1, 1]} : vector<2x3x8x1xf32> to vector<2x1x8x1xf32>
    %305 = vector.shape_cast %304 : vector<2x1x8x1xf32> to vector<2x8x1xf32>
    %306 = vector.extract_strided_slice %303 {offsets = [0, 1, 0, 0], sizes = [2, 1, 8, 1], strides = [1, 1, 1, 1]} : vector<2x3x8x1xf32> to vector<2x1x8x1xf32>
    %307 = vector.shape_cast %306 : vector<2x1x8x1xf32> to vector<2x8x1xf32>
    %308 = arith.addf %305, %307 : vector<2x8x1xf32>
    %309 = vector.extract_strided_slice %303 {offsets = [0, 2, 0, 0], sizes = [2, 1, 8, 1], strides = [1, 1, 1, 1]} : vector<2x3x8x1xf32> to vector<2x1x8x1xf32>
    %310 = vector.shape_cast %309 : vector<2x1x8x1xf32> to vector<2x8x1xf32>
    %311 = arith.addf %308, %310 : vector<2x8x1xf32>
    %cst_61 = arith.constant 0.333333343 : f32
    %312 = vector.broadcast %cst_61 : f32 to vector<2x8x1xf32>
    %313 = arith.mulf %311, %312 : vector<2x8x1xf32>
    %cst_62 = arith.constant 0.000000e+00 : f32
    %314 = vector.broadcast %cst_62 : f32 to vector<2x8x1xf32>
    %315 = arith.subf %314, %313 : vector<2x8x1xf32>
    %316 = math.exp %315 : vector<2x8x1xf32>
    %317 = arith.mulf %299, %316 : vector<2x8x1xf32>
    %318 = vector.shape_cast %317 : vector<2x8x1xf32> to vector<1x2x8x1xf32>
    %cst_63 = arith.constant dense<0.000000e+00> : vector<1xf32>
    %319 = vector.multi_reduction <add>, %318, %cst_63 [1, 2, 3] : vector<1x2x8x1xf32> to vector<1xf32>
    %320 = vector.shape_cast %319 : vector<1xf32> to vector<1x1x1x1xf32>
    %321 = vector.extract %320[0, 0, 0, 0] : f32 from vector<1x1x1x1xf32>
    %322 = arith.subf %295, %321 : f32
    %cst_64 = arith.constant 0.00892857183 : f32
    %323 = arith.mulf %322, %cst_64 : f32
    %324 = tpu.iota {dimensions = array<i32: 1>} : vector<8x128xi32>
    %325 = tpu.iota {dimensions = array<i32: 0>} : vector<8x128xi32>
    %c0_i32_65 = arith.constant 0 : i32
    %326 = vector.broadcast %c0_i32_65 : i32 to vector<8x128xi32>
    %327 = arith.cmpi eq, %325, %326 : vector<8x128xi32>
    %c0_i32_66 = arith.constant 0 : i32
    %328 = vector.broadcast %c0_i32_66 : i32 to vector<8x128xi32>
    %329 = arith.cmpi eq, %324, %328 : vector<8x128xi32>
    %330 = arith.andi %327, %329 : vector<8x128xi1>
    %cst_67 = arith.constant 0.000000e+00 : f32
    %331 = vector.broadcast %241 : f32 to vector<8x128xf32>
    %332 = vector.broadcast %cst_67 : f32 to vector<8x128xf32>
    %333 = arith.select %330, %331, %332 : vector<8x128xi1>, vector<8x128xf32>
    %c1_i32 = arith.constant 1 : i32
    %334 = vector.broadcast %c1_i32 : i32 to vector<8x128xi32>
    %335 = arith.cmpi eq, %324, %334 : vector<8x128xi32>
    %336 = arith.andi %327, %335 : vector<8x128xi1>
    %337 = vector.broadcast %248 : f32 to vector<8x128xf32>
    %338 = arith.select %336, %337, %333 : vector<8x128xi1>, vector<8x128xf32>
    %c2_i32 = arith.constant 2 : i32
    %339 = vector.broadcast %c2_i32 : i32 to vector<8x128xi32>
    %340 = arith.cmpi eq, %324, %339 : vector<8x128xi32>
    %341 = arith.andi %327, %340 : vector<8x128xi1>
    %342 = vector.broadcast %266 : f32 to vector<8x128xf32>
    %343 = arith.select %341, %342, %338 : vector<8x128xi1>, vector<8x128xf32>
    %c3_i32 = arith.constant 3 : i32
    %344 = vector.broadcast %c3_i32 : i32 to vector<8x128xi32>
    %345 = arith.cmpi eq, %324, %344 : vector<8x128xi32>
    %346 = arith.andi %327, %345 : vector<8x128xi1>
    %347 = vector.broadcast %323 : f32 to vector<8x128xf32>
    %348 = arith.select %346, %347, %343 : vector<8x128xi1>, vector<8x128xf32>
    %c0_68 = arith.constant 0 : index
    %c0_69 = arith.constant 0 : index
    %c0_70 = arith.constant 0 : index
    %349 = vector.load %arg5[%c0_68, %c0_69, %c0_70] : memref<1x8x128xf32, #tpu.memory_space<vmem>>, vector<1x8x128xf32>
    %350 = vector.shape_cast %349 : vector<1x8x128xf32> to vector<8x128xf32>
    %351 = vector.shape_cast %348 : vector<8x128xf32> to vector<1x8x128xf32>
    tpu.vector_store %arg5[%c0_68, %c0_69, %c0_70], %351 {strides = array<i32>} : memref<1x8x128xf32, #tpu.memory_space<vmem>>, vector<1x8x128xf32>,
    return
  }
  func.func @transform_0(%arg0: i32) -> (i32, i32, i32, i32, i32) {
    %c0_i32 = arith.constant 0 : i32
    %c0_i32_0 = arith.constant 0 : i32
    %c0_i32_1 = arith.constant 0 : i32
    %c0_i32_2 = arith.constant 0 : i32
    %c0_i32_3 = arith.constant 0 : i32
    return %arg0, %c0_i32, %c0_i32_0, %c0_i32_1, %c0_i32_2 : i32, i32, i32, i32, i32
  }
  func.func @transform_1(%arg0: i32) -> (i32, i32, i32, i32, i32) {
    %c0_i32 = arith.constant 0 : i32
    %c0_i32_0 = arith.constant 0 : i32
    %c0_i32_1 = arith.constant 0 : i32
    %c0_i32_2 = arith.constant 0 : i32
    %c0_i32_3 = arith.constant 0 : i32
    return %arg0, %c0_i32, %c0_i32_0, %c0_i32_1, %c0_i32_2 : i32, i32, i32, i32, i32
  }
  func.func @transform_2(%arg0: i32) -> (i32, i32, i32, i32, i32) {
    %c0_i32 = arith.constant 0 : i32
    %c0_i32_0 = arith.constant 0 : i32
    %c0_i32_1 = arith.constant 0 : i32
    %c0_i32_2 = arith.constant 0 : i32
    %c0_i32_3 = arith.constant 0 : i32
    return %arg0, %c0_i32, %c0_i32_0, %c0_i32_1, %c0_i32_2 : i32, i32, i32, i32, i32
  }
  func.func @transform_3(%arg0: i32) -> (i32, i32, i32, i32, i32) {
    %c0_i32 = arith.constant 0 : i32
    %c0_i32_0 = arith.constant 0 : i32
    %c0_i32_1 = arith.constant 0 : i32
    %c0_i32_2 = arith.constant 0 : i32
    %c0_i32_3 = arith.constant 0 : i32
    return %arg0, %c0_i32, %c0_i32_0, %c0_i32_1, %c0_i32_2 : i32, i32, i32, i32, i32
  }
  func.func @transform_4(%arg0: i32) -> (i32, i32, i32) {
    %c0_i32 = arith.constant 0 : i32
    %c0_i32_0 = arith.constant 0 : i32
    %c0_i32_1 = arith.constant 0 : i32
    return %arg0, %c0_i32, %c0_i32_0 : i32, i32, i32
  }
}

module attributes {stable_mosaic.version = 11 : i64} {
  func.func @_side_scale_loss_kernel(%arg0: i32, %arg1: memref<1x2x3x4x4xbf16, #tpu.memory_space<vmem>>, %arg2: memref<1x2x3x4x4xbf16, #tpu.memory_space<vmem>>, %arg3: memref<1x2x1x4x4xf32, #tpu.memory_space<vmem>>, %arg4: memref<1x2x1x4x4xf32, #tpu.memory_space<vmem>>, %arg5: memref<1x8x128xf32, #tpu.memory_space<vmem>>) attributes {dimension_semantics = [#tpu.dimension_semantics<parallel>], iteration_bounds = array<i64: 2>, scalar_prefetch = 0 : i64, scratch_operands = 0 : i64, tpu.core_type = #tpu.core_type<tc>, window_params = [{transform_indices = @transform_0, window_bounds = array<i64: 1, 2, 3, 4, 4>}, {transform_indices = @transform_1, window_bounds = array<i64: 1, 2, 3, 4, 4>}, {transform_indices = @transform_2, window_bounds = array<i64: 1, 2, 1, 4, 4>}, {transform_indices = @transform_3, window_bounds = array<i64: 1, 2, 1, 4, 4>}, {transform_indices = @transform_4, window_bounds = array<i64: 1, 8, 128>}]} {
    %c0 = arith.constant 0 : index
    %c0_0 = arith.constant 0 : index
    %c0_1 = arith.constant 0 : index
    %c0_2 = arith.constant 0 : index
    %c0_3 = arith.constant 0 : index
    %0 = vector.load %arg1[%c0, %c0_0, %c0_1, %c0_2, %c0_3] : memref<1x2x3x4x4xbf16, #tpu.memory_space<vmem>>, vector<1x2x3x4x4xbf16>
    %1 = vector.shape_cast %0 : vector<1x2x3x4x4xbf16> to vector<2x3x4x4xbf16>
    %2 = arith.extf %1 : vector<2x3x4x4xbf16> to vector<2x3x4x4xf32>
    %c0_4 = arith.constant 0 : index
    %c0_5 = arith.constant 0 : index
    %c0_6 = arith.constant 0 : index
    %c0_7 = arith.constant 0 : index
    %c0_8 = arith.constant 0 : index
    %3 = vector.load %arg2[%c0_4, %c0_5, %c0_6, %c0_7, %c0_8] : memref<1x2x3x4x4xbf16, #tpu.memory_space<vmem>>, vector<1x2x3x4x4xbf16>
    %4 = vector.shape_cast %3 : vector<1x2x3x4x4xbf16> to vector<2x3x4x4xbf16>
    %5 = arith.extf %4 : vector<2x3x4x4xbf16> to vector<2x3x4x4xf32>
    %c0_9 = arith.constant 0 : index
    %c0_10 = arith.constant 0 : index
    %c0_11 = arith.constant 0 : index
    %c0_12 = arith.constant 0 : index
    %c0_13 = arith.constant 0 : index
    %6 = vector.load %arg3[%c0_9, %c0_10, %c0_11, %c0_12, %c0_13] : memref<1x2x1x4x4xf32, #tpu.memory_space<vmem>>, vector<1x2x1x4x4xf32>
    %7 = vector.shape_cast %6 : vector<1x2x1x4x4xf32> to vector<2x1x4x4xf32>
    %c0_14 = arith.constant 0 : index
    %c0_15 = arith.constant 0 : index
    %c0_16 = arith.constant 0 : index
    %c0_17 = arith.constant 0 : index
    %c0_18 = arith.constant 0 : index
    %8 = vector.load %arg4[%c0_14, %c0_15, %c0_16, %c0_17, %c0_18] : memref<1x2x1x4x4xf32, #tpu.memory_space<vmem>>, vector<1x2x1x4x4xf32>
    %9 = vector.shape_cast %8 : vector<1x2x1x4x4xf32> to vector<2x1x4x4xf32>
    %10 = tpu.iota {dimensions = array<i32: 3>} : vector<1x1x1x4xi32>
    %c0_i32 = arith.constant 0 : i32
    %11 = vector.broadcast %c0_i32 : i32 to vector<1x1x1x4xi32>
    %12 = arith.cmpi eq, %10, %11 : vector<1x1x1x4xi32>
    %c3_i32 = arith.constant 3 : i32
    %13 = vector.broadcast %c3_i32 : i32 to vector<1x1x1x4xi32>
    %14 = arith.cmpi eq, %10, %13 : vector<1x1x1x4xi32>
    %15 = vector.extract_strided_slice %2 {offsets = [0, 0, 0, 3], sizes = [2, 3, 4, 1], strides = [1, 1, 1, 1]} : vector<2x3x4x4xf32> to vector<2x3x4x1xf32>
    %16 = vector.extract_strided_slice %2 {offsets = [0, 0, 0, 0], sizes = [2, 3, 4, 3], strides = [1, 1, 1, 1]} : vector<2x3x4x4xf32> to vector<2x3x4x3xf32>
    %17 = tpu.concatenate %15, %16 in 3 : vector<2x3x4x1xf32>, vector<2x3x4x3xf32> -> vector<2x3x4x4xf32>
    %18 = arith.addf %17, %2 : vector<2x3x4x4xf32>
    %19 = vector.extract_strided_slice %2 {offsets = [0, 0, 0, 1], sizes = [2, 3, 4, 3], strides = [1, 1, 1, 1]} : vector<2x3x4x4xf32> to vector<2x3x4x3xf32>
    %20 = vector.extract_strided_slice %2 {offsets = [0, 0, 0, 0], sizes = [2, 3, 4, 1], strides = [1, 1, 1, 1]} : vector<2x3x4x4xf32> to vector<2x3x4x1xf32>
    %21 = tpu.concatenate %19, %20 in 3 : vector<2x3x4x3xf32>, vector<2x3x4x1xf32> -> vector<2x3x4x4xf32>
    %22 = arith.addf %18, %21 : vector<2x3x4x4xf32>
    %23 = vector.extract_strided_slice %2 {offsets = [0, 0, 0, 1], sizes = [2, 3, 4, 1], strides = [1, 1, 1, 1]} : vector<2x3x4x4xf32> to vector<2x3x4x1xf32>
    %24 = vector.extract_strided_slice %2 {offsets = [0, 0, 0, 3], sizes = [2, 3, 4, 1], strides = [1, 1, 1, 1]} : vector<2x3x4x4xf32> to vector<2x3x4x1xf32>
    %25 = arith.subf %23, %24 : vector<2x3x4x1xf32>
    %26 = vector.extract_strided_slice %2 {offsets = [0, 0, 0, 2], sizes = [2, 3, 4, 1], strides = [1, 1, 1, 1]} : vector<2x3x4x4xf32> to vector<2x3x4x1xf32>
    %27 = vector.extract_strided_slice %2 {offsets = [0, 0, 0, 0], sizes = [2, 3, 4, 1], strides = [1, 1, 1, 1]} : vector<2x3x4x4xf32> to vector<2x3x4x1xf32>
    %28 = arith.subf %26, %27 : vector<2x3x4x1xf32>
    %cst = arith.constant 0.000000e+00 : f32
    %29 = vector.shape_cast %12 : vector<1x1x1x4xi1> to vector<1x1x1x4xi1>
    %30 = vector.broadcast %29 : vector<1x1x1x4xi1> to vector<2x3x4x4xi1>
    %31 = vector.shape_cast %25 : vector<2x3x4x1xf32> to vector<2x3x4x1xf32>
    %32 = vector.broadcast %31 : vector<2x3x4x1xf32> to vector<2x3x4x4xf32>
    %33 = vector.broadcast %cst : f32 to vector<2x3x4x4xf32>
    %34 = arith.select %30, %32, %33 : vector<2x3x4x4xi1>, vector<2x3x4x4xf32>
    %35 = arith.addf %22, %34 : vector<2x3x4x4xf32>
    %cst_19 = arith.constant 0.000000e+00 : f32
    %36 = vector.shape_cast %14 : vector<1x1x1x4xi1> to vector<1x1x1x4xi1>
    %37 = vector.broadcast %36 : vector<1x1x1x4xi1> to vector<2x3x4x4xi1>
    %38 = vector.shape_cast %28 : vector<2x3x4x1xf32> to vector<2x3x4x1xf32>
    %39 = vector.broadcast %38 : vector<2x3x4x1xf32> to vector<2x3x4x4xf32>
    %40 = vector.broadcast %cst_19 : f32 to vector<2x3x4x4xf32>
    %41 = arith.select %37, %39, %40 : vector<2x3x4x4xi1>, vector<2x3x4x4xf32>
    %42 = arith.addf %35, %41 : vector<2x3x4x4xf32>
    %43 = vector.extract_strided_slice %42 {offsets = [0, 0, 0, 0], sizes = [2, 3, 1, 4], strides = [1, 1, 1, 1]} : vector<2x3x4x4xf32> to vector<2x3x1x4xf32>
    %44 = vector.extract_strided_slice %42 {offsets = [0, 0, 1, 0], sizes = [2, 3, 1, 4], strides = [1, 1, 1, 1]} : vector<2x3x4x4xf32> to vector<2x3x1x4xf32>
    %cst_20 = arith.constant 2.000000e+00 : f32
    %45 = vector.broadcast %cst_20 : f32 to vector<2x3x1x4xf32>
    %46 = arith.mulf %45, %44 : vector<2x3x1x4xf32>
    %47 = arith.addf %43, %46 : vector<2x3x1x4xf32>
    %48 = vector.extract_strided_slice %42 {offsets = [0, 0, 3, 0], sizes = [2, 3, 1, 4], strides = [1, 1, 1, 1]} : vector<2x3x4x4xf32> to vector<2x3x1x4xf32>
    %49 = vector.extract_strided_slice %42 {offsets = [0, 0, 2, 0], sizes = [2, 3, 1, 4], strides = [1, 1, 1, 1]} : vector<2x3x4x4xf32> to vector<2x3x1x4xf32>
    %cst_21 = arith.constant 2.000000e+00 : f32
    %50 = vector.broadcast %cst_21 : f32 to vector<2x3x1x4xf32>
    %51 = arith.mulf %50, %49 : vector<2x3x1x4xf32>
    %52 = arith.addf %48, %51 : vector<2x3x1x4xf32>
    %53 = vector.extract_strided_slice %42 {offsets = [0, 0, 0, 0], sizes = [2, 3, 2, 4], strides = [1, 1, 1, 1]} : vector<2x3x4x4xf32> to vector<2x3x2x4xf32>
    %54 = vector.extract_strided_slice %42 {offsets = [0, 0, 1, 0], sizes = [2, 3, 2, 4], strides = [1, 1, 1, 1]} : vector<2x3x4x4xf32> to vector<2x3x2x4xf32>
    %55 = arith.addf %53, %54 : vector<2x3x2x4xf32>
    %56 = vector.extract_strided_slice %42 {offsets = [0, 0, 2, 0], sizes = [2, 3, 2, 4], strides = [1, 1, 1, 1]} : vector<2x3x4x4xf32> to vector<2x3x2x4xf32>
    %57 = arith.addf %55, %56 : vector<2x3x2x4xf32>
    %58 = tpu.concatenate %47, %57, %52 in 2 : vector<2x3x1x4xf32>, vector<2x3x2x4xf32>, vector<2x3x1x4xf32> -> vector<2x3x4x4xf32>
    %cst_22 = arith.constant 0.111111112 : f32
    %59 = vector.broadcast %cst_22 : f32 to vector<2x3x4x4xf32>
    %60 = arith.mulf %58, %59 : vector<2x3x4x4xf32>
    %61 = vector.extract_strided_slice %5 {offsets = [0, 0, 0, 3], sizes = [2, 3, 4, 1], strides = [1, 1, 1, 1]} : vector<2x3x4x4xf32> to vector<2x3x4x1xf32>
    %62 = vector.extract_strided_slice %5 {offsets = [0, 0, 0, 0], sizes = [2, 3, 4, 3], strides = [1, 1, 1, 1]} : vector<2x3x4x4xf32> to vector<2x3x4x3xf32>
    %63 = tpu.concatenate %61, %62 in 3 : vector<2x3x4x1xf32>, vector<2x3x4x3xf32> -> vector<2x3x4x4xf32>
    %64 = arith.addf %63, %5 : vector<2x3x4x4xf32>
    %65 = vector.extract_strided_slice %5 {offsets = [0, 0, 0, 1], sizes = [2, 3, 4, 3], strides = [1, 1, 1, 1]} : vector<2x3x4x4xf32> to vector<2x3x4x3xf32>
    %66 = vector.extract_strided_slice %5 {offsets = [0, 0, 0, 0], sizes = [2, 3, 4, 1], strides = [1, 1, 1, 1]} : vector<2x3x4x4xf32> to vector<2x3x4x1xf32>
    %67 = tpu.concatenate %65, %66 in 3 : vector<2x3x4x3xf32>, vector<2x3x4x1xf32> -> vector<2x3x4x4xf32>
    %68 = arith.addf %64, %67 : vector<2x3x4x4xf32>
    %69 = vector.extract_strided_slice %5 {offsets = [0, 0, 0, 1], sizes = [2, 3, 4, 1], strides = [1, 1, 1, 1]} : vector<2x3x4x4xf32> to vector<2x3x4x1xf32>
    %70 = vector.extract_strided_slice %5 {offsets = [0, 0, 0, 3], sizes = [2, 3, 4, 1], strides = [1, 1, 1, 1]} : vector<2x3x4x4xf32> to vector<2x3x4x1xf32>
    %71 = arith.subf %69, %70 : vector<2x3x4x1xf32>
    %72 = vector.extract_strided_slice %5 {offsets = [0, 0, 0, 2], sizes = [2, 3, 4, 1], strides = [1, 1, 1, 1]} : vector<2x3x4x4xf32> to vector<2x3x4x1xf32>
    %73 = vector.extract_strided_slice %5 {offsets = [0, 0, 0, 0], sizes = [2, 3, 4, 1], strides = [1, 1, 1, 1]} : vector<2x3x4x4xf32> to vector<2x3x4x1xf32>
    %74 = arith.subf %72, %73 : vector<2x3x4x1xf32>
    %cst_23 = arith.constant 0.000000e+00 : f32
    %75 = vector.shape_cast %12 : vector<1x1x1x4xi1> to vector<1x1x1x4xi1>
    %76 = vector.broadcast %75 : vector<1x1x1x4xi1> to vector<2x3x4x4xi1>
    %77 = vector.shape_cast %71 : vector<2x3x4x1xf32> to vector<2x3x4x1xf32>
    %78 = vector.broadcast %77 : vector<2x3x4x1xf32> to vector<2x3x4x4xf32>
    %79 = vector.broadcast %cst_23 : f32 to vector<2x3x4x4xf32>
    %80 = arith.select %76, %78, %79 : vector<2x3x4x4xi1>, vector<2x3x4x4xf32>
    %81 = arith.addf %68, %80 : vector<2x3x4x4xf32>
    %cst_24 = arith.constant 0.000000e+00 : f32
    %82 = vector.shape_cast %14 : vector<1x1x1x4xi1> to vector<1x1x1x4xi1>
    %83 = vector.broadcast %82 : vector<1x1x1x4xi1> to vector<2x3x4x4xi1>
    %84 = vector.shape_cast %74 : vector<2x3x4x1xf32> to vector<2x3x4x1xf32>
    %85 = vector.broadcast %84 : vector<2x3x4x1xf32> to vector<2x3x4x4xf32>
    %86 = vector.broadcast %cst_24 : f32 to vector<2x3x4x4xf32>
    %87 = arith.select %83, %85, %86 : vector<2x3x4x4xi1>, vector<2x3x4x4xf32>
    %88 = arith.addf %81, %87 : vector<2x3x4x4xf32>
    %89 = vector.extract_strided_slice %88 {offsets = [0, 0, 0, 0], sizes = [2, 3, 1, 4], strides = [1, 1, 1, 1]} : vector<2x3x4x4xf32> to vector<2x3x1x4xf32>
    %90 = vector.extract_strided_slice %88 {offsets = [0, 0, 1, 0], sizes = [2, 3, 1, 4], strides = [1, 1, 1, 1]} : vector<2x3x4x4xf32> to vector<2x3x1x4xf32>
    %cst_25 = arith.constant 2.000000e+00 : f32
    %91 = vector.broadcast %cst_25 : f32 to vector<2x3x1x4xf32>
    %92 = arith.mulf %91, %90 : vector<2x3x1x4xf32>
    %93 = arith.addf %89, %92 : vector<2x3x1x4xf32>
    %94 = vector.extract_strided_slice %88 {offsets = [0, 0, 3, 0], sizes = [2, 3, 1, 4], strides = [1, 1, 1, 1]} : vector<2x3x4x4xf32> to vector<2x3x1x4xf32>
    %95 = vector.extract_strided_slice %88 {offsets = [0, 0, 2, 0], sizes = [2, 3, 1, 4], strides = [1, 1, 1, 1]} : vector<2x3x4x4xf32> to vector<2x3x1x4xf32>
    %cst_26 = arith.constant 2.000000e+00 : f32
    %96 = vector.broadcast %cst_26 : f32 to vector<2x3x1x4xf32>
    %97 = arith.mulf %96, %95 : vector<2x3x1x4xf32>
    %98 = arith.addf %94, %97 : vector<2x3x1x4xf32>
    %99 = vector.extract_strided_slice %88 {offsets = [0, 0, 0, 0], sizes = [2, 3, 2, 4], strides = [1, 1, 1, 1]} : vector<2x3x4x4xf32> to vector<2x3x2x4xf32>
    %100 = vector.extract_strided_slice %88 {offsets = [0, 0, 1, 0], sizes = [2, 3, 2, 4], strides = [1, 1, 1, 1]} : vector<2x3x4x4xf32> to vector<2x3x2x4xf32>
    %101 = arith.addf %99, %100 : vector<2x3x2x4xf32>
    %102 = vector.extract_strided_slice %88 {offsets = [0, 0, 2, 0], sizes = [2, 3, 2, 4], strides = [1, 1, 1, 1]} : vector<2x3x4x4xf32> to vector<2x3x2x4xf32>
    %103 = arith.addf %101, %102 : vector<2x3x2x4xf32>
    %104 = tpu.concatenate %93, %103, %98 in 2 : vector<2x3x1x4xf32>, vector<2x3x2x4xf32>, vector<2x3x1x4xf32> -> vector<2x3x4x4xf32>
    %cst_27 = arith.constant 0.111111112 : f32
    %105 = vector.broadcast %cst_27 : f32 to vector<2x3x4x4xf32>
    %106 = arith.mulf %104, %105 : vector<2x3x4x4xf32>
    %107 = arith.mulf %2, %2 : vector<2x3x4x4xf32>
    %108 = arith.mulf %5, %5 : vector<2x3x4x4xf32>
    %109 = arith.addf %107, %108 : vector<2x3x4x4xf32>
    %110 = vector.extract_strided_slice %109 {offsets = [0, 0, 0, 3], sizes = [2, 3, 4, 1], strides = [1, 1, 1, 1]} : vector<2x3x4x4xf32> to vector<2x3x4x1xf32>
    %111 = vector.extract_strided_slice %109 {offsets = [0, 0, 0, 0], sizes = [2, 3, 4, 3], strides = [1, 1, 1, 1]} : vector<2x3x4x4xf32> to vector<2x3x4x3xf32>
    %112 = tpu.concatenate %110, %111 in 3 : vector<2x3x4x1xf32>, vector<2x3x4x3xf32> -> vector<2x3x4x4xf32>
    %113 = arith.addf %112, %109 : vector<2x3x4x4xf32>
    %114 = vector.extract_strided_slice %109 {offsets = [0, 0, 0, 1], sizes = [2, 3, 4, 3], strides = [1, 1, 1, 1]} : vector<2x3x4x4xf32> to vector<2x3x4x3xf32>
    %115 = vector.extract_strided_slice %109 {offsets = [0, 0, 0, 0], sizes = [2, 3, 4, 1], strides = [1, 1, 1, 1]} : vector<2x3x4x4xf32> to vector<2x3x4x1xf32>
    %116 = tpu.concatenate %114, %115 in 3 : vector<2x3x4x3xf32>, vector<2x3x4x1xf32> -> vector<2x3x4x4xf32>
    %117 = arith.addf %113, %116 : vector<2x3x4x4xf32>
    %118 = vector.extract_strided_slice %109 {offsets = [0, 0, 0, 1], sizes = [2, 3, 4, 1], strides = [1, 1, 1, 1]} : vector<2x3x4x4xf32> to vector<2x3x4x1xf32>
    %119 = vector.extract_strided_slice %109 {offsets = [0, 0, 0, 3], sizes = [2, 3, 4, 1], strides = [1, 1, 1, 1]} : vector<2x3x4x4xf32> to vector<2x3x4x1xf32>
    %120 = arith.subf %118, %119 : vector<2x3x4x1xf32>
    %121 = vector.extract_strided_slice %109 {offsets = [0, 0, 0, 2], sizes = [2, 3, 4, 1], strides = [1, 1, 1, 1]} : vector<2x3x4x4xf32> to vector<2x3x4x1xf32>
    %122 = vector.extract_strided_slice %109 {offsets = [0, 0, 0, 0], sizes = [2, 3, 4, 1], strides = [1, 1, 1, 1]} : vector<2x3x4x4xf32> to vector<2x3x4x1xf32>
    %123 = arith.subf %121, %122 : vector<2x3x4x1xf32>
    %cst_28 = arith.constant 0.000000e+00 : f32
    %124 = vector.shape_cast %12 : vector<1x1x1x4xi1> to vector<1x1x1x4xi1>
    %125 = vector.broadcast %124 : vector<1x1x1x4xi1> to vector<2x3x4x4xi1>
    %126 = vector.shape_cast %120 : vector<2x3x4x1xf32> to vector<2x3x4x1xf32>
    %127 = vector.broadcast %126 : vector<2x3x4x1xf32> to vector<2x3x4x4xf32>
    %128 = vector.broadcast %cst_28 : f32 to vector<2x3x4x4xf32>
    %129 = arith.select %125, %127, %128 : vector<2x3x4x4xi1>, vector<2x3x4x4xf32>
    %130 = arith.addf %117, %129 : vector<2x3x4x4xf32>
    %cst_29 = arith.constant 0.000000e+00 : f32
    %131 = vector.shape_cast %14 : vector<1x1x1x4xi1> to vector<1x1x1x4xi1>
    %132 = vector.broadcast %131 : vector<1x1x1x4xi1> to vector<2x3x4x4xi1>
    %133 = vector.shape_cast %123 : vector<2x3x4x1xf32> to vector<2x3x4x1xf32>
    %134 = vector.broadcast %133 : vector<2x3x4x1xf32> to vector<2x3x4x4xf32>
    %135 = vector.broadcast %cst_29 : f32 to vector<2x3x4x4xf32>
    %136 = arith.select %132, %134, %135 : vector<2x3x4x4xi1>, vector<2x3x4x4xf32>
    %137 = arith.addf %130, %136 : vector<2x3x4x4xf32>
    %138 = vector.extract_strided_slice %137 {offsets = [0, 0, 0, 0], sizes = [2, 3, 1, 4], strides = [1, 1, 1, 1]} : vector<2x3x4x4xf32> to vector<2x3x1x4xf32>
    %139 = vector.extract_strided_slice %137 {offsets = [0, 0, 1, 0], sizes = [2, 3, 1, 4], strides = [1, 1, 1, 1]} : vector<2x3x4x4xf32> to vector<2x3x1x4xf32>
    %cst_30 = arith.constant 2.000000e+00 : f32
    %140 = vector.broadcast %cst_30 : f32 to vector<2x3x1x4xf32>
    %141 = arith.mulf %140, %139 : vector<2x3x1x4xf32>
    %142 = arith.addf %138, %141 : vector<2x3x1x4xf32>
    %143 = vector.extract_strided_slice %137 {offsets = [0, 0, 3, 0], sizes = [2, 3, 1, 4], strides = [1, 1, 1, 1]} : vector<2x3x4x4xf32> to vector<2x3x1x4xf32>
    %144 = vector.extract_strided_slice %137 {offsets = [0, 0, 2, 0], sizes = [2, 3, 1, 4], strides = [1, 1, 1, 1]} : vector<2x3x4x4xf32> to vector<2x3x1x4xf32>
    %cst_31 = arith.constant 2.000000e+00 : f32
    %145 = vector.broadcast %cst_31 : f32 to vector<2x3x1x4xf32>
    %146 = arith.mulf %145, %144 : vector<2x3x1x4xf32>
    %147 = arith.addf %143, %146 : vector<2x3x1x4xf32>
    %148 = vector.extract_strided_slice %137 {offsets = [0, 0, 0, 0], sizes = [2, 3, 2, 4], strides = [1, 1, 1, 1]} : vector<2x3x4x4xf32> to vector<2x3x2x4xf32>
    %149 = vector.extract_strided_slice %137 {offsets = [0, 0, 1, 0], sizes = [2, 3, 2, 4], strides = [1, 1, 1, 1]} : vector<2x3x4x4xf32> to vector<2x3x2x4xf32>
    %150 = arith.addf %148, %149 : vector<2x3x2x4xf32>
    %151 = vector.extract_strided_slice %137 {offsets = [0, 0, 2, 0], sizes = [2, 3, 2, 4], strides = [1, 1, 1, 1]} : vector<2x3x4x4xf32> to vector<2x3x2x4xf32>
    %152 = arith.addf %150, %151 : vector<2x3x2x4xf32>
    %153 = tpu.concatenate %142, %152, %147 in 2 : vector<2x3x1x4xf32>, vector<2x3x2x4xf32>, vector<2x3x1x4xf32> -> vector<2x3x4x4xf32>
    %cst_32 = arith.constant 0.111111112 : f32
    %154 = vector.broadcast %cst_32 : f32 to vector<2x3x4x4xf32>
    %155 = arith.mulf %153, %154 : vector<2x3x4x4xf32>
    %156 = arith.mulf %60, %60 : vector<2x3x4x4xf32>
    %157 = arith.subf %155, %156 : vector<2x3x4x4xf32>
    %158 = arith.mulf %106, %106 : vector<2x3x4x4xf32>
    %159 = arith.subf %157, %158 : vector<2x3x4x4xf32>
    %160 = arith.mulf %2, %5 : vector<2x3x4x4xf32>
    %161 = vector.extract_strided_slice %160 {offsets = [0, 0, 0, 3], sizes = [2, 3, 4, 1], strides = [1, 1, 1, 1]} : vector<2x3x4x4xf32> to vector<2x3x4x1xf32>
    %162 = vector.extract_strided_slice %160 {offsets = [0, 0, 0, 0], sizes = [2, 3, 4, 3], strides = [1, 1, 1, 1]} : vector<2x3x4x4xf32> to vector<2x3x4x3xf32>
    %163 = tpu.concatenate %161, %162 in 3 : vector<2x3x4x1xf32>, vector<2x3x4x3xf32> -> vector<2x3x4x4xf32>
    %164 = arith.addf %163, %160 : vector<2x3x4x4xf32>
    %165 = vector.extract_strided_slice %160 {offsets = [0, 0, 0, 1], sizes = [2, 3, 4, 3], strides = [1, 1, 1, 1]} : vector<2x3x4x4xf32> to vector<2x3x4x3xf32>
    %166 = vector.extract_strided_slice %160 {offsets = [0, 0, 0, 0], sizes = [2, 3, 4, 1], strides = [1, 1, 1, 1]} : vector<2x3x4x4xf32> to vector<2x3x4x1xf32>
    %167 = tpu.concatenate %165, %166 in 3 : vector<2x3x4x3xf32>, vector<2x3x4x1xf32> -> vector<2x3x4x4xf32>
    %168 = arith.addf %164, %167 : vector<2x3x4x4xf32>
    %169 = vector.extract_strided_slice %160 {offsets = [0, 0, 0, 1], sizes = [2, 3, 4, 1], strides = [1, 1, 1, 1]} : vector<2x3x4x4xf32> to vector<2x3x4x1xf32>
    %170 = vector.extract_strided_slice %160 {offsets = [0, 0, 0, 3], sizes = [2, 3, 4, 1], strides = [1, 1, 1, 1]} : vector<2x3x4x4xf32> to vector<2x3x4x1xf32>
    %171 = arith.subf %169, %170 : vector<2x3x4x1xf32>
    %172 = vector.extract_strided_slice %160 {offsets = [0, 0, 0, 2], sizes = [2, 3, 4, 1], strides = [1, 1, 1, 1]} : vector<2x3x4x4xf32> to vector<2x3x4x1xf32>
    %173 = vector.extract_strided_slice %160 {offsets = [0, 0, 0, 0], sizes = [2, 3, 4, 1], strides = [1, 1, 1, 1]} : vector<2x3x4x4xf32> to vector<2x3x4x1xf32>
    %174 = arith.subf %172, %173 : vector<2x3x4x1xf32>
    %cst_33 = arith.constant 0.000000e+00 : f32
    %175 = vector.shape_cast %12 : vector<1x1x1x4xi1> to vector<1x1x1x4xi1>
    %176 = vector.broadcast %175 : vector<1x1x1x4xi1> to vector<2x3x4x4xi1>
    %177 = vector.shape_cast %171 : vector<2x3x4x1xf32> to vector<2x3x4x1xf32>
    %178 = vector.broadcast %177 : vector<2x3x4x1xf32> to vector<2x3x4x4xf32>
    %179 = vector.broadcast %cst_33 : f32 to vector<2x3x4x4xf32>
    %180 = arith.select %176, %178, %179 : vector<2x3x4x4xi1>, vector<2x3x4x4xf32>
    %181 = arith.addf %168, %180 : vector<2x3x4x4xf32>
    %cst_34 = arith.constant 0.000000e+00 : f32
    %182 = vector.shape_cast %14 : vector<1x1x1x4xi1> to vector<1x1x1x4xi1>
    %183 = vector.broadcast %182 : vector<1x1x1x4xi1> to vector<2x3x4x4xi1>
    %184 = vector.shape_cast %174 : vector<2x3x4x1xf32> to vector<2x3x4x1xf32>
    %185 = vector.broadcast %184 : vector<2x3x4x1xf32> to vector<2x3x4x4xf32>
    %186 = vector.broadcast %cst_34 : f32 to vector<2x3x4x4xf32>
    %187 = arith.select %183, %185, %186 : vector<2x3x4x4xi1>, vector<2x3x4x4xf32>
    %188 = arith.addf %181, %187 : vector<2x3x4x4xf32>
    %189 = vector.extract_strided_slice %188 {offsets = [0, 0, 0, 0], sizes = [2, 3, 1, 4], strides = [1, 1, 1, 1]} : vector<2x3x4x4xf32> to vector<2x3x1x4xf32>
    %190 = vector.extract_strided_slice %188 {offsets = [0, 0, 1, 0], sizes = [2, 3, 1, 4], strides = [1, 1, 1, 1]} : vector<2x3x4x4xf32> to vector<2x3x1x4xf32>
    %cst_35 = arith.constant 2.000000e+00 : f32
    %191 = vector.broadcast %cst_35 : f32 to vector<2x3x1x4xf32>
    %192 = arith.mulf %191, %190 : vector<2x3x1x4xf32>
    %193 = arith.addf %189, %192 : vector<2x3x1x4xf32>
    %194 = vector.extract_strided_slice %188 {offsets = [0, 0, 3, 0], sizes = [2, 3, 1, 4], strides = [1, 1, 1, 1]} : vector<2x3x4x4xf32> to vector<2x3x1x4xf32>
    %195 = vector.extract_strided_slice %188 {offsets = [0, 0, 2, 0], sizes = [2, 3, 1, 4], strides = [1, 1, 1, 1]} : vector<2x3x4x4xf32> to vector<2x3x1x4xf32>
    %cst_36 = arith.constant 2.000000e+00 : f32
    %196 = vector.broadcast %cst_36 : f32 to vector<2x3x1x4xf32>
    %197 = arith.mulf %196, %195 : vector<2x3x1x4xf32>
    %198 = arith.addf %194, %197 : vector<2x3x1x4xf32>
    %199 = vector.extract_strided_slice %188 {offsets = [0, 0, 0, 0], sizes = [2, 3, 2, 4], strides = [1, 1, 1, 1]} : vector<2x3x4x4xf32> to vector<2x3x2x4xf32>
    %200 = vector.extract_strided_slice %188 {offsets = [0, 0, 1, 0], sizes = [2, 3, 2, 4], strides = [1, 1, 1, 1]} : vector<2x3x4x4xf32> to vector<2x3x2x4xf32>
    %201 = arith.addf %199, %200 : vector<2x3x2x4xf32>
    %202 = vector.extract_strided_slice %188 {offsets = [0, 0, 2, 0], sizes = [2, 3, 2, 4], strides = [1, 1, 1, 1]} : vector<2x3x4x4xf32> to vector<2x3x2x4xf32>
    %203 = arith.addf %201, %202 : vector<2x3x2x4xf32>
    %204 = tpu.concatenate %193, %203, %198 in 2 : vector<2x3x1x4xf32>, vector<2x3x2x4xf32>, vector<2x3x1x4xf32> -> vector<2x3x4x4xf32>
    %cst_37 = arith.constant 0.111111112 : f32
    %205 = vector.broadcast %cst_37 : f32 to vector<2x3x4x4xf32>
    %206 = arith.mulf %204, %205 : vector<2x3x4x4xf32>
    %207 = arith.mulf %60, %106 : vector<2x3x4x4xf32>
    %208 = arith.subf %206, %207 : vector<2x3x4x4xf32>
    %cst_38 = arith.constant 2.000000e+00 : f32
    %209 = vector.broadcast %cst_38 : f32 to vector<2x3x4x4xf32>
    %210 = arith.mulf %209, %60 : vector<2x3x4x4xf32>
    %211 = arith.mulf %210, %106 : vector<2x3x4x4xf32>
    %cst_39 = arith.constant 9.99999974E-5 : f32
    %212 = vector.broadcast %cst_39 : f32 to vector<2x3x4x4xf32>
    %213 = arith.addf %211, %212 : vector<2x3x4x4xf32>
    %cst_40 = arith.constant 2.000000e+00 : f32
    %214 = vector.broadcast %cst_40 : f32 to vector<2x3x4x4xf32>
    %215 = arith.mulf %214, %208 : vector<2x3x4x4xf32>
    %cst_41 = arith.constant 8.99999984E-4 : f32
    %216 = vector.broadcast %cst_41 : f32 to vector<2x3x4x4xf32>
    %217 = arith.addf %215, %216 : vector<2x3x4x4xf32>
    %218 = arith.mulf %213, %217 : vector<2x3x4x4xf32>
    %219 = arith.mulf %60, %60 : vector<2x3x4x4xf32>
    %220 = arith.mulf %106, %106 : vector<2x3x4x4xf32>
    %221 = arith.addf %219, %220 : vector<2x3x4x4xf32>
    %cst_42 = arith.constant 9.99999974E-5 : f32
    %222 = vector.broadcast %cst_42 : f32 to vector<2x3x4x4xf32>
    %223 = arith.addf %221, %222 : vector<2x3x4x4xf32>
    %cst_43 = arith.constant 8.99999984E-4 : f32
    %224 = vector.broadcast %cst_43 : f32 to vector<2x3x4x4xf32>
    %225 = arith.addf %159, %224 : vector<2x3x4x4xf32>
    %226 = arith.mulf %223, %225 : vector<2x3x4x4xf32>
    %227 = tpu.reciprocal %226 {approx = true} : vector<2x3x4x4xf32> -> vector<2x3x4x4xf32>
    %228 = arith.mulf %218, %227 : vector<2x3x4x4xf32>
    %cst_44 = arith.constant 1.000000e+00 : f32
    %229 = vector.broadcast %cst_44 : f32 to vector<2x3x4x4xf32>
    %230 = arith.subf %229, %228 : vector<2x3x4x4xf32>
    %cst_45 = arith.constant 5.000000e-01 : f32
    %231 = vector.broadcast %cst_45 : f32 to vector<2x3x4x4xf32>
    %232 = arith.mulf %230, %231 : vector<2x3x4x4xf32>
    %cst_46 = arith.constant 0.000000e+00 : f32
    %cst_47 = arith.constant 1.000000e+00 : f32
    %233 = vector.broadcast %cst_46 : f32 to vector<2x3x4x4xf32>
    %234 = arith.maximumf %233, %232 : vector<2x3x4x4xf32>
    %235 = vector.broadcast %cst_47 : f32 to vector<2x3x4x4xf32>
    %236 = arith.minimumf %235, %234 : vector<2x3x4x4xf32>
    %237 = vector.shape_cast %236 : vector<2x3x4x4xf32> to vector<1x2x3x4x4xf32>
    %cst_48 = arith.constant dense<0.000000e+00> : vector<1xf32>
    %238 = vector.multi_reduction <add>, %237, %cst_48 [1, 2, 3, 4] : vector<1x2x3x4x4xf32> to vector<1xf32>
    %239 = vector.shape_cast %238 : vector<1xf32> to vector<1x1x1x1x1xf32>
    %240 = vector.extract %239[0, 0, 0, 0, 0] : f32 from vector<1x1x1x1x1xf32>
    %cst_49 = arith.constant 9.600000e+01 : f32
    %241 = arith.divf %240, %cst_49 : f32
    %242 = arith.subf %2, %5 : vector<2x3x4x4xf32>
    %243 = math.absf %242 : vector<2x3x4x4xf32>
    %244 = vector.shape_cast %243 : vector<2x3x4x4xf32> to vector<1x2x3x4x4xf32>
    %cst_50 = arith.constant dense<0.000000e+00> : vector<1xf32>
    %245 = vector.multi_reduction <add>, %244, %cst_50 [1, 2, 3, 4] : vector<1x2x3x4x4xf32> to vector<1xf32>
    %246 = vector.shape_cast %245 : vector<1xf32> to vector<1x1x1x1x1xf32>
    %247 = vector.extract %246[0, 0, 0, 0, 0] : f32 from vector<1x1x1x1x1xf32>
    %cst_51 = arith.constant 9.600000e+01 : f32
    %248 = arith.divf %247, %cst_51 : f32
    %cst_52 = arith.constant 9.99999996E-13 : f32
    %249 = arith.addf %248, %cst_52 : f32
    %cst_53 = arith.constant 1.000000e+00 : f32
    %250 = arith.divf %cst_53, %249 : f32
    %251 = vector.broadcast %250 : f32 to vector<2x3x4x4xf32>
    %252 = arith.mulf %243, %251 : vector<2x3x4x4xf32>
    %cst_54 = arith.constant 1.000000e+00 : f32
    %253 = vector.broadcast %cst_54 : f32 to vector<2x3x4x4xf32>
    %254 = arith.subf %253, %252 : vector<2x3x4x4xf32>
    %cst_55 = arith.constant 2.000000e+00 : f32
    %255 = vector.broadcast %cst_55 : f32 to vector<2x3x4x4xf32>
    %256 = arith.mulf %255, %254 : vector<2x3x4x4xf32>
    %257 = math.exp %256 : vector<2x3x4x4xf32>
    %258 = arith.subf %9, %7 : vector<2x1x4x4xf32>
    %259 = math.absf %258 : vector<2x1x4x4xf32>
    %260 = vector.broadcast %259 : vector<2x1x4x4xf32> to vector<2x3x4x4xf32>
    %261 = arith.mulf %257, %260 : vector<2x3x4x4xf32>
    %262 = vector.shape_cast %261 : vector<2x3x4x4xf32> to vector<1x2x3x4x4xf32>
    %cst_56 = arith.constant dense<0.000000e+00> : vector<1xf32>
    %263 = vector.multi_reduction <add>, %262, %cst_56 [1, 2, 3, 4] : vector<1x2x3x4x4xf32> to vector<1xf32>
    %264 = vector.shape_cast %263 : vector<1xf32> to vector<1x1x1x1x1xf32>
    %265 = vector.extract %264[0, 0, 0, 0, 0] : f32 from vector<1x1x1x1x1xf32>
    %cst_57 = arith.constant 0.010416667 : f32
    %266 = arith.mulf %265, %cst_57 : f32
    %267 = vector.shape_cast %7 : vector<2x1x4x4xf32> to vector<2x4x4xf32>
    %268 = vector.extract_strided_slice %267 {offsets = [0, 0, 1], sizes = [2, 4, 3], strides = [1, 1, 1]} : vector<2x4x4xf32> to vector<2x4x3xf32>
    %269 = vector.extract_strided_slice %267 {offsets = [0, 0, 0], sizes = [2, 4, 1], strides = [1, 1, 1]} : vector<2x4x4xf32> to vector<2x4x1xf32>
    %270 = tpu.concatenate %268, %269 in 2 : vector<2x4x3xf32>, vector<2x4x1xf32> -> vector<2x4x4xf32>
    %271 = vector.extract_strided_slice %5 {offsets = [0, 0, 0, 1], sizes = [2, 3, 4, 3], strides = [1, 1, 1, 1]} : vector<2x3x4x4xf32> to vector<2x3x4x3xf32>
    %272 = vector.extract_strided_slice %5 {offsets = [0, 0, 0, 0], sizes = [2, 3, 4, 1], strides = [1, 1, 1, 1]} : vector<2x3x4x4xf32> to vector<2x3x4x1xf32>
    %273 = tpu.concatenate %271, %272 in 3 : vector<2x3x4x3xf32>, vector<2x3x4x1xf32> -> vector<2x3x4x4xf32>
    %274 = arith.subf %5, %273 : vector<2x3x4x4xf32>
    %275 = math.absf %274 : vector<2x3x4x4xf32>
    %276 = vector.extract_strided_slice %275 {offsets = [0, 0, 0, 0], sizes = [2, 1, 4, 4], strides = [1, 1, 1, 1]} : vector<2x3x4x4xf32> to vector<2x1x4x4xf32>
    %277 = vector.shape_cast %276 : vector<2x1x4x4xf32> to vector<2x4x4xf32>
    %278 = vector.extract_strided_slice %275 {offsets = [0, 1, 0, 0], sizes = [2, 1, 4, 4], strides = [1, 1, 1, 1]} : vector<2x3x4x4xf32> to vector<2x1x4x4xf32>
    %279 = vector.shape_cast %278 : vector<2x1x4x4xf32> to vector<2x4x4xf32>
    %280 = arith.addf %277, %279 : vector<2x4x4xf32>
    %281 = vector.extract_strided_slice %275 {offsets = [0, 2, 0, 0], sizes = [2, 1, 4, 4], strides = [1, 1, 1, 1]} : vector<2x3x4x4xf32> to vector<2x1x4x4xf32>
    %282 = vector.shape_cast %281 : vector<2x1x4x4xf32> to vector<2x4x4xf32>
    %283 = arith.addf %280, %282 : vector<2x4x4xf32>
    %cst_58 = arith.constant 0.333333343 : f32
    %284 = vector.broadcast %cst_58 : f32 to vector<2x4x4xf32>
    %285 = arith.mulf %283, %284 : vector<2x4x4xf32>
    %cst_59 = arith.constant 0.000000e+00 : f32
    %286 = vector.broadcast %cst_59 : f32 to vector<2x4x4xf32>
    %287 = arith.subf %286, %285 : vector<2x4x4xf32>
    %288 = math.exp %287 : vector<2x4x4xf32>
    %289 = arith.subf %267, %270 : vector<2x4x4xf32>
    %290 = math.absf %289 : vector<2x4x4xf32>
    %291 = arith.mulf %290, %288 : vector<2x4x4xf32>
    %292 = vector.shape_cast %291 : vector<2x4x4xf32> to vector<1x2x4x4xf32>
    %cst_60 = arith.constant dense<0.000000e+00> : vector<1xf32>
    %293 = vector.multi_reduction <add>, %292, %cst_60 [1, 2, 3] : vector<1x2x4x4xf32> to vector<1xf32>
    %294 = vector.shape_cast %293 : vector<1xf32> to vector<1x1x1x1xf32>
    %295 = vector.extract %294[0, 0, 0, 0] : f32 from vector<1x1x1x1xf32>
    %296 = vector.extract_strided_slice %267 {offsets = [0, 0, 3], sizes = [2, 4, 1], strides = [1, 1, 1]} : vector<2x4x4xf32> to vector<2x4x1xf32>
    %297 = vector.extract_strided_slice %267 {offsets = [0, 0, 0], sizes = [2, 4, 1], strides = [1, 1, 1]} : vector<2x4x4xf32> to vector<2x4x1xf32>
    %298 = arith.subf %296, %297 : vector<2x4x1xf32>
    %299 = math.absf %298 : vector<2x4x1xf32>
    %300 = vector.extract_strided_slice %5 {offsets = [0, 0, 0, 3], sizes = [2, 3, 4, 1], strides = [1, 1, 1, 1]} : vector<2x3x4x4xf32> to vector<2x3x4x1xf32>
    %301 = vector.extract_strided_slice %5 {offsets = [0, 0, 0, 0], sizes = [2, 3, 4, 1], strides = [1, 1, 1, 1]} : vector<2x3x4x4xf32> to vector<2x3x4x1xf32>
    %302 = arith.subf %300, %301 : vector<2x3x4x1xf32>
    %303 = math.absf %302 : vector<2x3x4x1xf32>
    %304 = vector.extract_strided_slice %303 {offsets = [0, 0, 0, 0], sizes = [2, 1, 4, 1], strides = [1, 1, 1, 1]} : vector<2x3x4x1xf32> to vector<2x1x4x1xf32>
    %305 = vector.shape_cast %304 : vector<2x1x4x1xf32> to vector<2x4x1xf32>
    %306 = vector.extract_strided_slice %303 {offsets = [0, 1, 0, 0], sizes = [2, 1, 4, 1], strides = [1, 1, 1, 1]} : vector<2x3x4x1xf32> to vector<2x1x4x1xf32>
    %307 = vector.shape_cast %306 : vector<2x1x4x1xf32> to vector<2x4x1xf32>
    %308 = arith.addf %305, %307 : vector<2x4x1xf32>
    %309 = vector.extract_strided_slice %303 {offsets = [0, 2, 0, 0], sizes = [2, 1, 4, 1], strides = [1, 1, 1, 1]} : vector<2x3x4x1xf32> to vector<2x1x4x1xf32>
    %310 = vector.shape_cast %309 : vector<2x1x4x1xf32> to vector<2x4x1xf32>
    %311 = arith.addf %308, %310 : vector<2x4x1xf32>
    %cst_61 = arith.constant 0.333333343 : f32
    %312 = vector.broadcast %cst_61 : f32 to vector<2x4x1xf32>
    %313 = arith.mulf %311, %312 : vector<2x4x1xf32>
    %cst_62 = arith.constant 0.000000e+00 : f32
    %314 = vector.broadcast %cst_62 : f32 to vector<2x4x1xf32>
    %315 = arith.subf %314, %313 : vector<2x4x1xf32>
    %316 = math.exp %315 : vector<2x4x1xf32>
    %317 = arith.mulf %299, %316 : vector<2x4x1xf32>
    %318 = vector.shape_cast %317 : vector<2x4x1xf32> to vector<1x2x4x1xf32>
    %cst_63 = arith.constant dense<0.000000e+00> : vector<1xf32>
    %319 = vector.multi_reduction <add>, %318, %cst_63 [1, 2, 3] : vector<1x2x4x1xf32> to vector<1xf32>
    %320 = vector.shape_cast %319 : vector<1xf32> to vector<1x1x1x1xf32>
    %321 = vector.extract %320[0, 0, 0, 0] : f32 from vector<1x1x1x1xf32>
    %322 = arith.subf %295, %321 : f32
    %cst_64 = arith.constant 0.0416666679 : f32
    %323 = arith.mulf %322, %cst_64 : f32
    %324 = tpu.iota {dimensions = array<i32: 1>} : vector<8x128xi32>
    %325 = tpu.iota {dimensions = array<i32: 0>} : vector<8x128xi32>
    %c0_i32_65 = arith.constant 0 : i32
    %326 = vector.broadcast %c0_i32_65 : i32 to vector<8x128xi32>
    %327 = arith.cmpi eq, %325, %326 : vector<8x128xi32>
    %c0_i32_66 = arith.constant 0 : i32
    %328 = vector.broadcast %c0_i32_66 : i32 to vector<8x128xi32>
    %329 = arith.cmpi eq, %324, %328 : vector<8x128xi32>
    %330 = arith.andi %327, %329 : vector<8x128xi1>
    %cst_67 = arith.constant 0.000000e+00 : f32
    %331 = vector.broadcast %241 : f32 to vector<8x128xf32>
    %332 = vector.broadcast %cst_67 : f32 to vector<8x128xf32>
    %333 = arith.select %330, %331, %332 : vector<8x128xi1>, vector<8x128xf32>
    %c1_i32 = arith.constant 1 : i32
    %334 = vector.broadcast %c1_i32 : i32 to vector<8x128xi32>
    %335 = arith.cmpi eq, %324, %334 : vector<8x128xi32>
    %336 = arith.andi %327, %335 : vector<8x128xi1>
    %337 = vector.broadcast %248 : f32 to vector<8x128xf32>
    %338 = arith.select %336, %337, %333 : vector<8x128xi1>, vector<8x128xf32>
    %c2_i32 = arith.constant 2 : i32
    %339 = vector.broadcast %c2_i32 : i32 to vector<8x128xi32>
    %340 = arith.cmpi eq, %324, %339 : vector<8x128xi32>
    %341 = arith.andi %327, %340 : vector<8x128xi1>
    %342 = vector.broadcast %266 : f32 to vector<8x128xf32>
    %343 = arith.select %341, %342, %338 : vector<8x128xi1>, vector<8x128xf32>
    %c3_i32_68 = arith.constant 3 : i32
    %344 = vector.broadcast %c3_i32_68 : i32 to vector<8x128xi32>
    %345 = arith.cmpi eq, %324, %344 : vector<8x128xi32>
    %346 = arith.andi %327, %345 : vector<8x128xi1>
    %347 = vector.broadcast %323 : f32 to vector<8x128xf32>
    %348 = arith.select %346, %347, %343 : vector<8x128xi1>, vector<8x128xf32>
    %c0_69 = arith.constant 0 : index
    %c0_70 = arith.constant 0 : index
    %c0_71 = arith.constant 0 : index
    %349 = vector.load %arg5[%c0_69, %c0_70, %c0_71] : memref<1x8x128xf32, #tpu.memory_space<vmem>>, vector<1x8x128xf32>
    %350 = vector.shape_cast %349 : vector<1x8x128xf32> to vector<8x128xf32>
    %351 = vector.shape_cast %348 : vector<8x128xf32> to vector<1x8x128xf32>
    tpu.vector_store %arg5[%c0_69, %c0_70, %c0_71], %351 {strides = array<i32>} : memref<1x8x128xf32, #tpu.memory_space<vmem>>, vector<1x8x128xf32>,
    return
  }
  func.func @transform_0(%arg0: i32) -> (i32, i32, i32, i32, i32) {
    %c0_i32 = arith.constant 0 : i32
    %c0_i32_0 = arith.constant 0 : i32
    %c0_i32_1 = arith.constant 0 : i32
    %c0_i32_2 = arith.constant 0 : i32
    %c0_i32_3 = arith.constant 0 : i32
    return %arg0, %c0_i32, %c0_i32_0, %c0_i32_1, %c0_i32_2 : i32, i32, i32, i32, i32
  }
  func.func @transform_1(%arg0: i32) -> (i32, i32, i32, i32, i32) {
    %c0_i32 = arith.constant 0 : i32
    %c0_i32_0 = arith.constant 0 : i32
    %c0_i32_1 = arith.constant 0 : i32
    %c0_i32_2 = arith.constant 0 : i32
    %c0_i32_3 = arith.constant 0 : i32
    return %arg0, %c0_i32, %c0_i32_0, %c0_i32_1, %c0_i32_2 : i32, i32, i32, i32, i32
  }
  func.func @transform_2(%arg0: i32) -> (i32, i32, i32, i32, i32) {
    %c0_i32 = arith.constant 0 : i32
    %c0_i32_0 = arith.constant 0 : i32
    %c0_i32_1 = arith.constant 0 : i32
    %c0_i32_2 = arith.constant 0 : i32
    %c0_i32_3 = arith.constant 0 : i32
    return %arg0, %c0_i32, %c0_i32_0, %c0_i32_1, %c0_i32_2 : i32, i32, i32, i32, i32
  }
  func.func @transform_3(%arg0: i32) -> (i32, i32, i32, i32, i32) {
    %c0_i32 = arith.constant 0 : i32
    %c0_i32_0 = arith.constant 0 : i32
    %c0_i32_1 = arith.constant 0 : i32
    %c0_i32_2 = arith.constant 0 : i32
    %c0_i32_3 = arith.constant 0 : i32
    return %arg0, %c0_i32, %c0_i32_0, %c0_i32_1, %c0_i32_2 : i32, i32, i32, i32, i32
  }
  func.func @transform_4(%arg0: i32) -> (i32, i32, i32) {
    %c0_i32 = arith.constant 0 : i32
    %c0_i32_0 = arith.constant 0 : i32
    %c0_i32_1 = arith.constant 0 : i32
    return %arg0, %c0_i32, %c0_i32_0 : i32, i32, i32
  }
}

module attributes {stable_mosaic.version = 11 : i64} {
  func.func @_side_scale_loss_kernel(%arg0: i32, %arg1: memref<1x2x3x2x2xbf16, #tpu.memory_space<vmem>>, %arg2: memref<1x2x3x2x2xbf16, #tpu.memory_space<vmem>>, %arg3: memref<1x2x1x2x2xf32, #tpu.memory_space<vmem>>, %arg4: memref<1x2x1x2x2xf32, #tpu.memory_space<vmem>>, %arg5: memref<1x8x128xf32, #tpu.memory_space<vmem>>) attributes {dimension_semantics = [#tpu.dimension_semantics<parallel>], iteration_bounds = array<i64: 2>, scalar_prefetch = 0 : i64, scratch_operands = 0 : i64, tpu.core_type = #tpu.core_type<tc>, window_params = [{transform_indices = @transform_0, window_bounds = array<i64: 1, 2, 3, 2, 2>}, {transform_indices = @transform_1, window_bounds = array<i64: 1, 2, 3, 2, 2>}, {transform_indices = @transform_2, window_bounds = array<i64: 1, 2, 1, 2, 2>}, {transform_indices = @transform_3, window_bounds = array<i64: 1, 2, 1, 2, 2>}, {transform_indices = @transform_4, window_bounds = array<i64: 1, 8, 128>}]} {
    %c0 = arith.constant 0 : index
    %c0_0 = arith.constant 0 : index
    %c0_1 = arith.constant 0 : index
    %c0_2 = arith.constant 0 : index
    %c0_3 = arith.constant 0 : index
    %0 = vector.load %arg1[%c0, %c0_0, %c0_1, %c0_2, %c0_3] : memref<1x2x3x2x2xbf16, #tpu.memory_space<vmem>>, vector<1x2x3x2x2xbf16>
    %1 = vector.shape_cast %0 : vector<1x2x3x2x2xbf16> to vector<2x3x2x2xbf16>
    %2 = arith.extf %1 : vector<2x3x2x2xbf16> to vector<2x3x2x2xf32>
    %c0_4 = arith.constant 0 : index
    %c0_5 = arith.constant 0 : index
    %c0_6 = arith.constant 0 : index
    %c0_7 = arith.constant 0 : index
    %c0_8 = arith.constant 0 : index
    %3 = vector.load %arg2[%c0_4, %c0_5, %c0_6, %c0_7, %c0_8] : memref<1x2x3x2x2xbf16, #tpu.memory_space<vmem>>, vector<1x2x3x2x2xbf16>
    %4 = vector.shape_cast %3 : vector<1x2x3x2x2xbf16> to vector<2x3x2x2xbf16>
    %5 = arith.extf %4 : vector<2x3x2x2xbf16> to vector<2x3x2x2xf32>
    %c0_9 = arith.constant 0 : index
    %c0_10 = arith.constant 0 : index
    %c0_11 = arith.constant 0 : index
    %c0_12 = arith.constant 0 : index
    %c0_13 = arith.constant 0 : index
    %6 = vector.load %arg3[%c0_9, %c0_10, %c0_11, %c0_12, %c0_13] : memref<1x2x1x2x2xf32, #tpu.memory_space<vmem>>, vector<1x2x1x2x2xf32>
    %7 = vector.shape_cast %6 : vector<1x2x1x2x2xf32> to vector<2x1x2x2xf32>
    %c0_14 = arith.constant 0 : index
    %c0_15 = arith.constant 0 : index
    %c0_16 = arith.constant 0 : index
    %c0_17 = arith.constant 0 : index
    %c0_18 = arith.constant 0 : index
    %8 = vector.load %arg4[%c0_14, %c0_15, %c0_16, %c0_17, %c0_18] : memref<1x2x1x2x2xf32, #tpu.memory_space<vmem>>, vector<1x2x1x2x2xf32>
    %9 = vector.shape_cast %8 : vector<1x2x1x2x2xf32> to vector<2x1x2x2xf32>
    %10 = tpu.iota {dimensions = array<i32: 3>} : vector<1x1x1x2xi32>
    %c0_i32 = arith.constant 0 : i32
    %11 = vector.broadcast %c0_i32 : i32 to vector<1x1x1x2xi32>
    %12 = arith.cmpi eq, %10, %11 : vector<1x1x1x2xi32>
    %c1_i32 = arith.constant 1 : i32
    %13 = vector.broadcast %c1_i32 : i32 to vector<1x1x1x2xi32>
    %14 = arith.cmpi eq, %10, %13 : vector<1x1x1x2xi32>
    %15 = vector.extract_strided_slice %2 {offsets = [0, 0, 0, 1], sizes = [2, 3, 2, 1], strides = [1, 1, 1, 1]} : vector<2x3x2x2xf32> to vector<2x3x2x1xf32>
    %16 = vector.extract_strided_slice %2 {offsets = [0, 0, 0, 0], sizes = [2, 3, 2, 1], strides = [1, 1, 1, 1]} : vector<2x3x2x2xf32> to vector<2x3x2x1xf32>
    %17 = tpu.concatenate %15, %16 in 3 : vector<2x3x2x1xf32>, vector<2x3x2x1xf32> -> vector<2x3x2x2xf32>
    %18 = arith.addf %17, %2 : vector<2x3x2x2xf32>
    %19 = vector.extract_strided_slice %2 {offsets = [0, 0, 0, 1], sizes = [2, 3, 2, 1], strides = [1, 1, 1, 1]} : vector<2x3x2x2xf32> to vector<2x3x2x1xf32>
    %20 = vector.extract_strided_slice %2 {offsets = [0, 0, 0, 0], sizes = [2, 3, 2, 1], strides = [1, 1, 1, 1]} : vector<2x3x2x2xf32> to vector<2x3x2x1xf32>
    %21 = tpu.concatenate %19, %20 in 3 : vector<2x3x2x1xf32>, vector<2x3x2x1xf32> -> vector<2x3x2x2xf32>
    %22 = arith.addf %18, %21 : vector<2x3x2x2xf32>
    %23 = vector.extract_strided_slice %2 {offsets = [0, 0, 0, 1], sizes = [2, 3, 2, 1], strides = [1, 1, 1, 1]} : vector<2x3x2x2xf32> to vector<2x3x2x1xf32>
    %24 = vector.extract_strided_slice %2 {offsets = [0, 0, 0, 1], sizes = [2, 3, 2, 1], strides = [1, 1, 1, 1]} : vector<2x3x2x2xf32> to vector<2x3x2x1xf32>
    %25 = arith.subf %23, %24 : vector<2x3x2x1xf32>
    %26 = vector.extract_strided_slice %2 {offsets = [0, 0, 0, 0], sizes = [2, 3, 2, 1], strides = [1, 1, 1, 1]} : vector<2x3x2x2xf32> to vector<2x3x2x1xf32>
    %27 = vector.extract_strided_slice %2 {offsets = [0, 0, 0, 0], sizes = [2, 3, 2, 1], strides = [1, 1, 1, 1]} : vector<2x3x2x2xf32> to vector<2x3x2x1xf32>
    %28 = arith.subf %26, %27 : vector<2x3x2x1xf32>
    %cst = arith.constant 0.000000e+00 : f32
    %29 = vector.shape_cast %12 : vector<1x1x1x2xi1> to vector<1x1x1x2xi1>
    %30 = vector.broadcast %29 : vector<1x1x1x2xi1> to vector<2x3x2x2xi1>
    %31 = vector.shape_cast %25 : vector<2x3x2x1xf32> to vector<2x3x2x1xf32>
    %32 = vector.broadcast %31 : vector<2x3x2x1xf32> to vector<2x3x2x2xf32>
    %33 = vector.broadcast %cst : f32 to vector<2x3x2x2xf32>
    %34 = arith.select %30, %32, %33 : vector<2x3x2x2xi1>, vector<2x3x2x2xf32>
    %35 = arith.addf %22, %34 : vector<2x3x2x2xf32>
    %cst_19 = arith.constant 0.000000e+00 : f32
    %36 = vector.shape_cast %14 : vector<1x1x1x2xi1> to vector<1x1x1x2xi1>
    %37 = vector.broadcast %36 : vector<1x1x1x2xi1> to vector<2x3x2x2xi1>
    %38 = vector.shape_cast %28 : vector<2x3x2x1xf32> to vector<2x3x2x1xf32>
    %39 = vector.broadcast %38 : vector<2x3x2x1xf32> to vector<2x3x2x2xf32>
    %40 = vector.broadcast %cst_19 : f32 to vector<2x3x2x2xf32>
    %41 = arith.select %37, %39, %40 : vector<2x3x2x2xi1>, vector<2x3x2x2xf32>
    %42 = arith.addf %35, %41 : vector<2x3x2x2xf32>
    %43 = vector.extract_strided_slice %42 {offsets = [0, 0, 0, 0], sizes = [2, 3, 1, 2], strides = [1, 1, 1, 1]} : vector<2x3x2x2xf32> to vector<2x3x1x2xf32>
    %44 = vector.extract_strided_slice %42 {offsets = [0, 0, 1, 0], sizes = [2, 3, 1, 2], strides = [1, 1, 1, 1]} : vector<2x3x2x2xf32> to vector<2x3x1x2xf32>
    %cst_20 = arith.constant 2.000000e+00 : f32
    %45 = vector.broadcast %cst_20 : f32 to vector<2x3x1x2xf32>
    %46 = arith.mulf %45, %44 : vector<2x3x1x2xf32>
    %47 = arith.addf %43, %46 : vector<2x3x1x2xf32>
    %48 = vector.extract_strided_slice %42 {offsets = [0, 0, 1, 0], sizes = [2, 3, 1, 2], strides = [1, 1, 1, 1]} : vector<2x3x2x2xf32> to vector<2x3x1x2xf32>
    %49 = vector.extract_strided_slice %42 {offsets = [0, 0, 0, 0], sizes = [2, 3, 1, 2], strides = [1, 1, 1, 1]} : vector<2x3x2x2xf32> to vector<2x3x1x2xf32>
    %cst_21 = arith.constant 2.000000e+00 : f32
    %50 = vector.broadcast %cst_21 : f32 to vector<2x3x1x2xf32>
    %51 = arith.mulf %50, %49 : vector<2x3x1x2xf32>
    %52 = arith.addf %48, %51 : vector<2x3x1x2xf32>
    %53 = tpu.concatenate %47, %52 in 2 : vector<2x3x1x2xf32>, vector<2x3x1x2xf32> -> vector<2x3x2x2xf32>
    %cst_22 = arith.constant 0.111111112 : f32
    %54 = vector.broadcast %cst_22 : f32 to vector<2x3x2x2xf32>
    %55 = arith.mulf %53, %54 : vector<2x3x2x2xf32>
    %56 = vector.extract_strided_slice %5 {offsets = [0, 0, 0, 1], sizes = [2, 3, 2, 1], strides = [1, 1, 1, 1]} : vector<2x3x2x2xf32> to vector<2x3x2x1xf32>
    %57 = vector.extract_strided_slice %5 {offsets = [0, 0, 0, 0], sizes = [2, 3, 2, 1], strides = [1, 1, 1, 1]} : vector<2x3x2x2xf32> to vector<2x3x2x1xf32>
    %58 = tpu.concatenate %56, %57 in 3 : vector<2x3x2x1xf32>, vector<2x3x2x1xf32> -> vector<2x3x2x2xf32>
    %59 = arith.addf %58, %5 : vector<2x3x2x2xf32>
    %60 = vector.extract_strided_slice %5 {offsets = [0, 0, 0, 1], sizes = [2, 3, 2, 1], strides = [1, 1, 1, 1]} : vector<2x3x2x2xf32> to vector<2x3x2x1xf32>
    %61 = vector.extract_strided_slice %5 {offsets = [0, 0, 0, 0], sizes = [2, 3, 2, 1], strides = [1, 1, 1, 1]} : vector<2x3x2x2xf32> to vector<2x3x2x1xf32>
    %62 = tpu.concatenate %60, %61 in 3 : vector<2x3x2x1xf32>, vector<2x3x2x1xf32> -> vector<2x3x2x2xf32>
    %63 = arith.addf %59, %62 : vector<2x3x2x2xf32>
    %64 = vector.extract_strided_slice %5 {offsets = [0, 0, 0, 1], sizes = [2, 3, 2, 1], strides = [1, 1, 1, 1]} : vector<2x3x2x2xf32> to vector<2x3x2x1xf32>
    %65 = vector.extract_strided_slice %5 {offsets = [0, 0, 0, 1], sizes = [2, 3, 2, 1], strides = [1, 1, 1, 1]} : vector<2x3x2x2xf32> to vector<2x3x2x1xf32>
    %66 = arith.subf %64, %65 : vector<2x3x2x1xf32>
    %67 = vector.extract_strided_slice %5 {offsets = [0, 0, 0, 0], sizes = [2, 3, 2, 1], strides = [1, 1, 1, 1]} : vector<2x3x2x2xf32> to vector<2x3x2x1xf32>
    %68 = vector.extract_strided_slice %5 {offsets = [0, 0, 0, 0], sizes = [2, 3, 2, 1], strides = [1, 1, 1, 1]} : vector<2x3x2x2xf32> to vector<2x3x2x1xf32>
    %69 = arith.subf %67, %68 : vector<2x3x2x1xf32>
    %cst_23 = arith.constant 0.000000e+00 : f32
    %70 = vector.shape_cast %12 : vector<1x1x1x2xi1> to vector<1x1x1x2xi1>
    %71 = vector.broadcast %70 : vector<1x1x1x2xi1> to vector<2x3x2x2xi1>
    %72 = vector.shape_cast %66 : vector<2x3x2x1xf32> to vector<2x3x2x1xf32>
    %73 = vector.broadcast %72 : vector<2x3x2x1xf32> to vector<2x3x2x2xf32>
    %74 = vector.broadcast %cst_23 : f32 to vector<2x3x2x2xf32>
    %75 = arith.select %71, %73, %74 : vector<2x3x2x2xi1>, vector<2x3x2x2xf32>
    %76 = arith.addf %63, %75 : vector<2x3x2x2xf32>
    %cst_24 = arith.constant 0.000000e+00 : f32
    %77 = vector.shape_cast %14 : vector<1x1x1x2xi1> to vector<1x1x1x2xi1>
    %78 = vector.broadcast %77 : vector<1x1x1x2xi1> to vector<2x3x2x2xi1>
    %79 = vector.shape_cast %69 : vector<2x3x2x1xf32> to vector<2x3x2x1xf32>
    %80 = vector.broadcast %79 : vector<2x3x2x1xf32> to vector<2x3x2x2xf32>
    %81 = vector.broadcast %cst_24 : f32 to vector<2x3x2x2xf32>
    %82 = arith.select %78, %80, %81 : vector<2x3x2x2xi1>, vector<2x3x2x2xf32>
    %83 = arith.addf %76, %82 : vector<2x3x2x2xf32>
    %84 = vector.extract_strided_slice %83 {offsets = [0, 0, 0, 0], sizes = [2, 3, 1, 2], strides = [1, 1, 1, 1]} : vector<2x3x2x2xf32> to vector<2x3x1x2xf32>
    %85 = vector.extract_strided_slice %83 {offsets = [0, 0, 1, 0], sizes = [2, 3, 1, 2], strides = [1, 1, 1, 1]} : vector<2x3x2x2xf32> to vector<2x3x1x2xf32>
    %cst_25 = arith.constant 2.000000e+00 : f32
    %86 = vector.broadcast %cst_25 : f32 to vector<2x3x1x2xf32>
    %87 = arith.mulf %86, %85 : vector<2x3x1x2xf32>
    %88 = arith.addf %84, %87 : vector<2x3x1x2xf32>
    %89 = vector.extract_strided_slice %83 {offsets = [0, 0, 1, 0], sizes = [2, 3, 1, 2], strides = [1, 1, 1, 1]} : vector<2x3x2x2xf32> to vector<2x3x1x2xf32>
    %90 = vector.extract_strided_slice %83 {offsets = [0, 0, 0, 0], sizes = [2, 3, 1, 2], strides = [1, 1, 1, 1]} : vector<2x3x2x2xf32> to vector<2x3x1x2xf32>
    %cst_26 = arith.constant 2.000000e+00 : f32
    %91 = vector.broadcast %cst_26 : f32 to vector<2x3x1x2xf32>
    %92 = arith.mulf %91, %90 : vector<2x3x1x2xf32>
    %93 = arith.addf %89, %92 : vector<2x3x1x2xf32>
    %94 = tpu.concatenate %88, %93 in 2 : vector<2x3x1x2xf32>, vector<2x3x1x2xf32> -> vector<2x3x2x2xf32>
    %cst_27 = arith.constant 0.111111112 : f32
    %95 = vector.broadcast %cst_27 : f32 to vector<2x3x2x2xf32>
    %96 = arith.mulf %94, %95 : vector<2x3x2x2xf32>
    %97 = arith.mulf %2, %2 : vector<2x3x2x2xf32>
    %98 = arith.mulf %5, %5 : vector<2x3x2x2xf32>
    %99 = arith.addf %97, %98 : vector<2x3x2x2xf32>
    %100 = vector.extract_strided_slice %99 {offsets = [0, 0, 0, 1], sizes = [2, 3, 2, 1], strides = [1, 1, 1, 1]} : vector<2x3x2x2xf32> to vector<2x3x2x1xf32>
    %101 = vector.extract_strided_slice %99 {offsets = [0, 0, 0, 0], sizes = [2, 3, 2, 1], strides = [1, 1, 1, 1]} : vector<2x3x2x2xf32> to vector<2x3x2x1xf32>
    %102 = tpu.concatenate %100, %101 in 3 : vector<2x3x2x1xf32>, vector<2x3x2x1xf32> -> vector<2x3x2x2xf32>
    %103 = arith.addf %102, %99 : vector<2x3x2x2xf32>
    %104 = vector.extract_strided_slice %99 {offsets = [0, 0, 0, 1], sizes = [2, 3, 2, 1], strides = [1, 1, 1, 1]} : vector<2x3x2x2xf32> to vector<2x3x2x1xf32>
    %105 = vector.extract_strided_slice %99 {offsets = [0, 0, 0, 0], sizes = [2, 3, 2, 1], strides = [1, 1, 1, 1]} : vector<2x3x2x2xf32> to vector<2x3x2x1xf32>
    %106 = tpu.concatenate %104, %105 in 3 : vector<2x3x2x1xf32>, vector<2x3x2x1xf32> -> vector<2x3x2x2xf32>
    %107 = arith.addf %103, %106 : vector<2x3x2x2xf32>
    %108 = vector.extract_strided_slice %99 {offsets = [0, 0, 0, 1], sizes = [2, 3, 2, 1], strides = [1, 1, 1, 1]} : vector<2x3x2x2xf32> to vector<2x3x2x1xf32>
    %109 = vector.extract_strided_slice %99 {offsets = [0, 0, 0, 1], sizes = [2, 3, 2, 1], strides = [1, 1, 1, 1]} : vector<2x3x2x2xf32> to vector<2x3x2x1xf32>
    %110 = arith.subf %108, %109 : vector<2x3x2x1xf32>
    %111 = vector.extract_strided_slice %99 {offsets = [0, 0, 0, 0], sizes = [2, 3, 2, 1], strides = [1, 1, 1, 1]} : vector<2x3x2x2xf32> to vector<2x3x2x1xf32>
    %112 = vector.extract_strided_slice %99 {offsets = [0, 0, 0, 0], sizes = [2, 3, 2, 1], strides = [1, 1, 1, 1]} : vector<2x3x2x2xf32> to vector<2x3x2x1xf32>
    %113 = arith.subf %111, %112 : vector<2x3x2x1xf32>
    %cst_28 = arith.constant 0.000000e+00 : f32
    %114 = vector.shape_cast %12 : vector<1x1x1x2xi1> to vector<1x1x1x2xi1>
    %115 = vector.broadcast %114 : vector<1x1x1x2xi1> to vector<2x3x2x2xi1>
    %116 = vector.shape_cast %110 : vector<2x3x2x1xf32> to vector<2x3x2x1xf32>
    %117 = vector.broadcast %116 : vector<2x3x2x1xf32> to vector<2x3x2x2xf32>
    %118 = vector.broadcast %cst_28 : f32 to vector<2x3x2x2xf32>
    %119 = arith.select %115, %117, %118 : vector<2x3x2x2xi1>, vector<2x3x2x2xf32>
    %120 = arith.addf %107, %119 : vector<2x3x2x2xf32>
    %cst_29 = arith.constant 0.000000e+00 : f32
    %121 = vector.shape_cast %14 : vector<1x1x1x2xi1> to vector<1x1x1x2xi1>
    %122 = vector.broadcast %121 : vector<1x1x1x2xi1> to vector<2x3x2x2xi1>
    %123 = vector.shape_cast %113 : vector<2x3x2x1xf32> to vector<2x3x2x1xf32>
    %124 = vector.broadcast %123 : vector<2x3x2x1xf32> to vector<2x3x2x2xf32>
    %125 = vector.broadcast %cst_29 : f32 to vector<2x3x2x2xf32>
    %126 = arith.select %122, %124, %125 : vector<2x3x2x2xi1>, vector<2x3x2x2xf32>
    %127 = arith.addf %120, %126 : vector<2x3x2x2xf32>
    %128 = vector.extract_strided_slice %127 {offsets = [0, 0, 0, 0], sizes = [2, 3, 1, 2], strides = [1, 1, 1, 1]} : vector<2x3x2x2xf32> to vector<2x3x1x2xf32>
    %129 = vector.extract_strided_slice %127 {offsets = [0, 0, 1, 0], sizes = [2, 3, 1, 2], strides = [1, 1, 1, 1]} : vector<2x3x2x2xf32> to vector<2x3x1x2xf32>
    %cst_30 = arith.constant 2.000000e+00 : f32
    %130 = vector.broadcast %cst_30 : f32 to vector<2x3x1x2xf32>
    %131 = arith.mulf %130, %129 : vector<2x3x1x2xf32>
    %132 = arith.addf %128, %131 : vector<2x3x1x2xf32>
    %133 = vector.extract_strided_slice %127 {offsets = [0, 0, 1, 0], sizes = [2, 3, 1, 2], strides = [1, 1, 1, 1]} : vector<2x3x2x2xf32> to vector<2x3x1x2xf32>
    %134 = vector.extract_strided_slice %127 {offsets = [0, 0, 0, 0], sizes = [2, 3, 1, 2], strides = [1, 1, 1, 1]} : vector<2x3x2x2xf32> to vector<2x3x1x2xf32>
    %cst_31 = arith.constant 2.000000e+00 : f32
    %135 = vector.broadcast %cst_31 : f32 to vector<2x3x1x2xf32>
    %136 = arith.mulf %135, %134 : vector<2x3x1x2xf32>
    %137 = arith.addf %133, %136 : vector<2x3x1x2xf32>
    %138 = tpu.concatenate %132, %137 in 2 : vector<2x3x1x2xf32>, vector<2x3x1x2xf32> -> vector<2x3x2x2xf32>
    %cst_32 = arith.constant 0.111111112 : f32
    %139 = vector.broadcast %cst_32 : f32 to vector<2x3x2x2xf32>
    %140 = arith.mulf %138, %139 : vector<2x3x2x2xf32>
    %141 = arith.mulf %55, %55 : vector<2x3x2x2xf32>
    %142 = arith.subf %140, %141 : vector<2x3x2x2xf32>
    %143 = arith.mulf %96, %96 : vector<2x3x2x2xf32>
    %144 = arith.subf %142, %143 : vector<2x3x2x2xf32>
    %145 = arith.mulf %2, %5 : vector<2x3x2x2xf32>
    %146 = vector.extract_strided_slice %145 {offsets = [0, 0, 0, 1], sizes = [2, 3, 2, 1], strides = [1, 1, 1, 1]} : vector<2x3x2x2xf32> to vector<2x3x2x1xf32>
    %147 = vector.extract_strided_slice %145 {offsets = [0, 0, 0, 0], sizes = [2, 3, 2, 1], strides = [1, 1, 1, 1]} : vector<2x3x2x2xf32> to vector<2x3x2x1xf32>
    %148 = tpu.concatenate %146, %147 in 3 : vector<2x3x2x1xf32>, vector<2x3x2x1xf32> -> vector<2x3x2x2xf32>
    %149 = arith.addf %148, %145 : vector<2x3x2x2xf32>
    %150 = vector.extract_strided_slice %145 {offsets = [0, 0, 0, 1], sizes = [2, 3, 2, 1], strides = [1, 1, 1, 1]} : vector<2x3x2x2xf32> to vector<2x3x2x1xf32>
    %151 = vector.extract_strided_slice %145 {offsets = [0, 0, 0, 0], sizes = [2, 3, 2, 1], strides = [1, 1, 1, 1]} : vector<2x3x2x2xf32> to vector<2x3x2x1xf32>
    %152 = tpu.concatenate %150, %151 in 3 : vector<2x3x2x1xf32>, vector<2x3x2x1xf32> -> vector<2x3x2x2xf32>
    %153 = arith.addf %149, %152 : vector<2x3x2x2xf32>
    %154 = vector.extract_strided_slice %145 {offsets = [0, 0, 0, 1], sizes = [2, 3, 2, 1], strides = [1, 1, 1, 1]} : vector<2x3x2x2xf32> to vector<2x3x2x1xf32>
    %155 = vector.extract_strided_slice %145 {offsets = [0, 0, 0, 1], sizes = [2, 3, 2, 1], strides = [1, 1, 1, 1]} : vector<2x3x2x2xf32> to vector<2x3x2x1xf32>
    %156 = arith.subf %154, %155 : vector<2x3x2x1xf32>
    %157 = vector.extract_strided_slice %145 {offsets = [0, 0, 0, 0], sizes = [2, 3, 2, 1], strides = [1, 1, 1, 1]} : vector<2x3x2x2xf32> to vector<2x3x2x1xf32>
    %158 = vector.extract_strided_slice %145 {offsets = [0, 0, 0, 0], sizes = [2, 3, 2, 1], strides = [1, 1, 1, 1]} : vector<2x3x2x2xf32> to vector<2x3x2x1xf32>
    %159 = arith.subf %157, %158 : vector<2x3x2x1xf32>
    %cst_33 = arith.constant 0.000000e+00 : f32
    %160 = vector.shape_cast %12 : vector<1x1x1x2xi1> to vector<1x1x1x2xi1>
    %161 = vector.broadcast %160 : vector<1x1x1x2xi1> to vector<2x3x2x2xi1>
    %162 = vector.shape_cast %156 : vector<2x3x2x1xf32> to vector<2x3x2x1xf32>
    %163 = vector.broadcast %162 : vector<2x3x2x1xf32> to vector<2x3x2x2xf32>
    %164 = vector.broadcast %cst_33 : f32 to vector<2x3x2x2xf32>
    %165 = arith.select %161, %163, %164 : vector<2x3x2x2xi1>, vector<2x3x2x2xf32>
    %166 = arith.addf %153, %165 : vector<2x3x2x2xf32>
    %cst_34 = arith.constant 0.000000e+00 : f32
    %167 = vector.shape_cast %14 : vector<1x1x1x2xi1> to vector<1x1x1x2xi1>
    %168 = vector.broadcast %167 : vector<1x1x1x2xi1> to vector<2x3x2x2xi1>
    %169 = vector.shape_cast %159 : vector<2x3x2x1xf32> to vector<2x3x2x1xf32>
    %170 = vector.broadcast %169 : vector<2x3x2x1xf32> to vector<2x3x2x2xf32>
    %171 = vector.broadcast %cst_34 : f32 to vector<2x3x2x2xf32>
    %172 = arith.select %168, %170, %171 : vector<2x3x2x2xi1>, vector<2x3x2x2xf32>
    %173 = arith.addf %166, %172 : vector<2x3x2x2xf32>
    %174 = vector.extract_strided_slice %173 {offsets = [0, 0, 0, 0], sizes = [2, 3, 1, 2], strides = [1, 1, 1, 1]} : vector<2x3x2x2xf32> to vector<2x3x1x2xf32>
    %175 = vector.extract_strided_slice %173 {offsets = [0, 0, 1, 0], sizes = [2, 3, 1, 2], strides = [1, 1, 1, 1]} : vector<2x3x2x2xf32> to vector<2x3x1x2xf32>
    %cst_35 = arith.constant 2.000000e+00 : f32
    %176 = vector.broadcast %cst_35 : f32 to vector<2x3x1x2xf32>
    %177 = arith.mulf %176, %175 : vector<2x3x1x2xf32>
    %178 = arith.addf %174, %177 : vector<2x3x1x2xf32>
    %179 = vector.extract_strided_slice %173 {offsets = [0, 0, 1, 0], sizes = [2, 3, 1, 2], strides = [1, 1, 1, 1]} : vector<2x3x2x2xf32> to vector<2x3x1x2xf32>
    %180 = vector.extract_strided_slice %173 {offsets = [0, 0, 0, 0], sizes = [2, 3, 1, 2], strides = [1, 1, 1, 1]} : vector<2x3x2x2xf32> to vector<2x3x1x2xf32>
    %cst_36 = arith.constant 2.000000e+00 : f32
    %181 = vector.broadcast %cst_36 : f32 to vector<2x3x1x2xf32>
    %182 = arith.mulf %181, %180 : vector<2x3x1x2xf32>
    %183 = arith.addf %179, %182 : vector<2x3x1x2xf32>
    %184 = tpu.concatenate %178, %183 in 2 : vector<2x3x1x2xf32>, vector<2x3x1x2xf32> -> vector<2x3x2x2xf32>
    %cst_37 = arith.constant 0.111111112 : f32
    %185 = vector.broadcast %cst_37 : f32 to vector<2x3x2x2xf32>
    %186 = arith.mulf %184, %185 : vector<2x3x2x2xf32>
    %187 = arith.mulf %55, %96 : vector<2x3x2x2xf32>
    %188 = arith.subf %186, %187 : vector<2x3x2x2xf32>
    %cst_38 = arith.constant 2.000000e+00 : f32
    %189 = vector.broadcast %cst_38 : f32 to vector<2x3x2x2xf32>
    %190 = arith.mulf %189, %55 : vector<2x3x2x2xf32>
    %191 = arith.mulf %190, %96 : vector<2x3x2x2xf32>
    %cst_39 = arith.constant 9.99999974E-5 : f32
    %192 = vector.broadcast %cst_39 : f32 to vector<2x3x2x2xf32>
    %193 = arith.addf %191, %192 : vector<2x3x2x2xf32>
    %cst_40 = arith.constant 2.000000e+00 : f32
    %194 = vector.broadcast %cst_40 : f32 to vector<2x3x2x2xf32>
    %195 = arith.mulf %194, %188 : vector<2x3x2x2xf32>
    %cst_41 = arith.constant 8.99999984E-4 : f32
    %196 = vector.broadcast %cst_41 : f32 to vector<2x3x2x2xf32>
    %197 = arith.addf %195, %196 : vector<2x3x2x2xf32>
    %198 = arith.mulf %193, %197 : vector<2x3x2x2xf32>
    %199 = arith.mulf %55, %55 : vector<2x3x2x2xf32>
    %200 = arith.mulf %96, %96 : vector<2x3x2x2xf32>
    %201 = arith.addf %199, %200 : vector<2x3x2x2xf32>
    %cst_42 = arith.constant 9.99999974E-5 : f32
    %202 = vector.broadcast %cst_42 : f32 to vector<2x3x2x2xf32>
    %203 = arith.addf %201, %202 : vector<2x3x2x2xf32>
    %cst_43 = arith.constant 8.99999984E-4 : f32
    %204 = vector.broadcast %cst_43 : f32 to vector<2x3x2x2xf32>
    %205 = arith.addf %144, %204 : vector<2x3x2x2xf32>
    %206 = arith.mulf %203, %205 : vector<2x3x2x2xf32>
    %207 = tpu.reciprocal %206 {approx = true} : vector<2x3x2x2xf32> -> vector<2x3x2x2xf32>
    %208 = arith.mulf %198, %207 : vector<2x3x2x2xf32>
    %cst_44 = arith.constant 1.000000e+00 : f32
    %209 = vector.broadcast %cst_44 : f32 to vector<2x3x2x2xf32>
    %210 = arith.subf %209, %208 : vector<2x3x2x2xf32>
    %cst_45 = arith.constant 5.000000e-01 : f32
    %211 = vector.broadcast %cst_45 : f32 to vector<2x3x2x2xf32>
    %212 = arith.mulf %210, %211 : vector<2x3x2x2xf32>
    %cst_46 = arith.constant 0.000000e+00 : f32
    %cst_47 = arith.constant 1.000000e+00 : f32
    %213 = vector.broadcast %cst_46 : f32 to vector<2x3x2x2xf32>
    %214 = arith.maximumf %213, %212 : vector<2x3x2x2xf32>
    %215 = vector.broadcast %cst_47 : f32 to vector<2x3x2x2xf32>
    %216 = arith.minimumf %215, %214 : vector<2x3x2x2xf32>
    %217 = vector.shape_cast %216 : vector<2x3x2x2xf32> to vector<1x2x3x2x2xf32>
    %cst_48 = arith.constant dense<0.000000e+00> : vector<1xf32>
    %218 = vector.multi_reduction <add>, %217, %cst_48 [1, 2, 3, 4] : vector<1x2x3x2x2xf32> to vector<1xf32>
    %219 = vector.shape_cast %218 : vector<1xf32> to vector<1x1x1x1x1xf32>
    %220 = vector.extract %219[0, 0, 0, 0, 0] : f32 from vector<1x1x1x1x1xf32>
    %cst_49 = arith.constant 2.400000e+01 : f32
    %221 = arith.divf %220, %cst_49 : f32
    %222 = arith.subf %2, %5 : vector<2x3x2x2xf32>
    %223 = math.absf %222 : vector<2x3x2x2xf32>
    %224 = vector.shape_cast %223 : vector<2x3x2x2xf32> to vector<1x2x3x2x2xf32>
    %cst_50 = arith.constant dense<0.000000e+00> : vector<1xf32>
    %225 = vector.multi_reduction <add>, %224, %cst_50 [1, 2, 3, 4] : vector<1x2x3x2x2xf32> to vector<1xf32>
    %226 = vector.shape_cast %225 : vector<1xf32> to vector<1x1x1x1x1xf32>
    %227 = vector.extract %226[0, 0, 0, 0, 0] : f32 from vector<1x1x1x1x1xf32>
    %cst_51 = arith.constant 2.400000e+01 : f32
    %228 = arith.divf %227, %cst_51 : f32
    %cst_52 = arith.constant 9.99999996E-13 : f32
    %229 = arith.addf %228, %cst_52 : f32
    %cst_53 = arith.constant 1.000000e+00 : f32
    %230 = arith.divf %cst_53, %229 : f32
    %231 = vector.broadcast %230 : f32 to vector<2x3x2x2xf32>
    %232 = arith.mulf %223, %231 : vector<2x3x2x2xf32>
    %cst_54 = arith.constant 1.000000e+00 : f32
    %233 = vector.broadcast %cst_54 : f32 to vector<2x3x2x2xf32>
    %234 = arith.subf %233, %232 : vector<2x3x2x2xf32>
    %cst_55 = arith.constant 2.000000e+00 : f32
    %235 = vector.broadcast %cst_55 : f32 to vector<2x3x2x2xf32>
    %236 = arith.mulf %235, %234 : vector<2x3x2x2xf32>
    %237 = math.exp %236 : vector<2x3x2x2xf32>
    %238 = arith.subf %9, %7 : vector<2x1x2x2xf32>
    %239 = math.absf %238 : vector<2x1x2x2xf32>
    %240 = vector.broadcast %239 : vector<2x1x2x2xf32> to vector<2x3x2x2xf32>
    %241 = arith.mulf %237, %240 : vector<2x3x2x2xf32>
    %242 = vector.shape_cast %241 : vector<2x3x2x2xf32> to vector<1x2x3x2x2xf32>
    %cst_56 = arith.constant dense<0.000000e+00> : vector<1xf32>
    %243 = vector.multi_reduction <add>, %242, %cst_56 [1, 2, 3, 4] : vector<1x2x3x2x2xf32> to vector<1xf32>
    %244 = vector.shape_cast %243 : vector<1xf32> to vector<1x1x1x1x1xf32>
    %245 = vector.extract %244[0, 0, 0, 0, 0] : f32 from vector<1x1x1x1x1xf32>
    %cst_57 = arith.constant 0.0416666679 : f32
    %246 = arith.mulf %245, %cst_57 : f32
    %247 = vector.shape_cast %7 : vector<2x1x2x2xf32> to vector<2x2x2xf32>
    %248 = vector.extract_strided_slice %247 {offsets = [0, 0, 1], sizes = [2, 2, 1], strides = [1, 1, 1]} : vector<2x2x2xf32> to vector<2x2x1xf32>
    %249 = vector.extract_strided_slice %247 {offsets = [0, 0, 0], sizes = [2, 2, 1], strides = [1, 1, 1]} : vector<2x2x2xf32> to vector<2x2x1xf32>
    %250 = tpu.concatenate %248, %249 in 2 : vector<2x2x1xf32>, vector<2x2x1xf32> -> vector<2x2x2xf32>
    %251 = vector.extract_strided_slice %5 {offsets = [0, 0, 0, 1], sizes = [2, 3, 2, 1], strides = [1, 1, 1, 1]} : vector<2x3x2x2xf32> to vector<2x3x2x1xf32>
    %252 = vector.extract_strided_slice %5 {offsets = [0, 0, 0, 0], sizes = [2, 3, 2, 1], strides = [1, 1, 1, 1]} : vector<2x3x2x2xf32> to vector<2x3x2x1xf32>
    %253 = tpu.concatenate %251, %252 in 3 : vector<2x3x2x1xf32>, vector<2x3x2x1xf32> -> vector<2x3x2x2xf32>
    %254 = arith.subf %5, %253 : vector<2x3x2x2xf32>
    %255 = math.absf %254 : vector<2x3x2x2xf32>
    %256 = vector.extract_strided_slice %255 {offsets = [0, 0, 0, 0], sizes = [2, 1, 2, 2], strides = [1, 1, 1, 1]} : vector<2x3x2x2xf32> to vector<2x1x2x2xf32>
    %257 = vector.shape_cast %256 : vector<2x1x2x2xf32> to vector<2x2x2xf32>
    %258 = vector.extract_strided_slice %255 {offsets = [0, 1, 0, 0], sizes = [2, 1, 2, 2], strides = [1, 1, 1, 1]} : vector<2x3x2x2xf32> to vector<2x1x2x2xf32>
    %259 = vector.shape_cast %258 : vector<2x1x2x2xf32> to vector<2x2x2xf32>
    %260 = arith.addf %257, %259 : vector<2x2x2xf32>
    %261 = vector.extract_strided_slice %255 {offsets = [0, 2, 0, 0], sizes = [2, 1, 2, 2], strides = [1, 1, 1, 1]} : vector<2x3x2x2xf32> to vector<2x1x2x2xf32>
    %262 = vector.shape_cast %261 : vector<2x1x2x2xf32> to vector<2x2x2xf32>
    %263 = arith.addf %260, %262 : vector<2x2x2xf32>
    %cst_58 = arith.constant 0.333333343 : f32
    %264 = vector.broadcast %cst_58 : f32 to vector<2x2x2xf32>
    %265 = arith.mulf %263, %264 : vector<2x2x2xf32>
    %cst_59 = arith.constant 0.000000e+00 : f32
    %266 = vector.broadcast %cst_59 : f32 to vector<2x2x2xf32>
    %267 = arith.subf %266, %265 : vector<2x2x2xf32>
    %268 = math.exp %267 : vector<2x2x2xf32>
    %269 = arith.subf %247, %250 : vector<2x2x2xf32>
    %270 = math.absf %269 : vector<2x2x2xf32>
    %271 = arith.mulf %270, %268 : vector<2x2x2xf32>
    %272 = vector.shape_cast %271 : vector<2x2x2xf32> to vector<1x2x2x2xf32>
    %cst_60 = arith.constant dense<0.000000e+00> : vector<1xf32>
    %273 = vector.multi_reduction <add>, %272, %cst_60 [1, 2, 3] : vector<1x2x2x2xf32> to vector<1xf32>
    %274 = vector.shape_cast %273 : vector<1xf32> to vector<1x1x1x1xf32>
    %275 = vector.extract %274[0, 0, 0, 0] : f32 from vector<1x1x1x1xf32>
    %276 = vector.extract_strided_slice %247 {offsets = [0, 0, 1], sizes = [2, 2, 1], strides = [1, 1, 1]} : vector<2x2x2xf32> to vector<2x2x1xf32>
    %277 = vector.extract_strided_slice %247 {offsets = [0, 0, 0], sizes = [2, 2, 1], strides = [1, 1, 1]} : vector<2x2x2xf32> to vector<2x2x1xf32>
    %278 = arith.subf %276, %277 : vector<2x2x1xf32>
    %279 = math.absf %278 : vector<2x2x1xf32>
    %280 = vector.extract_strided_slice %5 {offsets = [0, 0, 0, 1], sizes = [2, 3, 2, 1], strides = [1, 1, 1, 1]} : vector<2x3x2x2xf32> to vector<2x3x2x1xf32>
    %281 = vector.extract_strided_slice %5 {offsets = [0, 0, 0, 0], sizes = [2, 3, 2, 1], strides = [1, 1, 1, 1]} : vector<2x3x2x2xf32> to vector<2x3x2x1xf32>
    %282 = arith.subf %280, %281 : vector<2x3x2x1xf32>
    %283 = math.absf %282 : vector<2x3x2x1xf32>
    %284 = vector.extract_strided_slice %283 {offsets = [0, 0, 0, 0], sizes = [2, 1, 2, 1], strides = [1, 1, 1, 1]} : vector<2x3x2x1xf32> to vector<2x1x2x1xf32>
    %285 = vector.shape_cast %284 : vector<2x1x2x1xf32> to vector<2x2x1xf32>
    %286 = vector.extract_strided_slice %283 {offsets = [0, 1, 0, 0], sizes = [2, 1, 2, 1], strides = [1, 1, 1, 1]} : vector<2x3x2x1xf32> to vector<2x1x2x1xf32>
    %287 = vector.shape_cast %286 : vector<2x1x2x1xf32> to vector<2x2x1xf32>
    %288 = arith.addf %285, %287 : vector<2x2x1xf32>
    %289 = vector.extract_strided_slice %283 {offsets = [0, 2, 0, 0], sizes = [2, 1, 2, 1], strides = [1, 1, 1, 1]} : vector<2x3x2x1xf32> to vector<2x1x2x1xf32>
    %290 = vector.shape_cast %289 : vector<2x1x2x1xf32> to vector<2x2x1xf32>
    %291 = arith.addf %288, %290 : vector<2x2x1xf32>
    %cst_61 = arith.constant 0.333333343 : f32
    %292 = vector.broadcast %cst_61 : f32 to vector<2x2x1xf32>
    %293 = arith.mulf %291, %292 : vector<2x2x1xf32>
    %cst_62 = arith.constant 0.000000e+00 : f32
    %294 = vector.broadcast %cst_62 : f32 to vector<2x2x1xf32>
    %295 = arith.subf %294, %293 : vector<2x2x1xf32>
    %296 = math.exp %295 : vector<2x2x1xf32>
    %297 = arith.mulf %279, %296 : vector<2x2x1xf32>
    %298 = vector.shape_cast %297 : vector<2x2x1xf32> to vector<1x2x2x1xf32>
    %cst_63 = arith.constant dense<0.000000e+00> : vector<1xf32>
    %299 = vector.multi_reduction <add>, %298, %cst_63 [1, 2, 3] : vector<1x2x2x1xf32> to vector<1xf32>
    %300 = vector.shape_cast %299 : vector<1xf32> to vector<1x1x1x1xf32>
    %301 = vector.extract %300[0, 0, 0, 0] : f32 from vector<1x1x1x1xf32>
    %302 = arith.subf %275, %301 : f32
    %cst_64 = arith.constant 2.500000e-01 : f32
    %303 = arith.mulf %302, %cst_64 : f32
    %304 = tpu.iota {dimensions = array<i32: 1>} : vector<8x128xi32>
    %305 = tpu.iota {dimensions = array<i32: 0>} : vector<8x128xi32>
    %c0_i32_65 = arith.constant 0 : i32
    %306 = vector.broadcast %c0_i32_65 : i32 to vector<8x128xi32>
    %307 = arith.cmpi eq, %305, %306 : vector<8x128xi32>
    %c0_i32_66 = arith.constant 0 : i32
    %308 = vector.broadcast %c0_i32_66 : i32 to vector<8x128xi32>
    %309 = arith.cmpi eq, %304, %308 : vector<8x128xi32>
    %310 = arith.andi %307, %309 : vector<8x128xi1>
    %cst_67 = arith.constant 0.000000e+00 : f32
    %311 = vector.broadcast %221 : f32 to vector<8x128xf32>
    %312 = vector.broadcast %cst_67 : f32 to vector<8x128xf32>
    %313 = arith.select %310, %311, %312 : vector<8x128xi1>, vector<8x128xf32>
    %c1_i32_68 = arith.constant 1 : i32
    %314 = vector.broadcast %c1_i32_68 : i32 to vector<8x128xi32>
    %315 = arith.cmpi eq, %304, %314 : vector<8x128xi32>
    %316 = arith.andi %307, %315 : vector<8x128xi1>
    %317 = vector.broadcast %228 : f32 to vector<8x128xf32>
    %318 = arith.select %316, %317, %313 : vector<8x128xi1>, vector<8x128xf32>
    %c2_i32 = arith.constant 2 : i32
    %319 = vector.broadcast %c2_i32 : i32 to vector<8x128xi32>
    %320 = arith.cmpi eq, %304, %319 : vector<8x128xi32>
    %321 = arith.andi %307, %320 : vector<8x128xi1>
    %322 = vector.broadcast %246 : f32 to vector<8x128xf32>
    %323 = arith.select %321, %322, %318 : vector<8x128xi1>, vector<8x128xf32>
    %c3_i32 = arith.constant 3 : i32
    %324 = vector.broadcast %c3_i32 : i32 to vector<8x128xi32>
    %325 = arith.cmpi eq, %304, %324 : vector<8x128xi32>
    %326 = arith.andi %307, %325 : vector<8x128xi1>
    %327 = vector.broadcast %303 : f32 to vector<8x128xf32>
    %328 = arith.select %326, %327, %323 : vector<8x128xi1>, vector<8x128xf32>
    %c0_69 = arith.constant 0 : index
    %c0_70 = arith.constant 0 : index
    %c0_71 = arith.constant 0 : index
    %329 = vector.load %arg5[%c0_69, %c0_70, %c0_71] : memref<1x8x128xf32, #tpu.memory_space<vmem>>, vector<1x8x128xf32>
    %330 = vector.shape_cast %329 : vector<1x8x128xf32> to vector<8x128xf32>
    %331 = vector.shape_cast %328 : vector<8x128xf32> to vector<1x8x128xf32>
    tpu.vector_store %arg5[%c0_69, %c0_70, %c0_71], %331 {strides = array<i32>} : memref<1x8x128xf32, #tpu.memory_space<vmem>>, vector<1x8x128xf32>,
    return
  }
  func.func @transform_0(%arg0: i32) -> (i32, i32, i32, i32, i32) {
    %c0_i32 = arith.constant 0 : i32
    %c0_i32_0 = arith.constant 0 : i32
    %c0_i32_1 = arith.constant 0 : i32
    %c0_i32_2 = arith.constant 0 : i32
    %c0_i32_3 = arith.constant 0 : i32
    return %arg0, %c0_i32, %c0_i32_0, %c0_i32_1, %c0_i32_2 : i32, i32, i32, i32, i32
  }
  func.func @transform_1(%arg0: i32) -> (i32, i32, i32, i32, i32) {
    %c0_i32 = arith.constant 0 : i32
    %c0_i32_0 = arith.constant 0 : i32
    %c0_i32_1 = arith.constant 0 : i32
    %c0_i32_2 = arith.constant 0 : i32
    %c0_i32_3 = arith.constant 0 : i32
    return %arg0, %c0_i32, %c0_i32_0, %c0_i32_1, %c0_i32_2 : i32, i32, i32, i32, i32
  }
  func.func @transform_2(%arg0: i32) -> (i32, i32, i32, i32, i32) {
    %c0_i32 = arith.constant 0 : i32
    %c0_i32_0 = arith.constant 0 : i32
    %c0_i32_1 = arith.constant 0 : i32
    %c0_i32_2 = arith.constant 0 : i32
    %c0_i32_3 = arith.constant 0 : i32
    return %arg0, %c0_i32, %c0_i32_0, %c0_i32_1, %c0_i32_2 : i32, i32, i32, i32, i32
  }
  func.func @transform_3(%arg0: i32) -> (i32, i32, i32, i32, i32) {
    %c0_i32 = arith.constant 0 : i32
    %c0_i32_0 = arith.constant 0 : i32
    %c0_i32_1 = arith.constant 0 : i32
    %c0_i32_2 = arith.constant 0 : i32
    %c0_i32_3 = arith.constant 0 : i32
    return %arg0, %c0_i32, %c0_i32_0, %c0_i32_1, %c0_i32_2 : i32, i32, i32, i32, i32
  }
  func.func @transform_4(%arg0: i32) -> (i32, i32, i32) {
    %c0_i32 = arith.constant 0 : i32
    %c0_i32_0 = arith.constant 0 : i32
    %c0_i32_1 = arith.constant 0 : i32
    return %arg0, %c0_i32, %c0_i32_0 : i32, i32, i32
  }
}

</mosaic_0001>

<llo_original>
// kernel: my_loss.4
$region0: #{my_loss.4}
  #allocation0 [shape = 'u32[]', space=smem, size = 0x4, offset = 0x4, fixed_abs, tag = 'smem constant byte address 0x4 - core index']
  #allocation1 [shape = 'u32[144,128]{1,0:T(1,128)}', space=vmem, size = 0x12000, scoped, tag = 'internal scratch']
  %s0 = inlined_call_operand.vmem [shape: bf16[2,2,3,16,16], index: 0, kind: input, shape index: {}]
  %s1 = inlined_call_operand.vmem [shape: bf16[2,2,3,16,16], index: 1, kind: input, shape index: {}]
  %s2 = inlined_call_operand.vmem [shape: f32[2,2,1,16,16], index: 2, kind: input, shape index: {}]
  %s3 = inlined_call_operand.vmem [shape: f32[2,2,1,16,16], index: 3, kind: input, shape index: {}]
  %s4 = inlined_call_operand.vmem [shape: f32[2,8,128], index: 4, kind: output, shape index: {}]
  %s5 = sld [smem:[#allocation0]]
  $region49: #{my_loss.4} parent=0
    _
  %s7 = ssub.s32 1, %s5
  %s8 = scalar_select 0, %s7, %s5
  loop: start=0, step=1, limit=4
  $region2: #{my_loss.4} parent=0 // loop_pre_header
    _
  $region3: #{my_loss.4} parent=0 // loop_header
    %s10 = sphi 0, %s14
    %p11 = scmp.ge.s32.totalorder %s10, 4
    %s20 = sphi 0, %s22
    %s23 = sphi 0, %s20
    %s24 = sphi 0, %s23
    %s40 = sphi 0, %s24
    %s46 = sphi 0, %s48
    %s49 = sphi 0, %s46
    %s50 = sphi 0, %s49
    %s66 = sphi 0, %s50
    %s72 = sphi 0, %s74
    %s75 = sphi 0, %s72
    %s76 = sphi 0, %s75
    %s92 = sphi 0, %s76
    %s98 = sphi 0, %s100
    %s101 = sphi 0, %s98
    %s102 = sphi 0, %s101
    %s118 = sphi 0, %s102
    %s124 = sphi 0, %s126
    %s127 = sphi 0, %s124
    %s128 = sphi 0, %s127
    %s144 = sphi 0, %s128
  $region4: #{my_loss.4} parent=0 // loop_header_branch
    %13 = sbr.rel (%p11) target = $region8
  $region5: #{my_loss.4} parent=0 // loop_body
    %s15 = ssub.s32 %s10, 1
    %s16 = ssub.s32 %s10, 2
    %s17 = sadd.s32 %s10, 1
    %s18 = ssub.s32 %s10, %s17
    %p19 = scmp.eq.s32.totalorder %s18, 0
    %s21 = sadd.s32 %s20, 1
    %s22 = scalar_select %p19, %s20, %s21
    %p25 = pneg %p19
    %p26 = scmp.eq.s32.totalorder %s10, 1
    %p27 = por %p25, %p26
    %p28 = scmp.ne.s32.totalorder %s20, %s23
    %p29 = scmp.eq.s32.totalorder %s10, 0
    %p30 = por %p28, %p29
    %p31 = scmp.ne.s32.totalorder %s20, %s23
    %p32 = scmp.eq.s32.totalorder %s15, 1
    %p33 = por %p31, %p32
    %p34 = scmp.ne.s32.totalorder %s23, %s24
    %p35 = scmp.eq.s32.totalorder %s15, 0
    %p36 = por %p34, %p35
    %p37 = scmp.ne.s32.totalorder %s23, %s24
    %p38 = scmp.eq.s32.totalorder %s16, 1
    %p39 = por %p37, %p38
    %p41 = scmp.ne.s32.totalorder %s24, %s40
    %p42 = scmp.eq.s32.totalorder %s16, 0
    %p43 = por %p41, %p42
    %s44 = ssub.s32 %s10, %s17
    %p45 = scmp.eq.s32.totalorder %s44, 0
    %s47 = sadd.s32 %s46, 1
    %s48 = scalar_select %p45, %s46, %s47
    %p51 = pneg %p45
    %p52 = scmp.eq.s32.totalorder %s10, 1
    %p53 = por %p51, %p52
    %p54 = scmp.ne.s32.totalorder %s46, %s49
    %p55 = scmp.eq.s32.totalorder %s10, 0
    %p56 = por %p54, %p55
    %p57 = scmp.ne.s32.totalorder %s46, %s49
    %p58 = scmp.eq.s32.totalorder %s15, 1
    %p59 = por %p57, %p58
    %p60 = scmp.ne.s32.totalorder %s49, %s50
    %p61 = scmp.eq.s32.totalorder %s15, 0
    %p62 = por %p60, %p61
    %p63 = scmp.ne.s32.totalorder %s49, %s50
    %p64 = scmp.eq.s32.totalorder %s16, 1
    %p65 = por %p63, %p64
    %p67 = scmp.ne.s32.totalorder %s50, %s66
    %p68 = scmp.eq.s32.totalorder %s16, 0
    %p69 = por %p67, %p68
    %s70 = ssub.s32 %s10, %s17
    %p71 = scmp.eq.s32.totalorder %s70, 0
    %s73 = sadd.s32 %s72, 1
    %s74 = scalar_select %p71, %s72, %s73
    %p77 = pneg %p71
    %p78 = scmp.eq.s32.totalorder %s10, 1
    %p79 = por %p77, %p78
    %p80 = scmp.ne.s32.totalorder %s72, %s75
    %p81 = scmp.eq.s32.totalorder %s10, 0
    %p82 = por %p80, %p81
    %p83 = scmp.ne.s32.totalorder %s72, %s75
    %p84 = scmp.eq.s32.totalorder %s15, 1
    %p85 = por %p83, %p84
    %p86 = scmp.ne.s32.totalorder %s75, %s76
    %p87 = scmp.eq.s32.totalorder %s15, 0
    %p88 = por %p86, %p87
    %p89 = scmp.ne.s32.totalorder %s75, %s76
    %p90 = scmp.eq.s32.totalorder %s16, 1
    %p91 = por %p89, %p90
    %p93 = scmp.ne.s32.totalorder %s76, %s92
    %p94 = scmp.eq.s32.totalorder %s16, 0
    %p95 = por %p93, %p94
    %s96 = ssub.s32 %s10, %s17
    %p97 = scmp.eq.s32.totalorder %s96, 0
    %s99 = sadd.s32 %s98, 1
    %s100 = scalar_select %p97, %s98, %s99
    %p103 = pneg %p97
    %p104 = scmp.eq.s32.totalorder %s10, 1
    %p105 = por %p103, %p104
    %p106 = scmp.ne.s32.totalorder %s98, %s101
    %p107 = scmp.eq.s32.totalorder %s10, 0
    %p108 = por %p106, %p107
    %p109 = scmp.ne.s32.totalorder %s98, %s101
    %p110 = scmp.eq.s32.totalorder %s15, 1
    %p111 = por %p109, %p110
    %p112 = scmp.ne.s32.totalorder %s101, %s102
    %p113 = scmp.eq.s32.totalorder %s15, 0
    %p114 = por %p112, %p113
    %p115 = scmp.ne.s32.totalorder %s101, %s102
    %p116 = scmp.eq.s32.totalorder %s16, 1
    %p117 = por %p115, %p116
    %p119 = scmp.ne.s32.totalorder %s102, %s118
    %p120 = scmp.eq.s32.totalorder %s16, 0
    %p121 = por %p119, %p120
    %s122 = ssub.s32 %s10, %s17
    %p123 = scmp.eq.s32.totalorder %s122, 0
    %s125 = sadd.s32 %s124, 1
    %s126 = scalar_select %p123, %s124, %s125
    %p129 = pneg %p123
    %p130 = scmp.eq.s32.totalorder %s10, 1
    %p131 = por %p129, %p130
    %p132 = scmp.ne.s32.totalorder %s124, %s127
    %p133 = scmp.eq.s32.totalorder %s10, 0
    %p134 = por %p132, %p133
    %p135 = scmp.ne.s32.totalorder %s124, %s127
    %p136 = scmp.eq.s32.totalorder %s15, 1
    %p137 = por %p135, %p136
    %p138 = scmp.ne.s32.totalorder %s127, %s128
    %p139 = scmp.eq.s32.totalorder %s15, 0
    %p140 = por %p138, %p139
    %p141 = scmp.ne.s32.totalorder %s127, %s128
    %p142 = scmp.eq.s32.totalorder %s16, 1
    %p143 = por %p141, %p142
    %p145 = scmp.ne.s32.totalorder %s128, %s144
    %p146 = scmp.eq.s32.totalorder %s16, 0
    %p147 = por %p145, %p146
    %p148 = scmp.le.s32.totalorder 1, %s10
    %p149 = scmp.lt.s32.totalorder %s10, 3
    %p150 = pnand %p148, %p149
    %p151 = pneg %p150
    // Predicated region
    $region9: #{my_loss.4} parent=5 // pred_check
      _
    $region10: #{my_loss.4} parent=5 // pred_check_branch
      %153 = sbr.rel (%p150) target = $region12
    $region11: #{my_loss.4} parent=5 // pred_region
      %s154 = ssub.s32 %s10, 1
    $region12: #{my_loss.4} parent=5 // pred_fallthru
      _
    %p155 = scmp.lt.s32.totalorder %s10, 2
    // Predicated region
    $region13: #{my_loss.4} parent=5 // pred_check
      %p156 = pneg %p155
    $region14: #{my_loss.4} parent=5 // pred_check_branch
      %158 = sbr.rel (%p156) target = $region16
    $region15: #{my_loss.4} parent=5 // pred_region
      // Predicated region
      $region17: #{my_loss.4} parent=15 // pred_check
        %p159 = pneg %p30
      $region18: #{my_loss.4} parent=15 // pred_check_branch
        %161 = sbr.rel (%p159) target = $region20
      $region19: #{my_loss.4} parent=15 // pred_region
        %p162 = scmp.lt.s32.totalorder %s10, 1
        %s163 = scalar_select %p162, %s10, 1
        %s164 = smul.addr %s163, 12
        %s165 = smul.addr %s164, 4
        %s166 = scalar_lea.vmem %s0, %s165
      $region20: #{my_loss.4} parent=15 // pred_fallthru
        _
      // Predicated region
      $region21: #{my_loss.4} parent=15 // pred_check
        %p167 = pneg %p56
      $region22: #{my_loss.4} parent=15 // pred_check_branch
        %169 = sbr.rel (%p167) target = $region24
      $region23: #{my_loss.4} parent=15 // pred_region
        %p170 = scmp.lt.s32.totalorder %s10, 1
        %s171 = scalar_select %p170, %s10, 1
        %s172 = smul.addr %s171, 12
        %s173 = smul.addr %s172, 4
        %s174 = scalar_lea.vmem %s1, %s173
      $region24: #{my_loss.4} parent=15 // pred_fallthru
        _
      // Predicated region
      $region25: #{my_loss.4} parent=15 // pred_check
        %p175 = pneg %p82
      $region26: #{my_loss.4} parent=15 // pred_check_branch
        %177 = sbr.rel (%p175) target = $region28
      $region27: #{my_loss.4} parent=15 // pred_region
        %p178 = scmp.lt.s32.totalorder %s10, 1
        %s179 = scalar_select %p178, %s10, 1
        %s180 = smul.addr %s179, 4
        %s181 = smul.addr %s180, 8
        %s182 = scalar_lea.vmem %s2, %s181
      $region28: #{my_loss.4} parent=15 // pred_fallthru
        _
      // Predicated region
      $region29: #{my_loss.4} parent=15 // pred_check
        %p183 = pneg %p108
      $region30: #{my_loss.4} parent=15 // pred_check_branch
        %185 = sbr.rel (%p183) target = $region32
      $region31: #{my_loss.4} parent=15 // pred_region
        %p186 = scmp.lt.s32.totalorder %s10, 1
        %s187 = scalar_select %p186, %s10, 1
        %s188 = smul.addr %s187, 4
        %s189 = smul.addr %s188, 8
        %s190 = scalar_lea.vmem %s3, %s189
      $region32: #{my_loss.4} parent=15 // pred_fallthru
        _
    $region16: #{my_loss.4} parent=5 // pred_fallthru
      _
    %p191 = scmp.le.s32.totalorder 1, %s10
    %p192 = scmp.lt.s32.totalorder %s10, 3
    %p193 = pnand %p191, %p192
    %p194 = pneg %p193
    // Predicated region
    $region33: #{my_loss.4} parent=5 // pred_check
      _
    $region34: #{my_loss.4} parent=5 // pred_check_branch
      %196 = sbr.rel (%p193) target = $region36
    $region35: #{my_loss.4} parent=5 // pred_region
      %s197 = ssub.s32 %s10, 1
      %p198 = scmp.lt.s32.totalorder %s15, 1
      %s199 = scalar_select %p198, %s15, 1
      %s200 = smul.addr %s199, 12
      %s201 = smul.addr %s200, 4
      %s202 = scalar_lea.vmem %s0, %s201
      %p203 = pneg %p36
      %p204 = pneg %p33
      %p205 = scmp.lt.s32.totalorder %s15, 1
      %s206 = scalar_select %p205, %s15, 1
      %s207 = smul.addr %s206, 12
      %s208 = smul.addr %s207, 4
      %s209 = scalar_lea.vmem %s1, %s208
      %p210 = pneg %p62
      %p211 = pneg %p59
      %p212 = scmp.lt.s32.totalorder %s15, 1
      %s213 = scalar_select %p212, %s15, 1
      %s214 = smul.addr %s213, 4
      %s215 = smul.addr %s214, 8
      %s216 = scalar_lea.vmem %s2, %s215
      %p217 = pneg %p88
      %p218 = pneg %p85
      %p219 = scmp.lt.s32.totalorder %s15, 1
      %s220 = scalar_select %p219, %s15, 1
      %s221 = smul.addr %s220, 4
      %s222 = smul.addr %s221, 8
      %s223 = scalar_lea.vmem %s3, %s222
      %p224 = pneg %p114
      %p225 = pneg %p111
      %p226 = pneg %p140
      %p227 = pneg %p137
      %p228 = scmp.lt.s32.totalorder %s15, 1
      %s229 = scalar_select %p228, %s15, 1
      %s230 = smul.addr %s229, 8
      %s231 = scalar_lea.vmem %s4, %s230
      %p232 = scmp.lt.s32.totalorder %s15, 1
      %s233 = scalar_select %p232, %s15, 1
      %s234 = smul.addr %s233, 12
      %s235 = smul.addr %s234, 4
      %s236 = scalar_lea.vmem %s0, %s235
      %p237 = scmp.lt.s32.totalorder %s15, 1
      %s238 = scalar_select %p237, %s15, 1
      %s239 = smul.addr %s238, 12
      %s240 = smul.addr %s239, 4
      %s241 = scalar_lea.vmem %s1, %s240
      %p242 = scmp.lt.s32.totalorder %s15, 1
      %s243 = scalar_select %p242, %s15, 1
      %s244 = smul.addr %s243, 4
      %s245 = smul.addr %s244, 8
      %s246 = scalar_lea.vmem %s2, %s245
      %p247 = scmp.lt.s32.totalorder %s15, 1
      %s248 = scalar_select %p247, %s15, 1
      %s249 = smul.addr %s248, 4
      %s250 = smul.addr %s249, 8
      %s251 = scalar_lea.vmem %s3, %s250
      %p252 = scmp.lt.s32.totalorder %s15, 1
      %s253 = scalar_select %p252, %s15, 1
      %s254 = smul.addr %s253, 8
      %s255 = scalar_lea.vmem %s4, %s254
      %v256 = vld [vmem:[%s236] sm:$0xf]
      %v257 = vld [vmem:[%s236 + $0x4] sm:$0xf]
      %v258 = vld [vmem:[%s236 + $0x8] sm:$0xf]
      %v259 = vld [vmem:[%s236 + $0xc] sm:$0xf]
      %v260 = vld [vmem:[%s236 + $0x10] sm:$0xf]
      %v261 = vld [vmem:[%s236 + $0x14] sm:$0xf]
      %v262 = vld [vmem:[%s236 + $0x18] sm:$0xf]
      %v263 = vld [vmem:[%s236 + $0x1c] sm:$0xf]
      %v264 = vld [vmem:[%s236 + $0x20] sm:$0xf]
      %v265 = vld [vmem:[%s236 + $0x24] sm:$0xf]
      %v266 = vld [vmem:[%s236 + $0x28] sm:$0xf]
      %v267 = vld [vmem:[%s236 + $0x2c] sm:$0xf]
      %v268 = vunpack.c.l.bf16 %v256
      %v269 = vunpack.c.l.bf16 %v257
      %v270 = vunpack.c.l.bf16 %v258
      %v271 = vunpack.c.l.bf16 %v259
      %v272 = vunpack.c.l.bf16 %v260
      %v273 = vunpack.c.l.bf16 %v261
      %v274 = vunpack.c.l.bf16 %v262
      %v275 = vunpack.c.l.bf16 %v263
      %v276 = vunpack.c.l.bf16 %v264
      %v277 = vunpack.c.l.bf16 %v265
      %v278 = vunpack.c.l.bf16 %v266
      %v279 = vunpack.c.l.bf16 %v267
      %v280 = vld [vmem:[%s241] sm:$0xf]
      %v281 = vld [vmem:[%s241 + $0x4] sm:$0xf]
      %v282 = vld [vmem:[%s241 + $0x8] sm:$0xf]
      %v283 = vld [vmem:[%s241 + $0xc] sm:$0xf]
      %v284 = vld [vmem:[%s241 + $0x10] sm:$0xf]
      %v285 = vld [vmem:[%s241 + $0x14] sm:$0xf]
      %v286 = vld [vmem:[%s241 + $0x18] sm:$0xf]
      %v287 = vld [vmem:[%s241 + $0x1c] sm:$0xf]
      %v288 = vld [vmem:[%s241 + $0x20] sm:$0xf]
      %v289 = vld [vmem:[%s241 + $0x24] sm:$0xf]
      %v290 = vld [vmem:[%s241 + $0x28] sm:$0xf]
      %v291 = vld [vmem:[%s241 + $0x2c] sm:$0xf]
      %v292 = vunpack.c.l.bf16 %v280
      %v293 = vunpack.c.l.bf16 %v281
      %v294 = vunpack.c.l.bf16 %v282
      %v295 = vunpack.c.l.bf16 %v283
      %v296 = vunpack.c.l.bf16 %v284
      %v297 = vunpack.c.l.bf16 %v285
      %v298 = vunpack.c.l.bf16 %v286
      %v299 = vunpack.c.l.bf16 %v287
      %v300 = vunpack.c.l.bf16 %v288
      %v301 = vunpack.c.l.bf16 %v289
      %v302 = vunpack.c.l.bf16 %v290
      %v303 = vunpack.c.l.bf16 %v291
      %v304 = vld [vmem:[%s246] sm:$0xff]
      %v305 = vld [vmem:[%s246 + $0x8] sm:$0xff]
      %v306 = vld [vmem:[%s246 + $0x10] sm:$0xff]
      %v307 = vld [vmem:[%s246 + $0x18] sm:$0xff]
      %v308 = vld [vmem:[%s251] sm:$0xff]
      %v309 = vld [vmem:[%s251 + $0x8] sm:$0xff]
      %v310 = vld [vmem:[%s251 + $0x10] sm:$0xff]
      %v311 = vld [vmem:[%s251 + $0x18] sm:$0xff]
      %v312 = vlaneseq
      %v313 = vand.u32 %v312, 127
      %vm314 = vcmp.eq.s32.totalorder %v313, 0
      %vm315 = vcmp.eq.s32.totalorder %v313, 15
      %328 = vrot.lane.b32.xlu0 %v268, 113
      %v329 = vpop.permute.xlu0 %328
      %330 = vrot.lane.b32.xlu0 %v269, 113
      %v331 = vpop.permute.xlu0 %330
      %332 = vrot.lane.b32.xlu0 %v270, 113
      %v333 = vpop.permute.xlu0 %332
      %334 = vrot.lane.b32.xlu0 %v271, 113
      %v335 = vpop.permute.xlu0 %334
      %336 = vrot.lane.b32.xlu0 %v272, 113
      %v337 = vpop.permute.xlu0 %336
      %338 = vrot.lane.b32.xlu0 %v273, 113
      %v339 = vpop.permute.xlu0 %338
      %340 = vrot.lane.b32.xlu0 %v274, 113
      %v341 = vpop.permute.xlu0 %340
      %342 = vrot.lane.b32.xlu0 %v275, 113
      %v343 = vpop.permute.xlu0 %342
      %344 = vrot.lane.b32.xlu0 %v276, 113
      %v345 = vpop.permute.xlu0 %344
      %346 = vrot.lane.b32.xlu0 %v277, 113
      %v347 = vpop.permute.xlu0 %346
      %348 = vrot.lane.b32.xlu0 %v278, 113
      %v349 = vpop.permute.xlu0 %348
      %350 = vrot.lane.b32.xlu0 %v279, 113
      %v351 = vpop.permute.xlu0 %350
      %364 = vrot.lane.b32.xlu0 %v268, 1
      %v365 = vpop.permute.xlu0 %364
      %366 = vrot.lane.b32.xlu0 %v269, 1
      %v367 = vpop.permute.xlu0 %366
      %368 = vrot.lane.b32.xlu0 %v270, 1
      %v369 = vpop.permute.xlu0 %368
      %370 = vrot.lane.b32.xlu0 %v271, 1
      %v371 = vpop.permute.xlu0 %370
      %372 = vrot.lane.b32.xlu0 %v272, 1
      %v373 = vpop.permute.xlu0 %372
      %374 = vrot.lane.b32.xlu0 %v273, 1
      %v375 = vpop.permute.xlu0 %374
      %376 = vrot.lane.b32.xlu0 %v274, 1
      %v377 = vpop.permute.xlu0 %376
      %378 = vrot.lane.b32.xlu0 %v275, 1
      %v379 = vpop.permute.xlu0 %378
      %380 = vrot.lane.b32.xlu0 %v276, 1
      %v381 = vpop.permute.xlu0 %380
      %382 = vrot.lane.b32.xlu0 %v277, 1
      %v383 = vpop.permute.xlu0 %382
      %384 = vrot.lane.b32.xlu0 %v278, 1
      %v385 = vpop.permute.xlu0 %384
      %386 = vrot.lane.b32.xlu0 %v279, 1
      %v387 = vpop.permute.xlu0 %386
      %vm400 = vcmask 7168
      %v401 = vsel %vm400, %v329, %v365
      %v402 = vsel %vm400, %v331, %v367
      %v403 = vsel %vm400, %v333, %v369
      %v404 = vsel %vm400, %v335, %v371
      %v405 = vsel %vm400, %v337, %v373
      %v406 = vsel %vm400, %v339, %v375
      %v407 = vsel %vm400, %v341, %v377
      %v408 = vsel %vm400, %v343, %v379
      %v409 = vsel %vm400, %v345, %v381
      %v410 = vsel %vm400, %v347, %v383
      %v411 = vsel %vm400, %v349, %v385
      %v412 = vsel %vm400, %v351, %v387
      %v413 = vadd.f32 %v401, %v268
      %v414 = vadd.f32 %v402, %v269
      %v415 = vadd.f32 %v403, %v270
      %v416 = vadd.f32 %v404, %v271
      %v417 = vadd.f32 %v405, %v272
      %v418 = vadd.f32 %v406, %v273
      %v419 = vadd.f32 %v407, %v274
      %v420 = vadd.f32 %v408, %v275
      %v421 = vadd.f32 %v409, %v276
      %v422 = vadd.f32 %v410, %v277
      %v423 = vadd.f32 %v411, %v278
      %v424 = vadd.f32 %v412, %v279
      %425 = vrot.lane.b32.xlu0 %v268, 127
      %v426 = vpop.permute.xlu0 %425
      %427 = vrot.lane.b32.xlu0 %v269, 127
      %v428 = vpop.permute.xlu0 %427
      %429 = vrot.lane.b32.xlu0 %v270, 127
      %v430 = vpop.permute.xlu0 %429
      %431 = vrot.lane.b32.xlu0 %v271, 127
      %v432 = vpop.permute.xlu0 %431
      %433 = vrot.lane.b32.xlu0 %v272, 127
      %v434 = vpop.permute.xlu0 %433
      %435 = vrot.lane.b32.xlu0 %v273, 127
      %v436 = vpop.permute.xlu0 %435
      %437 = vrot.lane.b32.xlu0 %v274, 127
      %v438 = vpop.permute.xlu0 %437
      %439 = vrot.lane.b32.xlu0 %v275, 127
      %v440 = vpop.permute.xlu0 %439
      %441 = vrot.lane.b32.xlu0 %v276, 127
      %v442 = vpop.permute.xlu0 %441
      %443 = vrot.lane.b32.xlu0 %v277, 127
      %v444 = vpop.permute.xlu0 %443
      %445 = vrot.lane.b32.xlu0 %v278, 127
      %v446 = vpop.permute.xlu0 %445
      %447 = vrot.lane.b32.xlu0 %v279, 127
      %v448 = vpop.permute.xlu0 %447
      %461 = vrot.lane.b32.xlu0 %v268, 15
      %v462 = vpop.permute.xlu0 %461
      %463 = vrot.lane.b32.xlu0 %v269, 15
      %v464 = vpop.permute.xlu0 %463
      %465 = vrot.lane.b32.xlu0 %v270, 15
      %v466 = vpop.permute.xlu0 %465
      %467 = vrot.lane.b32.xlu0 %v271, 15
      %v468 = vpop.permute.xlu0 %467
      %469 = vrot.lane.b32.xlu0 %v272, 15
      %v470 = vpop.permute.xlu0 %469
      %471 = vrot.lane.b32.xlu0 %v273, 15
      %v472 = vpop.permute.xlu0 %471
      %473 = vrot.lane.b32.xlu0 %v274, 15
      %v474 = vpop.permute.xlu0 %473
      %475 = vrot.lane.b32.xlu0 %v275, 15
      %v476 = vpop.permute.xlu0 %475
      %477 = vrot.lane.b32.xlu0 %v276, 15
      %v478 = vpop.permute.xlu0 %477
      %479 = vrot.lane.b32.xlu0 %v277, 15
      %v480 = vpop.permute.xlu0 %479
      %481 = vrot.lane.b32.xlu0 %v278, 15
      %v482 = vpop.permute.xlu0 %481
      %483 = vrot.lane.b32.xlu0 %v279, 15
      %v484 = vpop.permute.xlu0 %483
      %vm497 = vcmask 121856
      %v498 = vsel %vm497, %v426, %v462
      %v499 = vsel %vm497, %v428, %v464
      %v500 = vsel %vm497, %v430, %v466
      %v501 = vsel %vm497, %v432, %v468
      %v502 = vsel %vm497, %v434, %v470
      %v503 = vsel %vm497, %v436, %v472
      %v504 = vsel %vm497, %v438, %v474
      %v505 = vsel %vm497, %v440, %v476
      %v506 = vsel %vm497, %v442, %v478
      %v507 = vsel %vm497, %v444, %v480
      %v508 = vsel %vm497, %v446, %v482
      %v509 = vsel %vm497, %v448, %v484
      %v510 = vadd.f32 %v413, %v498
      %v511 = vadd.f32 %v414, %v499
      %v512 = vadd.f32 %v415, %v500
      %v513 = vadd.f32 %v416, %v501
      %v514 = vadd.f32 %v417, %v502
      %v515 = vadd.f32 %v418, %v503
      %v516 = vadd.f32 %v419, %v504
      %v517 = vadd.f32 %v420, %v505
      %v518 = vadd.f32 %v421, %v506
      %v519 = vadd.f32 %v422, %v507
      %v520 = vadd.f32 %v423, %v508
      %v521 = vadd.f32 %v424, %v509
      %522 = vrot.lane.b32.xlu0 %v268, 114
      %v523 = vpop.permute.xlu0 %522
      %524 = vrot.lane.b32.xlu0 %v269, 114
      %v525 = vpop.permute.xlu0 %524
      %526 = vrot.lane.b32.xlu0 %v270, 114
      %v527 = vpop.permute.xlu0 %526
      %528 = vrot.lane.b32.xlu0 %v271, 114
      %v529 = vpop.permute.xlu0 %528
      %530 = vrot.lane.b32.xlu0 %v272, 114
      %v531 = vpop.permute.xlu0 %530
      %532 = vrot.lane.b32.xlu0 %v273, 114
      %v533 = vpop.permute.xlu0 %532
      %534 = vrot.lane.b32.xlu0 %v274, 114
      %v535 = vpop.permute.xlu0 %534
      %536 = vrot.lane.b32.xlu0 %v275, 114
      %v537 = vpop.permute.xlu0 %536
      %538 = vrot.lane.b32.xlu0 %v276, 114
      %v539 = vpop.permute.xlu0 %538
      %540 = vrot.lane.b32.xlu0 %v277, 114
      %v541 = vpop.permute.xlu0 %540
      %542 = vrot.lane.b32.xlu0 %v278, 114
      %v543 = vpop.permute.xlu0 %542
      %544 = vrot.lane.b32.xlu0 %v279, 114
      %v545 = vpop.permute.xlu0 %544
      %v558 = vsub.f32 %v268, %v523
      %v559 = vsub.f32 %v269, %v525
      %v560 = vsub.f32 %v270, %v527
      %v561 = vsub.f32 %v271, %v529
      %v562 = vsub.f32 %v272, %v531
      %v563 = vsub.f32 %v273, %v533
      %v564 = vsub.f32 %v274, %v535
      %v565 = vsub.f32 %v275, %v537
      %v566 = vsub.f32 %v276, %v539
      %v567 = vsub.f32 %v277, %v541
      %v568 = vsub.f32 %v278, %v543
      %v569 = vsub.f32 %v279, %v545
      %570 = vrot.lane.b32.xlu0 %v268, 14
      %v571 = vpop.permute.xlu0 %570
      %572 = vrot.lane.b32.xlu0 %v269, 14
      %v573 = vpop.permute.xlu0 %572
      %574 = vrot.lane.b32.xlu0 %v270, 14
      %v575 = vpop.permute.xlu0 %574
      %576 = vrot.lane.b32.xlu0 %v271, 14
      %v577 = vpop.permute.xlu0 %576
      %578 = vrot.lane.b32.xlu0 %v272, 14
      %v579 = vpop.permute.xlu0 %578
      %580 = vrot.lane.b32.xlu0 %v273, 14
      %v581 = vpop.permute.xlu0 %580
      %582 = vrot.lane.b32.xlu0 %v274, 14
      %v583 = vpop.permute.xlu0 %582
      %584 = vrot.lane.b32.xlu0 %v275, 14
      %v585 = vpop.permute.xlu0 %584
      %586 = vrot.lane.b32.xlu0 %v276, 14
      %v587 = vpop.permute.xlu0 %586
      %588 = vrot.lane.b32.xlu0 %v277, 14
      %v589 = vpop.permute.xlu0 %588
      %590 = vrot.lane.b32.xlu0 %v278, 14
      %v591 = vpop.permute.xlu0 %590
      %592 = vrot.lane.b32.xlu0 %v279, 14
      %v593 = vpop.permute.xlu0 %592
      %v606 = vsub.f32 %v268, %v571
      %v607 = vsub.f32 %v269, %v573
      %v608 = vsub.f32 %v270, %v575
      %v609 = vsub.f32 %v271, %v577
      %v610 = vsub.f32 %v272, %v579
      %v611 = vsub.f32 %v273, %v581
      %v612 = vsub.f32 %v274, %v583
      %v613 = vsub.f32 %v275, %v585
      %v614 = vsub.f32 %v276, %v587
      %v615 = vsub.f32 %v277, %v589
      %v616 = vsub.f32 %v278, %v591
      %v617 = vsub.f32 %v279, %v593
      %v618 = vsel %vm314, 1, 0
      %vm619 = vcmp.eq.s32.totalorder %v618, 1
      %621 = vset.pattern.permute.xlu0 1
      %622 = vperm.xlu0 %621, %v558
      %v623 = vpop.permute.xlu0 %622
      %626 = vset.pattern.permute.xlu0 1
      %627 = vperm.xlu0 %626, %v559
      %v628 = vpop.permute.xlu0 %627
      %631 = vset.pattern.permute.xlu0 1
      %632 = vperm.xlu0 %631, %v560
      %v633 = vpop.permute.xlu0 %632
      %636 = vset.pattern.permute.xlu0 1
      %637 = vperm.xlu0 %636, %v561
      %v638 = vpop.permute.xlu0 %637
      %641 = vset.pattern.permute.xlu0 1
      %642 = vperm.xlu0 %641, %v562
      %v643 = vpop.permute.xlu0 %642
      %646 = vset.pattern.permute.xlu0 1
      %647 = vperm.xlu0 %646, %v563
      %v648 = vpop.permute.xlu0 %647
      %651 = vset.pattern.permute.xlu0 1
      %652 = vperm.xlu0 %651, %v564
      %v653 = vpop.permute.xlu0 %652
      %656 = vset.pattern.permute.xlu0 1
      %657 = vperm.xlu0 %656, %v565
      %v658 = vpop.permute.xlu0 %657
      %661 = vset.pattern.permute.xlu0 1
      %662 = vperm.xlu0 %661, %v566
      %v663 = vpop.permute.xlu0 %662
      %666 = vset.pattern.permute.xlu0 1
      %667 = vperm.xlu0 %666, %v567
      %v668 = vpop.permute.xlu0 %667
      %671 = vset.pattern.permute.xlu0 1
      %672 = vperm.xlu0 %671, %v568
      %v673 = vpop.permute.xlu0 %672
      %676 = vset.pattern.permute.xlu0 1
      %677 = vperm.xlu0 %676, %v569
      %v678 = vpop.permute.xlu0 %677
      %v680 = vsel %vm619, %v623, 0.0
      %v681 = vsel %vm619, %v628, 0.0
      %v682 = vsel %vm619, %v633, 0.0
      %v683 = vsel %vm619, %v638, 0.0
      %v684 = vsel %vm619, %v643, 0.0
      %v685 = vsel %vm619, %v648, 0.0
      %v686 = vsel %vm619, %v653, 0.0
      %v687 = vsel %vm619, %v658, 0.0
      %v688 = vsel %vm619, %v663, 0.0
      %v689 = vsel %vm619, %v668, 0.0
      %v690 = vsel %vm619, %v673, 0.0
      %v691 = vsel %vm619, %v678, 0.0
      %v692 = vadd.f32 %v510, %v680
      %v693 = vadd.f32 %v511, %v681
      %v694 = vadd.f32 %v512, %v682
      %v695 = vadd.f32 %v513, %v683
      %v696 = vadd.f32 %v514, %v684
      %v697 = vadd.f32 %v515, %v685
      %v698 = vadd.f32 %v516, %v686
      %v699 = vadd.f32 %v517, %v687
      %v700 = vadd.f32 %v518, %v688
      %v701 = vadd.f32 %v519, %v689
      %v702 = vadd.f32 %v520, %v690
      %v703 = vadd.f32 %v521, %v691
      %v704 = vsel %vm315, 1, 0
      %vm705 = vcmp.eq.s32.totalorder %v704, 1
      %707 = vset.pattern.permute.xlu0 14
      %708 = vperm.xlu0 %707, %v606
      %v709 = vpop.permute.xlu0 %708
      %712 = vset.pattern.permute.xlu0 14
      %713 = vperm.xlu0 %712, %v607
      %v714 = vpop.permute.xlu0 %713
      %717 = vset.pattern.permute.xlu0 14
      %718 = vperm.xlu0 %717, %v608
      %v719 = vpop.permute.xlu0 %718
      %722 = vset.pattern.permute.xlu0 14
      %723 = vperm.xlu0 %722, %v609
      %v724 = vpop.permute.xlu0 %723
      %727 = vset.pattern.permute.xlu0 14
      %728 = vperm.xlu0 %727, %v610
      %v729 = vpop.permute.xlu0 %728
      %732 = vset.pattern.permute.xlu0 14
      %733 = vperm.xlu0 %732, %v611
      %v734 = vpop.permute.xlu0 %733
      %737 = vset.pattern.permute.xlu0 14
      %738 = vperm.xlu0 %737, %v612
      %v739 = vpop.permute.xlu0 %738
      %742 = vset.pattern.permute.xlu0 14
      %743 = vperm.xlu0 %742, %v613
      %v744 = vpop.permute.xlu0 %743
      %747 = vset.pattern.permute.xlu0 14
      %748 = vperm.xlu0 %747, %v614
      %v749 = vpop.permute.xlu0 %748
      %752 = vset.pattern.permute.xlu0 14
      %753 = vperm.xlu0 %752, %v615
      %v754 = vpop.permute.xlu0 %753
      %757 = vset.pattern.permute.xlu0 14
      %758 = vperm.xlu0 %757, %v616
      %v759 = vpop.permute.xlu0 %758
      %762 = vset.pattern.permute.xlu0 14
      %763 = vperm.xlu0 %762, %v617
      %v764 = vpop.permute.xlu0 %763
      %v766 = vsel %vm705, %v709, 0.0
      %v767 = vsel %vm705, %v714, 0.0
      %v768 = vsel %vm705, %v719, 0.0
      %v769 = vsel %vm705, %v724, 0.0
      %v770 = vsel %vm705, %v729, 0.0
      %v771 = vsel %vm705, %v734, 0.0
      %v772 = vsel %vm705, %v739, 0.0
      %v773 = vsel %vm705, %v744, 0.0
      %v774 = vsel %vm705, %v749, 0.0
      %v775 = vsel %vm705, %v754, 0.0
      %v776 = vsel %vm705, %v759, 0.0
      %v777 = vsel %vm705, %v764, 0.0
      %v778 = vadd.f32 %v692, %v766
      %v779 = vadd.f32 %v693, %v767
      %v780 = vadd.f32 %v694, %v768
      %v781 = vadd.f32 %v695, %v769
      %v782 = vadd.f32 %v696, %v770
      %v783 = vadd.f32 %v697, %v771
      %v784 = vadd.f32 %v698, %v772
      %v785 = vadd.f32 %v699, %v773
      %v786 = vadd.f32 %v700, %v774
      %v787 = vadd.f32 %v701, %v775
      %v788 = vadd.f32 %v702, %v776
      %v789 = vadd.f32 %v703, %v777
      %v790 = vmul.f32 %v778, 2.0
      %v791 = vmul.f32 %v780, 2.0
      %v792 = vmul.f32 %v782, 2.0
      %v793 = vmul.f32 %v784, 2.0
      %v794 = vmul.f32 %v786, 2.0
      %v795 = vmul.f32 %v788, 2.0
      %v802 = vrot.slane %v790, 1
      %v803 = vrot.slane %v791, 1
      %v804 = vrot.slane %v792, 1
      %v805 = vrot.slane %v793, 1
      %v806 = vrot.slane %v794, 1
      %v807 = vrot.slane %v795, 1
      %v814 = vadd.f32 %v778, %v802
      %v815 = vadd.f32 %v780, %v803
      %v816 = vadd.f32 %v782, %v804
      %v817 = vadd.f32 %v784, %v805
      %v818 = vadd.f32 %v786, %v806
      %v819 = vadd.f32 %v788, %v807
      %v820 = vmul.f32 %v779, 2.0
      %v821 = vmul.f32 %v781, 2.0
      %v822 = vmul.f32 %v783, 2.0
      %v823 = vmul.f32 %v785, 2.0
      %v824 = vmul.f32 %v787, 2.0
      %v825 = vmul.f32 %v789, 2.0
      %v832 = vrot.slane %v820, 7
      %v833 = vrot.slane %v821, 7
      %v834 = vrot.slane %v822, 7
      %v835 = vrot.slane %v823, 7
      %v836 = vrot.slane %v824, 7
      %v837 = vrot.slane %v825, 7
      %v844 = vadd.f32 %v779, %v832
      %v845 = vadd.f32 %v781, %v833
      %v846 = vadd.f32 %v783, %v834
      %v847 = vadd.f32 %v785, %v835
      %v848 = vadd.f32 %v787, %v836
      %v849 = vadd.f32 %v789, %v837
      %vm862 = vcmask 1046528
      %v863 = vrot.slane %v778, 1
      %v864 = vrot.slane %v779, 1
      %v865 = vsel %vm862, %v863, %v864
      %v866 = vrot.slane %v780, 1
      %v867 = vrot.slane %v781, 1
      %v868 = vsel %vm862, %v866, %v867
      %v869 = vrot.slane %v782, 1
      %v870 = vrot.slane %v783, 1
      %v871 = vsel %vm862, %v869, %v870
      %v872 = vrot.slane %v784, 1
      %v873 = vrot.slane %v785, 1
      %v874 = vsel %vm862, %v872, %v873
      %v875 = vrot.slane %v786, 1
      %v876 = vrot.slane %v787, 1
      %v877 = vsel %vm862, %v875, %v876
      %v878 = vrot.slane %v788, 1
      %v879 = vrot.slane %v789, 1
      %v880 = vsel %vm862, %v878, %v879
      %v893 = vadd.f32 %v778, %v865
      %v894 = vadd.f32 %v779, %v864
      %v895 = vadd.f32 %v780, %v868
      %v896 = vadd.f32 %v781, %v867
      %v897 = vadd.f32 %v782, %v871
      %v898 = vadd.f32 %v783, %v870
      %v899 = vadd.f32 %v784, %v874
      %v900 = vadd.f32 %v785, %v873
      %v901 = vadd.f32 %v786, %v877
      %v902 = vadd.f32 %v787, %v876
      %v903 = vadd.f32 %v788, %v880
      %v904 = vadd.f32 %v789, %v879
      %vm905 = vcmask 1045504
      %v906 = vrot.slane %v778, 2
      %v907 = vrot.slane %v779, 2
      %v908 = vsel %vm905, %v906, %v907
      %v909 = vrot.slane %v780, 2
      %v910 = vrot.slane %v781, 2
      %v911 = vsel %vm905, %v909, %v910
      %v912 = vrot.slane %v782, 2
      %v913 = vrot.slane %v783, 2
      %v914 = vsel %vm905, %v912, %v913
      %v915 = vrot.slane %v784, 2
      %v916 = vrot.slane %v785, 2
      %v917 = vsel %vm905, %v915, %v916
      %v918 = vrot.slane %v786, 2
      %v919 = vrot.slane %v787, 2
      %v920 = vsel %vm905, %v918, %v919
      %v921 = vrot.slane %v788, 2
      %v922 = vrot.slane %v789, 2
      %v923 = vsel %vm905, %v921, %v922
      %v936 = vadd.f32 %v893, %v908
      %v937 = vadd.f32 %v894, %v907
      %v938 = vadd.f32 %v895, %v911
      %v939 = vadd.f32 %v896, %v910
      %v940 = vadd.f32 %v897, %v914
      %v941 = vadd.f32 %v898, %v913
      %v942 = vadd.f32 %v899, %v917
      %v943 = vadd.f32 %v900, %v916
      %v944 = vadd.f32 %v901, %v920
      %v945 = vadd.f32 %v902, %v919
      %v946 = vadd.f32 %v903, %v923
      %v947 = vadd.f32 %v904, %v922
      %vm960 = vcmask 1040384
      %v961 = vrot.slane %v936, 7
      %v962 = vrot.slane %v937, 7
      %v963 = vsel %vm960, %v961, %v962
      %v964 = vrot.slane %v938, 7
      %v965 = vrot.slane %v939, 7
      %v966 = vsel %vm960, %v964, %v965
      %v967 = vrot.slane %v940, 7
      %v968 = vrot.slane %v941, 7
      %v969 = vsel %vm960, %v967, %v968
      %v970 = vrot.slane %v942, 7
      %v971 = vrot.slane %v943, 7
      %v972 = vsel %vm960, %v970, %v971
      %v973 = vrot.slane %v944, 7
      %v974 = vrot.slane %v945, 7
      %v975 = vsel %vm960, %v973, %v974
      %v976 = vrot.slane %v946, 7
      %v977 = vrot.slane %v947, 7
      %v978 = vsel %vm960, %v976, %v977
      %v991 = vsel %vm960, %v814, %v961
      %v992 = vsel %vm960, %v815, %v964
      %v993 = vsel %vm960, %v816, %v967
      %v994 = vsel %vm960, %v817, %v970
      %v995 = vsel %vm960, %v818, %v973
      %v996 = vsel %vm960, %v819, %v976
      %v997 = vsel %vm862, %v963, %v844
      %v998 = vsel %vm862, %v966, %v845
      %v999 = vsel %vm862, %v969, %v846
      %v1000 = vsel %vm862, %v972, %v847
      %v1001 = vsel %vm862, %v975, %v848
      %v1002 = vsel %vm862, %v978, %v849
      %v1003 = vmul.f32 %v991, 0.11111111
      %v1004 = vmul.f32 %v997, 0.11111111
      %v1005 = vmul.f32 %v992, 0.11111111
      %v1006 = vmul.f32 %v998, 0.11111111
      %v1007 = vmul.f32 %v993, 0.11111111
      %v1008 = vmul.f32 %v999, 0.11111111
      %v1009 = vmul.f32 %v994, 0.11111111
      %v1010 = vmul.f32 %v1000, 0.11111111
      %v1011 = vmul.f32 %v995, 0.11111111
      %v1012 = vmul.f32 %v1001, 0.11111111
      %v1013 = vmul.f32 %v996, 0.11111111
      %v1014 = vmul.f32 %v1002, 0.11111111
      %1027 = vrot.lane.b32.xlu0 %v292, 113
      %v1028 = vpop.permute.xlu0 %1027
      %1029 = vrot.lane.b32.xlu0 %v293, 113
      %v1030 = vpop.permute.xlu0 %1029
      %1031 = vrot.lane.b32.xlu0 %v294, 113
      %v1032 = vpop.permute.xlu0 %1031
      %1033 = vrot.lane.b32.xlu0 %v295, 113
      %v1034 = vpop.permute.xlu0 %1033
      %1035 = vrot.lane.b32.xlu0 %v296, 113
      %v1036 = vpop.permute.xlu0 %1035
      %1037 = vrot.lane.b32.xlu0 %v297, 113
      %v1038 = vpop.permute.xlu0 %1037
      %1039 = vrot.lane.b32.xlu0 %v298, 113
      %v1040 = vpop.permute.xlu0 %1039
      %1041 = vrot.lane.b32.xlu0 %v299, 113
      %v1042 = vpop.permute.xlu0 %1041
      %1043 = vrot.lane.b32.xlu0 %v300, 113
      %v1044 = vpop.permute.xlu0 %1043
      %1045 = vrot.lane.b32.xlu0 %v301, 113
      %v1046 = vpop.permute.xlu0 %1045
      %1047 = vrot.lane.b32.xlu0 %v302, 113
      %v1048 = vpop.permute.xlu0 %1047
      %1049 = vrot.lane.b32.xlu0 %v303, 113
      %v1050 = vpop.permute.xlu0 %1049
      %1063 = vrot.lane.b32.xlu0 %v292, 1
      %v1064 = vpop.permute.xlu0 %1063
      %1065 = vrot.lane.b32.xlu0 %v293, 1
      %v1066 = vpop.permute.xlu0 %1065
      %1067 = vrot.lane.b32.xlu0 %v294, 1
      %v1068 = vpop.permute.xlu0 %1067
      %1069 = vrot.lane.b32.xlu0 %v295, 1
      %v1070 = vpop.permute.xlu0 %1069
      %1071 = vrot.lane.b32.xlu0 %v296, 1
      %v1072 = vpop.permute.xlu0 %1071
      %1073 = vrot.lane.b32.xlu0 %v297, 1
      %v1074 = vpop.permute.xlu0 %1073
      %1075 = vrot.lane.b32.xlu0 %v298, 1
      %v1076 = vpop.permute.xlu0 %1075
      %1077 = vrot.lane.b32.xlu0 %v299, 1
      %v1078 = vpop.permute.xlu0 %1077
      %1079 = vrot.lane.b32.xlu0 %v300, 1
      %v1080 = vpop.permute.xlu0 %1079
      %1081 = vrot.lane.b32.xlu0 %v301, 1
      %v1082 = vpop.permute.xlu0 %1081
      %1083 = vrot.lane.b32.xlu0 %v302, 1
      %v1084 = vpop.permute.xlu0 %1083
      %1085 = vrot.lane.b32.xlu0 %v303, 1
      %v1086 = vpop.permute.xlu0 %1085
      %v1099 = vsel %vm400, %v1028, %v1064
      %v1100 = vsel %vm400, %v1030, %v1066
      %v1101 = vsel %vm400, %v1032, %v1068
      %v1102 = vsel %vm400, %v1034, %v1070
      %v1103 = vsel %vm400, %v1036, %v1072
      %v1104 = vsel %vm400, %v1038, %v1074
      %v1105 = vsel %vm400, %v1040, %v1076
      %v1106 = vsel %vm400, %v1042, %v1078
      %v1107 = vsel %vm400, %v1044, %v1080
      %v1108 = vsel %vm400, %v1046, %v1082
      %v1109 = vsel %vm400, %v1048, %v1084
      %v1110 = vsel %vm400, %v1050, %v1086
      %v1111 = vadd.f32 %v1099, %v292
      %v1112 = vadd.f32 %v1100, %v293
      %v1113 = vadd.f32 %v1101, %v294
      %v1114 = vadd.f32 %v1102, %v295
      %v1115 = vadd.f32 %v1103, %v296
      %v1116 = vadd.f32 %v1104, %v297
      %v1117 = vadd.f32 %v1105, %v298
      %v1118 = vadd.f32 %v1106, %v299
      %v1119 = vadd.f32 %v1107, %v300
      %v1120 = vadd.f32 %v1108, %v301
      %v1121 = vadd.f32 %v1109, %v302
      %v1122 = vadd.f32 %v1110, %v303
      %1123 = vrot.lane.b32.xlu0 %v292, 127
      %v1124 = vpop.permute.xlu0 %1123
      %1125 = vrot.lane.b32.xlu0 %v293, 127
      %v1126 = vpop.permute.xlu0 %1125
      %1127 = vrot.lane.b32.xlu0 %v294, 127
      %v1128 = vpop.permute.xlu0 %1127
      %1129 = vrot.lane.b32.xlu0 %v295, 127
      %v1130 = vpop.permute.xlu0 %1129
      %1131 = vrot.lane.b32.xlu0 %v296, 127
      %v1132 = vpop.permute.xlu0 %1131
      %1133 = vrot.lane.b32.xlu0 %v297, 127
      %v1134 = vpop.permute.xlu0 %1133
      %1135 = vrot.lane.b32.xlu0 %v298, 127
      %v1136 = vpop.permute.xlu0 %1135
      %1137 = vrot.lane.b32.xlu0 %v299, 127
      %v1138 = vpop.permute.xlu0 %1137
      %1139 = vrot.lane.b32.xlu0 %v300, 127
      %v1140 = vpop.permute.xlu0 %1139
      %1141 = vrot.lane.b32.xlu0 %v301, 127
      %v1142 = vpop.permute.xlu0 %1141
      %1143 = vrot.lane.b32.xlu0 %v302, 127
      %v1144 = vpop.permute.xlu0 %1143
      %1145 = vrot.lane.b32.xlu0 %v303, 127
      %v1146 = vpop.permute.xlu0 %1145
      %1159 = vrot.lane.b32.xlu0 %v292, 15
      %v1160 = vpop.permute.xlu0 %1159
      %1161 = vrot.lane.b32.xlu0 %v293, 15
      %v1162 = vpop.permute.xlu0 %1161
      %1163 = vrot.lane.b32.xlu0 %v294, 15
      %v1164 = vpop.permute.xlu0 %1163
      %1165 = vrot.lane.b32.xlu0 %v295, 15
      %v1166 = vpop.permute.xlu0 %1165
      %1167 = vrot.lane.b32.xlu0 %v296, 15
      %v1168 = vpop.permute.xlu0 %1167
      %1169 = vrot.lane.b32.xlu0 %v297, 15
      %v1170 = vpop.permute.xlu0 %1169
      %1171 = vrot.lane.b32.xlu0 %v298, 15
      %v1172 = vpop.permute.xlu0 %1171
      %1173 = vrot.lane.b32.xlu0 %v299, 15
      %v1174 = vpop.permute.xlu0 %1173
      %1175 = vrot.lane.b32.xlu0 %v300, 15
      %v1176 = vpop.permute.xlu0 %1175
      %1177 = vrot.lane.b32.xlu0 %v301, 15
      %v1178 = vpop.permute.xlu0 %1177
      %1179 = vrot.lane.b32.xlu0 %v302, 15
      %v1180 = vpop.permute.xlu0 %1179
      %1181 = vrot.lane.b32.xlu0 %v303, 15
      %v1182 = vpop.permute.xlu0 %1181
      %v1195 = vsel %vm497, %v1124, %v1160
      %v1196 = vsel %vm497, %v1126, %v1162
      %v1197 = vsel %vm497, %v1128, %v1164
      %v1198 = vsel %vm497, %v1130, %v1166
      %v1199 = vsel %vm497, %v1132, %v1168
      %v1200 = vsel %vm497, %v1134, %v1170
      %v1201 = vsel %vm497, %v1136, %v1172
      %v1202 = vsel %vm497, %v1138, %v1174
      %v1203 = vsel %vm497, %v1140, %v1176
      %v1204 = vsel %vm497, %v1142, %v1178
      %v1205 = vsel %vm497, %v1144, %v1180
      %v1206 = vsel %vm497, %v1146, %v1182
      %v1207 = vadd.f32 %v1111, %v1195
      %v1208 = vadd.f32 %v1112, %v1196
      %v1209 = vadd.f32 %v1113, %v1197
      %v1210 = vadd.f32 %v1114, %v1198
      %v1211 = vadd.f32 %v1115, %v1199
      %v1212 = vadd.f32 %v1116, %v1200
      %v1213 = vadd.f32 %v1117, %v1201
      %v1214 = vadd.f32 %v1118, %v1202
      %v1215 = vadd.f32 %v1119, %v1203
      %v1216 = vadd.f32 %v1120, %v1204
      %v1217 = vadd.f32 %v1121, %v1205
      %v1218 = vadd.f32 %v1122, %v1206
      %1219 = vrot.lane.b32.xlu0 %v292, 114
      %v1220 = vpop.permute.xlu0 %1219
      %1221 = vrot.lane.b32.xlu0 %v293, 114
      %v1222 = vpop.permute.xlu0 %1221
      %1223 = vrot.lane.b32.xlu0 %v294, 114
      %v1224 = vpop.permute.xlu0 %1223
      %1225 = vrot.lane.b32.xlu0 %v295, 114
      %v1226 = vpop.permute.xlu0 %1225
      %1227 = vrot.lane.b32.xlu0 %v296, 114
      %v1228 = vpop.permute.xlu0 %1227
      %1229 = vrot.lane.b32.xlu0 %v297, 114
      %v1230 = vpop.permute.xlu0 %1229
      %1231 = vrot.lane.b32.xlu0 %v298, 114
      %v1232 = vpop.permute.xlu0 %1231
      %1233 = vrot.lane.b32.xlu0 %v299, 114
      %v1234 = vpop.permute.xlu0 %1233
      %1235 = vrot.lane.b32.xlu0 %v300, 114
      %v1236 = vpop.permute.xlu0 %1235
      %1237 = vrot.lane.b32.xlu0 %v301, 114
      %v1238 = vpop.permute.xlu0 %1237
      %1239 = vrot.lane.b32.xlu0 %v302, 114
      %v1240 = vpop.permute.xlu0 %1239
      %1241 = vrot.lane.b32.xlu0 %v303, 114
      %v1242 = vpop.permute.xlu0 %1241
      %v1255 = vsub.f32 %v292, %v1220
      %v1256 = vsub.f32 %v293, %v1222
      %v1257 = vsub.f32 %v294, %v1224
      %v1258 = vsub.f32 %v295, %v1226
      %v1259 = vsub.f32 %v296, %v1228
      %v1260 = vsub.f32 %v297, %v1230
      %v1261 = vsub.f32 %v298, %v1232
      %v1262 = vsub.f32 %v299, %v1234
      %v1263 = vsub.f32 %v300, %v1236
      %v1264 = vsub.f32 %v301, %v1238
      %v1265 = vsub.f32 %v302, %v1240
      %v1266 = vsub.f32 %v303, %v1242
      %1267 = vrot.lane.b32.xlu0 %v292, 14
      %v1268 = vpop.permute.xlu0 %1267
      %1269 = vrot.lane.b32.xlu0 %v293, 14
      %v1270 = vpop.permute.xlu0 %1269
      %1271 = vrot.lane.b32.xlu0 %v294, 14
      %v1272 = vpop.permute.xlu0 %1271
      %1273 = vrot.lane.b32.xlu0 %v295, 14
      %v1274 = vpop.permute.xlu0 %1273
      %1275 = vrot.lane.b32.xlu0 %v296, 14
      %v1276 = vpop.permute.xlu0 %1275
      %1277 = vrot.lane.b32.xlu0 %v297, 14
      %v1278 = vpop.permute.xlu0 %1277
      %1279 = vrot.lane.b32.xlu0 %v298, 14
      %v1280 = vpop.permute.xlu0 %1279
      %1281 = vrot.lane.b32.xlu0 %v299, 14
      %v1282 = vpop.permute.xlu0 %1281
      %1283 = vrot.lane.b32.xlu0 %v300, 14
      %v1284 = vpop.permute.xlu0 %1283
      %1285 = vrot.lane.b32.xlu0 %v301, 14
      %v1286 = vpop.permute.xlu0 %1285
      %1287 = vrot.lane.b32.xlu0 %v302, 14
      %v1288 = vpop.permute.xlu0 %1287
      %1289 = vrot.lane.b32.xlu0 %v303, 14
      %v1290 = vpop.permute.xlu0 %1289
      %v1303 = vsub.f32 %v292, %v1268
      %v1304 = vsub.f32 %v293, %v1270
      %v1305 = vsub.f32 %v294, %v1272
      %v1306 = vsub.f32 %v295, %v1274
      %v1307 = vsub.f32 %v296, %v1276
      %v1308 = vsub.f32 %v297, %v1278
      %v1309 = vsub.f32 %v298, %v1280
      %v1310 = vsub.f32 %v299, %v1282
      %v1311 = vsub.f32 %v300, %v1284
      %v1312 = vsub.f32 %v301, %v1286
      %v1313 = vsub.f32 %v302, %v1288
      %v1314 = vsub.f32 %v303, %v1290
      %1316 = vset.pattern.permute.xlu0 1
      %1317 = vperm.xlu0 %1316, %v1255
      %v1318 = vpop.permute.xlu0 %1317
      %1321 = vset.pattern.permute.xlu0 1
      %1322 = vperm.xlu0 %1321, %v1256
      %v1323 = vpop.permute.xlu0 %1322
      %1326 = vset.pattern.permute.xlu0 1
      %1327 = vperm.xlu0 %1326, %v1257
      %v1328 = vpop.permute.xlu0 %1327
      %1331 = vset.pattern.permute.xlu0 1
      %1332 = vperm.xlu0 %1331, %v1258
      %v1333 = vpop.permute.xlu0 %1332
      %1336 = vset.pattern.permute.xlu0 1
      %1337 = vperm.xlu0 %1336, %v1259
      %v1338 = vpop.permute.xlu0 %1337
      %1341 = vset.pattern.permute.xlu0 1
      %1342 = vperm.xlu0 %1341, %v1260
      %v1343 = vpop.permute.xlu0 %1342
      %1346 = vset.pattern.permute.xlu0 1
      %1347 = vperm.xlu0 %1346, %v1261
      %v1348 = vpop.permute.xlu0 %1347
      %1351 = vset.pattern.permute.xlu0 1
      %1352 = vperm.xlu0 %1351, %v1262
      %v1353 = vpop.permute.xlu0 %1352
      %1356 = vset.pattern.permute.xlu0 1
      %1357 = vperm.xlu0 %1356, %v1263
      %v1358 = vpop.permute.xlu0 %1357
      %1361 = vset.pattern.permute.xlu0 1
      %1362 = vperm.xlu0 %1361, %v1264
      %v1363 = vpop.permute.xlu0 %1362
      %1366 = vset.pattern.permute.xlu0 1
      %1367 = vperm.xlu0 %1366, %v1265
      %v1368 = vpop.permute.xlu0 %1367
      %1371 = vset.pattern.permute.xlu0 1
      %1372 = vperm.xlu0 %1371, %v1266
      %v1373 = vpop.permute.xlu0 %1372
      %v1375 = vsel %vm619, %v1318, 0.0
      %v1376 = vsel %vm619, %v1323, 0.0
      %v1377 = vsel %vm619, %v1328, 0.0
      %v1378 = vsel %vm619, %v1333, 0.0
      %v1379 = vsel %vm619, %v1338, 0.0
      %v1380 = vsel %vm619, %v1343, 0.0
      %v1381 = vsel %vm619, %v1348, 0.0
      %v1382 = vsel %vm619, %v1353, 0.0
      %v1383 = vsel %vm619, %v1358, 0.0
      %v1384 = vsel %vm619, %v1363, 0.0
      %v1385 = vsel %vm619, %v1368, 0.0
      %v1386 = vsel %vm619, %v1373, 0.0
      %v1387 = vadd.f32 %v1207, %v1375
      %v1388 = vadd.f32 %v1208, %v1376
      %v1389 = vadd.f32 %v1209, %v1377
      %v1390 = vadd.f32 %v1210, %v1378
      %v1391 = vadd.f32 %v1211, %v1379
      %v1392 = vadd.f32 %v1212, %v1380
      %v1393 = vadd.f32 %v1213, %v1381
      %v1394 = vadd.f32 %v1214, %v1382
      %v1395 = vadd.f32 %v1215, %v1383
      %v1396 = vadd.f32 %v1216, %v1384
      %v1397 = vadd.f32 %v1217, %v1385
      %v1398 = vadd.f32 %v1218, %v1386
      %1400 = vset.pattern.permute.xlu0 14
      %1401 = vperm.xlu0 %1400, %v1303
      %v1402 = vpop.permute.xlu0 %1401
      %1405 = vset.pattern.permute.xlu0 14
      %1406 = vperm.xlu0 %1405, %v1304
      %v1407 = vpop.permute.xlu0 %1406
      %1410 = vset.pattern.permute.xlu0 14
      %1411 = vperm.xlu0 %1410, %v1305
      %v1412 = vpop.permute.xlu0 %1411
      %1415 = vset.pattern.permute.xlu0 14
      %1416 = vperm.xlu0 %1415, %v1306
      %v1417 = vpop.permute.xlu0 %1416
      %1420 = vset.pattern.permute.xlu0 14
      %1421 = vperm.xlu0 %1420, %v1307
      %v1422 = vpop.permute.xlu0 %1421
      %1425 = vset.pattern.permute.xlu0 14
      %1426 = vperm.xlu0 %1425, %v1308
      %v1427 = vpop.permute.xlu0 %1426
      %1430 = vset.pattern.permute.xlu0 14
      %1431 = vperm.xlu0 %1430, %v1309
      %v1432 = vpop.permute.xlu0 %1431
      %1435 = vset.pattern.permute.xlu0 14
      %1436 = vperm.xlu0 %1435, %v1310
      %v1437 = vpop.permute.xlu0 %1436
      %1440 = vset.pattern.permute.xlu0 14
      %1441 = vperm.xlu0 %1440, %v1311
      %v1442 = vpop.permute.xlu0 %1441
      %1445 = vset.pattern.permute.xlu0 14
      %1446 = vperm.xlu0 %1445, %v1312
      %v1447 = vpop.permute.xlu0 %1446
      %1450 = vset.pattern.permute.xlu0 14
      %1451 = vperm.xlu0 %1450, %v1313
      %v1452 = vpop.permute.xlu0 %1451
      %1455 = vset.pattern.permute.xlu0 14
      %1456 = vperm.xlu0 %1455, %v1314
      %v1457 = vpop.permute.xlu0 %1456
      %v1459 = vsel %vm705, %v1402, 0.0
      %v1460 = vsel %vm705, %v1407, 0.0
      %v1461 = vsel %vm705, %v1412, 0.0
      %v1462 = vsel %vm705, %v1417, 0.0
      %v1463 = vsel %vm705, %v1422, 0.0
      %v1464 = vsel %vm705, %v1427, 0.0
      %v1465 = vsel %vm705, %v1432, 0.0
      %v1466 = vsel %vm705, %v1437, 0.0
      %v1467 = vsel %vm705, %v1442, 0.0
      %v1468 = vsel %vm705, %v1447, 0.0
      %v1469 = vsel %vm705, %v1452, 0.0
      %v1470 = vsel %vm705, %v1457, 0.0
      %v1471 = vadd.f32 %v1387, %v1459
      %v1472 = vadd.f32 %v1388, %v1460
      %v1473 = vadd.f32 %v1389, %v1461
      %v1474 = vadd.f32 %v1390, %v1462
      %v1475 = vadd.f32 %v1391, %v1463
      %v1476 = vadd.f32 %v1392, %v1464
      %v1477 = vadd.f32 %v1393, %v1465
      %v1478 = vadd.f32 %v1394, %v1466
      %v1479 = vadd.f32 %v1395, %v1467
      %v1480 = vadd.f32 %v1396, %v1468
      %v1481 = vadd.f32 %v1397, %v1469
      %v1482 = vadd.f32 %v1398, %v1470
      %v1483 = vmul.f32 %v1471, 2.0
      %v1484 = vmul.f32 %v1473, 2.0
      %v1485 = vmul.f32 %v1475, 2.0
      %v1486 = vmul.f32 %v1477, 2.0
      %v1487 = vmul.f32 %v1479, 2.0
      %v1488 = vmul.f32 %v1481, 2.0
      %v1495 = vrot.slane %v1483, 1
      %v1496 = vrot.slane %v1484, 1
      %v1497 = vrot.slane %v1485, 1
      %v1498 = vrot.slane %v1486, 1
      %v1499 = vrot.slane %v1487, 1
      %v1500 = vrot.slane %v1488, 1
      %v1507 = vadd.f32 %v1471, %v1495
      %v1508 = vadd.f32 %v1473, %v1496
      %v1509 = vadd.f32 %v1475, %v1497
      %v1510 = vadd.f32 %v1477, %v1498
      %v1511 = vadd.f32 %v1479, %v1499
      %v1512 = vadd.f32 %v1481, %v1500
      %v1513 = vmul.f32 %v1472, 2.0
      %v1514 = vmul.f32 %v1474, 2.0
      %v1515 = vmul.f32 %v1476, 2.0
      %v1516 = vmul.f32 %v1478, 2.0
      %v1517 = vmul.f32 %v1480, 2.0
      %v1518 = vmul.f32 %v1482, 2.0
      %v1525 = vrot.slane %v1513, 7
      %v1526 = vrot.slane %v1514, 7
      %v1527 = vrot.slane %v1515, 7
      %v1528 = vrot.slane %v1516, 7
      %v1529 = vrot.slane %v1517, 7
      %v1530 = vrot.slane %v1518, 7
      %v1537 = vadd.f32 %v1472, %v1525
      %v1538 = vadd.f32 %v1474, %v1526
      %v1539 = vadd.f32 %v1476, %v1527
      %v1540 = vadd.f32 %v1478, %v1528
      %v1541 = vadd.f32 %v1480, %v1529
      %v1542 = vadd.f32 %v1482, %v1530
      %v1555 = vrot.slane %v1471, 1
      %v1556 = vrot.slane %v1472, 1
      %v1557 = vsel %vm862, %v1555, %v1556
      %v1558 = vrot.slane %v1473, 1
      %v1559 = vrot.slane %v1474, 1
      %v1560 = vsel %vm862, %v1558, %v1559
      %v1561 = vrot.slane %v1475, 1
      %v1562 = vrot.slane %v1476, 1
      %v1563 = vsel %vm862, %v1561, %v1562
      %v1564 = vrot.slane %v1477, 1
      %v1565 = vrot.slane %v1478, 1
      %v1566 = vsel %vm862, %v1564, %v1565
      %v1567 = vrot.slane %v1479, 1
      %v1568 = vrot.slane %v1480, 1
      %v1569 = vsel %vm862, %v1567, %v1568
      %v1570 = vrot.slane %v1481, 1
      %v1571 = vrot.slane %v1482, 1
      %v1572 = vsel %vm862, %v1570, %v1571
      %v1585 = vadd.f32 %v1471, %v1557
      %v1586 = vadd.f32 %v1472, %v1556
      %v1587 = vadd.f32 %v1473, %v1560
      %v1588 = vadd.f32 %v1474, %v1559
      %v1589 = vadd.f32 %v1475, %v1563
      %v1590 = vadd.f32 %v1476, %v1562
      %v1591 = vadd.f32 %v1477, %v1566
      %v1592 = vadd.f32 %v1478, %v1565
      %v1593 = vadd.f32 %v1479, %v1569
      %v1594 = vadd.f32 %v1480, %v1568
      %v1595 = vadd.f32 %v1481, %v1572
      %v1596 = vadd.f32 %v1482, %v1571
      %v1597 = vrot.slane %v1471, 2
      %v1598 = vrot.slane %v1472, 2
      %v1599 = vsel %vm905, %v1597, %v1598
      %v1600 = vrot.slane %v1473, 2
      %v1601 = vrot.slane %v1474, 2
      %v1602 = vsel %vm905, %v1600, %v1601
      %v1603 = vrot.slane %v1475, 2
      %v1604 = vrot.slane %v1476, 2
      %v1605 = vsel %vm905, %v1603, %v1604
      %v1606 = vrot.slane %v1477, 2
      %v1607 = vrot.slane %v1478, 2
      %v1608 = vsel %vm905, %v1606, %v1607
      %v1609 = vrot.slane %v1479, 2
      %v1610 = vrot.slane %v1480, 2
      %v1611 = vsel %vm905, %v1609, %v1610
      %v1612 = vrot.slane %v1481, 2
      %v1613 = vrot.slane %v1482, 2
      %v1614 = vsel %vm905, %v1612, %v1613
      %v1627 = vadd.f32 %v1585, %v1599
      %v1628 = vadd.f32 %v1586, %v1598
      %v1629 = vadd.f32 %v1587, %v1602
      %v1630 = vadd.f32 %v1588, %v1601
      %v1631 = vadd.f32 %v1589, %v1605
      %v1632 = vadd.f32 %v1590, %v1604
      %v1633 = vadd.f32 %v1591, %v1608
      %v1634 = vadd.f32 %v1592, %v1607
      %v1635 = vadd.f32 %v1593, %v1611
      %v1636 = vadd.f32 %v1594, %v1610
      %v1637 = vadd.f32 %v1595, %v1614
      %v1638 = vadd.f32 %v1596, %v1613
      %v1651 = vrot.slane %v1627, 7
      %v1652 = vrot.slane %v1628, 7
      %v1653 = vsel %vm960, %v1651, %v1652
      %v1654 = vrot.slane %v1629, 7
      %v1655 = vrot.slane %v1630, 7
      %v1656 = vsel %vm960, %v1654, %v1655
      %v1657 = vrot.slane %v1631, 7
      %v1658 = vrot.slane %v1632, 7
      %v1659 = vsel %vm960, %v1657, %v1658
      %v1660 = vrot.slane %v1633, 7
      %v1661 = vrot.slane %v1634, 7
      %v1662 = vsel %vm960, %v1660, %v1661
      %v1663 = vrot.slane %v1635, 7
      %v1664 = vrot.slane %v1636, 7
      %v1665 = vsel %vm960, %v1663, %v1664
      %v1666 = vrot.slane %v1637, 7
      %v1667 = vrot.slane %v1638, 7
      %v1668 = vsel %vm960, %v1666, %v1667
      %v1681 = vsel %vm960, %v1507, %v1651
      %v1682 = vsel %vm960, %v1508, %v1654
      %v1683 = vsel %vm960, %v1509, %v1657
      %v1684 = vsel %vm960, %v1510, %v1660
      %v1685 = vsel %vm960, %v1511, %v1663
      %v1686 = vsel %vm960, %v1512, %v1666
      %v1687 = vsel %vm862, %v1653, %v1537
      %v1688 = vsel %vm862, %v1656, %v1538
      %v1689 = vsel %vm862, %v1659, %v1539
      %v1690 = vsel %vm862, %v1662, %v1540
      %v1691 = vsel %vm862, %v1665, %v1541
      %v1692 = vsel %vm862, %v1668, %v1542
      %v1693 = vmul.f32 %v1681, 0.11111111
      %v1694 = vmul.f32 %v1687, 0.11111111
      %v1695 = vmul.f32 %v1682, 0.11111111
      %v1696 = vmul.f32 %v1688, 0.11111111
      %v1697 = vmul.f32 %v1683, 0.11111111
      %v1698 = vmul.f32 %v1689, 0.11111111
      %v1699 = vmul.f32 %v1684, 0.11111111
      %v1700 = vmul.f32 %v1690, 0.11111111
      %v1701 = vmul.f32 %v1685, 0.11111111
      %v1702 = vmul.f32 %v1691, 0.11111111
      %v1703 = vmul.f32 %v1686, 0.11111111
      %v1704 = vmul.f32 %v1692, 0.11111111
      %v1705 = vmul.f32 %v268, %v268
      %v1706 = vmul.f32 %v269, %v269
      %v1707 = vmul.f32 %v270, %v270
      %v1708 = vmul.f32 %v271, %v271
      %v1709 = vmul.f32 %v272, %v272
      %v1710 = vmul.f32 %v273, %v273
      %v1711 = vmul.f32 %v274, %v274
      %v1712 = vmul.f32 %v275, %v275
      %v1713 = vmul.f32 %v276, %v276
      %v1714 = vmul.f32 %v277, %v277
      %v1715 = vmul.f32 %v278, %v278
      %v1716 = vmul.f32 %v279, %v279
      %v1717 = vmul.f32 %v292, %v292
      %v1718 = vmul.f32 %v293, %v293
      %v1719 = vmul.f32 %v294, %v294
      %v1720 = vmul.f32 %v295, %v295
      %v1721 = vmul.f32 %v296, %v296
      %v1722 = vmul.f32 %v297, %v297
      %v1723 = vmul.f32 %v298, %v298
      %v1724 = vmul.f32 %v299, %v299
      %v1725 = vmul.f32 %v300, %v300
      %v1726 = vmul.f32 %v301, %v301
      %v1727 = vmul.f32 %v302, %v302
      %v1728 = vmul.f32 %v303, %v303
      %v1729 = vadd.f32 %v1705, %v1717
      %v1730 = vadd.f32 %v1706, %v1718
      %v1731 = vadd.f32 %v1707, %v1719
      %v1732 = vadd.f32 %v1708, %v1720
      %v1733 = vadd.f32 %v1709, %v1721
      %v1734 = vadd.f32 %v1710, %v1722
      %v1735 = vadd.f32 %v1711, %v1723
      %v1736 = vadd.f32 %v1712, %v1724
      %v1737 = vadd.f32 %v1713, %v1725
      %v1738 = vadd.f32 %v1714, %v1726
      %v1739 = vadd.f32 %v1715, %v1727
      %v1740 = vadd.f32 %v1716, %v1728
      %1753 = vrot.lane.b32.xlu0 %v1729, 113
      %v1754 = vpop.permute.xlu0 %1753
      %1755 = vrot.lane.b32.xlu0 %v1730, 113
      %v1756 = vpop.permute.xlu0 %1755
      %1757 = vrot.lane.b32.xlu0 %v1731, 113
      %v1758 = vpop.permute.xlu0 %1757
      %1759 = vrot.lane.b32.xlu0 %v1732, 113
      %v1760 = vpop.permute.xlu0 %1759
      %1761 = vrot.lane.b32.xlu0 %v1733, 113
      %v1762 = vpop.permute.xlu0 %1761
      %1763 = vrot.lane.b32.xlu0 %v1734, 113
      %v1764 = vpop.permute.xlu0 %1763
      %1765 = vrot.lane.b32.xlu0 %v1735, 113
      %v1766 = vpop.permute.xlu0 %1765
      %1767 = vrot.lane.b32.xlu0 %v1736, 113
      %v1768 = vpop.permute.xlu0 %1767
      %1769 = vrot.lane.b32.xlu0 %v1737, 113
      %v1770 = vpop.permute.xlu0 %1769
      %1771 = vrot.lane.b32.xlu0 %v1738, 113
      %v1772 = vpop.permute.xlu0 %1771
      %1773 = vrot.lane.b32.xlu0 %v1739, 113
      %v1774 = vpop.permute.xlu0 %1773
      %1775 = vrot.lane.b32.xlu0 %v1740, 113
      %v1776 = vpop.permute.xlu0 %1775
      %1789 = vrot.lane.b32.xlu0 %v1729, 1
      %v1790 = vpop.permute.xlu0 %1789
      %1791 = vrot.lane.b32.xlu0 %v1730, 1
      %v1792 = vpop.permute.xlu0 %1791
      %1793 = vrot.lane.b32.xlu0 %v1731, 1
      %v1794 = vpop.permute.xlu0 %1793
      %1795 = vrot.lane.b32.xlu0 %v1732, 1
      %v1796 = vpop.permute.xlu0 %1795
      %1797 = vrot.lane.b32.xlu0 %v1733, 1
      %v1798 = vpop.permute.xlu0 %1797
      %1799 = vrot.lane.b32.xlu0 %v1734, 1
      %v1800 = vpop.permute.xlu0 %1799
      %1801 = vrot.lane.b32.xlu0 %v1735, 1
      %v1802 = vpop.permute.xlu0 %1801
      %1803 = vrot.lane.b32.xlu0 %v1736, 1
      %v1804 = vpop.permute.xlu0 %1803
      %1805 = vrot.lane.b32.xlu0 %v1737, 1
      %v1806 = vpop.permute.xlu0 %1805
      %1807 = vrot.lane.b32.xlu0 %v1738, 1
      %v1808 = vpop.permute.xlu0 %1807
      %1809 = vrot.lane.b32.xlu0 %v1739, 1
      %v1810 = vpop.permute.xlu0 %1809
      %1811 = vrot.lane.b32.xlu0 %v1740, 1
      %v1812 = vpop.permute.xlu0 %1811
      %v1825 = vsel %vm400, %v1754, %v1790
      %v1826 = vsel %vm400, %v1756, %v1792
      %v1827 = vsel %vm400, %v1758, %v1794
      %v1828 = vsel %vm400, %v1760, %v1796
      %v1829 = vsel %vm400, %v1762, %v1798
      %v1830 = vsel %vm400, %v1764, %v1800
      %v1831 = vsel %vm400, %v1766, %v1802
      %v1832 = vsel %vm400, %v1768, %v1804
      %v1833 = vsel %vm400, %v1770, %v1806
      %v1834 = vsel %vm400, %v1772, %v1808
      %v1835 = vsel %vm400, %v1774, %v1810
      %v1836 = vsel %vm400, %v1776, %v1812
      %v1837 = vadd.f32 %v1825, %v1729
      %v1838 = vadd.f32 %v1826, %v1730
      %v1839 = vadd.f32 %v1827, %v1731
      %v1840 = vadd.f32 %v1828, %v1732
      %v1841 = vadd.f32 %v1829, %v1733
      %v1842 = vadd.f32 %v1830, %v1734
      %v1843 = vadd.f32 %v1831, %v1735
      %v1844 = vadd.f32 %v1832, %v1736
      %v1845 = vadd.f32 %v1833, %v1737
      %v1846 = vadd.f32 %v1834, %v1738
      %v1847 = vadd.f32 %v1835, %v1739
      %v1848 = vadd.f32 %v1836, %v1740
      %1849 = vrot.lane.b32.xlu0 %v1729, 127
      %v1850 = vpop.permute.xlu0 %1849
      %1851 = vrot.lane.b32.xlu0 %v1730, 127
      %v1852 = vpop.permute.xlu0 %1851
      %1853 = vrot.lane.b32.xlu0 %v1731, 127
      %v1854 = vpop.permute.xlu0 %1853
      %1855 = vrot.lane.b32.xlu0 %v1732, 127
      %v1856 = vpop.permute.xlu0 %1855
      %1857 = vrot.lane.b32.xlu0 %v1733, 127
      %v1858 = vpop.permute.xlu0 %1857
      %1859 = vrot.lane.b32.xlu0 %v1734, 127
      %v1860 = vpop.permute.xlu0 %1859
      %1861 = vrot.lane.b32.xlu0 %v1735, 127
      %v1862 = vpop.permute.xlu0 %1861
      %1863 = vrot.lane.b32.xlu0 %v1736, 127
      %v1864 = vpop.permute.xlu0 %1863
      %1865 = vrot.lane.b32.xlu0 %v1737, 127
      %v1866 = vpop.permute.xlu0 %1865
      %1867 = vrot.lane.b32.xlu0 %v1738, 127
      %v1868 = vpop.permute.xlu0 %1867
      %1869 = vrot.lane.b32.xlu0 %v1739, 127
      %v1870 = vpop.permute.xlu0 %1869
      %1871 = vrot.lane.b32.xlu0 %v1740, 127
      %v1872 = vpop.permute.xlu0 %1871
      %1885 = vrot.lane.b32.xlu0 %v1729, 15
      %v1886 = vpop.permute.xlu0 %1885
      %1887 = vrot.lane.b32.xlu0 %v1730, 15
      %v1888 = vpop.permute.xlu0 %1887
      %1889 = vrot.lane.b32.xlu0 %v1731, 15
      %v1890 = vpop.permute.xlu0 %1889
      %1891 = vrot.lane.b32.xlu0 %v1732, 15
      %v1892 = vpop.permute.xlu0 %1891
      %1893 = vrot.lane.b32.xlu0 %v1733, 15
      %v1894 = vpop.permute.xlu0 %1893
      %1895 = vrot.lane.b32.xlu0 %v1734, 15
      %v1896 = vpop.permute.xlu0 %1895
      %1897 = vrot.lane.b32.xlu0 %v1735, 15
      %v1898 = vpop.permute.xlu0 %1897
      %1899 = vrot.lane.b32.xlu0 %v1736, 15
      %v1900 = vpop.permute.xlu0 %1899
      %1901 = vrot.lane.b32.xlu0 %v1737, 15
      %v1902 = vpop.permute.xlu0 %1901
      %1903 = vrot.lane.b32.xlu0 %v1738, 15
      %v1904 = vpop.permute.xlu0 %1903
      %1905 = vrot.lane.b32.xlu0 %v1739, 15
      %v1906 = vpop.permute.xlu0 %1905
      %1907 = vrot.lane.b32.xlu0 %v1740, 15
      %v1908 = vpop.permute.xlu0 %1907
      %v1921 = vsel %vm497, %v1850, %v1886
      %v1922 = vsel %vm497, %v1852, %v1888
      %v1923 = vsel %vm497, %v1854, %v1890
      %v1924 = vsel %vm497, %v1856, %v1892
      %v1925 = vsel %vm497, %v1858, %v1894
      %v1926 = vsel %vm497, %v1860, %v1896
      %v1927 = vsel %vm497, %v1862, %v1898
      %v1928 = vsel %vm497, %v1864, %v1900
      %v1929 = vsel %vm497, %v1866, %v1902
      %v1930 = vsel %vm497, %v1868, %v1904
      %v1931 = vsel %vm497, %v1870, %v1906
      %v1932 = vsel %vm497, %v1872, %v1908
      %v1933 = vadd.f32 %v1837, %v1921
      %v1934 = vadd.f32 %v1838, %v1922
      %v1935 = vadd.f32 %v1839, %v1923
      %v1936 = vadd.f32 %v1840, %v1924
      %v1937 = vadd.f32 %v1841, %v1925
      %v1938 = vadd.f32 %v1842, %v1926
      %v1939 = vadd.f32 %v1843, %v1927
      %v1940 = vadd.f32 %v1844, %v1928
      %v1941 = vadd.f32 %v1845, %v1929
      %v1942 = vadd.f32 %v1846, %v1930
      %v1943 = vadd.f32 %v1847, %v1931
      %v1944 = vadd.f32 %v1848, %v1932
      %1945 = vrot.lane.b32.xlu0 %v1729, 114
      %v1946 = vpop.permute.xlu0 %1945
      %1947 = vrot.lane.b32.xlu0 %v1730, 114
      %v1948 = vpop.permute.xlu0 %1947
      %1949 = vrot.lane.b32.xlu0 %v1731, 114
      %v1950 = vpop.permute.xlu0 %1949
      %1951 = vrot.lane.b32.xlu0 %v1732, 114
      %v1952 = vpop.permute.xlu0 %1951
      %1953 = vrot.lane.b32.xlu0 %v1733, 114
      %v1954 = vpop.permute.xlu0 %1953
      %1955 = vrot.lane.b32.xlu0 %v1734, 114
      %v1956 = vpop.permute.xlu0 %1955
      %1957 = vrot.lane.b32.xlu0 %v1735, 114
      %v1958 = vpop.permute.xlu0 %1957
      %1959 = vrot.lane.b32.xlu0 %v1736, 114
      %v1960 = vpop.permute.xlu0 %1959
      %1961 = vrot.lane.b32.xlu0 %v1737, 114
      %v1962 = vpop.permute.xlu0 %1961
      %1963 = vrot.lane.b32.xlu0 %v1738, 114
      %v1964 = vpop.permute.xlu0 %1963
      %1965 = vrot.lane.b32.xlu0 %v1739, 114
      %v1966 = vpop.permute.xlu0 %1965
      %1967 = vrot.lane.b32.xlu0 %v1740, 114
      %v1968 = vpop.permute.xlu0 %1967
      %v1981 = vsub.f32 %v1729, %v1946
      %v1982 = vsub.f32 %v1730, %v1948
      %v1983 = vsub.f32 %v1731, %v1950
      %v1984 = vsub.f32 %v1732, %v1952
      %v1985 = vsub.f32 %v1733, %v1954
      %v1986 = vsub.f32 %v1734, %v1956
      %v1987 = vsub.f32 %v1735, %v1958
      %v1988 = vsub.f32 %v1736, %v1960
      %v1989 = vsub.f32 %v1737, %v1962
      %v1990 = vsub.f32 %v1738, %v1964
      %v1991 = vsub.f32 %v1739, %v1966
      %v1992 = vsub.f32 %v1740, %v1968
      %1993 = vrot.lane.b32.xlu0 %v1729, 14
      %v1994 = vpop.permute.xlu0 %1993
      %1995 = vrot.lane.b32.xlu0 %v1730, 14
      %v1996 = vpop.permute.xlu0 %1995
      %1997 = vrot.lane.b32.xlu0 %v1731, 14
      %v1998 = vpop.permute.xlu0 %1997
      %1999 = vrot.lane.b32.xlu0 %v1732, 14
      %v2000 = vpop.permute.xlu0 %1999
      %2001 = vrot.lane.b32.xlu0 %v1733, 14
      %v2002 = vpop.permute.xlu0 %2001
      %2003 = vrot.lane.b32.xlu0 %v1734, 14
      %v2004 = vpop.permute.xlu0 %2003
      %2005 = vrot.lane.b32.xlu0 %v1735, 14
      %v2006 = vpop.permute.xlu0 %2005
      %2007 = vrot.lane.b32.xlu0 %v1736, 14
      %v2008 = vpop.permute.xlu0 %2007
      %2009 = vrot.lane.b32.xlu0 %v1737, 14
      %v2010 = vpop.permute.xlu0 %2009
      %2011 = vrot.lane.b32.xlu0 %v1738, 14
      %v2012 = vpop.permute.xlu0 %2011
      %2013 = vrot.lane.b32.xlu0 %v1739, 14
      %v2014 = vpop.permute.xlu0 %2013
      %2015 = vrot.lane.b32.xlu0 %v1740, 14
      %v2016 = vpop.permute.xlu0 %2015
      %v2029 = vsub.f32 %v1729, %v1994
      %v2030 = vsub.f32 %v1730, %v1996
      %v2031 = vsub.f32 %v1731, %v1998
      %v2032 = vsub.f32 %v1732, %v2000
      %v2033 = vsub.f32 %v1733, %v2002
      %v2034 = vsub.f32 %v1734, %v2004
      %v2035 = vsub.f32 %v1735, %v2006
      %v2036 = vsub.f32 %v1736, %v2008
      %v2037 = vsub.f32 %v1737, %v2010
      %v2038 = vsub.f32 %v1738, %v2012
      %v2039 = vsub.f32 %v1739, %v2014
      %v2040 = vsub.f32 %v1740, %v2016
      %2042 = vset.pattern.permute.xlu0 1
      %2043 = vperm.xlu0 %2042, %v1981
      %v2044 = vpop.permute.xlu0 %2043
      %2047 = vset.pattern.permute.xlu0 1
      %2048 = vperm.xlu0 %2047, %v1982
      %v2049 = vpop.permute.xlu0 %2048
      %2052 = vset.pattern.permute.xlu0 1
      %2053 = vperm.xlu0 %2052, %v1983
      %v2054 = vpop.permute.xlu0 %2053
      %2057 = vset.pattern.permute.xlu0 1
      %2058 = vperm.xlu0 %2057, %v1984
      %v2059 = vpop.permute.xlu0 %2058
      %2062 = vset.pattern.permute.xlu0 1
      %2063 = vperm.xlu0 %2062, %v1985
      %v2064 = vpop.permute.xlu0 %2063
      %2067 = vset.pattern.permute.xlu0 1
      %2068 = vperm.xlu0 %2067, %v1986
      %v2069 = vpop.permute.xlu0 %2068
      %2072 = vset.pattern.permute.xlu0 1
      %2073 = vperm.xlu0 %2072, %v1987
      %v2074 = vpop.permute.xlu0 %2073
      %2077 = vset.pattern.permute.xlu0 1
      %2078 = vperm.xlu0 %2077, %v1988
      %v2079 = vpop.permute.xlu0 %2078
      %2082 = vset.pattern.permute.xlu0 1
      %2083 = vperm.xlu0 %2082, %v1989
      %v2084 = vpop.permute.xlu0 %2083
      %2087 = vset.pattern.permute.xlu0 1
      %2088 = vperm.xlu0 %2087, %v1990
      %v2089 = vpop.permute.xlu0 %2088
      %2092 = vset.pattern.permute.xlu0 1
      %2093 = vperm.xlu0 %2092, %v1991
      %v2094 = vpop.permute.xlu0 %2093
      %2097 = vset.pattern.permute.xlu0 1
      %2098 = vperm.xlu0 %2097, %v1992
      %v2099 = vpop.permute.xlu0 %2098
      %v2101 = vsel %vm619, %v2044, 0.0
      %v2102 = vsel %vm619, %v2049, 0.0
      %v2103 = vsel %vm619, %v2054, 0.0
      %v2104 = vsel %vm619, %v2059, 0.0
      %v2105 = vsel %vm619, %v2064, 0.0
      %v2106 = vsel %vm619, %v2069, 0.0
      %v2107 = vsel %vm619, %v2074, 0.0
      %v2108 = vsel %vm619, %v2079, 0.0
      %v2109 = vsel %vm619, %v2084, 0.0
      %v2110 = vsel %vm619, %v2089, 0.0
      %v2111 = vsel %vm619, %v2094, 0.0
      %v2112 = vsel %vm619, %v2099, 0.0
      %v2113 = vadd.f32 %v1933, %v2101
      %v2114 = vadd.f32 %v1934, %v2102
      %v2115 = vadd.f32 %v1935, %v2103
      %v2116 = vadd.f32 %v1936, %v2104
      %v2117 = vadd.f32 %v1937, %v2105
      %v2118 = vadd.f32 %v1938, %v2106
      %v2119 = vadd.f32 %v1939, %v2107
      %v2120 = vadd.f32 %v1940, %v2108
      %v2121 = vadd.f32 %v1941, %v2109
      %v2122 = vadd.f32 %v1942, %v2110
      %v2123 = vadd.f32 %v1943, %v2111
      %v2124 = vadd.f32 %v1944, %v2112
      %2126 = vset.pattern.permute.xlu0 14
      %2127 = vperm.xlu0 %2126, %v2029
      %v2128 = vpop.permute.xlu0 %2127
      %2131 = vset.pattern.permute.xlu0 14
      %2132 = vperm.xlu0 %2131, %v2030
      %v2133 = vpop.permute.xlu0 %2132
      %2136 = vset.pattern.permute.xlu0 14
      %2137 = vperm.xlu0 %2136, %v2031
      %v2138 = vpop.permute.xlu0 %2137
      %2141 = vset.pattern.permute.xlu0 14
      %2142 = vperm.xlu0 %2141, %v2032
      %v2143 = vpop.permute.xlu0 %2142
      %2146 = vset.pattern.permute.xlu0 14
      %2147 = vperm.xlu0 %2146, %v2033
      %v2148 = vpop.permute.xlu0 %2147
      %2151 = vset.pattern.permute.xlu0 14
      %2152 = vperm.xlu0 %2151, %v2034
      %v2153 = vpop.permute.xlu0 %2152
      %2156 = vset.pattern.permute.xlu0 14
      %2157 = vperm.xlu0 %2156, %v2035
      %v2158 = vpop.permute.xlu0 %2157
      %2161 = vset.pattern.permute.xlu0 14
      %2162 = vperm.xlu0 %2161, %v2036
      %v2163 = vpop.permute.xlu0 %2162
      %2166 = vset.pattern.permute.xlu0 14
      %2167 = vperm.xlu0 %2166, %v2037
      %v2168 = vpop.permute.xlu0 %2167
      %2171 = vset.pattern.permute.xlu0 14
      %2172 = vperm.xlu0 %2171, %v2038
      %v2173 = vpop.permute.xlu0 %2172
      %2176 = vset.pattern.permute.xlu0 14
      %2177 = vperm.xlu0 %2176, %v2039
      %v2178 = vpop.permute.xlu0 %2177
      %2181 = vset.pattern.permute.xlu0 14
      %2182 = vperm.xlu0 %2181, %v2040
      %v2183 = vpop.permute.xlu0 %2182
      %v2185 = vsel %vm705, %v2128, 0.0
      %v2186 = vsel %vm705, %v2133, 0.0
      %v2187 = vsel %vm705, %v2138, 0.0
      %v2188 = vsel %vm705, %v2143, 0.0
      %v2189 = vsel %vm705, %v2148, 0.0
      %v2190 = vsel %vm705, %v2153, 0.0
      %v2191 = vsel %vm705, %v2158, 0.0
      %v2192 = vsel %vm705, %v2163, 0.0
      %v2193 = vsel %vm705, %v2168, 0.0
      %v2194 = vsel %vm705, %v2173, 0.0
      %v2195 = vsel %vm705, %v2178, 0.0
      %v2196 = vsel %vm705, %v2183, 0.0
      %v2197 = vadd.f32 %v2113, %v2185
      %v2198 = vadd.f32 %v2114, %v2186
      %v2199 = vadd.f32 %v2115, %v2187
      %v2200 = vadd.f32 %v2116, %v2188
      %v2201 = vadd.f32 %v2117, %v2189
      %v2202 = vadd.f32 %v2118, %v2190
      %v2203 = vadd.f32 %v2119, %v2191
      %v2204 = vadd.f32 %v2120, %v2192
      %v2205 = vadd.f32 %v2121, %v2193
      %v2206 = vadd.f32 %v2122, %v2194
      %v2207 = vadd.f32 %v2123, %v2195
      %v2208 = vadd.f32 %v2124, %v2196
      %v2209 = vmul.f32 %v2197, 2.0
      %v2210 = vmul.f32 %v2199, 2.0
      %v2211 = vmul.f32 %v2201, 2.0
      %v2212 = vmul.f32 %v2203, 2.0
      %v2213 = vmul.f32 %v2205, 2.0
      %v2214 = vmul.f32 %v2207, 2.0
      %v2221 = vrot.slane %v2209, 1
      %v2222 = vrot.slane %v2210, 1
      %v2223 = vrot.slane %v2211, 1
      %v2224 = vrot.slane %v2212, 1
      %v2225 = vrot.slane %v2213, 1
      %v2226 = vrot.slane %v2214, 1
      %v2233 = vadd.f32 %v2197, %v2221
      %v2234 = vadd.f32 %v2199, %v2222
      %v2235 = vadd.f32 %v2201, %v2223
      %v2236 = vadd.f32 %v2203, %v2224
      %v2237 = vadd.f32 %v2205, %v2225
      %v2238 = vadd.f32 %v2207, %v2226
      %v2239 = vmul.f32 %v2198, 2.0
      %v2240 = vmul.f32 %v2200, 2.0
      %v2241 = vmul.f32 %v2202, 2.0
      %v2242 = vmul.f32 %v2204, 2.0
      %v2243 = vmul.f32 %v2206, 2.0
      %v2244 = vmul.f32 %v2208, 2.0
      %v2251 = vrot.slane %v2239, 7
      %v2252 = vrot.slane %v2240, 7
      %v2253 = vrot.slane %v2241, 7
      %v2254 = vrot.slane %v2242, 7
      %v2255 = vrot.slane %v2243, 7
      %v2256 = vrot.slane %v2244, 7
      %v2263 = vadd.f32 %v2198, %v2251
      %v2264 = vadd.f32 %v2200, %v2252
      %v2265 = vadd.f32 %v2202, %v2253
      %v2266 = vadd.f32 %v2204, %v2254
      %v2267 = vadd.f32 %v2206, %v2255
      %v2268 = vadd.f32 %v2208, %v2256
      %v2281 = vrot.slane %v2197, 1
      %v2282 = vrot.slane %v2198, 1
      %v2283 = vsel %vm862, %v2281, %v2282
      %v2284 = vrot.slane %v2199, 1
      %v2285 = vrot.slane %v2200, 1
      %v2286 = vsel %vm862, %v2284, %v2285
      %v2287 = vrot.slane %v2201, 1
      %v2288 = vrot.slane %v2202, 1
      %v2289 = vsel %vm862, %v2287, %v2288
      %v2290 = vrot.slane %v2203, 1
      %v2291 = vrot.slane %v2204, 1
      %v2292 = vsel %vm862, %v2290, %v2291
      %v2293 = vrot.slane %v2205, 1
      %v2294 = vrot.slane %v2206, 1
      %v2295 = vsel %vm862, %v2293, %v2294
      %v2296 = vrot.slane %v2207, 1
      %v2297 = vrot.slane %v2208, 1
      %v2298 = vsel %vm862, %v2296, %v2297
      %v2311 = vadd.f32 %v2197, %v2283
      %v2312 = vadd.f32 %v2198, %v2282
      %v2313 = vadd.f32 %v2199, %v2286
      %v2314 = vadd.f32 %v2200, %v2285
      %v2315 = vadd.f32 %v2201, %v2289
      %v2316 = vadd.f32 %v2202, %v2288
      %v2317 = vadd.f32 %v2203, %v2292
      %v2318 = vadd.f32 %v2204, %v2291
      %v2319 = vadd.f32 %v2205, %v2295
      %v2320 = vadd.f32 %v2206, %v2294
      %v2321 = vadd.f32 %v2207, %v2298
      %v2322 = vadd.f32 %v2208, %v2297
      %v2323 = vrot.slane %v2197, 2
      %v2324 = vrot.slane %v2198, 2
      %v2325 = vsel %vm905, %v2323, %v2324
      %v2326 = vrot.slane %v2199, 2
      %v2327 = vrot.slane %v2200, 2
      %v2328 = vsel %vm905, %v2326, %v2327
      %v2329 = vrot.slane %v2201, 2
      %v2330 = vrot.slane %v2202, 2
      %v2331 = vsel %vm905, %v2329, %v2330
      %v2332 = vrot.slane %v2203, 2
      %v2333 = vrot.slane %v2204, 2
      %v2334 = vsel %vm905, %v2332, %v2333
      %v2335 = vrot.slane %v2205, 2
      %v2336 = vrot.slane %v2206, 2
      %v2337 = vsel %vm905, %v2335, %v2336
      %v2338 = vrot.slane %v2207, 2
      %v2339 = vrot.slane %v2208, 2
      %v2340 = vsel %vm905, %v2338, %v2339
      %v2353 = vadd.f32 %v2311, %v2325
      %v2354 = vadd.f32 %v2312, %v2324
      %v2355 = vadd.f32 %v2313, %v2328
      %v2356 = vadd.f32 %v2314, %v2327
      %v2357 = vadd.f32 %v2315, %v2331
      %v2358 = vadd.f32 %v2316, %v2330
      %v2359 = vadd.f32 %v2317, %v2334
      %v2360 = vadd.f32 %v2318, %v2333
      %v2361 = vadd.f32 %v2319, %v2337
      %v2362 = vadd.f32 %v2320, %v2336
      %v2363 = vadd.f32 %v2321, %v2340
      %v2364 = vadd.f32 %v2322, %v2339
      %v2377 = vrot.slane %v2353, 7
      %v2378 = vrot.slane %v2354, 7
      %v2379 = vsel %vm960, %v2377, %v2378
      %v2380 = vrot.slane %v2355, 7
      %v2381 = vrot.slane %v2356, 7
      %v2382 = vsel %vm960, %v2380, %v2381
      %v2383 = vrot.slane %v2357, 7
      %v2384 = vrot.slane %v2358, 7
      %v2385 = vsel %vm960, %v2383, %v2384
      %v2386 = vrot.slane %v2359, 7
      %v2387 = vrot.slane %v2360, 7
      %v2388 = vsel %vm960, %v2386, %v2387
      %v2389 = vrot.slane %v2361, 7
      %v2390 = vrot.slane %v2362, 7
      %v2391 = vsel %vm960, %v2389, %v2390
      %v2392 = vrot.slane %v2363, 7
      %v2393 = vrot.slane %v2364, 7
      %v2394 = vsel %vm960, %v2392, %v2393
      %v2407 = vsel %vm960, %v2233, %v2377
      %v2408 = vsel %vm960, %v2234, %v2380
      %v2409 = vsel %vm960, %v2235, %v2383
      %v2410 = vsel %vm960, %v2236, %v2386
      %v2411 = vsel %vm960, %v2237, %v2389
      %v2412 = vsel %vm960, %v2238, %v2392
      %v2413 = vsel %vm862, %v2379, %v2263
      %v2414 = vsel %vm862, %v2382, %v2264
      %v2415 = vsel %vm862, %v2385, %v2265
      %v2416 = vsel %vm862, %v2388, %v2266
      %v2417 = vsel %vm862, %v2391, %v2267
      %v2418 = vsel %vm862, %v2394, %v2268
      %v2419 = vmul.f32 %v2407, 0.11111111
      %v2420 = vmul.f32 %v2413, 0.11111111
      %v2421 = vmul.f32 %v2408, 0.11111111
      %v2422 = vmul.f32 %v2414, 0.11111111
      %v2423 = vmul.f32 %v2409, 0.11111111
      %v2424 = vmul.f32 %v2415, 0.11111111
      %v2425 = vmul.f32 %v2410, 0.11111111
      %v2426 = vmul.f32 %v2416, 0.11111111
      %v2427 = vmul.f32 %v2411, 0.11111111
      %v2428 = vmul.f32 %v2417, 0.11111111
      %v2429 = vmul.f32 %v2412, 0.11111111
      %v2430 = vmul.f32 %v2418, 0.11111111
      %v2431 = vmul.f32 %v1003, %v1003
      %v2432 = vmul.f32 %v1004, %v1004
      %v2433 = vmul.f32 %v1005, %v1005
      %v2434 = vmul.f32 %v1006, %v1006
      %v2435 = vmul.f32 %v1007, %v1007
      %v2436 = vmul.f32 %v1008, %v1008
      %v2437 = vmul.f32 %v1009, %v1009
      %v2438 = vmul.f32 %v1010, %v1010
      %v2439 = vmul.f32 %v1011, %v1011
      %v2440 = vmul.f32 %v1012, %v1012
      %v2441 = vmul.f32 %v1013, %v1013
      %v2442 = vmul.f32 %v1014, %v1014
      %v2443 = vsub.f32 %v2419, %v2431
      %v2444 = vsub.f32 %v2420, %v2432
      %v2445 = vsub.f32 %v2421, %v2433
      %v2446 = vsub.f32 %v2422, %v2434
      %v2447 = vsub.f32 %v2423, %v2435
      %v2448 = vsub.f32 %v2424, %v2436
      %v2449 = vsub.f32 %v2425, %v2437
      %v2450 = vsub.f32 %v2426, %v2438
      %v2451 = vsub.f32 %v2427, %v2439
      %v2452 = vsub.f32 %v2428, %v2440
      %v2453 = vsub.f32 %v2429, %v2441
      %v2454 = vsub.f32 %v2430, %v2442
      %v2455 = vmul.f32 %v1693, %v1693
      %v2456 = vmul.f32 %v1694, %v1694
      %v2457 = vmul.f32 %v1695, %v1695
      %v2458 = vmul.f32 %v1696, %v1696
      %v2459 = vmul.f32 %v1697, %v1697
      %v2460 = vmul.f32 %v1698, %v1698
      %v2461 = vmul.f32 %v1699, %v1699
      %v2462 = vmul.f32 %v1700, %v1700
      %v2463 = vmul.f32 %v1701, %v1701
      %v2464 = vmul.f32 %v1702, %v1702
      %v2465 = vmul.f32 %v1703, %v1703
      %v2466 = vmul.f32 %v1704, %v1704
      %v2467 = vsub.f32 %v2443, %v2455
      %v2468 = vsub.f32 %v2444, %v2456
      %v2469 = vsub.f32 %v2445, %v2457
      %v2470 = vsub.f32 %v2446, %v2458
      %v2471 = vsub.f32 %v2447, %v2459
      %v2472 = vsub.f32 %v2448, %v2460
      %v2473 = vsub.f32 %v2449, %v2461
      %v2474 = vsub.f32 %v2450, %v2462
      %v2475 = vsub.f32 %v2451, %v2463
      %v2476 = vsub.f32 %v2452, %v2464
      %v2477 = vsub.f32 %v2453, %v2465
      %v2478 = vsub.f32 %v2454, %v2466
      %v2479 = vmul.f32 %v268, %v292
      %v2480 = vmul.f32 %v269, %v293
      %v2481 = vmul.f32 %v270, %v294
      %v2482 = vmul.f32 %v271, %v295
      %v2483 = vmul.f32 %v272, %v296
      %v2484 = vmul.f32 %v273, %v297
      %v2485 = vmul.f32 %v274, %v298
      %v2486 = vmul.f32 %v275, %v299
      %v2487 = vmul.f32 %v276, %v300
      %v2488 = vmul.f32 %v277, %v301
      %v2489 = vmul.f32 %v278, %v302
      %v2490 = vmul.f32 %v279, %v303
      %2503 = vrot.lane.b32.xlu0 %v2479, 113
      %v2504 = vpop.permute.xlu0 %2503
      %2505 = vrot.lane.b32.xlu0 %v2480, 113
      %v2506 = vpop.permute.xlu0 %2505
      %2507 = vrot.lane.b32.xlu0 %v2481, 113
      %v2508 = vpop.permute.xlu0 %2507
      %2509 = vrot.lane.b32.xlu0 %v2482, 113
      %v2510 = vpop.permute.xlu0 %2509
      %2511 = vrot.lane.b32.xlu0 %v2483, 113
      %v2512 = vpop.permute.xlu0 %2511
      %2513 = vrot.lane.b32.xlu0 %v2484, 113
      %v2514 = vpop.permute.xlu0 %2513
      %2515 = vrot.lane.b32.xlu0 %v2485, 113
      %v2516 = vpop.permute.xlu0 %2515
      %2517 = vrot.lane.b32.xlu0 %v2486, 113
      %v2518 = vpop.permute.xlu0 %2517
      %2519 = vrot.lane.b32.xlu0 %v2487, 113
      %v2520 = vpop.permute.xlu0 %2519
      %2521 = vrot.lane.b32.xlu0 %v2488, 113
      %v2522 = vpop.permute.xlu0 %2521
      %2523 = vrot.lane.b32.xlu0 %v2489, 113
      %v2524 = vpop.permute.xlu0 %2523
      %2525 = vrot.lane.b32.xlu0 %v2490, 113
      %v2526 = vpop.permute.xlu0 %2525
      %2539 = vrot.lane.b32.xlu0 %v2479, 1
      %v2540 = vpop.permute.xlu0 %2539
      %2541 = vrot.lane.b32.xlu0 %v2480, 1
      %v2542 = vpop.permute.xlu0 %2541
      %2543 = vrot.lane.b32.xlu0 %v2481, 1
      %v2544 = vpop.permute.xlu0 %2543
      %2545 = vrot.lane.b32.xlu0 %v2482, 1
      %v2546 = vpop.permute.xlu0 %2545
      %2547 = vrot.lane.b32.xlu0 %v2483, 1
      %v2548 = vpop.permute.xlu0 %2547
      %2549 = vrot.lane.b32.xlu0 %v2484, 1
      %v2550 = vpop.permute.xlu0 %2549
      %2551 = vrot.lane.b32.xlu0 %v2485, 1
      %v2552 = vpop.permute.xlu0 %2551
      %2553 = vrot.lane.b32.xlu0 %v2486, 1
      %v2554 = vpop.permute.xlu0 %2553
      %2555 = vrot.lane.b32.xlu0 %v2487, 1
      %v2556 = vpop.permute.xlu0 %2555
      %2557 = vrot.lane.b32.xlu0 %v2488, 1
      %v2558 = vpop.permute.xlu0 %2557
      %2559 = vrot.lane.b32.xlu0 %v2489, 1
      %v2560 = vpop.permute.xlu0 %2559
      %2561 = vrot.lane.b32.xlu0 %v2490, 1
      %v2562 = vpop.permute.xlu0 %2561
      %v2575 = vsel %vm400, %v2504, %v2540
      %v2576 = vsel %vm400, %v2506, %v2542
      %v2577 = vsel %vm400, %v2508, %v2544
      %v2578 = vsel %vm400, %v2510, %v2546
      %v2579 = vsel %vm400, %v2512, %v2548
      %v2580 = vsel %vm400, %v2514, %v2550
      %v2581 = vsel %vm400, %v2516, %v2552
      %v2582 = vsel %vm400, %v2518, %v2554
      %v2583 = vsel %vm400, %v2520, %v2556
      %v2584 = vsel %vm400, %v2522, %v2558
      %v2585 = vsel %vm400, %v2524, %v2560
      %v2586 = vsel %vm400, %v2526, %v2562
      %v2587 = vadd.f32 %v2575, %v2479
      %v2588 = vadd.f32 %v2576, %v2480
      %v2589 = vadd.f32 %v2577, %v2481
      %v2590 = vadd.f32 %v2578, %v2482
      %v2591 = vadd.f32 %v2579, %v2483
      %v2592 = vadd.f32 %v2580, %v2484
      %v2593 = vadd.f32 %v2581, %v2485
      %v2594 = vadd.f32 %v2582, %v2486
      %v2595 = vadd.f32 %v2583, %v2487
      %v2596 = vadd.f32 %v2584, %v2488
      %v2597 = vadd.f32 %v2585, %v2489
      %v2598 = vadd.f32 %v2586, %v2490
      %2599 = vrot.lane.b32.xlu0 %v2479, 127
      %v2600 = vpop.permute.xlu0 %2599
      %2601 = vrot.lane.b32.xlu0 %v2480, 127
      %v2602 = vpop.permute.xlu0 %2601
      %2603 = vrot.lane.b32.xlu0 %v2481, 127
      %v2604 = vpop.permute.xlu0 %2603
      %2605 = vrot.lane.b32.xlu0 %v2482, 127
      %v2606 = vpop.permute.xlu0 %2605
      %2607 = vrot.lane.b32.xlu0 %v2483, 127
      %v2608 = vpop.permute.xlu0 %2607
      %2609 = vrot.lane.b32.xlu0 %v2484, 127
      %v2610 = vpop.permute.xlu0 %2609
      %2611 = vrot.lane.b32.xlu0 %v2485, 127
      %v2612 = vpop.permute.xlu0 %2611
      %2613 = vrot.lane.b32.xlu0 %v2486, 127
      %v2614 = vpop.permute.xlu0 %2613
      %2615 = vrot.lane.b32.xlu0 %v2487, 127
      %v2616 = vpop.permute.xlu0 %2615
      %2617 = vrot.lane.b32.xlu0 %v2488, 127
      %v2618 = vpop.permute.xlu0 %2617
      %2619 = vrot.lane.b32.xlu0 %v2489, 127
      %v2620 = vpop.permute.xlu0 %2619
      %2621 = vrot.lane.b32.xlu0 %v2490, 127
      %v2622 = vpop.permute.xlu0 %2621
      %2635 = vrot.lane.b32.xlu0 %v2479, 15
      %v2636 = vpop.permute.xlu0 %2635
      %2637 = vrot.lane.b32.xlu0 %v2480, 15
      %v2638 = vpop.permute.xlu0 %2637
      %2639 = vrot.lane.b32.xlu0 %v2481, 15
      %v2640 = vpop.permute.xlu0 %2639
      %2641 = vrot.lane.b32.xlu0 %v2482, 15
      %v2642 = vpop.permute.xlu0 %2641
      %2643 = vrot.lane.b32.xlu0 %v2483, 15
      %v2644 = vpop.permute.xlu0 %2643
      %2645 = vrot.lane.b32.xlu0 %v2484, 15
      %v2646 = vpop.permute.xlu0 %2645
      %2647 = vrot.lane.b32.xlu0 %v2485, 15
      %v2648 = vpop.permute.xlu0 %2647
      %2649 = vrot.lane.b32.xlu0 %v2486, 15
      %v2650 = vpop.permute.xlu0 %2649
      %2651 = vrot.lane.b32.xlu0 %v2487, 15
      %v2652 = vpop.permute.xlu0 %2651
      %2653 = vrot.lane.b32.xlu0 %v2488, 15
      %v2654 = vpop.permute.xlu0 %2653
      %2655 = vrot.lane.b32.xlu0 %v2489, 15
      %v2656 = vpop.permute.xlu0 %2655
      %2657 = vrot.lane.b32.xlu0 %v2490, 15
      %v2658 = vpop.permute.xlu0 %2657
      %v2671 = vsel %vm497, %v2600, %v2636
      %v2672 = vsel %vm497, %v2602, %v2638
      %v2673 = vsel %vm497, %v2604, %v2640
      %v2674 = vsel %vm497, %v2606, %v2642
      %v2675 = vsel %vm497, %v2608, %v2644
      %v2676 = vsel %vm497, %v2610, %v2646
      %v2677 = vsel %vm497, %v2612, %v2648
      %v2678 = vsel %vm497, %v2614, %v2650
      %v2679 = vsel %vm497, %v2616, %v2652
      %v2680 = vsel %vm497, %v2618, %v2654
      %v2681 = vsel %vm497, %v2620, %v2656
      %v2682 = vsel %vm497, %v2622, %v2658
      %v2683 = vadd.f32 %v2587, %v2671
      %v2684 = vadd.f32 %v2588, %v2672
      %v2685 = vadd.f32 %v2589, %v2673
      %v2686 = vadd.f32 %v2590, %v2674
      %v2687 = vadd.f32 %v2591, %v2675
      %v2688 = vadd.f32 %v2592, %v2676
      %v2689 = vadd.f32 %v2593, %v2677
      %v2690 = vadd.f32 %v2594, %v2678
      %v2691 = vadd.f32 %v2595, %v2679
      %v2692 = vadd.f32 %v2596, %v2680
      %v2693 = vadd.f32 %v2597, %v2681
      %v2694 = vadd.f32 %v2598, %v2682
      %2695 = vrot.lane.b32.xlu0 %v2479, 114
      %v2696 = vpop.permute.xlu0 %2695
      %2697 = vrot.lane.b32.xlu0 %v2480, 114
      %v2698 = vpop.permute.xlu0 %2697
      %2699 = vrot.lane.b32.xlu0 %v2481, 114
      %v2700 = vpop.permute.xlu0 %2699
      %2701 = vrot.lane.b32.xlu0 %v2482, 114
      %v2702 = vpop.permute.xlu0 %2701
      %2703 = vrot.lane.b32.xlu0 %v2483, 114
      %v2704 = vpop.permute.xlu0 %2703
      %2705 = vrot.lane.b32.xlu0 %v2484, 114
      %v2706 = vpop.permute.xlu0 %2705
      %2707 = vrot.lane.b32.xlu0 %v2485, 114
      %v2708 = vpop.permute.xlu0 %2707
      %2709 = vrot.lane.b32.xlu0 %v2486, 114
      %v2710 = vpop.permute.xlu0 %2709
      %2711 = vrot.lane.b32.xlu0 %v2487, 114
      %v2712 = vpop.permute.xlu0 %2711
      %2713 = vrot.lane.b32.xlu0 %v2488, 114
      %v2714 = vpop.permute.xlu0 %2713
      %2715 = vrot.lane.b32.xlu0 %v2489, 114
      %v2716 = vpop.permute.xlu0 %2715
      %2717 = vrot.lane.b32.xlu0 %v2490, 114
      %v2718 = vpop.permute.xlu0 %2717
      %v2731 = vsub.f32 %v2479, %v2696
      %v2732 = vsub.f32 %v2480, %v2698
      %v2733 = vsub.f32 %v2481, %v2700
      %v2734 = vsub.f32 %v2482, %v2702
      %v2735 = vsub.f32 %v2483, %v2704
      %v2736 = vsub.f32 %v2484, %v2706
      %v2737 = vsub.f32 %v2485, %v2708
      %v2738 = vsub.f32 %v2486, %v2710
      %v2739 = vsub.f32 %v2487, %v2712
      %v2740 = vsub.f32 %v2488, %v2714
      %v2741 = vsub.f32 %v2489, %v2716
      %v2742 = vsub.f32 %v2490, %v2718
      %2743 = vrot.lane.b32.xlu0 %v2479, 14
      %v2744 = vpop.permute.xlu0 %2743
      %2745 = vrot.lane.b32.xlu0 %v2480, 14
      %v2746 = vpop.permute.xlu0 %2745
      %2747 = vrot.lane.b32.xlu0 %v2481, 14
      %v2748 = vpop.permute.xlu0 %2747
      %2749 = vrot.lane.b32.xlu0 %v2482, 14
      %v2750 = vpop.permute.xlu0 %2749
      %2751 = vrot.lane.b32.xlu0 %v2483, 14
      %v2752 = vpop.permute.xlu0 %2751
      %2753 = vrot.lane.b32.xlu0 %v2484, 14
      %v2754 = vpop.permute.xlu0 %2753
      %2755 = vrot.lane.b32.xlu0 %v2485, 14
      %v2756 = vpop.permute.xlu0 %2755
      %2757 = vrot.lane.b32.xlu0 %v2486, 14
      %v2758 = vpop.permute.xlu0 %2757
      %2759 = vrot.lane.b32.xlu0 %v2487, 14
      %v2760 = vpop.permute.xlu0 %2759
      %2761 = vrot.lane.b32.xlu0 %v2488, 14
      %v2762 = vpop.permute.xlu0 %2761
      %2763 = vrot.lane.b32.xlu0 %v2489, 14
      %v2764 = vpop.permute.xlu0 %2763
      %2765 = vrot.lane.b32.xlu0 %v2490, 14
      %v2766 = vpop.permute.xlu0 %2765
      %v2779 = vsub.f32 %v2479, %v2744
      %v2780 = vsub.f32 %v2480, %v2746
      %v2781 = vsub.f32 %v2481, %v2748
      %v2782 = vsub.f32 %v2482, %v2750
      %v2783 = vsub.f32 %v2483, %v2752
      %v2784 = vsub.f32 %v2484, %v2754
      %v2785 = vsub.f32 %v2485, %v2756
      %v2786 = vsub.f32 %v2486, %v2758
      %v2787 = vsub.f32 %v2487, %v2760
      %v2788 = vsub.f32 %v2488, %v2762
      %v2789 = vsub.f32 %v2489, %v2764
      %v2790 = vsub.f32 %v2490, %v2766
      %2792 = vset.pattern.permute.xlu0 1
      %2793 = vperm.xlu0 %2792, %v2731
      %v2794 = vpop.permute.xlu0 %2793
      %2797 = vset.pattern.permute.xlu0 1
      %2798 = vperm.xlu0 %2797, %v2732
      %v2799 = vpop.permute.xlu0 %2798
      %2802 = vset.pattern.permute.xlu0 1
      %2803 = vperm.xlu0 %2802, %v2733
      %v2804 = vpop.permute.xlu0 %2803
      %2807 = vset.pattern.permute.xlu0 1
      %2808 = vperm.xlu0 %2807, %v2734
      %v2809 = vpop.permute.xlu0 %2808
      %2812 = vset.pattern.permute.xlu0 1
      %2813 = vperm.xlu0 %2812, %v2735
      %v2814 = vpop.permute.xlu0 %2813
      %2817 = vset.pattern.permute.xlu0 1
      %2818 = vperm.xlu0 %2817, %v2736
      %v2819 = vpop.permute.xlu0 %2818
      %2822 = vset.pattern.permute.xlu0 1
      %2823 = vperm.xlu0 %2822, %v2737
      %v2824 = vpop.permute.xlu0 %2823
      %2827 = vset.pattern.permute.xlu0 1
      %2828 = vperm.xlu0 %2827, %v2738
      %v2829 = vpop.permute.xlu0 %2828
      %2832 = vset.pattern.permute.xlu0 1
      %2833 = vperm.xlu0 %2832, %v2739
      %v2834 = vpop.permute.xlu0 %2833
      %2837 = vset.pattern.permute.xlu0 1
      %2838 = vperm.xlu0 %2837, %v2740
      %v2839 = vpop.permute.xlu0 %2838
      %2842 = vset.pattern.permute.xlu0 1
      %2843 = vperm.xlu0 %2842, %v2741
      %v2844 = vpop.permute.xlu0 %2843
      %2847 = vset.pattern.permute.xlu0 1
      %2848 = vperm.xlu0 %2847, %v2742
      %v2849 = vpop.permute.xlu0 %2848
      %v2851 = vsel %vm619, %v2794, 0.0
      %v2852 = vsel %vm619, %v2799, 0.0
      %v2853 = vsel %vm619, %v2804, 0.0
      %v2854 = vsel %vm619, %v2809, 0.0
      %v2855 = vsel %vm619, %v2814, 0.0
      %v2856 = vsel %vm619, %v2819, 0.0
      %v2857 = vsel %vm619, %v2824, 0.0
      %v2858 = vsel %vm619, %v2829, 0.0
      %v2859 = vsel %vm619, %v2834, 0.0
      %v2860 = vsel %vm619, %v2839, 0.0
      %v2861 = vsel %vm619, %v2844, 0.0
      %v2862 = vsel %vm619, %v2849, 0.0
      %v2863 = vadd.f32 %v2683, %v2851
      %v2864 = vadd.f32 %v2684, %v2852
      %v2865 = vadd.f32 %v2685, %v2853
      %v2866 = vadd.f32 %v2686, %v2854
      %v2867 = vadd.f32 %v2687, %v2855
      %v2868 = vadd.f32 %v2688, %v2856
      %v2869 = vadd.f32 %v2689, %v2857
      %v2870 = vadd.f32 %v2690, %v2858
      %v2871 = vadd.f32 %v2691, %v2859
      %v2872 = vadd.f32 %v2692, %v2860
      %v2873 = vadd.f32 %v2693, %v2861
      %v2874 = vadd.f32 %v2694, %v2862
      %2876 = vset.pattern.permute.xlu0 14
      %2877 = vperm.xlu0 %2876, %v2779
      %v2878 = vpop.permute.xlu0 %2877
      %2881 = vset.pattern.permute.xlu0 14
      %2882 = vperm.xlu0 %2881, %v2780
      %v2883 = vpop.permute.xlu0 %2882
      %2886 = vset.pattern.permute.xlu0 14
      %2887 = vperm.xlu0 %2886, %v2781
      %v2888 = vpop.permute.xlu0 %2887
      %2891 = vset.pattern.permute.xlu0 14
      %2892 = vperm.xlu0 %2891, %v2782
      %v2893 = vpop.permute.xlu0 %2892
      %2896 = vset.pattern.permute.xlu0 14
      %2897 = vperm.xlu0 %2896, %v2783
      %v2898 = vpop.permute.xlu0 %2897
      %2901 = vset.pattern.permute.xlu0 14
      %2902 = vperm.xlu0 %2901, %v2784
      %v2903 = vpop.permute.xlu0 %2902
      %2906 = vset.pattern.permute.xlu0 14
      %2907 = vperm.xlu0 %2906, %v2785
      %v2908 = vpop.permute.xlu0 %2907
      %2911 = vset.pattern.permute.xlu0 14
      %2912 = vperm.xlu0 %2911, %v2786
      %v2913 = vpop.permute.xlu0 %2912
      %2916 = vset.pattern.permute.xlu0 14
      %2917 = vperm.xlu0 %2916, %v2787
      %v2918 = vpop.permute.xlu0 %2917
      %2921 = vset.pattern.permute.xlu0 14
      %2922 = vperm.xlu0 %2921, %v2788
      %v2923 = vpop.permute.xlu0 %2922
      %2926 = vset.pattern.permute.xlu0 14
      %2927 = vperm.xlu0 %2926, %v2789
      %v2928 = vpop.permute.xlu0 %2927
      %2931 = vset.pattern.permute.xlu0 14
      %2932 = vperm.xlu0 %2931, %v2790
      %v2933 = vpop.permute.xlu0 %2932
      %v2935 = vsel %vm705, %v2878, 0.0
      %v2936 = vsel %vm705, %v2883, 0.0
      %v2937 = vsel %vm705, %v2888, 0.0
      %v2938 = vsel %vm705, %v2893, 0.0
      %v2939 = vsel %vm705, %v2898, 0.0
      %v2940 = vsel %vm705, %v2903, 0.0
      %v2941 = vsel %vm705, %v2908, 0.0
      %v2942 = vsel %vm705, %v2913, 0.0
      %v2943 = vsel %vm705, %v2918, 0.0
      %v2944 = vsel %vm705, %v2923, 0.0
      %v2945 = vsel %vm705, %v2928, 0.0
      %v2946 = vsel %vm705, %v2933, 0.0
      %v2947 = vadd.f32 %v2863, %v2935
      %v2948 = vadd.f32 %v2864, %v2936
      %v2949 = vadd.f32 %v2865, %v2937
      %v2950 = vadd.f32 %v2866, %v2938
      %v2951 = vadd.f32 %v2867, %v2939
      %v2952 = vadd.f32 %v2868, %v2940
      %v2953 = vadd.f32 %v2869, %v2941
      %v2954 = vadd.f32 %v2870, %v2942
      %v2955 = vadd.f32 %v2871, %v2943
      %v2956 = vadd.f32 %v2872, %v2944
      %v2957 = vadd.f32 %v2873, %v2945
      %v2958 = vadd.f32 %v2874, %v2946
      %v2959 = vmul.f32 %v2947, 2.0
      %v2960 = vmul.f32 %v2949, 2.0
      %v2961 = vmul.f32 %v2951, 2.0
      %v2962 = vmul.f32 %v2953, 2.0
      %v2963 = vmul.f32 %v2955, 2.0
      %v2964 = vmul.f32 %v2957, 2.0
      %v2971 = vrot.slane %v2959, 1
      %v2972 = vrot.slane %v2960, 1
      %v2973 = vrot.slane %v2961, 1
      %v2974 = vrot.slane %v2962, 1
      %v2975 = vrot.slane %v2963, 1
      %v2976 = vrot.slane %v2964, 1
      %v2983 = vadd.f32 %v2947, %v2971
      %v2984 = vadd.f32 %v2949, %v2972
      %v2985 = vadd.f32 %v2951, %v2973
      %v2986 = vadd.f32 %v2953, %v2974
      %v2987 = vadd.f32 %v2955, %v2975
      %v2988 = vadd.f32 %v2957, %v2976
      %v2989 = vmul.f32 %v2948, 2.0
      %v2990 = vmul.f32 %v2950, 2.0
      %v2991 = vmul.f32 %v2952, 2.0
      %v2992 = vmul.f32 %v2954, 2.0
      %v2993 = vmul.f32 %v2956, 2.0
      %v2994 = vmul.f32 %v2958, 2.0
      %v3001 = vrot.slane %v2989, 7
      %v3002 = vrot.slane %v2990, 7
      %v3003 = vrot.slane %v2991, 7
      %v3004 = vrot.slane %v2992, 7
      %v3005 = vrot.slane %v2993, 7
      %v3006 = vrot.slane %v2994, 7
      %v3013 = vadd.f32 %v2948, %v3001
      %v3014 = vadd.f32 %v2950, %v3002
      %v3015 = vadd.f32 %v2952, %v3003
      %v3016 = vadd.f32 %v2954, %v3004
      %v3017 = vadd.f32 %v2956, %v3005
      %v3018 = vadd.f32 %v2958, %v3006
      %v3031 = vrot.slane %v2947, 1
      %v3032 = vrot.slane %v2948, 1
      %v3033 = vsel %vm862, %v3031, %v3032
      %v3034 = vrot.slane %v2949, 1
      %v3035 = vrot.slane %v2950, 1
      %v3036 = vsel %vm862, %v3034, %v3035
      %v3037 = vrot.slane %v2951, 1
      %v3038 = vrot.slane %v2952, 1
      %v3039 = vsel %vm862, %v3037, %v3038
      %v3040 = vrot.slane %v2953, 1
      %v3041 = vrot.slane %v2954, 1
      %v3042 = vsel %vm862, %v3040, %v3041
      %v3043 = vrot.slane %v2955, 1
      %v3044 = vrot.slane %v2956, 1
      %v3045 = vsel %vm862, %v3043, %v3044
      %v3046 = vrot.slane %v2957, 1
      %v3047 = vrot.slane %v2958, 1
      %v3048 = vsel %vm862, %v3046, %v3047
      %v3061 = vadd.f32 %v2947, %v3033
      %v3062 = vadd.f32 %v2948, %v3032
      %v3063 = vadd.f32 %v2949, %v3036
      %v3064 = vadd.f32 %v2950, %v3035
      %v3065 = vadd.f32 %v2951, %v3039
      %v3066 = vadd.f32 %v2952, %v3038
      %v3067 = vadd.f32 %v2953, %v3042
      %v3068 = vadd.f32 %v2954, %v3041
      %v3069 = vadd.f32 %v2955, %v3045
      %v3070 = vadd.f32 %v2956, %v3044
      %v3071 = vadd.f32 %v2957, %v3048
      %v3072 = vadd.f32 %v2958, %v3047
      %v3073 = vrot.slane %v2947, 2
      %v3074 = vrot.slane %v2948, 2
      %v3075 = vsel %vm905, %v3073, %v3074
      %v3076 = vrot.slane %v2949, 2
      %v3077 = vrot.slane %v2950, 2
      %v3078 = vsel %vm905, %v3076, %v3077
      %v3079 = vrot.slane %v2951, 2
      %v3080 = vrot.slane %v2952, 2
      %v3081 = vsel %vm905, %v3079, %v3080
      %v3082 = vrot.slane %v2953, 2
      %v3083 = vrot.slane %v2954, 2
      %v3084 = vsel %vm905, %v3082, %v3083
      %v3085 = vrot.slane %v2955, 2
      %v3086 = vrot.slane %v2956, 2
      %v3087 = vsel %vm905, %v3085, %v3086
      %v3088 = vrot.slane %v2957, 2
      %v3089 = vrot.slane %v2958, 2
      %v3090 = vsel %vm905, %v3088, %v3089
      %v3103 = vadd.f32 %v3061, %v3075
      %v3104 = vadd.f32 %v3062, %v3074
      %v3105 = vadd.f32 %v3063, %v3078
      %v3106 = vadd.f32 %v3064, %v3077
      %v3107 = vadd.f32 %v3065, %v3081
      %v3108 = vadd.f32 %v3066, %v3080
      %v3109 = vadd.f32 %v3067, %v3084
      %v3110 = vadd.f32 %v3068, %v3083
      %v3111 = vadd.f32 %v3069, %v3087
      %v3112 = vadd.f32 %v3070, %v3086
      %v3113 = vadd.f32 %v3071, %v3090
      %v3114 = vadd.f32 %v3072, %v3089
      %v3127 = vrot.slane %v3103, 7
      %v3128 = vrot.slane %v3104, 7
      %v3129 = vsel %vm960, %v3127, %v3128
      %v3130 = vrot.slane %v3105, 7
      %v3131 = vrot.slane %v3106, 7
      %v3132 = vsel %vm960, %v3130, %v3131
      %v3133 = vrot.slane %v3107, 7
      %v3134 = vrot.slane %v3108, 7
      %v3135 = vsel %vm960, %v3133, %v3134
      %v3136 = vrot.slane %v3109, 7
      %v3137 = vrot.slane %v3110, 7
      %v3138 = vsel %vm960, %v3136, %v3137
      %v3139 = vrot.slane %v3111, 7
      %v3140 = vrot.slane %v3112, 7
      %v3141 = vsel %vm960, %v3139, %v3140
      %v3142 = vrot.slane %v3113, 7
      %v3143 = vrot.slane %v3114, 7
      %v3144 = vsel %vm960, %v3142, %v3143
      %v3157 = vsel %vm960, %v2983, %v3127
      %v3158 = vsel %vm960, %v2984, %v3130
      %v3159 = vsel %vm960, %v2985, %v3133
      %v3160 = vsel %vm960, %v2986, %v3136
      %v3161 = vsel %vm960, %v2987, %v3139
      %v3162 = vsel %vm960, %v2988, %v3142
      %v3163 = vsel %vm862, %v3129, %v3013
      %v3164 = vsel %vm862, %v3132, %v3014
      %v3165 = vsel %vm862, %v3135, %v3015
      %v3166 = vsel %vm862, %v3138, %v3016
      %v3167 = vsel %vm862, %v3141, %v3017
      %v3168 = vsel %vm862, %v3144, %v3018
      %v3169 = vmul.f32 %v3157, 0.11111111
      %v3170 = vmul.f32 %v3163, 0.11111111
      %v3171 = vmul.f32 %v3158, 0.11111111
      %v3172 = vmul.f32 %v3164, 0.11111111
      %v3173 = vmul.f32 %v3159, 0.11111111
      %v3174 = vmul.f32 %v3165, 0.11111111
      %v3175 = vmul.f32 %v3160, 0.11111111
      %v3176 = vmul.f32 %v3166, 0.11111111
      %v3177 = vmul.f32 %v3161, 0.11111111
      %v3178 = vmul.f32 %v3167, 0.11111111
      %v3179 = vmul.f32 %v3162, 0.11111111
      %v3180 = vmul.f32 %v3168, 0.11111111
      %v3181 = vmul.f32 %v1003, %v1693
      %v3182 = vmul.f32 %v1004, %v1694
      %v3183 = vmul.f32 %v1005, %v1695
      %v3184 = vmul.f32 %v1006, %v1696
      %v3185 = vmul.f32 %v1007, %v1697
      %v3186 = vmul.f32 %v1008, %v1698
      %v3187 = vmul.f32 %v1009, %v1699
      %v3188 = vmul.f32 %v1010, %v1700
      %v3189 = vmul.f32 %v1011, %v1701
      %v3190 = vmul.f32 %v1012, %v1702
      %v3191 = vmul.f32 %v1013, %v1703
      %v3192 = vmul.f32 %v1014, %v1704
      %v3193 = vsub.f32 %v3169, %v3181
      %v3194 = vsub.f32 %v3170, %v3182
      %v3195 = vsub.f32 %v3171, %v3183
      %v3196 = vsub.f32 %v3172, %v3184
      %v3197 = vsub.f32 %v3173, %v3185
      %v3198 = vsub.f32 %v3174, %v3186
      %v3199 = vsub.f32 %v3175, %v3187
      %v3200 = vsub.f32 %v3176, %v3188
      %v3201 = vsub.f32 %v3177, %v3189
      %v3202 = vsub.f32 %v3178, %v3190
      %v3203 = vsub.f32 %v3179, %v3191
      %v3204 = vsub.f32 %v3180, %v3192
      %v3205 = vmul.f32 %v1003, 2.0
      %v3206 = vmul.f32 %v1004, 2.0
      %v3207 = vmul.f32 %v1005, 2.0
      %v3208 = vmul.f32 %v1006, 2.0
      %v3209 = vmul.f32 %v1007, 2.0
      %v3210 = vmul.f32 %v1008, 2.0
      %v3211 = vmul.f32 %v1009, 2.0
      %v3212 = vmul.f32 %v1010, 2.0
      %v3213 = vmul.f32 %v1011, 2.0
      %v3214 = vmul.f32 %v1012, 2.0
      %v3215 = vmul.f32 %v1013, 2.0
      %v3216 = vmul.f32 %v1014, 2.0
      %v3217 = vmul.f32 %v3205, %v1693
      %v3218 = vmul.f32 %v3206, %v1694
      %v3219 = vmul.f32 %v3207, %v1695
      %v3220 = vmul.f32 %v3208, %v1696
      %v3221 = vmul.f32 %v3209, %v1697
      %v3222 = vmul.f32 %v3210, %v1698
      %v3223 = vmul.f32 %v3211, %v1699
      %v3224 = vmul.f32 %v3212, %v1700
      %v3225 = vmul.f32 %v3213, %v1701
      %v3226 = vmul.f32 %v3214, %v1702
      %v3227 = vmul.f32 %v3215, %v1703
      %v3228 = vmul.f32 %v3216, %v1704
      %v3229 = vadd.f32 %v3217, 0.0001
      %v3230 = vadd.f32 %v3218, 0.0001
      %v3231 = vadd.f32 %v3219, 0.0001
      %v3232 = vadd.f32 %v3220, 0.0001
      %v3233 = vadd.f32 %v3221, 0.0001
      %v3234 = vadd.f32 %v3222, 0.0001
      %v3235 = vadd.f32 %v3223, 0.0001
      %v3236 = vadd.f32 %v3224, 0.0001
      %v3237 = vadd.f32 %v3225, 0.0001
      %v3238 = vadd.f32 %v3226, 0.0001
      %v3239 = vadd.f32 %v3227, 0.0001
      %v3240 = vadd.f32 %v3228, 0.0001
      %v3241 = vmul.f32 %v3193, 2.0
      %v3242 = vmul.f32 %v3194, 2.0
      %v3243 = vmul.f32 %v3195, 2.0
      %v3244 = vmul.f32 %v3196, 2.0
      %v3245 = vmul.f32 %v3197, 2.0
      %v3246 = vmul.f32 %v3198, 2.0
      %v3247 = vmul.f32 %v3199, 2.0
      %v3248 = vmul.f32 %v3200, 2.0
      %v3249 = vmul.f32 %v3201, 2.0
      %v3250 = vmul.f32 %v3202, 2.0
      %v3251 = vmul.f32 %v3203, 2.0
      %v3252 = vmul.f32 %v3204, 2.0
      %v3253 = vadd.f32 %v3241, 0.0009
      %v3254 = vadd.f32 %v3242, 0.0009
      %v3255 = vadd.f32 %v3243, 0.0009
      %v3256 = vadd.f32 %v3244, 0.0009
      %v3257 = vadd.f32 %v3245, 0.0009
      %v3258 = vadd.f32 %v3246, 0.0009
      %v3259 = vadd.f32 %v3247, 0.0009
      %v3260 = vadd.f32 %v3248, 0.0009
      %v3261 = vadd.f32 %v3249, 0.0009
      %v3262 = vadd.f32 %v3250, 0.0009
      %v3263 = vadd.f32 %v3251, 0.0009
      %v3264 = vadd.f32 %v3252, 0.0009
      %v3265 = vmul.f32 %v3229, %v3253
      %v3266 = vmul.f32 %v3230, %v3254
      %v3267 = vmul.f32 %v3231, %v3255
      %v3268 = vmul.f32 %v3232, %v3256
      %v3269 = vmul.f32 %v3233, %v3257
      %v3270 = vmul.f32 %v3234, %v3258
      %v3271 = vmul.f32 %v3235, %v3259
      %v3272 = vmul.f32 %v3236, %v3260
      %v3273 = vmul.f32 %v3237, %v3261
      %v3274 = vmul.f32 %v3238, %v3262
      %v3275 = vmul.f32 %v3239, %v3263
      %v3276 = vmul.f32 %v3240, %v3264
      %v3277 = vadd.f32 %v2431, %v2455
      %v3278 = vadd.f32 %v2432, %v2456
      %v3279 = vadd.f32 %v2433, %v2457
      %v3280 = vadd.f32 %v2434, %v2458
      %v3281 = vadd.f32 %v2435, %v2459
      %v3282 = vadd.f32 %v2436, %v2460
      %v3283 = vadd.f32 %v2437, %v2461
      %v3284 = vadd.f32 %v2438, %v2462
      %v3285 = vadd.f32 %v2439, %v2463
      %v3286 = vadd.f32 %v2440, %v2464
      %v3287 = vadd.f32 %v2441, %v2465
      %v3288 = vadd.f32 %v2442, %v2466
      %v3289 = vadd.f32 %v3277, 0.0001
      %v3290 = vadd.f32 %v3278, 0.0001
      %v3291 = vadd.f32 %v3279, 0.0001
      %v3292 = vadd.f32 %v3280, 0.0001
      %v3293 = vadd.f32 %v3281, 0.0001
      %v3294 = vadd.f32 %v3282, 0.0001
      %v3295 = vadd.f32 %v3283, 0.0001
      %v3296 = vadd.f32 %v3284, 0.0001
      %v3297 = vadd.f32 %v3285, 0.0001
      %v3298 = vadd.f32 %v3286, 0.0001
      %v3299 = vadd.f32 %v3287, 0.0001
      %v3300 = vadd.f32 %v3288, 0.0001
      %v3301 = vadd.f32 %v2467, 0.0009
      %v3302 = vadd.f32 %v2468, 0.0009
      %v3303 = vadd.f32 %v2469, 0.0009
      %v3304 = vadd.f32 %v2470, 0.0009
      %v3305 = vadd.f32 %v2471, 0.0009
      %v3306 = vadd.f32 %v2472, 0.0009
      %v3307 = vadd.f32 %v2473, 0.0009
      %v3308 = vadd.f32 %v2474, 0.0009
      %v3309 = vadd.f32 %v2475, 0.0009
      %v3310 = vadd.f32 %v2476, 0.0009
      %v3311 = vadd.f32 %v2477, 0.0009
      %v3312 = vadd.f32 %v2478, 0.0009
      %v3313 = vmul.f32 %v3289, %v3301
      %v3314 = vmul.f32 %v3290, %v3302
      %v3315 = vmul.f32 %v3291, %v3303
      %v3316 = vmul.f32 %v3292, %v3304
      %v3317 = vmul.f32 %v3293, %v3305
      %v3318 = vmul.f32 %v3294, %v3306
      %v3319 = vmul.f32 %v3295, %v3307
      %v3320 = vmul.f32 %v3296, %v3308
      %v3321 = vmul.f32 %v3297, %v3309
      %v3322 = vmul.f32 %v3298, %v3310
      %v3323 = vmul.f32 %v3299, %v3311
      %v3324 = vmul.f32 %v3300, %v3312
      %v3325 = vrcp.pop %v3313
      %v3326 = vrcp.pop %v3314
      %v3327 = vrcp.pop %v3315
      %v3328 = vrcp.pop %v3316
      %v3329 = vrcp.pop %v3317
      %v3330 = vrcp.pop %v3318
      %v3331 = vrcp.pop %v3319
      %v3332 = vrcp.pop %v3320
      %v3333 = vrcp.pop %v3321
      %v3334 = vrcp.pop %v3322
      %v3335 = vrcp.pop %v3323
      %v3336 = vrcp.pop %v3324
      %v3337 = vmul.f32 %v3265, %v3325
      %v3338 = vmul.f32 %v3266, %v3326
      %v3339 = vmul.f32 %v3267, %v3327
      %v3340 = vmul.f32 %v3268, %v3328
      %v3341 = vmul.f32 %v3269, %v3329
      %v3342 = vmul.f32 %v3270, %v3330
      %v3343 = vmul.f32 %v3271, %v3331
      %v3344 = vmul.f32 %v3272, %v3332
      %v3345 = vmul.f32 %v3273, %v3333
      %v3346 = vmul.f32 %v3274, %v3334
      %v3347 = vmul.f32 %v3275, %v3335
      %v3348 = vmul.f32 %v3276, %v3336
      %v3349 = vsub.f32 1.0, %v3337
      %v3350 = vsub.f32 1.0, %v3338
      %v3351 = vsub.f32 1.0, %v3339
      %v3352 = vsub.f32 1.0, %v3340
      %v3353 = vsub.f32 1.0, %v3341
      %v3354 = vsub.f32 1.0, %v3342
      %v3355 = vsub.f32 1.0, %v3343
      %v3356 = vsub.f32 1.0, %v3344
      %v3357 = vsub.f32 1.0, %v3345
      %v3358 = vsub.f32 1.0, %v3346
      %v3359 = vsub.f32 1.0, %v3347
      %v3360 = vsub.f32 1.0, %v3348
      %v3361 = vmul.f32 %v3349, 0.5
      %v3362 = vmul.f32 %v3350, 0.5
      %v3363 = vmul.f32 %v3351, 0.5
      %v3364 = vmul.f32 %v3352, 0.5
      %v3365 = vmul.f32 %v3353, 0.5
      %v3366 = vmul.f32 %v3354, 0.5
      %v3367 = vmul.f32 %v3355, 0.5
      %v3368 = vmul.f32 %v3356, 0.5
      %v3369 = vmul.f32 %v3357, 0.5
      %v3370 = vmul.f32 %v3358, 0.5
      %v3371 = vmul.f32 %v3359, 0.5
      %v3372 = vmul.f32 %v3360, 0.5
      %v3373 = vmax.f32 %v3361, 0.0
      %v3374 = vmax.f32 %v3362, 0.0
      %v3375 = vmax.f32 %v3363, 0.0
      %v3376 = vmax.f32 %v3364, 0.0
      %v3377 = vmax.f32 %v3365, 0.0
      %v3378 = vmax.f32 %v3366, 0.0
      %v3379 = vmax.f32 %v3367, 0.0
      %v3380 = vmax.f32 %v3368, 0.0
      %v3381 = vmax.f32 %v3369, 0.0
      %v3382 = vmax.f32 %v3370, 0.0
      %v3383 = vmax.f32 %v3371, 0.0
      %v3384 = vmax.f32 %v3372, 0.0
      %v3385 = vmin.f32 %v3373, 1.0
      %v3386 = vmin.f32 %v3374, 1.0
      %v3387 = vmin.f32 %v3375, 1.0
      %v3388 = vmin.f32 %v3376, 1.0
      %v3389 = vmin.f32 %v3377, 1.0
      %v3390 = vmin.f32 %v3378, 1.0
      %v3391 = vmin.f32 %v3379, 1.0
      %v3392 = vmin.f32 %v3380, 1.0
      %v3393 = vmin.f32 %v3381, 1.0
      %v3394 = vmin.f32 %v3382, 1.0
      %v3395 = vmin.f32 %v3383, 1.0
      %v3396 = vmin.f32 %v3384, 1.0
      %vm3397 = vcmask 130048
      %v3398 = vsel %vm3397, %v3385, 0.0
      %v3399 = vsel %vm3397, %v3386, 0.0
      %v3400 = vadd.f32 %v3398, %v3399
      %v3401 = vsel %vm3397, %v3387, 0.0
      %v3402 = vadd.f32 %v3400, %v3401
      %v3403 = vsel %vm3397, %v3388, 0.0
      %v3404 = vadd.f32 %v3402, %v3403
      %v3405 = vsel %vm3397, %v3389, 0.0
      %v3406 = vadd.f32 %v3404, %v3405
      %v3407 = vsel %vm3397, %v3390, 0.0
      %v3408 = vadd.f32 %v3406, %v3407
      %v3409 = vsel %vm3397, %v3391, 0.0
      %v3410 = vadd.f32 %v3408, %v3409
      %v3411 = vsel %vm3397, %v3392, 0.0
      %v3412 = vadd.f32 %v3410, %v3411
      %v3413 = vsel %vm3397, %v3393, 0.0
      %v3414 = vadd.f32 %v3412, %v3413
      %v3415 = vsel %vm3397, %v3394, 0.0
      %v3416 = vadd.f32 %v3414, %v3415
      %v3417 = vsel %vm3397, %v3395, 0.0
      %v3418 = vadd.f32 %v3416, %v3417
      %v3419 = vsel %vm3397, %v3396, 0.0
      %v3420 = vadd.f32 %v3418, %v3419
      %3421 = vadd.xlane.f32.xlu0 %v3420
      %v3422 = vpop.xlane.xlu0 %3421
      %v3423 = vrot.slane %v3422, 4
      %v3424 = vadd.f32 %v3422, %v3423
      %v3425 = vrot.slane %v3424, 2
      %v3426 = vadd.f32 %v3424, %v3425
      %v3427 = vrot.slane %v3426, 1
      %v3428 = vadd.f32 %v3426, %v3427
      %s3429 = vtos %v3428
      %v3430 = vrcp.pop 1536.0
      %s3431 = vtos %v3430
      %s3432 = smul.f32 %s3429, %s3431
      %v3433 = vsub.f32 %v268, %v292
      %v3434 = vsub.f32 %v269, %v293
      %v3435 = vsub.f32 %v270, %v294
      %v3436 = vsub.f32 %v271, %v295
      %v3437 = vsub.f32 %v272, %v296
      %v3438 = vsub.f32 %v273, %v297
      %v3439 = vsub.f32 %v274, %v298
      %v3440 = vsub.f32 %v275, %v299
      %v3441 = vsub.f32 %v276, %v300
      %v3442 = vsub.f32 %v277, %v301
      %v3443 = vsub.f32 %v278, %v302
      %v3444 = vsub.f32 %v279, %v303
      %v3445 = vand.u32 2147483647, %v3433
      %v3446 = vand.u32 2147483647, %v3434
      %v3447 = vand.u32 2147483647, %v3435
      %v3448 = vand.u32 2147483647, %v3436
      %v3449 = vand.u32 2147483647, %v3437
      %v3450 = vand.u32 2147483647, %v3438
      %v3451 = vand.u32 2147483647, %v3439
      %v3452 = vand.u32 2147483647, %v3440
      %v3453 = vand.u32 2147483647, %v3441
      %v3454 = vand.u32 2147483647, %v3442
      %v3455 = vand.u32 2147483647, %v3443
      %v3456 = vand.u32 2147483647, %v3444
      %v3457 = vsel %vm3397, %v3445, 0.0
      %v3458 = vsel %vm3397, %v3446, 0.0
      %v3459 = vadd.f32 %v3457, %v3458
      %v3460 = vsel %vm3397, %v3447, 0.0
      %v3461 = vadd.f32 %v3459, %v3460
      %v3462 = vsel %vm3397, %v3448, 0.0
      %v3463 = vadd.f32 %v3461, %v3462
      %v3464 = vsel %vm3397, %v3449, 0.0
      %v3465 = vadd.f32 %v3463, %v3464
      %v3466 = vsel %vm3397, %v3450, 0.0
      %v3467 = vadd.f32 %v3465, %v3466
      %v3468 = vsel %vm3397, %v3451, 0.0
      %v3469 = vadd.f32 %v3467, %v3468
      %v3470 = vsel %vm3397, %v3452, 0.0
      %v3471 = vadd.f32 %v3469, %v3470
      %v3472 = vsel %vm3397, %v3453, 0.0
      %v3473 = vadd.f32 %v3471, %v3472
      %v3474 = vsel %vm3397, %v3454, 0.0
      %v3475 = vadd.f32 %v3473, %v3474
      %v3476 = vsel %vm3397, %v3455, 0.0
      %v3477 = vadd.f32 %v3475, %v3476
      %v3478 = vsel %vm3397, %v3456, 0.0
      %v3479 = vadd.f32 %v3477, %v3478
      %3480 = vadd.xlane.f32.xlu0 %v3479
      %v3481 = vpop.xlane.xlu0 %3480
      %v3482 = vrot.slane %v3481, 4
      %v3483 = vadd.f32 %v3481, %v3482
      %v3484 = vrot.slane %v3483, 2
      %v3485 = vadd.f32 %v3483, %v3484
      %v3486 = vrot.slane %v3485, 1
      %v3487 = vadd.f32 %v3485, %v3486
      %s3488 = vtos %v3487
      %v3489 = vrcp.pop 1536.0
      %s3490 = vtos %v3489
      %s3491 = smul.f32 %s3488, %s3490
      %s3492 = sadd.f32 %s3491, 1e-12
      %v3493 = vstv %s3492
      %v3494 = vrcp.pop %v3493
      %s3495 = vtos %v3494
      %v3496 = vstv %s3495
      %v3497 = vmul.f32 %v3445, %v3496
      %v3498 = vmul.f32 %v3446, %v3496
      %v3499 = vmul.f32 %v3447, %v3496
      %v3500 = vmul.f32 %v3448, %v3496
      %v3501 = vmul.f32 %v3449, %v3496
      %v3502 = vmul.f32 %v3450, %v3496
      %v3503 = vmul.f32 %v3451, %v3496
      %v3504 = vmul.f32 %v3452, %v3496
      %v3505 = vmul.f32 %v3453, %v3496
      %v3506 = vmul.f32 %v3454, %v3496
      %v3507 = vmul.f32 %v3455, %v3496
      %v3508 = vmul.f32 %v3456, %v3496
      %v3509 = vsub.f32 1.0, %v3497
      %v3510 = vsub.f32 1.0, %v3498
      %v3511 = vsub.f32 1.0, %v3499
      %v3512 = vsub.f32 1.0, %v3500
      %v3513 = vsub.f32 1.0, %v3501
      %v3514 = vsub.f32 1.0, %v3502
      %v3515 = vsub.f32 1.0, %v3503
      %v3516 = vsub.f32 1.0, %v3504
      %v3517 = vsub.f32 1.0, %v3505
      %v3518 = vsub.f32 1.0, %v3506
      %v3519 = vsub.f32 1.0, %v3507
      %v3520 = vsub.f32 1.0, %v3508
      %v3521 = vmul.f32 %v3509, 2.0
      %v3522 = vmul.f32 %v3510, 2.0
      %v3523 = vmul.f32 %v3511, 2.0
      %v3524 = vmul.f32 %v3512, 2.0
      %v3525 = vmul.f32 %v3513, 2.0
      %v3526 = vmul.f32 %v3514, 2.0
      %v3527 = vmul.f32 %v3515, 2.0
      %v3528 = vmul.f32 %v3516, 2.0
      %v3529 = vmul.f32 %v3517, 2.0
      %v3530 = vmul.f32 %v3518, 2.0
      %v3531 = vmul.f32 %v3519, 2.0
      %v3532 = vmul.f32 %v3520, 2.0
      %v3533 = vmul.f32 %v3521, 1.442695
      %v3534 = vpow.pop %v3533
      %v3535 = vmul.f32 %v3522, 1.442695
      %v3536 = vpow.pop %v3535
      %v3537 = vmul.f32 %v3523, 1.442695
      %v3538 = vpow.pop %v3537
      %v3539 = vmul.f32 %v3524, 1.442695
      %v3540 = vpow.pop %v3539
      %v3541 = vmul.f32 %v3525, 1.442695
      %v3542 = vpow.pop %v3541
      %v3543 = vmul.f32 %v3526, 1.442695
      %v3544 = vpow.pop %v3543
      %v3545 = vmul.f32 %v3527, 1.442695
      %v3546 = vpow.pop %v3545
      %v3547 = vmul.f32 %v3528, 1.442695
      %v3548 = vpow.pop %v3547
      %v3549 = vmul.f32 %v3529, 1.442695
      %v3550 = vpow.pop %v3549
      %v3551 = vmul.f32 %v3530, 1.442695
      %v3552 = vpow.pop %v3551
      %v3553 = vmul.f32 %v3531, 1.442695
      %v3554 = vpow.pop %v3553
      %v3555 = vmul.f32 %v3532, 1.442695
      %v3556 = vpow.pop %v3555
      %v3557 = vsub.f32 %v308, %v304
      %v3558 = vsub.f32 %v309, %v305
      %v3559 = vsub.f32 %v310, %v306
      %v3560 = vsub.f32 %v311, %v307
      %v3561 = vand.u32 2147483647, %v3557
      %v3562 = vand.u32 2147483647, %v3558
      %v3563 = vand.u32 2147483647, %v3559
      %v3564 = vand.u32 2147483647, %v3560
      %v3565 = vmul.f32 %v3534, %v3561
      %v3566 = vmul.f32 %v3536, %v3562
      %v3567 = vmul.f32 %v3538, %v3561
      %v3568 = vmul.f32 %v3540, %v3562
      %v3569 = vmul.f32 %v3542, %v3561
      %v3570 = vmul.f32 %v3544, %v3562
      %v3571 = vmul.f32 %v3546, %v3563
      %v3572 = vmul.f32 %v3548, %v3564
      %v3573 = vmul.f32 %v3550, %v3563
      %v3574 = vmul.f32 %v3552, %v3564
      %v3575 = vmul.f32 %v3554, %v3563
      %v3576 = vmul.f32 %v3556, %v3564
      %v3577 = vsel %vm3397, %v3565, 0.0
      %v3578 = vsel %vm3397, %v3566, 0.0
      %v3579 = vadd.f32 %v3577, %v3578
      %v3580 = vsel %vm3397, %v3567, 0.0
      %v3581 = vadd.f32 %v3579, %v3580
      %v3582 = vsel %vm3397, %v3568, 0.0
      %v3583 = vadd.f32 %v3581, %v3582
      %v3584 = vsel %vm3397, %v3569, 0.0
      %v3585 = vadd.f32 %v3583, %v3584
      %v3586 = vsel %vm3397, %v3570, 0.0
      %v3587 = vadd.f32 %v3585, %v3586
      %v3588 = vsel %vm3397, %v3571, 0.0
      %v3589 = vadd.f32 %v3587, %v3588
      %v3590 = vsel %vm3397, %v3572, 0.0
      %v3591 = vadd.f32 %v3589, %v3590
      %v3592 = vsel %vm3397, %v3573, 0.0
      %v3593 = vadd.f32 %v3591, %v3592
      %v3594 = vsel %vm3397, %v3574, 0.0
      %v3595 = vadd.f32 %v3593, %v3594
      %v3596 = vsel %vm3397, %v3575, 0.0
      %v3597 = vadd.f32 %v3595, %v3596
      %v3598 = vsel %vm3397, %v3576, 0.0
      %v3599 = vadd.f32 %v3597, %v3598
      %3600 = vadd.xlane.f32.xlu0 %v3599
      %v3601 = vpop.xlane.xlu0 %3600
      %v3602 = vrot.slane %v3601, 4
      %v3603 = vadd.f32 %v3601, %v3602
      %v3604 = vrot.slane %v3603, 2
      %v3605 = vadd.f32 %v3603, %v3604
      %v3606 = vrot.slane %v3605, 1
      %v3607 = vadd.f32 %v3605, %v3606
      %s3608 = vtos %v3607
      %s3609 = smul.f32 %s3608, 0.0006510417
      %3614 = vrot.lane.b32.xlu0 %v304, 127
      %v3615 = vpop.permute.xlu0 %3614
      %3616 = vrot.lane.b32.xlu0 %v305, 127
      %v3617 = vpop.permute.xlu0 %3616
      %3618 = vrot.lane.b32.xlu0 %v306, 127
      %v3619 = vpop.permute.xlu0 %3618
      %3620 = vrot.lane.b32.xlu0 %v307, 127
      %v3621 = vpop.permute.xlu0 %3620
      %3626 = vrot.lane.b32.xlu0 %v304, 15
      %v3627 = vpop.permute.xlu0 %3626
      %3628 = vrot.lane.b32.xlu0 %v305, 15
      %v3629 = vpop.permute.xlu0 %3628
      %3630 = vrot.lane.b32.xlu0 %v306, 15
      %v3631 = vpop.permute.xlu0 %3630
      %3632 = vrot.lane.b32.xlu0 %v307, 15
      %v3633 = vpop.permute.xlu0 %3632
      %v3638 = vsel %vm497, %v3615, %v3627
      %v3639 = vsel %vm497, %v3617, %v3629
      %v3640 = vsel %vm497, %v3619, %v3631
      %v3641 = vsel %vm497, %v3621, %v3633
      %v3642 = vsub.f32 %v292, %v1195
      %v3643 = vsub.f32 %v293, %v1196
      %v3644 = vsub.f32 %v294, %v1197
      %v3645 = vsub.f32 %v295, %v1198
      %v3646 = vsub.f32 %v296, %v1199
      %v3647 = vsub.f32 %v297, %v1200
      %v3648 = vsub.f32 %v298, %v1201
      %v3649 = vsub.f32 %v299, %v1202
      %v3650 = vsub.f32 %v300, %v1203
      %v3651 = vsub.f32 %v301, %v1204
      %v3652 = vsub.f32 %v302, %v1205
      %v3653 = vsub.f32 %v303, %v1206
      %v3654 = vand.u32 2147483647, %v3642
      %v3655 = vand.u32 2147483647, %v3643
      %v3656 = vand.u32 2147483647, %v3644
      %v3657 = vand.u32 2147483647, %v3645
      %v3658 = vand.u32 2147483647, %v3646
      %v3659 = vand.u32 2147483647, %v3647
      %v3660 = vand.u32 2147483647, %v3648
      %v3661 = vand.u32 2147483647, %v3649
      %v3662 = vand.u32 2147483647, %v3650
      %v3663 = vand.u32 2147483647, %v3651
      %v3664 = vand.u32 2147483647, %v3652
      %v3665 = vand.u32 2147483647, %v3653
      %v3666 = vadd.f32 %v3654, %v3656
      %v3667 = vadd.f32 %v3655, %v3657
      %v3668 = vadd.f32 %v3660, %v3662
      %v3669 = vadd.f32 %v3661, %v3663
      %v3670 = vadd.f32 %v3666, %v3658
      %v3671 = vadd.f32 %v3667, %v3659
      %v3672 = vadd.f32 %v3668, %v3664
      %v3673 = vadd.f32 %v3669, %v3665
      %v3674 = vmul.f32 %v3670, 0.33333334
      %v3675 = vmul.f32 %v3671, 0.33333334
      %v3676 = vmul.f32 %v3672, 0.33333334
      %v3677 = vmul.f32 %v3673, 0.33333334
      %v3678 = vsub.f32 0.0, %v3674
      %v3679 = vsub.f32 0.0, %v3675
      %v3680 = vsub.f32 0.0, %v3676
      %v3681 = vsub.f32 0.0, %v3677
      %v3682 = vmul.f32 %v3678, 1.442695
      %v3683 = vpow.pop %v3682
      %v3684 = vmul.f32 %v3679, 1.442695
      %v3685 = vpow.pop %v3684
      %v3686 = vmul.f32 %v3680, 1.442695
      %v3687 = vpow.pop %v3686
      %v3688 = vmul.f32 %v3681, 1.442695
      %v3689 = vpow.pop %v3688
      %v3690 = vsub.f32 %v304, %v3638
      %v3691 = vsub.f32 %v305, %v3639
      %v3692 = vsub.f32 %v306, %v3640
      %v3693 = vsub.f32 %v307, %v3641
      %v3694 = vand.u32 2147483647, %v3690
      %v3695 = vand.u32 2147483647, %v3691
      %v3696 = vand.u32 2147483647, %v3692
      %v3697 = vand.u32 2147483647, %v3693
      %v3698 = vmul.f32 %v3694, %v3683
      %v3699 = vmul.f32 %v3695, %v3685
      %v3700 = vmul.f32 %v3696, %v3687
      %v3701 = vmul.f32 %v3697, %v3689
      %v3702 = vsel %vm3397, %v3698, 0.0
      %v3703 = vsel %vm3397, %v3699, 0.0
      %v3704 = vadd.f32 %v3702, %v3703
      %v3705 = vsel %vm3397, %v3700, 0.0
      %v3706 = vadd.f32 %v3704, %v3705
      %v3707 = vsel %vm3397, %v3701, 0.0
      %v3708 = vadd.f32 %v3706, %v3707
      %3709 = vadd.xlane.f32.xlu0 %v3708
      %v3710 = vpop.xlane.xlu0 %3709
      %v3711 = vrot.slane %v3710, 4
      %v3712 = vadd.f32 %v3710, %v3711
      %v3713 = vrot.slane %v3712, 2
      %v3714 = vadd.f32 %v3712, %v3713
      %v3715 = vrot.slane %v3714, 1
      %v3716 = vadd.f32 %v3714, %v3715
      %s3717 = vtos %v3716
      %v3718 = vsub.f32 %v304, %v3627
      %v3719 = vsub.f32 %v305, %v3629
      %v3720 = vsub.f32 %v306, %v3631
      %v3721 = vsub.f32 %v307, %v3633
      %v3722 = vand.u32 2147483647, %v3718
      %v3723 = vand.u32 2147483647, %v3719
      %v3724 = vand.u32 2147483647, %v3720
      %v3725 = vand.u32 2147483647, %v3721
      %v3726 = vsub.f32 %v292, %v1160
      %v3727 = vsub.f32 %v293, %v1162
      %v3728 = vsub.f32 %v294, %v1164
      %v3729 = vsub.f32 %v295, %v1166
      %v3730 = vsub.f32 %v296, %v1168
      %v3731 = vsub.f32 %v297, %v1170
      %v3732 = vsub.f32 %v298, %v1172
      %v3733 = vsub.f32 %v299, %v1174
      %v3734 = vsub.f32 %v300, %v1176
      %v3735 = vsub.f32 %v301, %v1178
      %v3736 = vsub.f32 %v302, %v1180
      %v3737 = vsub.f32 %v303, %v1182
      %v3738 = vand.u32 2147483647, %v3726
      %v3739 = vand.u32 2147483647, %v3727
      %v3740 = vand.u32 2147483647, %v3728
      %v3741 = vand.u32 2147483647, %v3729
      %v3742 = vand.u32 2147483647, %v3730
      %v3743 = vand.u32 2147483647, %v3731
      %v3744 = vand.u32 2147483647, %v3732
      %v3745 = vand.u32 2147483647, %v3733
      %v3746 = vand.u32 2147483647, %v3734
      %v3747 = vand.u32 2147483647, %v3735
      %v3748 = vand.u32 2147483647, %v3736
      %v3749 = vand.u32 2147483647, %v3737
      %v3750 = vadd.f32 %v3738, %v3740
      %v3751 = vadd.f32 %v3739, %v3741
      %v3752 = vadd.f32 %v3744, %v3746
      %v3753 = vadd.f32 %v3745, %v3747
      %v3754 = vadd.f32 %v3750, %v3742
      %v3755 = vadd.f32 %v3751, %v3743
      %v3756 = vadd.f32 %v3752, %v3748
      %v3757 = vadd.f32 %v3753, %v3749
      %v3758 = vmul.f32 %v3754, 0.33333334
      %v3759 = vmul.f32 %v3755, 0.33333334
      %v3760 = vmul.f32 %v3756, 0.33333334
      %v3761 = vmul.f32 %v3757, 0.33333334
      %v3762 = vsub.f32 0.0, %v3758
      %v3763 = vsub.f32 0.0, %v3759
      %v3764 = vsub.f32 0.0, %v3760
      %v3765 = vsub.f32 0.0, %v3761
      %v3766 = vmul.f32 %v3762, 1.442695
      %v3767 = vpow.pop %v3766
      %v3768 = vmul.f32 %v3763, 1.442695
      %v3769 = vpow.pop %v3768
      %v3770 = vmul.f32 %v3764, 1.442695
      %v3771 = vpow.pop %v3770
      %v3772 = vmul.f32 %v3765, 1.442695
      %v3773 = vpow.pop %v3772
      %v3774 = vmul.f32 %v3722, %v3767
      %v3775 = vmul.f32 %v3723, %v3769
      %v3776 = vmul.f32 %v3724, %v3771
      %v3777 = vmul.f32 %v3725, %v3773
      %3782 = vrot.lane.b32.xlu0 %v3774, 113
      %v3783 = vpop.permute.xlu0 %3782
      %3784 = vrot.lane.b32.xlu0 %v3775, 113
      %v3785 = vpop.permute.xlu0 %3784
      %3786 = vrot.lane.b32.xlu0 %v3776, 113
      %v3787 = vpop.permute.xlu0 %3786
      %3788 = vrot.lane.b32.xlu0 %v3777, 113
      %v3789 = vpop.permute.xlu0 %3788
      %v3794 = vsel %vm400, %v3783, 0.0
      %v3795 = vsel %vm400, %v3785, 0.0
      %v3796 = vadd.f32 %v3794, %v3795
      %v3797 = vsel %vm400, %v3787, 0.0
      %v3798 = vadd.f32 %v3796, %v3797
      %v3799 = vsel %vm400, %v3789, 0.0
      %v3800 = vadd.f32 %v3798, %v3799
      %3801 = vadd.xlane.f32.xlu0 %v3800
      %v3802 = vpop.xlane.xlu0 %3801
      %v3803 = vrot.slane %v3802, 4
      %v3804 = vadd.f32 %v3802, %v3803
      %v3805 = vrot.slane %v3804, 2
      %v3806 = vadd.f32 %v3804, %v3805
      %v3807 = vrot.slane %v3806, 1
      %v3808 = vadd.f32 %v3806, %v3807
      %s3809 = vtos %v3808
      %s3810 = ssub.f32 %s3717, %s3809
      %s3811 = smul.f32 %s3810, 0.0020833334
      %v3812 = vlaneseq
      %v3813 = vshrl.u32 %v3812, 7
      %vm3814 = vcmp.eq.s32.totalorder %v3813, 0
      %vm3815 = vmand %vm3814, %vm314
      %v3816 = vstv %s3432
      %v3817 = vsel %vm3815, %v3816, 0.0
      %vm3818 = vcmp.eq.s32.totalorder %v313, 1
      %vm3819 = vmand %vm3814, %vm3818
      %v3820 = vstv %s3491
      %v3821 = vsel %vm3819, %v3820, %v3817
      %vm3822 = vcmp.eq.s32.totalorder %v313, 2
      %vm3823 = vmand %vm3814, %vm3822
      %v3824 = vstv %s3609
      %v3825 = vsel %vm3823, %v3824, %v3821
      %vm3826 = vcmp.eq.s32.totalorder %v313, 3
      %vm3827 = vmand %vm3814, %vm3826
      %v3828 = vstv %s3811
      %v3829 = vsel %vm3827, %v3828, %v3825
      %3830 = vst [vmem:[%s255] sm:$0xff] %v3829
      %p3831 = scmp.lt.s32.totalorder %s15, 1
      %s3832 = scalar_select %p3831, %s15, 1
      %s3833 = smul.addr %s3832, 8
      %s3834 = scalar_lea.vmem %s4, %s3833
      // Predicated region
      $region37: #{my_loss.4} parent=35 // pred_check
        %p3835 = pneg %p137
      $region38: #{my_loss.4} parent=35 // pred_check_branch
        %3837 = sbr.rel (%p3835) target = $region40
      $region39: #{my_loss.4} parent=35 // pred_region
        _
      $region40: #{my_loss.4} parent=35 // pred_fallthru
        _
    $region36: #{my_loss.4} parent=5 // pred_fallthru
      _
    %p3838 = scmp.le.s32.totalorder 2, %s10
    // Predicated region
    $region41: #{my_loss.4} parent=5 // pred_check
      %p3839 = pneg %p3838
    $region42: #{my_loss.4} parent=5 // pred_check_branch
      %3841 = sbr.rel (%p3839) target = $region44
    $region43: #{my_loss.4} parent=5 // pred_region
      %s3842 = ssub.s32 %s10, 2
      // Predicated region
      $region45: #{my_loss.4} parent=43 // pred_check
        %p3843 = pneg %p143
      $region46: #{my_loss.4} parent=43 // pred_check_branch
        %3845 = sbr.rel (%p3843) target = $region48
      $region47: #{my_loss.4} parent=43 // pred_region
        %p3846 = scmp.lt.s32.totalorder %s16, 1
        %s3847 = scalar_select %p3846, %s16, 1
        %s3848 = smul.addr %s3847, 8
        %s3849 = scalar_lea.vmem %s4, %s3848
      $region48: #{my_loss.4} parent=43 // pred_fallthru
        _
    $region44: #{my_loss.4} parent=5 // pred_fallthru
      _
  $region6: #{my_loss.4} parent=0 // loop_footer
    %s14 = sadd.s32 1, %s10
  $region7: #{my_loss.4} parent=0 // loop_footer_branch
    %9 = sbr.rel target = $region3
  $region8: #{my_loss.4} parent=0 // loop_exit
    _

// kernel: my_loss.5
$region0: #{my_loss.5}
  #allocation0 [shape = 'u32[]', space=smem, size = 0x4, offset = 0x4, fixed_abs, tag = 'smem constant byte address 0x4 - core index']
  #allocation1 [shape = 'u32[144,128]{1,0:T(1,128)}', space=vmem, size = 0x12000, scoped, tag = 'internal scratch']
  %s0 = inlined_call_operand.vmem [shape: bf16[2,2,3,8,8], index: 0, kind: input, shape index: {}]
  %s1 = inlined_call_operand.vmem [shape: bf16[2,2,3,8,8], index: 1, kind: input, shape index: {}]
  %s2 = inlined_call_operand.vmem [shape: f32[2,2,1,8,8], index: 2, kind: input, shape index: {}]
  %s3 = inlined_call_operand.vmem [shape: f32[2,2,1,8,8], index: 3, kind: input, shape index: {}]
  %s4 = inlined_call_operand.vmem [shape: f32[2,8,128], index: 4, kind: output, shape index: {}]
  %s5 = sld [smem:[#allocation0]]
  $region49: #{my_loss.5} parent=0
    _
  %s7 = ssub.s32 1, %s5
  %s8 = scalar_select 0, %s7, %s5
  loop: start=0, step=1, limit=4
  $region2: #{my_loss.5} parent=0 // loop_pre_header
    _
  $region3: #{my_loss.5} parent=0 // loop_header
    %s10 = sphi 0, %s14
    %p11 = scmp.ge.s32.totalorder %s10, 4
    %s20 = sphi 0, %s22
    %s23 = sphi 0, %s20
    %s24 = sphi 0, %s23
    %s40 = sphi 0, %s24
    %s46 = sphi 0, %s48
    %s49 = sphi 0, %s46
    %s50 = sphi 0, %s49
    %s66 = sphi 0, %s50
    %s72 = sphi 0, %s74
    %s75 = sphi 0, %s72
    %s76 = sphi 0, %s75
    %s92 = sphi 0, %s76
    %s98 = sphi 0, %s100
    %s101 = sphi 0, %s98
    %s102 = sphi 0, %s101
    %s118 = sphi 0, %s102
    %s124 = sphi 0, %s126
    %s127 = sphi 0, %s124
    %s128 = sphi 0, %s127
    %s144 = sphi 0, %s128
  $region4: #{my_loss.5} parent=0 // loop_header_branch
    %13 = sbr.rel (%p11) target = $region8
  $region5: #{my_loss.5} parent=0 // loop_body
    %s15 = ssub.s32 %s10, 1
    %s16 = ssub.s32 %s10, 2
    %s17 = sadd.s32 %s10, 1
    %s18 = ssub.s32 %s10, %s17
    %p19 = scmp.eq.s32.totalorder %s18, 0
    %s21 = sadd.s32 %s20, 1
    %s22 = scalar_select %p19, %s20, %s21
    %p25 = pneg %p19
    %p26 = scmp.eq.s32.totalorder %s10, 1
    %p27 = por %p25, %p26
    %p28 = scmp.ne.s32.totalorder %s20, %s23
    %p29 = scmp.eq.s32.totalorder %s10, 0
    %p30 = por %p28, %p29
    %p31 = scmp.ne.s32.totalorder %s20, %s23
    %p32 = scmp.eq.s32.totalorder %s15, 1
    %p33 = por %p31, %p32
    %p34 = scmp.ne.s32.totalorder %s23, %s24
    %p35 = scmp.eq.s32.totalorder %s15, 0
    %p36 = por %p34, %p35
    %p37 = scmp.ne.s32.totalorder %s23, %s24
    %p38 = scmp.eq.s32.totalorder %s16, 1
    %p39 = por %p37, %p38
    %p41 = scmp.ne.s32.totalorder %s24, %s40
    %p42 = scmp.eq.s32.totalorder %s16, 0
    %p43 = por %p41, %p42
    %s44 = ssub.s32 %s10, %s17
    %p45 = scmp.eq.s32.totalorder %s44, 0
    %s47 = sadd.s32 %s46, 1
    %s48 = scalar_select %p45, %s46, %s47
    %p51 = pneg %p45
    %p52 = scmp.eq.s32.totalorder %s10, 1
    %p53 = por %p51, %p52
    %p54 = scmp.ne.s32.totalorder %s46, %s49
    %p55 = scmp.eq.s32.totalorder %s10, 0
    %p56 = por %p54, %p55
    %p57 = scmp.ne.s32.totalorder %s46, %s49
    %p58 = scmp.eq.s32.totalorder %s15, 1
    %p59 = por %p57, %p58
    %p60 = scmp.ne.s32.totalorder %s49, %s50
    %p61 = scmp.eq.s32.totalorder %s15, 0
    %p62 = por %p60, %p61
    %p63 = scmp.ne.s32.totalorder %s49, %s50
    %p64 = scmp.eq.s32.totalorder %s16, 1
    %p65 = por %p63, %p64
    %p67 = scmp.ne.s32.totalorder %s50, %s66
    %p68 = scmp.eq.s32.totalorder %s16, 0
    %p69 = por %p67, %p68
    %s70 = ssub.s32 %s10, %s17
    %p71 = scmp.eq.s32.totalorder %s70, 0
    %s73 = sadd.s32 %s72, 1
    %s74 = scalar_select %p71, %s72, %s73
    %p77 = pneg %p71
    %p78 = scmp.eq.s32.totalorder %s10, 1
    %p79 = por %p77, %p78
    %p80 = scmp.ne.s32.totalorder %s72, %s75
    %p81 = scmp.eq.s32.totalorder %s10, 0
    %p82 = por %p80, %p81
    %p83 = scmp.ne.s32.totalorder %s72, %s75
    %p84 = scmp.eq.s32.totalorder %s15, 1
    %p85 = por %p83, %p84
    %p86 = scmp.ne.s32.totalorder %s75, %s76
    %p87 = scmp.eq.s32.totalorder %s15, 0
    %p88 = por %p86, %p87
    %p89 = scmp.ne.s32.totalorder %s75, %s76
    %p90 = scmp.eq.s32.totalorder %s16, 1
    %p91 = por %p89, %p90
    %p93 = scmp.ne.s32.totalorder %s76, %s92
    %p94 = scmp.eq.s32.totalorder %s16, 0
    %p95 = por %p93, %p94
    %s96 = ssub.s32 %s10, %s17
    %p97 = scmp.eq.s32.totalorder %s96, 0
    %s99 = sadd.s32 %s98, 1
    %s100 = scalar_select %p97, %s98, %s99
    %p103 = pneg %p97
    %p104 = scmp.eq.s32.totalorder %s10, 1
    %p105 = por %p103, %p104
    %p106 = scmp.ne.s32.totalorder %s98, %s101
    %p107 = scmp.eq.s32.totalorder %s10, 0
    %p108 = por %p106, %p107
    %p109 = scmp.ne.s32.totalorder %s98, %s101
    %p110 = scmp.eq.s32.totalorder %s15, 1
    %p111 = por %p109, %p110
    %p112 = scmp.ne.s32.totalorder %s101, %s102
    %p113 = scmp.eq.s32.totalorder %s15, 0
    %p114 = por %p112, %p113
    %p115 = scmp.ne.s32.totalorder %s101, %s102
    %p116 = scmp.eq.s32.totalorder %s16, 1
    %p117 = por %p115, %p116
    %p119 = scmp.ne.s32.totalorder %s102, %s118
    %p120 = scmp.eq.s32.totalorder %s16, 0
    %p121 = por %p119, %p120
    %s122 = ssub.s32 %s10, %s17
    %p123 = scmp.eq.s32.totalorder %s122, 0
    %s125 = sadd.s32 %s124, 1
    %s126 = scalar_select %p123, %s124, %s125
    %p129 = pneg %p123
    %p130 = scmp.eq.s32.totalorder %s10, 1
    %p131 = por %p129, %p130
    %p132 = scmp.ne.s32.totalorder %s124, %s127
    %p133 = scmp.eq.s32.totalorder %s10, 0
    %p134 = por %p132, %p133
    %p135 = scmp.ne.s32.totalorder %s124, %s127
    %p136 = scmp.eq.s32.totalorder %s15, 1
    %p137 = por %p135, %p136
    %p138 = scmp.ne.s32.totalorder %s127, %s128
    %p139 = scmp.eq.s32.totalorder %s15, 0
    %p140 = por %p138, %p139
    %p141 = scmp.ne.s32.totalorder %s127, %s128
    %p142 = scmp.eq.s32.totalorder %s16, 1
    %p143 = por %p141, %p142
    %p145 = scmp.ne.s32.totalorder %s128, %s144
    %p146 = scmp.eq.s32.totalorder %s16, 0
    %p147 = por %p145, %p146
    %p148 = scmp.le.s32.totalorder 1, %s10
    %p149 = scmp.lt.s32.totalorder %s10, 3
    %p150 = pnand %p148, %p149
    %p151 = pneg %p150
    // Predicated region
    $region9: #{my_loss.5} parent=5 // pred_check
      _
    $region10: #{my_loss.5} parent=5 // pred_check_branch
      %153 = sbr.rel (%p150) target = $region12
    $region11: #{my_loss.5} parent=5 // pred_region
      %s154 = ssub.s32 %s10, 1
    $region12: #{my_loss.5} parent=5 // pred_fallthru
      _
    %p155 = scmp.lt.s32.totalorder %s10, 2
    // Predicated region
    $region13: #{my_loss.5} parent=5 // pred_check
      %p156 = pneg %p155
    $region14: #{my_loss.5} parent=5 // pred_check_branch
      %158 = sbr.rel (%p156) target = $region16
    $region15: #{my_loss.5} parent=5 // pred_region
      // Predicated region
      $region17: #{my_loss.5} parent=15 // pred_check
        %p159 = pneg %p30
      $region18: #{my_loss.5} parent=15 // pred_check_branch
        %161 = sbr.rel (%p159) target = $region20
      $region19: #{my_loss.5} parent=15 // pred_region
        %p162 = scmp.lt.s32.totalorder %s10, 1
        %s163 = scalar_select %p162, %s10, 1
        %s164 = smul.addr %s163, 6
        %s165 = smul.addr %s164, 4
        %s166 = scalar_lea.vmem %s0, %s165
      $region20: #{my_loss.5} parent=15 // pred_fallthru
        _
      // Predicated region
      $region21: #{my_loss.5} parent=15 // pred_check
        %p167 = pneg %p56
      $region22: #{my_loss.5} parent=15 // pred_check_branch
        %169 = sbr.rel (%p167) target = $region24
      $region23: #{my_loss.5} parent=15 // pred_region
        %p170 = scmp.lt.s32.totalorder %s10, 1
        %s171 = scalar_select %p170, %s10, 1
        %s172 = smul.addr %s171, 6
        %s173 = smul.addr %s172, 4
        %s174 = scalar_lea.vmem %s1, %s173
      $region24: #{my_loss.5} parent=15 // pred_fallthru
        _
      // Predicated region
      $region25: #{my_loss.5} parent=15 // pred_check
        %p175 = pneg %p82
      $region26: #{my_loss.5} parent=15 // pred_check_branch
        %177 = sbr.rel (%p175) target = $region28
      $region27: #{my_loss.5} parent=15 // pred_region
        %p178 = scmp.lt.s32.totalorder %s10, 1
        %s179 = scalar_select %p178, %s10, 1
        %s180 = smul.addr %s179, 2
        %s181 = smul.addr %s180, 8
        %s182 = scalar_lea.vmem %s2, %s181
      $region28: #{my_loss.5} parent=15 // pred_fallthru
        _
      // Predicated region
      $region29: #{my_loss.5} parent=15 // pred_check
        %p183 = pneg %p108
      $region30: #{my_loss.5} parent=15 // pred_check_branch
        %185 = sbr.rel (%p183) target = $region32
      $region31: #{my_loss.5} parent=15 // pred_region
        %p186 = scmp.lt.s32.totalorder %s10, 1
        %s187 = scalar_select %p186, %s10, 1
        %s188 = smul.addr %s187, 2
        %s189 = smul.addr %s188, 8
        %s190 = scalar_lea.vmem %s3, %s189
      $region32: #{my_loss.5} parent=15 // pred_fallthru
        _
    $region16: #{my_loss.5} parent=5 // pred_fallthru
      _
    %p191 = scmp.le.s32.totalorder 1, %s10
    %p192 = scmp.lt.s32.totalorder %s10, 3
    %p193 = pnand %p191, %p192
    %p194 = pneg %p193
    // Predicated region
    $region33: #{my_loss.5} parent=5 // pred_check
      _
    $region34: #{my_loss.5} parent=5 // pred_check_branch
      %196 = sbr.rel (%p193) target = $region36
    $region35: #{my_loss.5} parent=5 // pred_region
      %s197 = ssub.s32 %s10, 1
      %p198 = scmp.lt.s32.totalorder %s15, 1
      %s199 = scalar_select %p198, %s15, 1
      %s200 = smul.addr %s199, 6
      %s201 = smul.addr %s200, 4
      %s202 = scalar_lea.vmem %s0, %s201
      %p203 = pneg %p36
      %p204 = pneg %p33
      %p205 = scmp.lt.s32.totalorder %s15, 1
      %s206 = scalar_select %p205, %s15, 1
      %s207 = smul.addr %s206, 6
      %s208 = smul.addr %s207, 4
      %s209 = scalar_lea.vmem %s1, %s208
      %p210 = pneg %p62
      %p211 = pneg %p59
      %p212 = scmp.lt.s32.totalorder %s15, 1
      %s213 = scalar_select %p212, %s15, 1
      %s214 = smul.addr %s213, 2
      %s215 = smul.addr %s214, 8
      %s216 = scalar_lea.vmem %s2, %s215
      %p217 = pneg %p88
      %p218 = pneg %p85
      %p219 = scmp.lt.s32.totalorder %s15, 1
      %s220 = scalar_select %p219, %s15, 1
      %s221 = smul.addr %s220, 2
      %s222 = smul.addr %s221, 8
      %s223 = scalar_lea.vmem %s3, %s222
      %p224 = pneg %p114
      %p225 = pneg %p111
      %p226 = pneg %p140
      %p227 = pneg %p137
      %p228 = scmp.lt.s32.totalorder %s15, 1
      %s229 = scalar_select %p228, %s15, 1
      %s230 = smul.addr %s229, 8
      %s231 = scalar_lea.vmem %s4, %s230
      %p232 = scmp.lt.s32.totalorder %s15, 1
      %s233 = scalar_select %p232, %s15, 1
      %s234 = smul.addr %s233, 6
      %s235 = smul.addr %s234, 4
      %s236 = scalar_lea.vmem %s0, %s235
      %p237 = scmp.lt.s32.totalorder %s15, 1
      %s238 = scalar_select %p237, %s15, 1
      %s239 = smul.addr %s238, 6
      %s240 = smul.addr %s239, 4
      %s241 = scalar_lea.vmem %s1, %s240
      %p242 = scmp.lt.s32.totalorder %s15, 1
      %s243 = scalar_select %p242, %s15, 1
      %s244 = smul.addr %s243, 2
      %s245 = smul.addr %s244, 8
      %s246 = scalar_lea.vmem %s2, %s245
      %p247 = scmp.lt.s32.totalorder %s15, 1
      %s248 = scalar_select %p247, %s15, 1
      %s249 = smul.addr %s248, 2
      %s250 = smul.addr %s249, 8
      %s251 = scalar_lea.vmem %s3, %s250
      %p252 = scmp.lt.s32.totalorder %s15, 1
      %s253 = scalar_select %p252, %s15, 1
      %s254 = smul.addr %s253, 8
      %s255 = scalar_lea.vmem %s4, %s254
      %v256 = vld [vmem:[%s236] sm:$0xf]
      %v257 = vld [vmem:[%s236 + $0x4] sm:$0xf]
      %v258 = vld [vmem:[%s236 + $0x8] sm:$0xf]
      %v259 = vld [vmem:[%s236 + $0xc] sm:$0xf]
      %v260 = vld [vmem:[%s236 + $0x10] sm:$0xf]
      %v261 = vld [vmem:[%s236 + $0x14] sm:$0xf]
      %v262 = vunpack.c.l.bf16 %v256
      %v263 = vunpack.c.l.bf16 %v257
      %v264 = vunpack.c.l.bf16 %v258
      %v265 = vunpack.c.l.bf16 %v259
      %v266 = vunpack.c.l.bf16 %v260
      %v267 = vunpack.c.l.bf16 %v261
      %v268 = vld [vmem:[%s241] sm:$0xf]
      %v269 = vld [vmem:[%s241 + $0x4] sm:$0xf]
      %v270 = vld [vmem:[%s241 + $0x8] sm:$0xf]
      %v271 = vld [vmem:[%s241 + $0xc] sm:$0xf]
      %v272 = vld [vmem:[%s241 + $0x10] sm:$0xf]
      %v273 = vld [vmem:[%s241 + $0x14] sm:$0xf]
      %v274 = vunpack.c.l.bf16 %v268
      %v275 = vunpack.c.l.bf16 %v269
      %v276 = vunpack.c.l.bf16 %v270
      %v277 = vunpack.c.l.bf16 %v271
      %v278 = vunpack.c.l.bf16 %v272
      %v279 = vunpack.c.l.bf16 %v273
      %v280 = vld [vmem:[%s246] sm:$0xff]
      %v281 = vld [vmem:[%s246 + $0x8] sm:$0xff]
      %v282 = vld [vmem:[%s251] sm:$0xff]
      %v283 = vld [vmem:[%s251 + $0x8] sm:$0xff]
      %v284 = vlaneseq
      %v285 = vand.u32 %v284, 127
      %vm286 = vcmp.eq.s32.totalorder %v285, 0
      %vm287 = vcmp.eq.s32.totalorder %v285, 7
      %294 = vrot.lane.b32.xlu0 %v262, 121
      %v295 = vpop.permute.xlu0 %294
      %296 = vrot.lane.b32.xlu0 %v263, 121
      %v297 = vpop.permute.xlu0 %296
      %298 = vrot.lane.b32.xlu0 %v264, 121
      %v299 = vpop.permute.xlu0 %298
      %300 = vrot.lane.b32.xlu0 %v265, 121
      %v301 = vpop.permute.xlu0 %300
      %302 = vrot.lane.b32.xlu0 %v266, 121
      %v303 = vpop.permute.xlu0 %302
      %304 = vrot.lane.b32.xlu0 %v267, 121
      %v305 = vpop.permute.xlu0 %304
      %312 = vrot.lane.b32.xlu0 %v262, 1
      %v313 = vpop.permute.xlu0 %312
      %314 = vrot.lane.b32.xlu0 %v263, 1
      %v315 = vpop.permute.xlu0 %314
      %316 = vrot.lane.b32.xlu0 %v264, 1
      %v317 = vpop.permute.xlu0 %316
      %318 = vrot.lane.b32.xlu0 %v265, 1
      %v319 = vpop.permute.xlu0 %318
      %320 = vrot.lane.b32.xlu0 %v266, 1
      %v321 = vpop.permute.xlu0 %320
      %322 = vrot.lane.b32.xlu0 %v267, 1
      %v323 = vpop.permute.xlu0 %322
      %vm330 = vcmask 7168
      %v331 = vsel %vm330, %v295, %v313
      %v332 = vsel %vm330, %v297, %v315
      %v333 = vsel %vm330, %v299, %v317
      %v334 = vsel %vm330, %v301, %v319
      %v335 = vsel %vm330, %v303, %v321
      %v336 = vsel %vm330, %v305, %v323
      %v337 = vadd.f32 %v331, %v262
      %v338 = vadd.f32 %v332, %v263
      %v339 = vadd.f32 %v333, %v264
      %v340 = vadd.f32 %v334, %v265
      %v341 = vadd.f32 %v335, %v266
      %v342 = vadd.f32 %v336, %v267
      %343 = vrot.lane.b32.xlu0 %v262, 127
      %v344 = vpop.permute.xlu0 %343
      %345 = vrot.lane.b32.xlu0 %v263, 127
      %v346 = vpop.permute.xlu0 %345
      %347 = vrot.lane.b32.xlu0 %v264, 127
      %v348 = vpop.permute.xlu0 %347
      %349 = vrot.lane.b32.xlu0 %v265, 127
      %v350 = vpop.permute.xlu0 %349
      %351 = vrot.lane.b32.xlu0 %v266, 127
      %v352 = vpop.permute.xlu0 %351
      %353 = vrot.lane.b32.xlu0 %v267, 127
      %v354 = vpop.permute.xlu0 %353
      %361 = vrot.lane.b32.xlu0 %v262, 7
      %v362 = vpop.permute.xlu0 %361
      %363 = vrot.lane.b32.xlu0 %v263, 7
      %v364 = vpop.permute.xlu0 %363
      %365 = vrot.lane.b32.xlu0 %v264, 7
      %v366 = vpop.permute.xlu0 %365
      %367 = vrot.lane.b32.xlu0 %v265, 7
      %v368 = vpop.permute.xlu0 %367
      %369 = vrot.lane.b32.xlu0 %v266, 7
      %v370 = vpop.permute.xlu0 %369
      %371 = vrot.lane.b32.xlu0 %v267, 7
      %v372 = vpop.permute.xlu0 %371
      %vm379 = vcmask 56320
      %v380 = vsel %vm379, %v344, %v362
      %v381 = vsel %vm379, %v346, %v364
      %v382 = vsel %vm379, %v348, %v366
      %v383 = vsel %vm379, %v350, %v368
      %v384 = vsel %vm379, %v352, %v370
      %v385 = vsel %vm379, %v354, %v372
      %v386 = vadd.f32 %v337, %v380
      %v387 = vadd.f32 %v338, %v381
      %v388 = vadd.f32 %v339, %v382
      %v389 = vadd.f32 %v340, %v383
      %v390 = vadd.f32 %v341, %v384
      %v391 = vadd.f32 %v342, %v385
      %392 = vrot.lane.b32.xlu0 %v262, 122
      %v393 = vpop.permute.xlu0 %392
      %394 = vrot.lane.b32.xlu0 %v263, 122
      %v395 = vpop.permute.xlu0 %394
      %396 = vrot.lane.b32.xlu0 %v264, 122
      %v397 = vpop.permute.xlu0 %396
      %398 = vrot.lane.b32.xlu0 %v265, 122
      %v399 = vpop.permute.xlu0 %398
      %400 = vrot.lane.b32.xlu0 %v266, 122
      %v401 = vpop.permute.xlu0 %400
      %402 = vrot.lane.b32.xlu0 %v267, 122
      %v403 = vpop.permute.xlu0 %402
      %v410 = vsub.f32 %v262, %v393
      %v411 = vsub.f32 %v263, %v395
      %v412 = vsub.f32 %v264, %v397
      %v413 = vsub.f32 %v265, %v399
      %v414 = vsub.f32 %v266, %v401
      %v415 = vsub.f32 %v267, %v403
      %416 = vrot.lane.b32.xlu0 %v262, 6
      %v417 = vpop.permute.xlu0 %416
      %418 = vrot.lane.b32.xlu0 %v263, 6
      %v419 = vpop.permute.xlu0 %418
      %420 = vrot.lane.b32.xlu0 %v264, 6
      %v421 = vpop.permute.xlu0 %420
      %422 = vrot.lane.b32.xlu0 %v265, 6
      %v423 = vpop.permute.xlu0 %422
      %424 = vrot.lane.b32.xlu0 %v266, 6
      %v425 = vpop.permute.xlu0 %424
      %426 = vrot.lane.b32.xlu0 %v267, 6
      %v427 = vpop.permute.xlu0 %426
      %v434 = vsub.f32 %v262, %v417
      %v435 = vsub.f32 %v263, %v419
      %v436 = vsub.f32 %v264, %v421
      %v437 = vsub.f32 %v265, %v423
      %v438 = vsub.f32 %v266, %v425
      %v439 = vsub.f32 %v267, %v427
      %v440 = vsel %vm286, 1, 0
      %vm441 = vcmp.eq.s32.totalorder %v440, 1
      %443 = vset.pattern.permute.xlu0 1
      %444 = vperm.xlu0 %443, %v410
      %v445 = vpop.permute.xlu0 %444
      %448 = vset.pattern.permute.xlu0 1
      %449 = vperm.xlu0 %448, %v411
      %v450 = vpop.permute.xlu0 %449
      %453 = vset.pattern.permute.xlu0 1
      %454 = vperm.xlu0 %453, %v412
      %v455 = vpop.permute.xlu0 %454
      %458 = vset.pattern.permute.xlu0 1
      %459 = vperm.xlu0 %458, %v413
      %v460 = vpop.permute.xlu0 %459
      %463 = vset.pattern.permute.xlu0 1
      %464 = vperm.xlu0 %463, %v414
      %v465 = vpop.permute.xlu0 %464
      %468 = vset.pattern.permute.xlu0 1
      %469 = vperm.xlu0 %468, %v415
      %v470 = vpop.permute.xlu0 %469
      %v472 = vsel %vm441, %v445, 0.0
      %v473 = vsel %vm441, %v450, 0.0
      %v474 = vsel %vm441, %v455, 0.0
      %v475 = vsel %vm441, %v460, 0.0
      %v476 = vsel %vm441, %v465, 0.0
      %v477 = vsel %vm441, %v470, 0.0
      %v478 = vadd.f32 %v386, %v472
      %v479 = vadd.f32 %v387, %v473
      %v480 = vadd.f32 %v388, %v474
      %v481 = vadd.f32 %v389, %v475
      %v482 = vadd.f32 %v390, %v476
      %v483 = vadd.f32 %v391, %v477
      %v484 = vsel %vm287, 1, 0
      %vm485 = vcmp.eq.s32.totalorder %v484, 1
      %487 = vset.pattern.permute.xlu0 6
      %488 = vperm.xlu0 %487, %v434
      %v489 = vpop.permute.xlu0 %488
      %492 = vset.pattern.permute.xlu0 6
      %493 = vperm.xlu0 %492, %v435
      %v494 = vpop.permute.xlu0 %493
      %497 = vset.pattern.permute.xlu0 6
      %498 = vperm.xlu0 %497, %v436
      %v499 = vpop.permute.xlu0 %498
      %502 = vset.pattern.permute.xlu0 6
      %503 = vperm.xlu0 %502, %v437
      %v504 = vpop.permute.xlu0 %503
      %507 = vset.pattern.permute.xlu0 6
      %508 = vperm.xlu0 %507, %v438
      %v509 = vpop.permute.xlu0 %508
      %512 = vset.pattern.permute.xlu0 6
      %513 = vperm.xlu0 %512, %v439
      %v514 = vpop.permute.xlu0 %513
      %v516 = vsel %vm485, %v489, 0.0
      %v517 = vsel %vm485, %v494, 0.0
      %v518 = vsel %vm485, %v499, 0.0
      %v519 = vsel %vm485, %v504, 0.0
      %v520 = vsel %vm485, %v509, 0.0
      %v521 = vsel %vm485, %v514, 0.0
      %v522 = vadd.f32 %v478, %v516
      %v523 = vadd.f32 %v479, %v517
      %v524 = vadd.f32 %v480, %v518
      %v525 = vadd.f32 %v481, %v519
      %v526 = vadd.f32 %v482, %v520
      %v527 = vadd.f32 %v483, %v521
      %v528 = vmul.f32 %v522, 2.0
      %v529 = vmul.f32 %v523, 2.0
      %v530 = vmul.f32 %v524, 2.0
      %v531 = vmul.f32 %v525, 2.0
      %v532 = vmul.f32 %v526, 2.0
      %v533 = vmul.f32 %v527, 2.0
      %v540 = vrot.slane %v528, 1
      %v541 = vrot.slane %v529, 1
      %v542 = vrot.slane %v530, 1
      %v543 = vrot.slane %v531, 1
      %v544 = vrot.slane %v532, 1
      %v545 = vrot.slane %v533, 1
      %v552 = vadd.f32 %v522, %v540
      %v553 = vadd.f32 %v523, %v541
      %v554 = vadd.f32 %v524, %v542
      %v555 = vadd.f32 %v525, %v543
      %v556 = vadd.f32 %v526, %v544
      %v557 = vadd.f32 %v527, %v545
      %v558 = vrot.slane %v528, 7
      %v559 = vrot.slane %v529, 7
      %v560 = vrot.slane %v530, 7
      %v561 = vrot.slane %v531, 7
      %v562 = vrot.slane %v532, 7
      %v563 = vrot.slane %v533, 7
      %v570 = vadd.f32 %v522, %v558
      %v571 = vadd.f32 %v523, %v559
      %v572 = vadd.f32 %v524, %v560
      %v573 = vadd.f32 %v525, %v561
      %v574 = vadd.f32 %v526, %v562
      %v575 = vadd.f32 %v527, %v563
      %v582 = vrot.slane %v522, 1
      %v583 = vrot.slane %v523, 1
      %v584 = vrot.slane %v524, 1
      %v585 = vrot.slane %v525, 1
      %v586 = vrot.slane %v526, 1
      %v587 = vrot.slane %v527, 1
      %v594 = vadd.f32 %v522, %v582
      %v595 = vadd.f32 %v523, %v583
      %v596 = vadd.f32 %v524, %v584
      %v597 = vadd.f32 %v525, %v585
      %v598 = vadd.f32 %v526, %v586
      %v599 = vadd.f32 %v527, %v587
      %v600 = vrot.slane %v522, 2
      %v601 = vrot.slane %v523, 2
      %v602 = vrot.slane %v524, 2
      %v603 = vrot.slane %v525, 2
      %v604 = vrot.slane %v526, 2
      %v605 = vrot.slane %v527, 2
      %v612 = vadd.f32 %v594, %v600
      %v613 = vadd.f32 %v595, %v601
      %v614 = vadd.f32 %v596, %v602
      %v615 = vadd.f32 %v597, %v603
      %v616 = vadd.f32 %v598, %v604
      %v617 = vadd.f32 %v599, %v605
      %v624 = vrot.slane %v612, 7
      %v625 = vrot.slane %v613, 7
      %v626 = vrot.slane %v614, 7
      %v627 = vrot.slane %v615, 7
      %v628 = vrot.slane %v616, 7
      %v629 = vrot.slane %v617, 7
      %vm636 = vcmask 1040384
      %v637 = vsel %vm636, %v552, %v624
      %v638 = vsel %vm636, %v553, %v625
      %v639 = vsel %vm636, %v554, %v626
      %v640 = vsel %vm636, %v555, %v627
      %v641 = vsel %vm636, %v556, %v628
      %v642 = vsel %vm636, %v557, %v629
      %vm643 = vcmask 1046528
      %v644 = vsel %vm643, %v637, %v570
      %v645 = vsel %vm643, %v638, %v571
      %v646 = vsel %vm643, %v639, %v572
      %v647 = vsel %vm643, %v640, %v573
      %v648 = vsel %vm643, %v641, %v574
      %v649 = vsel %vm643, %v642, %v575
      %v650 = vmul.f32 %v644, 0.11111111
      %v651 = vmul.f32 %v645, 0.11111111
      %v652 = vmul.f32 %v646, 0.11111111
      %v653 = vmul.f32 %v647, 0.11111111
      %v654 = vmul.f32 %v648, 0.11111111
      %v655 = vmul.f32 %v649, 0.11111111
      %662 = vrot.lane.b32.xlu0 %v274, 121
      %v663 = vpop.permute.xlu0 %662
      %664 = vrot.lane.b32.xlu0 %v275, 121
      %v665 = vpop.permute.xlu0 %664
      %666 = vrot.lane.b32.xlu0 %v276, 121
      %v667 = vpop.permute.xlu0 %666
      %668 = vrot.lane.b32.xlu0 %v277, 121
      %v669 = vpop.permute.xlu0 %668
      %670 = vrot.lane.b32.xlu0 %v278, 121
      %v671 = vpop.permute.xlu0 %670
      %672 = vrot.lane.b32.xlu0 %v279, 121
      %v673 = vpop.permute.xlu0 %672
      %680 = vrot.lane.b32.xlu0 %v274, 1
      %v681 = vpop.permute.xlu0 %680
      %682 = vrot.lane.b32.xlu0 %v275, 1
      %v683 = vpop.permute.xlu0 %682
      %684 = vrot.lane.b32.xlu0 %v276, 1
      %v685 = vpop.permute.xlu0 %684
      %686 = vrot.lane.b32.xlu0 %v277, 1
      %v687 = vpop.permute.xlu0 %686
      %688 = vrot.lane.b32.xlu0 %v278, 1
      %v689 = vpop.permute.xlu0 %688
      %690 = vrot.lane.b32.xlu0 %v279, 1
      %v691 = vpop.permute.xlu0 %690
      %v698 = vsel %vm330, %v663, %v681
      %v699 = vsel %vm330, %v665, %v683
      %v700 = vsel %vm330, %v667, %v685
      %v701 = vsel %vm330, %v669, %v687
      %v702 = vsel %vm330, %v671, %v689
      %v703 = vsel %vm330, %v673, %v691
      %v704 = vadd.f32 %v698, %v274
      %v705 = vadd.f32 %v699, %v275
      %v706 = vadd.f32 %v700, %v276
      %v707 = vadd.f32 %v701, %v277
      %v708 = vadd.f32 %v702, %v278
      %v709 = vadd.f32 %v703, %v279
      %710 = vrot.lane.b32.xlu0 %v274, 127
      %v711 = vpop.permute.xlu0 %710
      %712 = vrot.lane.b32.xlu0 %v275, 127
      %v713 = vpop.permute.xlu0 %712
      %714 = vrot.lane.b32.xlu0 %v276, 127
      %v715 = vpop.permute.xlu0 %714
      %716 = vrot.lane.b32.xlu0 %v277, 127
      %v717 = vpop.permute.xlu0 %716
      %718 = vrot.lane.b32.xlu0 %v278, 127
      %v719 = vpop.permute.xlu0 %718
      %720 = vrot.lane.b32.xlu0 %v279, 127
      %v721 = vpop.permute.xlu0 %720
      %728 = vrot.lane.b32.xlu0 %v274, 7
      %v729 = vpop.permute.xlu0 %728
      %730 = vrot.lane.b32.xlu0 %v275, 7
      %v731 = vpop.permute.xlu0 %730
      %732 = vrot.lane.b32.xlu0 %v276, 7
      %v733 = vpop.permute.xlu0 %732
      %734 = vrot.lane.b32.xlu0 %v277, 7
      %v735 = vpop.permute.xlu0 %734
      %736 = vrot.lane.b32.xlu0 %v278, 7
      %v737 = vpop.permute.xlu0 %736
      %738 = vrot.lane.b32.xlu0 %v279, 7
      %v739 = vpop.permute.xlu0 %738
      %v746 = vsel %vm379, %v711, %v729
      %v747 = vsel %vm379, %v713, %v731
      %v748 = vsel %vm379, %v715, %v733
      %v749 = vsel %vm379, %v717, %v735
      %v750 = vsel %vm379, %v719, %v737
      %v751 = vsel %vm379, %v721, %v739
      %v752 = vadd.f32 %v704, %v746
      %v753 = vadd.f32 %v705, %v747
      %v754 = vadd.f32 %v706, %v748
      %v755 = vadd.f32 %v707, %v749
      %v756 = vadd.f32 %v708, %v750
      %v757 = vadd.f32 %v709, %v751
      %758 = vrot.lane.b32.xlu0 %v274, 122
      %v759 = vpop.permute.xlu0 %758
      %760 = vrot.lane.b32.xlu0 %v275, 122
      %v761 = vpop.permute.xlu0 %760
      %762 = vrot.lane.b32.xlu0 %v276, 122
      %v763 = vpop.permute.xlu0 %762
      %764 = vrot.lane.b32.xlu0 %v277, 122
      %v765 = vpop.permute.xlu0 %764
      %766 = vrot.lane.b32.xlu0 %v278, 122
      %v767 = vpop.permute.xlu0 %766
      %768 = vrot.lane.b32.xlu0 %v279, 122
      %v769 = vpop.permute.xlu0 %768
      %v776 = vsub.f32 %v274, %v759
      %v777 = vsub.f32 %v275, %v761
      %v778 = vsub.f32 %v276, %v763
      %v779 = vsub.f32 %v277, %v765
      %v780 = vsub.f32 %v278, %v767
      %v781 = vsub.f32 %v279, %v769
      %782 = vrot.lane.b32.xlu0 %v274, 6
      %v783 = vpop.permute.xlu0 %782
      %784 = vrot.lane.b32.xlu0 %v275, 6
      %v785 = vpop.permute.xlu0 %784
      %786 = vrot.lane.b32.xlu0 %v276, 6
      %v787 = vpop.permute.xlu0 %786
      %788 = vrot.lane.b32.xlu0 %v277, 6
      %v789 = vpop.permute.xlu0 %788
      %790 = vrot.lane.b32.xlu0 %v278, 6
      %v791 = vpop.permute.xlu0 %790
      %792 = vrot.lane.b32.xlu0 %v279, 6
      %v793 = vpop.permute.xlu0 %792
      %v800 = vsub.f32 %v274, %v783
      %v801 = vsub.f32 %v275, %v785
      %v802 = vsub.f32 %v276, %v787
      %v803 = vsub.f32 %v277, %v789
      %v804 = vsub.f32 %v278, %v791
      %v805 = vsub.f32 %v279, %v793
      %807 = vset.pattern.permute.xlu0 1
      %808 = vperm.xlu0 %807, %v776
      %v809 = vpop.permute.xlu0 %808
      %812 = vset.pattern.permute.xlu0 1
      %813 = vperm.xlu0 %812, %v777
      %v814 = vpop.permute.xlu0 %813
      %817 = vset.pattern.permute.xlu0 1
      %818 = vperm.xlu0 %817, %v778
      %v819 = vpop.permute.xlu0 %818
      %822 = vset.pattern.permute.xlu0 1
      %823 = vperm.xlu0 %822, %v779
      %v824 = vpop.permute.xlu0 %823
      %827 = vset.pattern.permute.xlu0 1
      %828 = vperm.xlu0 %827, %v780
      %v829 = vpop.permute.xlu0 %828
      %832 = vset.pattern.permute.xlu0 1
      %833 = vperm.xlu0 %832, %v781
      %v834 = vpop.permute.xlu0 %833
      %v836 = vsel %vm441, %v809, 0.0
      %v837 = vsel %vm441, %v814, 0.0
      %v838 = vsel %vm441, %v819, 0.0
      %v839 = vsel %vm441, %v824, 0.0
      %v840 = vsel %vm441, %v829, 0.0
      %v841 = vsel %vm441, %v834, 0.0
      %v842 = vadd.f32 %v752, %v836
      %v843 = vadd.f32 %v753, %v837
      %v844 = vadd.f32 %v754, %v838
      %v845 = vadd.f32 %v755, %v839
      %v846 = vadd.f32 %v756, %v840
      %v847 = vadd.f32 %v757, %v841
      %849 = vset.pattern.permute.xlu0 6
      %850 = vperm.xlu0 %849, %v800
      %v851 = vpop.permute.xlu0 %850
      %854 = vset.pattern.permute.xlu0 6
      %855 = vperm.xlu0 %854, %v801
      %v856 = vpop.permute.xlu0 %855
      %859 = vset.pattern.permute.xlu0 6
      %860 = vperm.xlu0 %859, %v802
      %v861 = vpop.permute.xlu0 %860
      %864 = vset.pattern.permute.xlu0 6
      %865 = vperm.xlu0 %864, %v803
      %v866 = vpop.permute.xlu0 %865
      %869 = vset.pattern.permute.xlu0 6
      %870 = vperm.xlu0 %869, %v804
      %v871 = vpop.permute.xlu0 %870
      %874 = vset.pattern.permute.xlu0 6
      %875 = vperm.xlu0 %874, %v805
      %v876 = vpop.permute.xlu0 %875
      %v878 = vsel %vm485, %v851, 0.0
      %v879 = vsel %vm485, %v856, 0.0
      %v880 = vsel %vm485, %v861, 0.0
      %v881 = vsel %vm485, %v866, 0.0
      %v882 = vsel %vm485, %v871, 0.0
      %v883 = vsel %vm485, %v876, 0.0
      %v884 = vadd.f32 %v842, %v878
      %v885 = vadd.f32 %v843, %v879
      %v886 = vadd.f32 %v844, %v880
      %v887 = vadd.f32 %v845, %v881
      %v888 = vadd.f32 %v846, %v882
      %v889 = vadd.f32 %v847, %v883
      %v890 = vmul.f32 %v884, 2.0
      %v891 = vmul.f32 %v885, 2.0
      %v892 = vmul.f32 %v886, 2.0
      %v893 = vmul.f32 %v887, 2.0
      %v894 = vmul.f32 %v888, 2.0
      %v895 = vmul.f32 %v889, 2.0
      %v902 = vrot.slane %v890, 1
      %v903 = vrot.slane %v891, 1
      %v904 = vrot.slane %v892, 1
      %v905 = vrot.slane %v893, 1
      %v906 = vrot.slane %v894, 1
      %v907 = vrot.slane %v895, 1
      %v914 = vadd.f32 %v884, %v902
      %v915 = vadd.f32 %v885, %v903
      %v916 = vadd.f32 %v886, %v904
      %v917 = vadd.f32 %v887, %v905
      %v918 = vadd.f32 %v888, %v906
      %v919 = vadd.f32 %v889, %v907
      %v920 = vrot.slane %v890, 7
      %v921 = vrot.slane %v891, 7
      %v922 = vrot.slane %v892, 7
      %v923 = vrot.slane %v893, 7
      %v924 = vrot.slane %v894, 7
      %v925 = vrot.slane %v895, 7
      %v932 = vadd.f32 %v884, %v920
      %v933 = vadd.f32 %v885, %v921
      %v934 = vadd.f32 %v886, %v922
      %v935 = vadd.f32 %v887, %v923
      %v936 = vadd.f32 %v888, %v924
      %v937 = vadd.f32 %v889, %v925
      %v944 = vrot.slane %v884, 1
      %v945 = vrot.slane %v885, 1
      %v946 = vrot.slane %v886, 1
      %v947 = vrot.slane %v887, 1
      %v948 = vrot.slane %v888, 1
      %v949 = vrot.slane %v889, 1
      %v956 = vadd.f32 %v884, %v944
      %v957 = vadd.f32 %v885, %v945
      %v958 = vadd.f32 %v886, %v946
      %v959 = vadd.f32 %v887, %v947
      %v960 = vadd.f32 %v888, %v948
      %v961 = vadd.f32 %v889, %v949
      %v962 = vrot.slane %v884, 2
      %v963 = vrot.slane %v885, 2
      %v964 = vrot.slane %v886, 2
      %v965 = vrot.slane %v887, 2
      %v966 = vrot.slane %v888, 2
      %v967 = vrot.slane %v889, 2
      %v974 = vadd.f32 %v956, %v962
      %v975 = vadd.f32 %v957, %v963
      %v976 = vadd.f32 %v958, %v964
      %v977 = vadd.f32 %v959, %v965
      %v978 = vadd.f32 %v960, %v966
      %v979 = vadd.f32 %v961, %v967
      %v986 = vrot.slane %v974, 7
      %v987 = vrot.slane %v975, 7
      %v988 = vrot.slane %v976, 7
      %v989 = vrot.slane %v977, 7
      %v990 = vrot.slane %v978, 7
      %v991 = vrot.slane %v979, 7
      %v998 = vsel %vm636, %v914, %v986
      %v999 = vsel %vm636, %v915, %v987
      %v1000 = vsel %vm636, %v916, %v988
      %v1001 = vsel %vm636, %v917, %v989
      %v1002 = vsel %vm636, %v918, %v990
      %v1003 = vsel %vm636, %v919, %v991
      %v1004 = vsel %vm643, %v998, %v932
      %v1005 = vsel %vm643, %v999, %v933
      %v1006 = vsel %vm643, %v1000, %v934
      %v1007 = vsel %vm643, %v1001, %v935
      %v1008 = vsel %vm643, %v1002, %v936
      %v1009 = vsel %vm643, %v1003, %v937
      %v1010 = vmul.f32 %v1004, 0.11111111
      %v1011 = vmul.f32 %v1005, 0.11111111
      %v1012 = vmul.f32 %v1006, 0.11111111
      %v1013 = vmul.f32 %v1007, 0.11111111
      %v1014 = vmul.f32 %v1008, 0.11111111
      %v1015 = vmul.f32 %v1009, 0.11111111
      %v1016 = vmul.f32 %v262, %v262
      %v1017 = vmul.f32 %v263, %v263
      %v1018 = vmul.f32 %v264, %v264
      %v1019 = vmul.f32 %v265, %v265
      %v1020 = vmul.f32 %v266, %v266
      %v1021 = vmul.f32 %v267, %v267
      %v1022 = vmul.f32 %v274, %v274
      %v1023 = vmul.f32 %v275, %v275
      %v1024 = vmul.f32 %v276, %v276
      %v1025 = vmul.f32 %v277, %v277
      %v1026 = vmul.f32 %v278, %v278
      %v1027 = vmul.f32 %v279, %v279
      %v1028 = vadd.f32 %v1016, %v1022
      %v1029 = vadd.f32 %v1017, %v1023
      %v1030 = vadd.f32 %v1018, %v1024
      %v1031 = vadd.f32 %v1019, %v1025
      %v1032 = vadd.f32 %v1020, %v1026
      %v1033 = vadd.f32 %v1021, %v1027
      %1040 = vrot.lane.b32.xlu0 %v1028, 121
      %v1041 = vpop.permute.xlu0 %1040
      %1042 = vrot.lane.b32.xlu0 %v1029, 121
      %v1043 = vpop.permute.xlu0 %1042
      %1044 = vrot.lane.b32.xlu0 %v1030, 121
      %v1045 = vpop.permute.xlu0 %1044
      %1046 = vrot.lane.b32.xlu0 %v1031, 121
      %v1047 = vpop.permute.xlu0 %1046
      %1048 = vrot.lane.b32.xlu0 %v1032, 121
      %v1049 = vpop.permute.xlu0 %1048
      %1050 = vrot.lane.b32.xlu0 %v1033, 121
      %v1051 = vpop.permute.xlu0 %1050
      %1058 = vrot.lane.b32.xlu0 %v1028, 1
      %v1059 = vpop.permute.xlu0 %1058
      %1060 = vrot.lane.b32.xlu0 %v1029, 1
      %v1061 = vpop.permute.xlu0 %1060
      %1062 = vrot.lane.b32.xlu0 %v1030, 1
      %v1063 = vpop.permute.xlu0 %1062
      %1064 = vrot.lane.b32.xlu0 %v1031, 1
      %v1065 = vpop.permute.xlu0 %1064
      %1066 = vrot.lane.b32.xlu0 %v1032, 1
      %v1067 = vpop.permute.xlu0 %1066
      %1068 = vrot.lane.b32.xlu0 %v1033, 1
      %v1069 = vpop.permute.xlu0 %1068
      %v1076 = vsel %vm330, %v1041, %v1059
      %v1077 = vsel %vm330, %v1043, %v1061
      %v1078 = vsel %vm330, %v1045, %v1063
      %v1079 = vsel %vm330, %v1047, %v1065
      %v1080 = vsel %vm330, %v1049, %v1067
      %v1081 = vsel %vm330, %v1051, %v1069
      %v1082 = vadd.f32 %v1076, %v1028
      %v1083 = vadd.f32 %v1077, %v1029
      %v1084 = vadd.f32 %v1078, %v1030
      %v1085 = vadd.f32 %v1079, %v1031
      %v1086 = vadd.f32 %v1080, %v1032
      %v1087 = vadd.f32 %v1081, %v1033
      %1088 = vrot.lane.b32.xlu0 %v1028, 127
      %v1089 = vpop.permute.xlu0 %1088
      %1090 = vrot.lane.b32.xlu0 %v1029, 127
      %v1091 = vpop.permute.xlu0 %1090
      %1092 = vrot.lane.b32.xlu0 %v1030, 127
      %v1093 = vpop.permute.xlu0 %1092
      %1094 = vrot.lane.b32.xlu0 %v1031, 127
      %v1095 = vpop.permute.xlu0 %1094
      %1096 = vrot.lane.b32.xlu0 %v1032, 127
      %v1097 = vpop.permute.xlu0 %1096
      %1098 = vrot.lane.b32.xlu0 %v1033, 127
      %v1099 = vpop.permute.xlu0 %1098
      %1106 = vrot.lane.b32.xlu0 %v1028, 7
      %v1107 = vpop.permute.xlu0 %1106
      %1108 = vrot.lane.b32.xlu0 %v1029, 7
      %v1109 = vpop.permute.xlu0 %1108
      %1110 = vrot.lane.b32.xlu0 %v1030, 7
      %v1111 = vpop.permute.xlu0 %1110
      %1112 = vrot.lane.b32.xlu0 %v1031, 7
      %v1113 = vpop.permute.xlu0 %1112
      %1114 = vrot.lane.b32.xlu0 %v1032, 7
      %v1115 = vpop.permute.xlu0 %1114
      %1116 = vrot.lane.b32.xlu0 %v1033, 7
      %v1117 = vpop.permute.xlu0 %1116
      %v1124 = vsel %vm379, %v1089, %v1107
      %v1125 = vsel %vm379, %v1091, %v1109
      %v1126 = vsel %vm379, %v1093, %v1111
      %v1127 = vsel %vm379, %v1095, %v1113
      %v1128 = vsel %vm379, %v1097, %v1115
      %v1129 = vsel %vm379, %v1099, %v1117
      %v1130 = vadd.f32 %v1082, %v1124
      %v1131 = vadd.f32 %v1083, %v1125
      %v1132 = vadd.f32 %v1084, %v1126
      %v1133 = vadd.f32 %v1085, %v1127
      %v1134 = vadd.f32 %v1086, %v1128
      %v1135 = vadd.f32 %v1087, %v1129
      %1136 = vrot.lane.b32.xlu0 %v1028, 122
      %v1137 = vpop.permute.xlu0 %1136
      %1138 = vrot.lane.b32.xlu0 %v1029, 122
      %v1139 = vpop.permute.xlu0 %1138
      %1140 = vrot.lane.b32.xlu0 %v1030, 122
      %v1141 = vpop.permute.xlu0 %1140
      %1142 = vrot.lane.b32.xlu0 %v1031, 122
      %v1143 = vpop.permute.xlu0 %1142
      %1144 = vrot.lane.b32.xlu0 %v1032, 122
      %v1145 = vpop.permute.xlu0 %1144
      %1146 = vrot.lane.b32.xlu0 %v1033, 122
      %v1147 = vpop.permute.xlu0 %1146
      %v1154 = vsub.f32 %v1028, %v1137
      %v1155 = vsub.f32 %v1029, %v1139
      %v1156 = vsub.f32 %v1030, %v1141
      %v1157 = vsub.f32 %v1031, %v1143
      %v1158 = vsub.f32 %v1032, %v1145
      %v1159 = vsub.f32 %v1033, %v1147
      %1160 = vrot.lane.b32.xlu0 %v1028, 6
      %v1161 = vpop.permute.xlu0 %1160
      %1162 = vrot.lane.b32.xlu0 %v1029, 6
      %v1163 = vpop.permute.xlu0 %1162
      %1164 = vrot.lane.b32.xlu0 %v1030, 6
      %v1165 = vpop.permute.xlu0 %1164
      %1166 = vrot.lane.b32.xlu0 %v1031, 6
      %v1167 = vpop.permute.xlu0 %1166
      %1168 = vrot.lane.b32.xlu0 %v1032, 6
      %v1169 = vpop.permute.xlu0 %1168
      %1170 = vrot.lane.b32.xlu0 %v1033, 6
      %v1171 = vpop.permute.xlu0 %1170
      %v1178 = vsub.f32 %v1028, %v1161
      %v1179 = vsub.f32 %v1029, %v1163
      %v1180 = vsub.f32 %v1030, %v1165
      %v1181 = vsub.f32 %v1031, %v1167
      %v1182 = vsub.f32 %v1032, %v1169
      %v1183 = vsub.f32 %v1033, %v1171
      %1185 = vset.pattern.permute.xlu0 1
      %1186 = vperm.xlu0 %1185, %v1154
      %v1187 = vpop.permute.xlu0 %1186
      %1190 = vset.pattern.permute.xlu0 1
      %1191 = vperm.xlu0 %1190, %v1155
      %v1192 = vpop.permute.xlu0 %1191
      %1195 = vset.pattern.permute.xlu0 1
      %1196 = vperm.xlu0 %1195, %v1156
      %v1197 = vpop.permute.xlu0 %1196
      %1200 = vset.pattern.permute.xlu0 1
      %1201 = vperm.xlu0 %1200, %v1157
      %v1202 = vpop.permute.xlu0 %1201
      %1205 = vset.pattern.permute.xlu0 1
      %1206 = vperm.xlu0 %1205, %v1158
      %v1207 = vpop.permute.xlu0 %1206
      %1210 = vset.pattern.permute.xlu0 1
      %1211 = vperm.xlu0 %1210, %v1159
      %v1212 = vpop.permute.xlu0 %1211
      %v1214 = vsel %vm441, %v1187, 0.0
      %v1215 = vsel %vm441, %v1192, 0.0
      %v1216 = vsel %vm441, %v1197, 0.0
      %v1217 = vsel %vm441, %v1202, 0.0
      %v1218 = vsel %vm441, %v1207, 0.0
      %v1219 = vsel %vm441, %v1212, 0.0
      %v1220 = vadd.f32 %v1130, %v1214
      %v1221 = vadd.f32 %v1131, %v1215
      %v1222 = vadd.f32 %v1132, %v1216
      %v1223 = vadd.f32 %v1133, %v1217
      %v1224 = vadd.f32 %v1134, %v1218
      %v1225 = vadd.f32 %v1135, %v1219
      %1227 = vset.pattern.permute.xlu0 6
      %1228 = vperm.xlu0 %1227, %v1178
      %v1229 = vpop.permute.xlu0 %1228
      %1232 = vset.pattern.permute.xlu0 6
      %1233 = vperm.xlu0 %1232, %v1179
      %v1234 = vpop.permute.xlu0 %1233
      %1237 = vset.pattern.permute.xlu0 6
      %1238 = vperm.xlu0 %1237, %v1180
      %v1239 = vpop.permute.xlu0 %1238
      %1242 = vset.pattern.permute.xlu0 6
      %1243 = vperm.xlu0 %1242, %v1181
      %v1244 = vpop.permute.xlu0 %1243
      %1247 = vset.pattern.permute.xlu0 6
      %1248 = vperm.xlu0 %1247, %v1182
      %v1249 = vpop.permute.xlu0 %1248
      %1252 = vset.pattern.permute.xlu0 6
      %1253 = vperm.xlu0 %1252, %v1183
      %v1254 = vpop.permute.xlu0 %1253
      %v1256 = vsel %vm485, %v1229, 0.0
      %v1257 = vsel %vm485, %v1234, 0.0
      %v1258 = vsel %vm485, %v1239, 0.0
      %v1259 = vsel %vm485, %v1244, 0.0
      %v1260 = vsel %vm485, %v1249, 0.0
      %v1261 = vsel %vm485, %v1254, 0.0
      %v1262 = vadd.f32 %v1220, %v1256
      %v1263 = vadd.f32 %v1221, %v1257
      %v1264 = vadd.f32 %v1222, %v1258
      %v1265 = vadd.f32 %v1223, %v1259
      %v1266 = vadd.f32 %v1224, %v1260
      %v1267 = vadd.f32 %v1225, %v1261
      %v1268 = vmul.f32 %v1262, 2.0
      %v1269 = vmul.f32 %v1263, 2.0
      %v1270 = vmul.f32 %v1264, 2.0
      %v1271 = vmul.f32 %v1265, 2.0
      %v1272 = vmul.f32 %v1266, 2.0
      %v1273 = vmul.f32 %v1267, 2.0
      %v1280 = vrot.slane %v1268, 1
      %v1281 = vrot.slane %v1269, 1
      %v1282 = vrot.slane %v1270, 1
      %v1283 = vrot.slane %v1271, 1
      %v1284 = vrot.slane %v1272, 1
      %v1285 = vrot.slane %v1273, 1
      %v1292 = vadd.f32 %v1262, %v1280
      %v1293 = vadd.f32 %v1263, %v1281
      %v1294 = vadd.f32 %v1264, %v1282
      %v1295 = vadd.f32 %v1265, %v1283
      %v1296 = vadd.f32 %v1266, %v1284
      %v1297 = vadd.f32 %v1267, %v1285
      %v1298 = vrot.slane %v1268, 7
      %v1299 = vrot.slane %v1269, 7
      %v1300 = vrot.slane %v1270, 7
      %v1301 = vrot.slane %v1271, 7
      %v1302 = vrot.slane %v1272, 7
      %v1303 = vrot.slane %v1273, 7
      %v1310 = vadd.f32 %v1262, %v1298
      %v1311 = vadd.f32 %v1263, %v1299
      %v1312 = vadd.f32 %v1264, %v1300
      %v1313 = vadd.f32 %v1265, %v1301
      %v1314 = vadd.f32 %v1266, %v1302
      %v1315 = vadd.f32 %v1267, %v1303
      %v1322 = vrot.slane %v1262, 1
      %v1323 = vrot.slane %v1263, 1
      %v1324 = vrot.slane %v1264, 1
      %v1325 = vrot.slane %v1265, 1
      %v1326 = vrot.slane %v1266, 1
      %v1327 = vrot.slane %v1267, 1
      %v1334 = vadd.f32 %v1262, %v1322
      %v1335 = vadd.f32 %v1263, %v1323
      %v1336 = vadd.f32 %v1264, %v1324
      %v1337 = vadd.f32 %v1265, %v1325
      %v1338 = vadd.f32 %v1266, %v1326
      %v1339 = vadd.f32 %v1267, %v1327
      %v1340 = vrot.slane %v1262, 2
      %v1341 = vrot.slane %v1263, 2
      %v1342 = vrot.slane %v1264, 2
      %v1343 = vrot.slane %v1265, 2
      %v1344 = vrot.slane %v1266, 2
      %v1345 = vrot.slane %v1267, 2
      %v1352 = vadd.f32 %v1334, %v1340
      %v1353 = vadd.f32 %v1335, %v1341
      %v1354 = vadd.f32 %v1336, %v1342
      %v1355 = vadd.f32 %v1337, %v1343
      %v1356 = vadd.f32 %v1338, %v1344
      %v1357 = vadd.f32 %v1339, %v1345
      %v1364 = vrot.slane %v1352, 7
      %v1365 = vrot.slane %v1353, 7
      %v1366 = vrot.slane %v1354, 7
      %v1367 = vrot.slane %v1355, 7
      %v1368 = vrot.slane %v1356, 7
      %v1369 = vrot.slane %v1357, 7
      %v1376 = vsel %vm636, %v1292, %v1364
      %v1377 = vsel %vm636, %v1293, %v1365
      %v1378 = vsel %vm636, %v1294, %v1366
      %v1379 = vsel %vm636, %v1295, %v1367
      %v1380 = vsel %vm636, %v1296, %v1368
      %v1381 = vsel %vm636, %v1297, %v1369
      %v1382 = vsel %vm643, %v1376, %v1310
      %v1383 = vsel %vm643, %v1377, %v1311
      %v1384 = vsel %vm643, %v1378, %v1312
      %v1385 = vsel %vm643, %v1379, %v1313
      %v1386 = vsel %vm643, %v1380, %v1314
      %v1387 = vsel %vm643, %v1381, %v1315
      %v1388 = vmul.f32 %v1382, 0.11111111
      %v1389 = vmul.f32 %v1383, 0.11111111
      %v1390 = vmul.f32 %v1384, 0.11111111
      %v1391 = vmul.f32 %v1385, 0.11111111
      %v1392 = vmul.f32 %v1386, 0.11111111
      %v1393 = vmul.f32 %v1387, 0.11111111
      %v1394 = vmul.f32 %v650, %v650
      %v1395 = vmul.f32 %v651, %v651
      %v1396 = vmul.f32 %v652, %v652
      %v1397 = vmul.f32 %v653, %v653
      %v1398 = vmul.f32 %v654, %v654
      %v1399 = vmul.f32 %v655, %v655
      %v1400 = vsub.f32 %v1388, %v1394
      %v1401 = vsub.f32 %v1389, %v1395
      %v1402 = vsub.f32 %v1390, %v1396
      %v1403 = vsub.f32 %v1391, %v1397
      %v1404 = vsub.f32 %v1392, %v1398
      %v1405 = vsub.f32 %v1393, %v1399
      %v1406 = vmul.f32 %v1010, %v1010
      %v1407 = vmul.f32 %v1011, %v1011
      %v1408 = vmul.f32 %v1012, %v1012
      %v1409 = vmul.f32 %v1013, %v1013
      %v1410 = vmul.f32 %v1014, %v1014
      %v1411 = vmul.f32 %v1015, %v1015
      %v1412 = vsub.f32 %v1400, %v1406
      %v1413 = vsub.f32 %v1401, %v1407
      %v1414 = vsub.f32 %v1402, %v1408
      %v1415 = vsub.f32 %v1403, %v1409
      %v1416 = vsub.f32 %v1404, %v1410
      %v1417 = vsub.f32 %v1405, %v1411
      %v1418 = vmul.f32 %v262, %v274
      %v1419 = vmul.f32 %v263, %v275
      %v1420 = vmul.f32 %v264, %v276
      %v1421 = vmul.f32 %v265, %v277
      %v1422 = vmul.f32 %v266, %v278
      %v1423 = vmul.f32 %v267, %v279
      %1430 = vrot.lane.b32.xlu0 %v1418, 121
      %v1431 = vpop.permute.xlu0 %1430
      %1432 = vrot.lane.b32.xlu0 %v1419, 121
      %v1433 = vpop.permute.xlu0 %1432
      %1434 = vrot.lane.b32.xlu0 %v1420, 121
      %v1435 = vpop.permute.xlu0 %1434
      %1436 = vrot.lane.b32.xlu0 %v1421, 121
      %v1437 = vpop.permute.xlu0 %1436
      %1438 = vrot.lane.b32.xlu0 %v1422, 121
      %v1439 = vpop.permute.xlu0 %1438
      %1440 = vrot.lane.b32.xlu0 %v1423, 121
      %v1441 = vpop.permute.xlu0 %1440
      %1448 = vrot.lane.b32.xlu0 %v1418, 1
      %v1449 = vpop.permute.xlu0 %1448
      %1450 = vrot.lane.b32.xlu0 %v1419, 1
      %v1451 = vpop.permute.xlu0 %1450
      %1452 = vrot.lane.b32.xlu0 %v1420, 1
      %v1453 = vpop.permute.xlu0 %1452
      %1454 = vrot.lane.b32.xlu0 %v1421, 1
      %v1455 = vpop.permute.xlu0 %1454
      %1456 = vrot.lane.b32.xlu0 %v1422, 1
      %v1457 = vpop.permute.xlu0 %1456
      %1458 = vrot.lane.b32.xlu0 %v1423, 1
      %v1459 = vpop.permute.xlu0 %1458
      %v1466 = vsel %vm330, %v1431, %v1449
      %v1467 = vsel %vm330, %v1433, %v1451
      %v1468 = vsel %vm330, %v1435, %v1453
      %v1469 = vsel %vm330, %v1437, %v1455
      %v1470 = vsel %vm330, %v1439, %v1457
      %v1471 = vsel %vm330, %v1441, %v1459
      %v1472 = vadd.f32 %v1466, %v1418
      %v1473 = vadd.f32 %v1467, %v1419
      %v1474 = vadd.f32 %v1468, %v1420
      %v1475 = vadd.f32 %v1469, %v1421
      %v1476 = vadd.f32 %v1470, %v1422
      %v1477 = vadd.f32 %v1471, %v1423
      %1478 = vrot.lane.b32.xlu0 %v1418, 127
      %v1479 = vpop.permute.xlu0 %1478
      %1480 = vrot.lane.b32.xlu0 %v1419, 127
      %v1481 = vpop.permute.xlu0 %1480
      %1482 = vrot.lane.b32.xlu0 %v1420, 127
      %v1483 = vpop.permute.xlu0 %1482
      %1484 = vrot.lane.b32.xlu0 %v1421, 127
      %v1485 = vpop.permute.xlu0 %1484
      %1486 = vrot.lane.b32.xlu0 %v1422, 127
      %v1487 = vpop.permute.xlu0 %1486
      %1488 = vrot.lane.b32.xlu0 %v1423, 127
      %v1489 = vpop.permute.xlu0 %1488
      %1496 = vrot.lane.b32.xlu0 %v1418, 7
      %v1497 = vpop.permute.xlu0 %1496
      %1498 = vrot.lane.b32.xlu0 %v1419, 7
      %v1499 = vpop.permute.xlu0 %1498
      %1500 = vrot.lane.b32.xlu0 %v1420, 7
      %v1501 = vpop.permute.xlu0 %1500
      %1502 = vrot.lane.b32.xlu0 %v1421, 7
      %v1503 = vpop.permute.xlu0 %1502
      %1504 = vrot.lane.b32.xlu0 %v1422, 7
      %v1505 = vpop.permute.xlu0 %1504
      %1506 = vrot.lane.b32.xlu0 %v1423, 7
      %v1507 = vpop.permute.xlu0 %1506
      %v1514 = vsel %vm379, %v1479, %v1497
      %v1515 = vsel %vm379, %v1481, %v1499
      %v1516 = vsel %vm379, %v1483, %v1501
      %v1517 = vsel %vm379, %v1485, %v1503
      %v1518 = vsel %vm379, %v1487, %v1505
      %v1519 = vsel %vm379, %v1489, %v1507
      %v1520 = vadd.f32 %v1472, %v1514
      %v1521 = vadd.f32 %v1473, %v1515
      %v1522 = vadd.f32 %v1474, %v1516
      %v1523 = vadd.f32 %v1475, %v1517
      %v1524 = vadd.f32 %v1476, %v1518
      %v1525 = vadd.f32 %v1477, %v1519
      %1526 = vrot.lane.b32.xlu0 %v1418, 122
      %v1527 = vpop.permute.xlu0 %1526
      %1528 = vrot.lane.b32.xlu0 %v1419, 122
      %v1529 = vpop.permute.xlu0 %1528
      %1530 = vrot.lane.b32.xlu0 %v1420, 122
      %v1531 = vpop.permute.xlu0 %1530
      %1532 = vrot.lane.b32.xlu0 %v1421, 122
      %v1533 = vpop.permute.xlu0 %1532
      %1534 = vrot.lane.b32.xlu0 %v1422, 122
      %v1535 = vpop.permute.xlu0 %1534
      %1536 = vrot.lane.b32.xlu0 %v1423, 122
      %v1537 = vpop.permute.xlu0 %1536
      %v1544 = vsub.f32 %v1418, %v1527
      %v1545 = vsub.f32 %v1419, %v1529
      %v1546 = vsub.f32 %v1420, %v1531
      %v1547 = vsub.f32 %v1421, %v1533
      %v1548 = vsub.f32 %v1422, %v1535
      %v1549 = vsub.f32 %v1423, %v1537
      %1550 = vrot.lane.b32.xlu0 %v1418, 6
      %v1551 = vpop.permute.xlu0 %1550
      %1552 = vrot.lane.b32.xlu0 %v1419, 6
      %v1553 = vpop.permute.xlu0 %1552
      %1554 = vrot.lane.b32.xlu0 %v1420, 6
      %v1555 = vpop.permute.xlu0 %1554
      %1556 = vrot.lane.b32.xlu0 %v1421, 6
      %v1557 = vpop.permute.xlu0 %1556
      %1558 = vrot.lane.b32.xlu0 %v1422, 6
      %v1559 = vpop.permute.xlu0 %1558
      %1560 = vrot.lane.b32.xlu0 %v1423, 6
      %v1561 = vpop.permute.xlu0 %1560
      %v1568 = vsub.f32 %v1418, %v1551
      %v1569 = vsub.f32 %v1419, %v1553
      %v1570 = vsub.f32 %v1420, %v1555
      %v1571 = vsub.f32 %v1421, %v1557
      %v1572 = vsub.f32 %v1422, %v1559
      %v1573 = vsub.f32 %v1423, %v1561
      %1575 = vset.pattern.permute.xlu0 1
      %1576 = vperm.xlu0 %1575, %v1544
      %v1577 = vpop.permute.xlu0 %1576
      %1580 = vset.pattern.permute.xlu0 1
      %1581 = vperm.xlu0 %1580, %v1545
      %v1582 = vpop.permute.xlu0 %1581
      %1585 = vset.pattern.permute.xlu0 1
      %1586 = vperm.xlu0 %1585, %v1546
      %v1587 = vpop.permute.xlu0 %1586
      %1590 = vset.pattern.permute.xlu0 1
      %1591 = vperm.xlu0 %1590, %v1547
      %v1592 = vpop.permute.xlu0 %1591
      %1595 = vset.pattern.permute.xlu0 1
      %1596 = vperm.xlu0 %1595, %v1548
      %v1597 = vpop.permute.xlu0 %1596
      %1600 = vset.pattern.permute.xlu0 1
      %1601 = vperm.xlu0 %1600, %v1549
      %v1602 = vpop.permute.xlu0 %1601
      %v1604 = vsel %vm441, %v1577, 0.0
      %v1605 = vsel %vm441, %v1582, 0.0
      %v1606 = vsel %vm441, %v1587, 0.0
      %v1607 = vsel %vm441, %v1592, 0.0
      %v1608 = vsel %vm441, %v1597, 0.0
      %v1609 = vsel %vm441, %v1602, 0.0
      %v1610 = vadd.f32 %v1520, %v1604
      %v1611 = vadd.f32 %v1521, %v1605
      %v1612 = vadd.f32 %v1522, %v1606
      %v1613 = vadd.f32 %v1523, %v1607
      %v1614 = vadd.f32 %v1524, %v1608
      %v1615 = vadd.f32 %v1525, %v1609
      %1617 = vset.pattern.permute.xlu0 6
      %1618 = vperm.xlu0 %1617, %v1568
      %v1619 = vpop.permute.xlu0 %1618
      %1622 = vset.pattern.permute.xlu0 6
      %1623 = vperm.xlu0 %1622, %v1569
      %v1624 = vpop.permute.xlu0 %1623
      %1627 = vset.pattern.permute.xlu0 6
      %1628 = vperm.xlu0 %1627, %v1570
      %v1629 = vpop.permute.xlu0 %1628
      %1632 = vset.pattern.permute.xlu0 6
      %1633 = vperm.xlu0 %1632, %v1571
      %v1634 = vpop.permute.xlu0 %1633
      %1637 = vset.pattern.permute.xlu0 6
      %1638 = vperm.xlu0 %1637, %v1572
      %v1639 = vpop.permute.xlu0 %1638
      %1642 = vset.pattern.permute.xlu0 6
      %1643 = vperm.xlu0 %1642, %v1573
      %v1644 = vpop.permute.xlu0 %1643
      %v1646 = vsel %vm485, %v1619, 0.0
      %v1647 = vsel %vm485, %v1624, 0.0
      %v1648 = vsel %vm485, %v1629, 0.0
      %v1649 = vsel %vm485, %v1634, 0.0
      %v1650 = vsel %vm485, %v1639, 0.0
      %v1651 = vsel %vm485, %v1644, 0.0
      %v1652 = vadd.f32 %v1610, %v1646
      %v1653 = vadd.f32 %v1611, %v1647
      %v1654 = vadd.f32 %v1612, %v1648
      %v1655 = vadd.f32 %v1613, %v1649
      %v1656 = vadd.f32 %v1614, %v1650
      %v1657 = vadd.f32 %v1615, %v1651
      %v1658 = vmul.f32 %v1652, 2.0
      %v1659 = vmul.f32 %v1653, 2.0
      %v1660 = vmul.f32 %v1654, 2.0
      %v1661 = vmul.f32 %v1655, 2.0
      %v1662 = vmul.f32 %v1656, 2.0
      %v1663 = vmul.f32 %v1657, 2.0
      %v1670 = vrot.slane %v1658, 1
      %v1671 = vrot.slane %v1659, 1
      %v1672 = vrot.slane %v1660, 1
      %v1673 = vrot.slane %v1661, 1
      %v1674 = vrot.slane %v1662, 1
      %v1675 = vrot.slane %v1663, 1
      %v1682 = vadd.f32 %v1652, %v1670
      %v1683 = vadd.f32 %v1653, %v1671
      %v1684 = vadd.f32 %v1654, %v1672
      %v1685 = vadd.f32 %v1655, %v1673
      %v1686 = vadd.f32 %v1656, %v1674
      %v1687 = vadd.f32 %v1657, %v1675
      %v1688 = vrot.slane %v1658, 7
      %v1689 = vrot.slane %v1659, 7
      %v1690 = vrot.slane %v1660, 7
      %v1691 = vrot.slane %v1661, 7
      %v1692 = vrot.slane %v1662, 7
      %v1693 = vrot.slane %v1663, 7
      %v1700 = vadd.f32 %v1652, %v1688
      %v1701 = vadd.f32 %v1653, %v1689
      %v1702 = vadd.f32 %v1654, %v1690
      %v1703 = vadd.f32 %v1655, %v1691
      %v1704 = vadd.f32 %v1656, %v1692
      %v1705 = vadd.f32 %v1657, %v1693
      %v1712 = vrot.slane %v1652, 1
      %v1713 = vrot.slane %v1653, 1
      %v1714 = vrot.slane %v1654, 1
      %v1715 = vrot.slane %v1655, 1
      %v1716 = vrot.slane %v1656, 1
      %v1717 = vrot.slane %v1657, 1
      %v1724 = vadd.f32 %v1652, %v1712
      %v1725 = vadd.f32 %v1653, %v1713
      %v1726 = vadd.f32 %v1654, %v1714
      %v1727 = vadd.f32 %v1655, %v1715
      %v1728 = vadd.f32 %v1656, %v1716
      %v1729 = vadd.f32 %v1657, %v1717
      %v1730 = vrot.slane %v1652, 2
      %v1731 = vrot.slane %v1653, 2
      %v1732 = vrot.slane %v1654, 2
      %v1733 = vrot.slane %v1655, 2
      %v1734 = vrot.slane %v1656, 2
      %v1735 = vrot.slane %v1657, 2
      %v1742 = vadd.f32 %v1724, %v1730
      %v1743 = vadd.f32 %v1725, %v1731
      %v1744 = vadd.f32 %v1726, %v1732
      %v1745 = vadd.f32 %v1727, %v1733
      %v1746 = vadd.f32 %v1728, %v1734
      %v1747 = vadd.f32 %v1729, %v1735
      %v1754 = vrot.slane %v1742, 7
      %v1755 = vrot.slane %v1743, 7
      %v1756 = vrot.slane %v1744, 7
      %v1757 = vrot.slane %v1745, 7
      %v1758 = vrot.slane %v1746, 7
      %v1759 = vrot.slane %v1747, 7
      %v1766 = vsel %vm636, %v1682, %v1754
      %v1767 = vsel %vm636, %v1683, %v1755
      %v1768 = vsel %vm636, %v1684, %v1756
      %v1769 = vsel %vm636, %v1685, %v1757
      %v1770 = vsel %vm636, %v1686, %v1758
      %v1771 = vsel %vm636, %v1687, %v1759
      %v1772 = vsel %vm643, %v1766, %v1700
      %v1773 = vsel %vm643, %v1767, %v1701
      %v1774 = vsel %vm643, %v1768, %v1702
      %v1775 = vsel %vm643, %v1769, %v1703
      %v1776 = vsel %vm643, %v1770, %v1704
      %v1777 = vsel %vm643, %v1771, %v1705
      %v1778 = vmul.f32 %v1772, 0.11111111
      %v1779 = vmul.f32 %v1773, 0.11111111
      %v1780 = vmul.f32 %v1774, 0.11111111
      %v1781 = vmul.f32 %v1775, 0.11111111
      %v1782 = vmul.f32 %v1776, 0.11111111
      %v1783 = vmul.f32 %v1777, 0.11111111
      %v1784 = vmul.f32 %v650, %v1010
      %v1785 = vmul.f32 %v651, %v1011
      %v1786 = vmul.f32 %v652, %v1012
      %v1787 = vmul.f32 %v653, %v1013
      %v1788 = vmul.f32 %v654, %v1014
      %v1789 = vmul.f32 %v655, %v1015
      %v1790 = vsub.f32 %v1778, %v1784
      %v1791 = vsub.f32 %v1779, %v1785
      %v1792 = vsub.f32 %v1780, %v1786
      %v1793 = vsub.f32 %v1781, %v1787
      %v1794 = vsub.f32 %v1782, %v1788
      %v1795 = vsub.f32 %v1783, %v1789
      %v1796 = vmul.f32 %v650, 2.0
      %v1797 = vmul.f32 %v651, 2.0
      %v1798 = vmul.f32 %v652, 2.0
      %v1799 = vmul.f32 %v653, 2.0
      %v1800 = vmul.f32 %v654, 2.0
      %v1801 = vmul.f32 %v655, 2.0
      %v1802 = vmul.f32 %v1796, %v1010
      %v1803 = vmul.f32 %v1797, %v1011
      %v1804 = vmul.f32 %v1798, %v1012
      %v1805 = vmul.f32 %v1799, %v1013
      %v1806 = vmul.f32 %v1800, %v1014
      %v1807 = vmul.f32 %v1801, %v1015
      %v1808 = vadd.f32 %v1802, 0.0001
      %v1809 = vadd.f32 %v1803, 0.0001
      %v1810 = vadd.f32 %v1804, 0.0001
      %v1811 = vadd.f32 %v1805, 0.0001
      %v1812 = vadd.f32 %v1806, 0.0001
      %v1813 = vadd.f32 %v1807, 0.0001
      %v1814 = vmul.f32 %v1790, 2.0
      %v1815 = vmul.f32 %v1791, 2.0
      %v1816 = vmul.f32 %v1792, 2.0
      %v1817 = vmul.f32 %v1793, 2.0
      %v1818 = vmul.f32 %v1794, 2.0
      %v1819 = vmul.f32 %v1795, 2.0
      %v1820 = vadd.f32 %v1814, 0.0009
      %v1821 = vadd.f32 %v1815, 0.0009
      %v1822 = vadd.f32 %v1816, 0.0009
      %v1823 = vadd.f32 %v1817, 0.0009
      %v1824 = vadd.f32 %v1818, 0.0009
      %v1825 = vadd.f32 %v1819, 0.0009
      %v1826 = vmul.f32 %v1808, %v1820
      %v1827 = vmul.f32 %v1809, %v1821
      %v1828 = vmul.f32 %v1810, %v1822
      %v1829 = vmul.f32 %v1811, %v1823
      %v1830 = vmul.f32 %v1812, %v1824
      %v1831 = vmul.f32 %v1813, %v1825
      %v1832 = vadd.f32 %v1394, %v1406
      %v1833 = vadd.f32 %v1395, %v1407
      %v1834 = vadd.f32 %v1396, %v1408
      %v1835 = vadd.f32 %v1397, %v1409
      %v1836 = vadd.f32 %v1398, %v1410
      %v1837 = vadd.f32 %v1399, %v1411
      %v1838 = vadd.f32 %v1832, 0.0001
      %v1839 = vadd.f32 %v1833, 0.0001
      %v1840 = vadd.f32 %v1834, 0.0001
      %v1841 = vadd.f32 %v1835, 0.0001
      %v1842 = vadd.f32 %v1836, 0.0001
      %v1843 = vadd.f32 %v1837, 0.0001
      %v1844 = vadd.f32 %v1412, 0.0009
      %v1845 = vadd.f32 %v1413, 0.0009
      %v1846 = vadd.f32 %v1414, 0.0009
      %v1847 = vadd.f32 %v1415, 0.0009
      %v1848 = vadd.f32 %v1416, 0.0009
      %v1849 = vadd.f32 %v1417, 0.0009
      %v1850 = vmul.f32 %v1838, %v1844
      %v1851 = vmul.f32 %v1839, %v1845
      %v1852 = vmul.f32 %v1840, %v1846
      %v1853 = vmul.f32 %v1841, %v1847
      %v1854 = vmul.f32 %v1842, %v1848
      %v1855 = vmul.f32 %v1843, %v1849
      %v1856 = vrcp.pop %v1850
      %v1857 = vrcp.pop %v1851
      %v1858 = vrcp.pop %v1852
      %v1859 = vrcp.pop %v1853
      %v1860 = vrcp.pop %v1854
      %v1861 = vrcp.pop %v1855
      %v1862 = vmul.f32 %v1826, %v1856
      %v1863 = vmul.f32 %v1827, %v1857
      %v1864 = vmul.f32 %v1828, %v1858
      %v1865 = vmul.f32 %v1829, %v1859
      %v1866 = vmul.f32 %v1830, %v1860
      %v1867 = vmul.f32 %v1831, %v1861
      %v1868 = vsub.f32 1.0, %v1862
      %v1869 = vsub.f32 1.0, %v1863
      %v1870 = vsub.f32 1.0, %v1864
      %v1871 = vsub.f32 1.0, %v1865
      %v1872 = vsub.f32 1.0, %v1866
      %v1873 = vsub.f32 1.0, %v1867
      %v1874 = vmul.f32 %v1868, 0.5
      %v1875 = vmul.f32 %v1869, 0.5
      %v1876 = vmul.f32 %v1870, 0.5
      %v1877 = vmul.f32 %v1871, 0.5
      %v1878 = vmul.f32 %v1872, 0.5
      %v1879 = vmul.f32 %v1873, 0.5
      %v1880 = vmax.f32 %v1874, 0.0
      %v1881 = vmax.f32 %v1875, 0.0
      %v1882 = vmax.f32 %v1876, 0.0
      %v1883 = vmax.f32 %v1877, 0.0
      %v1884 = vmax.f32 %v1878, 0.0
      %v1885 = vmax.f32 %v1879, 0.0
      %v1886 = vmin.f32 %v1880, 1.0
      %v1887 = vmin.f32 %v1881, 1.0
      %v1888 = vmin.f32 %v1882, 1.0
      %v1889 = vmin.f32 %v1883, 1.0
      %v1890 = vmin.f32 %v1884, 1.0
      %v1891 = vmin.f32 %v1885, 1.0
      %vm1892 = vcmask 64512
      %v1893 = vsel %vm1892, %v1886, 0.0
      %v1894 = vsel %vm1892, %v1887, 0.0
      %v1895 = vadd.f32 %v1893, %v1894
      %v1896 = vsel %vm1892, %v1888, 0.0
      %v1897 = vadd.f32 %v1895, %v1896
      %v1898 = vsel %vm1892, %v1889, 0.0
      %v1899 = vadd.f32 %v1897, %v1898
      %v1900 = vsel %vm1892, %v1890, 0.0
      %v1901 = vadd.f32 %v1899, %v1900
      %v1902 = vsel %vm1892, %v1891, 0.0
      %v1903 = vadd.f32 %v1901, %v1902
      %1904 = vadd.xlane.f32.xlu0 %v1903
      %v1905 = vpop.xlane.xlu0 %1904
      %v1906 = vrot.slane %v1905, 4
      %v1907 = vadd.f32 %v1905, %v1906
      %v1908 = vrot.slane %v1907, 2
      %v1909 = vadd.f32 %v1907, %v1908
      %v1910 = vrot.slane %v1909, 1
      %v1911 = vadd.f32 %v1909, %v1910
      %s1912 = vtos %v1911
      %v1913 = vrcp.pop 384.0
      %s1914 = vtos %v1913
      %s1915 = smul.f32 %s1912, %s1914
      %v1916 = vsub.f32 %v262, %v274
      %v1917 = vsub.f32 %v263, %v275
      %v1918 = vsub.f32 %v264, %v276
      %v1919 = vsub.f32 %v265, %v277
      %v1920 = vsub.f32 %v266, %v278
      %v1921 = vsub.f32 %v267, %v279
      %v1922 = vand.u32 2147483647, %v1916
      %v1923 = vand.u32 2147483647, %v1917
      %v1924 = vand.u32 2147483647, %v1918
      %v1925 = vand.u32 2147483647, %v1919
      %v1926 = vand.u32 2147483647, %v1920
      %v1927 = vand.u32 2147483647, %v1921
      %v1928 = vsel %vm1892, %v1922, 0.0
      %v1929 = vsel %vm1892, %v1923, 0.0
      %v1930 = vadd.f32 %v1928, %v1929
      %v1931 = vsel %vm1892, %v1924, 0.0
      %v1932 = vadd.f32 %v1930, %v1931
      %v1933 = vsel %vm1892, %v1925, 0.0
      %v1934 = vadd.f32 %v1932, %v1933
      %v1935 = vsel %vm1892, %v1926, 0.0
      %v1936 = vadd.f32 %v1934, %v1935
      %v1937 = vsel %vm1892, %v1927, 0.0
      %v1938 = vadd.f32 %v1936, %v1937
      %1939 = vadd.xlane.f32.xlu0 %v1938
      %v1940 = vpop.xlane.xlu0 %1939
      %v1941 = vrot.slane %v1940, 4
      %v1942 = vadd.f32 %v1940, %v1941
      %v1943 = vrot.slane %v1942, 2
      %v1944 = vadd.f32 %v1942, %v1943
      %v1945 = vrot.slane %v1944, 1
      %v1946 = vadd.f32 %v1944, %v1945
      %s1947 = vtos %v1946
      %v1948 = vrcp.pop 384.0
      %s1949 = vtos %v1948
      %s1950 = smul.f32 %s1947, %s1949
      %s1951 = sadd.f32 %s1950, 1e-12
      %v1952 = vstv %s1951
      %v1953 = vrcp.pop %v1952
      %s1954 = vtos %v1953
      %v1955 = vstv %s1954
      %v1956 = vmul.f32 %v1922, %v1955
      %v1957 = vmul.f32 %v1923, %v1955
      %v1958 = vmul.f32 %v1924, %v1955
      %v1959 = vmul.f32 %v1925, %v1955
      %v1960 = vmul.f32 %v1926, %v1955
      %v1961 = vmul.f32 %v1927, %v1955
      %v1962 = vsub.f32 1.0, %v1956
      %v1963 = vsub.f32 1.0, %v1957
      %v1964 = vsub.f32 1.0, %v1958
      %v1965 = vsub.f32 1.0, %v1959
      %v1966 = vsub.f32 1.0, %v1960
      %v1967 = vsub.f32 1.0, %v1961
      %v1968 = vmul.f32 %v1962, 2.0
      %v1969 = vmul.f32 %v1963, 2.0
      %v1970 = vmul.f32 %v1964, 2.0
      %v1971 = vmul.f32 %v1965, 2.0
      %v1972 = vmul.f32 %v1966, 2.0
      %v1973 = vmul.f32 %v1967, 2.0
      %v1974 = vmul.f32 %v1968, 1.442695
      %v1975 = vpow.pop %v1974
      %v1976 = vmul.f32 %v1969, 1.442695
      %v1977 = vpow.pop %v1976
      %v1978 = vmul.f32 %v1970, 1.442695
      %v1979 = vpow.pop %v1978
      %v1980 = vmul.f32 %v1971, 1.442695
      %v1981 = vpow.pop %v1980
      %v1982 = vmul.f32 %v1972, 1.442695
      %v1983 = vpow.pop %v1982
      %v1984 = vmul.f32 %v1973, 1.442695
      %v1985 = vpow.pop %v1984
      %v1986 = vsub.f32 %v282, %v280
      %v1987 = vsub.f32 %v283, %v281
      %v1988 = vand.u32 2147483647, %v1986
      %v1989 = vand.u32 2147483647, %v1987
      %v1990 = vmul.f32 %v1975, %v1988
      %v1991 = vmul.f32 %v1977, %v1988
      %v1992 = vmul.f32 %v1979, %v1988
      %v1993 = vmul.f32 %v1981, %v1989
      %v1994 = vmul.f32 %v1983, %v1989
      %v1995 = vmul.f32 %v1985, %v1989
      %v1996 = vsel %vm1892, %v1990, 0.0
      %v1997 = vsel %vm1892, %v1991, 0.0
      %v1998 = vadd.f32 %v1996, %v1997
      %v1999 = vsel %vm1892, %v1992, 0.0
      %v2000 = vadd.f32 %v1998, %v1999
      %v2001 = vsel %vm1892, %v1993, 0.0
      %v2002 = vadd.f32 %v2000, %v2001
      %v2003 = vsel %vm1892, %v1994, 0.0
      %v2004 = vadd.f32 %v2002, %v2003
      %v2005 = vsel %vm1892, %v1995, 0.0
      %v2006 = vadd.f32 %v2004, %v2005
      %2007 = vadd.xlane.f32.xlu0 %v2006
      %v2008 = vpop.xlane.xlu0 %2007
      %v2009 = vrot.slane %v2008, 4
      %v2010 = vadd.f32 %v2008, %v2009
      %v2011 = vrot.slane %v2010, 2
      %v2012 = vadd.f32 %v2010, %v2011
      %v2013 = vrot.slane %v2012, 1
      %v2014 = vadd.f32 %v2012, %v2013
      %s2015 = vtos %v2014
      %s2016 = smul.f32 %s2015, 0.0026041667
      %2019 = vrot.lane.b32.xlu0 %v280, 127
      %v2020 = vpop.permute.xlu0 %2019
      %2021 = vrot.lane.b32.xlu0 %v281, 127
      %v2022 = vpop.permute.xlu0 %2021
      %2025 = vrot.lane.b32.xlu0 %v280, 7
      %v2026 = vpop.permute.xlu0 %2025
      %2027 = vrot.lane.b32.xlu0 %v281, 7
      %v2028 = vpop.permute.xlu0 %2027
      %v2031 = vsel %vm379, %v2020, %v2026
      %v2032 = vsel %vm379, %v2022, %v2028
      %v2033 = vsub.f32 %v274, %v746
      %v2034 = vsub.f32 %v275, %v747
      %v2035 = vsub.f32 %v276, %v748
      %v2036 = vsub.f32 %v277, %v749
      %v2037 = vsub.f32 %v278, %v750
      %v2038 = vsub.f32 %v279, %v751
      %v2039 = vand.u32 2147483647, %v2033
      %v2040 = vand.u32 2147483647, %v2034
      %v2041 = vand.u32 2147483647, %v2035
      %v2042 = vand.u32 2147483647, %v2036
      %v2043 = vand.u32 2147483647, %v2037
      %v2044 = vand.u32 2147483647, %v2038
      %v2045 = vadd.f32 %v2039, %v2040
      %v2046 = vadd.f32 %v2042, %v2043
      %v2047 = vadd.f32 %v2045, %v2041
      %v2048 = vadd.f32 %v2046, %v2044
      %v2049 = vmul.f32 %v2047, 0.33333334
      %v2050 = vmul.f32 %v2048, 0.33333334
      %v2051 = vsub.f32 0.0, %v2049
      %v2052 = vsub.f32 0.0, %v2050
      %v2053 = vmul.f32 %v2051, 1.442695
      %v2054 = vpow.pop %v2053
      %v2055 = vmul.f32 %v2052, 1.442695
      %v2056 = vpow.pop %v2055
      %v2057 = vsub.f32 %v280, %v2031
      %v2058 = vsub.f32 %v281, %v2032
      %v2059 = vand.u32 2147483647, %v2057
      %v2060 = vand.u32 2147483647, %v2058
      %v2061 = vmul.f32 %v2059, %v2054
      %v2062 = vmul.f32 %v2060, %v2056
      %v2063 = vsel %vm1892, %v2061, 0.0
      %v2064 = vsel %vm1892, %v2062, 0.0
      %v2065 = vadd.f32 %v2063, %v2064
      %2066 = vadd.xlane.f32.xlu0 %v2065
      %v2067 = vpop.xlane.xlu0 %2066
      %v2068 = vrot.slane %v2067, 4
      %v2069 = vadd.f32 %v2067, %v2068
      %v2070 = vrot.slane %v2069, 2
      %v2071 = vadd.f32 %v2069, %v2070
      %v2072 = vrot.slane %v2071, 1
      %v2073 = vadd.f32 %v2071, %v2072
      %s2074 = vtos %v2073
      %v2075 = vsub.f32 %v280, %v2026
      %v2076 = vsub.f32 %v281, %v2028
      %v2077 = vand.u32 2147483647, %v2075
      %v2078 = vand.u32 2147483647, %v2076
      %v2079 = vsub.f32 %v274, %v729
      %v2080 = vsub.f32 %v275, %v731
      %v2081 = vsub.f32 %v276, %v733
      %v2082 = vsub.f32 %v277, %v735
      %v2083 = vsub.f32 %v278, %v737
      %v2084 = vsub.f32 %v279, %v739
      %v2085 = vand.u32 2147483647, %v2079
      %v2086 = vand.u32 2147483647, %v2080
      %v2087 = vand.u32 2147483647, %v2081
      %v2088 = vand.u32 2147483647, %v2082
      %v2089 = vand.u32 2147483647, %v2083
      %v2090 = vand.u32 2147483647, %v2084
      %v2091 = vadd.f32 %v2085, %v2086
      %v2092 = vadd.f32 %v2088, %v2089
      %v2093 = vadd.f32 %v2091, %v2087
      %v2094 = vadd.f32 %v2092, %v2090
      %v2095 = vmul.f32 %v2093, 0.33333334
      %v2096 = vmul.f32 %v2094, 0.33333334
      %v2097 = vsub.f32 0.0, %v2095
      %v2098 = vsub.f32 0.0, %v2096
      %v2099 = vmul.f32 %v2097, 1.442695
      %v2100 = vpow.pop %v2099
      %v2101 = vmul.f32 %v2098, 1.442695
      %v2102 = vpow.pop %v2101
      %v2103 = vmul.f32 %v2077, %v2100
      %v2104 = vmul.f32 %v2078, %v2102
      %2107 = vrot.lane.b32.xlu0 %v2103, 121
      %v2108 = vpop.permute.xlu0 %2107
      %2109 = vrot.lane.b32.xlu0 %v2104, 121
      %v2110 = vpop.permute.xlu0 %2109
      %v2113 = vsel %vm330, %v2108, 0.0
      %v2114 = vsel %vm330, %v2110, 0.0
      %v2115 = vadd.f32 %v2113, %v2114
      %2116 = vadd.xlane.f32.xlu0 %v2115
      %v2117 = vpop.xlane.xlu0 %2116
      %v2118 = vrot.slane %v2117, 4
      %v2119 = vadd.f32 %v2117, %v2118
      %v2120 = vrot.slane %v2119, 2
      %v2121 = vadd.f32 %v2119, %v2120
      %v2122 = vrot.slane %v2121, 1
      %v2123 = vadd.f32 %v2121, %v2122
      %s2124 = vtos %v2123
      %s2125 = ssub.f32 %s2074, %s2124
      %s2126 = smul.f32 %s2125, 0.008928572
      %v2127 = vlaneseq
      %v2128 = vshrl.u32 %v2127, 7
      %vm2129 = vcmp.eq.s32.totalorder %v2128, 0
      %vm2130 = vmand %vm2129, %vm286
      %v2131 = vstv %s1915
      %v2132 = vsel %vm2130, %v2131, 0.0
      %vm2133 = vcmp.eq.s32.totalorder %v285, 1
      %vm2134 = vmand %vm2129, %vm2133
      %v2135 = vstv %s1950
      %v2136 = vsel %vm2134, %v2135, %v2132
      %vm2137 = vcmp.eq.s32.totalorder %v285, 2
      %vm2138 = vmand %vm2129, %vm2137
      %v2139 = vstv %s2016
      %v2140 = vsel %vm2138, %v2139, %v2136
      %vm2141 = vcmp.eq.s32.totalorder %v285, 3
      %vm2142 = vmand %vm2129, %vm2141
      %v2143 = vstv %s2126
      %v2144 = vsel %vm2142, %v2143, %v2140
      %2145 = vst [vmem:[%s255] sm:$0xff] %v2144
      %p2146 = scmp.lt.s32.totalorder %s15, 1
      %s2147 = scalar_select %p2146, %s15, 1
      %s2148 = smul.addr %s2147, 8
      %s2149 = scalar_lea.vmem %s4, %s2148
      // Predicated region
      $region37: #{my_loss.5} parent=35 // pred_check
        %p2150 = pneg %p137
      $region38: #{my_loss.5} parent=35 // pred_check_branch
        %2152 = sbr.rel (%p2150) target = $region40
      $region39: #{my_loss.5} parent=35 // pred_region
        _
      $region40: #{my_loss.5} parent=35 // pred_fallthru
        _
    $region36: #{my_loss.5} parent=5 // pred_fallthru
      _
    %p2153 = scmp.le.s32.totalorder 2, %s10
    // Predicated region
    $region41: #{my_loss.5} parent=5 // pred_check
      %p2154 = pneg %p2153
    $region42: #{my_loss.5} parent=5 // pred_check_branch
      %2156 = sbr.rel (%p2154) target = $region44
    $region43: #{my_loss.5} parent=5 // pred_region
      %s2157 = ssub.s32 %s10, 2
      // Predicated region
      $region45: #{my_loss.5} parent=43 // pred_check
        %p2158 = pneg %p143
      $region46: #{my_loss.5} parent=43 // pred_check_branch
        %2160 = sbr.rel (%p2158) target = $region48
      $region47: #{my_loss.5} parent=43 // pred_region
        %p2161 = scmp.lt.s32.totalorder %s16, 1
        %s2162 = scalar_select %p2161, %s16, 1
        %s2163 = smul.addr %s2162, 8
        %s2164 = scalar_lea.vmem %s4, %s2163
      $region48: #{my_loss.5} parent=43 // pred_fallthru
        _
    $region44: #{my_loss.5} parent=5 // pred_fallthru
      _
  $region6: #{my_loss.5} parent=0 // loop_footer
    %s14 = sadd.s32 1, %s10
  $region7: #{my_loss.5} parent=0 // loop_footer_branch
    %9 = sbr.rel target = $region3
  $region8: #{my_loss.5} parent=0 // loop_exit
    _

// kernel: my_loss.6
$region0: #{my_loss.6}
  #allocation0 [shape = 'u32[]', space=smem, size = 0x4, offset = 0x4, fixed_abs, tag = 'smem constant byte address 0x4 - core index']
  #allocation1 [shape = 'u32[144,128]{1,0:T(1,128)}', space=vmem, size = 0x12000, scoped, tag = 'internal scratch']
  %s0 = inlined_call_operand.vmem [shape: bf16[2,2,3,4,4], index: 0, kind: input, shape index: {}]
  %s1 = inlined_call_operand.vmem [shape: bf16[2,2,3,4,4], index: 1, kind: input, shape index: {}]
  %s2 = inlined_call_operand.vmem [shape: f32[2,2,1,4,4], index: 2, kind: input, shape index: {}]
  %s3 = inlined_call_operand.vmem [shape: f32[2,2,1,4,4], index: 3, kind: input, shape index: {}]
  %s4 = inlined_call_operand.vmem [shape: f32[2,8,128], index: 4, kind: output, shape index: {}]
  %s5 = sld [smem:[#allocation0]]
  $region49: #{my_loss.6} parent=0
    _
  %s7 = ssub.s32 1, %s5
  %s8 = scalar_select 0, %s7, %s5
  loop: start=0, step=1, limit=4
  $region2: #{my_loss.6} parent=0 // loop_pre_header
    _
  $region3: #{my_loss.6} parent=0 // loop_header
    %s10 = sphi 0, %s14
    %p11 = scmp.ge.s32.totalorder %s10, 4
    %s20 = sphi 0, %s22
    %s23 = sphi 0, %s20
    %s24 = sphi 0, %s23
    %s40 = sphi 0, %s24
    %s46 = sphi 0, %s48
    %s49 = sphi 0, %s46
    %s50 = sphi 0, %s49
    %s66 = sphi 0, %s50
    %s72 = sphi 0, %s74
    %s75 = sphi 0, %s72
    %s76 = sphi 0, %s75
    %s92 = sphi 0, %s76
    %s98 = sphi 0, %s100
    %s101 = sphi 0, %s98
    %s102 = sphi 0, %s101
    %s118 = sphi 0, %s102
    %s124 = sphi 0, %s126
    %s127 = sphi 0, %s124
    %s128 = sphi 0, %s127
    %s144 = sphi 0, %s128
  $region4: #{my_loss.6} parent=0 // loop_header_branch
    %13 = sbr.rel (%p11) target = $region8
  $region5: #{my_loss.6} parent=0 // loop_body
    %s15 = ssub.s32 %s10, 1
    %s16 = ssub.s32 %s10, 2
    %s17 = sadd.s32 %s10, 1
    %s18 = ssub.s32 %s10, %s17
    %p19 = scmp.eq.s32.totalorder %s18, 0
    %s21 = sadd.s32 %s20, 1
    %s22 = scalar_select %p19, %s20, %s21
    %p25 = pneg %p19
    %p26 = scmp.eq.s32.totalorder %s10, 1
    %p27 = por %p25, %p26
    %p28 = scmp.ne.s32.totalorder %s20, %s23
    %p29 = scmp.eq.s32.totalorder %s10, 0
    %p30 = por %p28, %p29
    %p31 = scmp.ne.s32.totalorder %s20, %s23
    %p32 = scmp.eq.s32.totalorder %s15, 1
    %p33 = por %p31, %p32
    %p34 = scmp.ne.s32.totalorder %s23, %s24
    %p35 = scmp.eq.s32.totalorder %s15, 0
    %p36 = por %p34, %p35
    %p37 = scmp.ne.s32.totalorder %s23, %s24
    %p38 = scmp.eq.s32.totalorder %s16, 1
    %p39 = por %p37, %p38
    %p41 = scmp.ne.s32.totalorder %s24, %s40
    %p42 = scmp.eq.s32.totalorder %s16, 0
    %p43 = por %p41, %p42
    %s44 = ssub.s32 %s10, %s17
    %p45 = scmp.eq.s32.totalorder %s44, 0
    %s47 = sadd.s32 %s46, 1
    %s48 = scalar_select %p45, %s46, %s47
    %p51 = pneg %p45
    %p52 = scmp.eq.s32.totalorder %s10, 1
    %p53 = por %p51, %p52
    %p54 = scmp.ne.s32.totalorder %s46, %s49
    %p55 = scmp.eq.s32.totalorder %s10, 0
    %p56 = por %p54, %p55
    %p57 = scmp.ne.s32.totalorder %s46, %s49
    %p58 = scmp.eq.s32.totalorder %s15, 1
    %p59 = por %p57, %p58
    %p60 = scmp.ne.s32.totalorder %s49, %s50
    %p61 = scmp.eq.s32.totalorder %s15, 0
    %p62 = por %p60, %p61
    %p63 = scmp.ne.s32.totalorder %s49, %s50
    %p64 = scmp.eq.s32.totalorder %s16, 1
    %p65 = por %p63, %p64
    %p67 = scmp.ne.s32.totalorder %s50, %s66
    %p68 = scmp.eq.s32.totalorder %s16, 0
    %p69 = por %p67, %p68
    %s70 = ssub.s32 %s10, %s17
    %p71 = scmp.eq.s32.totalorder %s70, 0
    %s73 = sadd.s32 %s72, 1
    %s74 = scalar_select %p71, %s72, %s73
    %p77 = pneg %p71
    %p78 = scmp.eq.s32.totalorder %s10, 1
    %p79 = por %p77, %p78
    %p80 = scmp.ne.s32.totalorder %s72, %s75
    %p81 = scmp.eq.s32.totalorder %s10, 0
    %p82 = por %p80, %p81
    %p83 = scmp.ne.s32.totalorder %s72, %s75
    %p84 = scmp.eq.s32.totalorder %s15, 1
    %p85 = por %p83, %p84
    %p86 = scmp.ne.s32.totalorder %s75, %s76
    %p87 = scmp.eq.s32.totalorder %s15, 0
    %p88 = por %p86, %p87
    %p89 = scmp.ne.s32.totalorder %s75, %s76
    %p90 = scmp.eq.s32.totalorder %s16, 1
    %p91 = por %p89, %p90
    %p93 = scmp.ne.s32.totalorder %s76, %s92
    %p94 = scmp.eq.s32.totalorder %s16, 0
    %p95 = por %p93, %p94
    %s96 = ssub.s32 %s10, %s17
    %p97 = scmp.eq.s32.totalorder %s96, 0
    %s99 = sadd.s32 %s98, 1
    %s100 = scalar_select %p97, %s98, %s99
    %p103 = pneg %p97
    %p104 = scmp.eq.s32.totalorder %s10, 1
    %p105 = por %p103, %p104
    %p106 = scmp.ne.s32.totalorder %s98, %s101
    %p107 = scmp.eq.s32.totalorder %s10, 0
    %p108 = por %p106, %p107
    %p109 = scmp.ne.s32.totalorder %s98, %s101
    %p110 = scmp.eq.s32.totalorder %s15, 1
    %p111 = por %p109, %p110
    %p112 = scmp.ne.s32.totalorder %s101, %s102
    %p113 = scmp.eq.s32.totalorder %s15, 0
    %p114 = por %p112, %p113
    %p115 = scmp.ne.s32.totalorder %s101, %s102
    %p116 = scmp.eq.s32.totalorder %s16, 1
    %p117 = por %p115, %p116
    %p119 = scmp.ne.s32.totalorder %s102, %s118
    %p120 = scmp.eq.s32.totalorder %s16, 0
    %p121 = por %p119, %p120
    %s122 = ssub.s32 %s10, %s17
    %p123 = scmp.eq.s32.totalorder %s122, 0
    %s125 = sadd.s32 %s124, 1
    %s126 = scalar_select %p123, %s124, %s125
    %p129 = pneg %p123
    %p130 = scmp.eq.s32.totalorder %s10, 1
    %p131 = por %p129, %p130
    %p132 = scmp.ne.s32.totalorder %s124, %s127
    %p133 = scmp.eq.s32.totalorder %s10, 0
    %p134 = por %p132, %p133
    %p135 = scmp.ne.s32.totalorder %s124, %s127
    %p136 = scmp.eq.s32.totalorder %s15, 1
    %p137 = por %p135, %p136
    %p138 = scmp.ne.s32.totalorder %s127, %s128
    %p139 = scmp.eq.s32.totalorder %s15, 0
    %p140 = por %p138, %p139
    %p141 = scmp.ne.s32.totalorder %s127, %s128
    %p142 = scmp.eq.s32.totalorder %s16, 1
    %p143 = por %p141, %p142
    %p145 = scmp.ne.s32.totalorder %s128, %s144
    %p146 = scmp.eq.s32.totalorder %s16, 0
    %p147 = por %p145, %p146
    %p148 = scmp.le.s32.totalorder 1, %s10
    %p149 = scmp.lt.s32.totalorder %s10, 3
    %p150 = pnand %p148, %p149
    %p151 = pneg %p150
    // Predicated region
    $region9: #{my_loss.6} parent=5 // pred_check
      _
    $region10: #{my_loss.6} parent=5 // pred_check_branch
      %153 = sbr.rel (%p150) target = $region12
    $region11: #{my_loss.6} parent=5 // pred_region
      %s154 = ssub.s32 %s10, 1
    $region12: #{my_loss.6} parent=5 // pred_fallthru
      _
    %p155 = scmp.lt.s32.totalorder %s10, 2
    // Predicated region
    $region13: #{my_loss.6} parent=5 // pred_check
      %p156 = pneg %p155
    $region14: #{my_loss.6} parent=5 // pred_check_branch
      %158 = sbr.rel (%p156) target = $region16
    $region15: #{my_loss.6} parent=5 // pred_region
      // Predicated region
      $region17: #{my_loss.6} parent=15 // pred_check
        %p159 = pneg %p30
      $region18: #{my_loss.6} parent=15 // pred_check_branch
        %161 = sbr.rel (%p159) target = $region20
      $region19: #{my_loss.6} parent=15 // pred_region
        %p162 = scmp.lt.s32.totalorder %s10, 1
        %s163 = scalar_select %p162, %s10, 1
        %s164 = smul.addr %s163, 6
        %s165 = smul.addr %s164, 2
        %s166 = scalar_lea.vmem %s0, %s165
      $region20: #{my_loss.6} parent=15 // pred_fallthru
        _
      // Predicated region
      $region21: #{my_loss.6} parent=15 // pred_check
        %p167 = pneg %p56
      $region22: #{my_loss.6} parent=15 // pred_check_branch
        %169 = sbr.rel (%p167) target = $region24
      $region23: #{my_loss.6} parent=15 // pred_region
        %p170 = scmp.lt.s32.totalorder %s10, 1
        %s171 = scalar_select %p170, %s10, 1
        %s172 = smul.addr %s171, 6
        %s173 = smul.addr %s172, 2
        %s174 = scalar_lea.vmem %s1, %s173
      $region24: #{my_loss.6} parent=15 // pred_fallthru
        _
      // Predicated region
      $region25: #{my_loss.6} parent=15 // pred_check
        %p175 = pneg %p82
      $region26: #{my_loss.6} parent=15 // pred_check_branch
        %177 = sbr.rel (%p175) target = $region28
      $region27: #{my_loss.6} parent=15 // pred_region
        %p178 = scmp.lt.s32.totalorder %s10, 1
        %s179 = scalar_select %p178, %s10, 1
        %s180 = smul.addr %s179, 2
        %s181 = smul.addr %s180, 4
        %s182 = scalar_lea.vmem %s2, %s181
      $region28: #{my_loss.6} parent=15 // pred_fallthru
        _
      // Predicated region
      $region29: #{my_loss.6} parent=15 // pred_check
        %p183 = pneg %p108
      $region30: #{my_loss.6} parent=15 // pred_check_branch
        %185 = sbr.rel (%p183) target = $region32
      $region31: #{my_loss.6} parent=15 // pred_region
        %p186 = scmp.lt.s32.totalorder %s10, 1
        %s187 = scalar_select %p186, %s10, 1
        %s188 = smul.addr %s187, 2
        %s189 = smul.addr %s188, 4
        %s190 = scalar_lea.vmem %s3, %s189
      $region32: #{my_loss.6} parent=15 // pred_fallthru
        _
    $region16: #{my_loss.6} parent=5 // pred_fallthru
      _
    %p191 = scmp.le.s32.totalorder 1, %s10
    %p192 = scmp.lt.s32.totalorder %s10, 3
    %p193 = pnand %p191, %p192
    %p194 = pneg %p193
    // Predicated region
    $region33: #{my_loss.6} parent=5 // pred_check
      _
    $region34: #{my_loss.6} parent=5 // pred_check_branch
      %196 = sbr.rel (%p193) target = $region36
    $region35: #{my_loss.6} parent=5 // pred_region
      %s197 = ssub.s32 %s10, 1
      %p198 = scmp.lt.s32.totalorder %s15, 1
      %s199 = scalar_select %p198, %s15, 1
      %s200 = smul.addr %s199, 6
      %s201 = smul.addr %s200, 2
      %s202 = scalar_lea.vmem %s0, %s201
      %p203 = pneg %p36
      %p204 = pneg %p33
      %p205 = scmp.lt.s32.totalorder %s15, 1
      %s206 = scalar_select %p205, %s15, 1
      %s207 = smul.addr %s206, 6
      %s208 = smul.addr %s207, 2
      %s209 = scalar_lea.vmem %s1, %s208
      %p210 = pneg %p62
      %p211 = pneg %p59
      %p212 = scmp.lt.s32.totalorder %s15, 1
      %s213 = scalar_select %p212, %s15, 1
      %s214 = smul.addr %s213, 2
      %s215 = smul.addr %s214, 4
      %s216 = scalar_lea.vmem %s2, %s215
      %p217 = pneg %p88
      %p218 = pneg %p85
      %p219 = scmp.lt.s32.totalorder %s15, 1
      %s220 = scalar_select %p219, %s15, 1
      %s221 = smul.addr %s220, 2
      %s222 = smul.addr %s221, 4
      %s223 = scalar_lea.vmem %s3, %s222
      %p224 = pneg %p114
      %p225 = pneg %p111
      %p226 = pneg %p140
      %p227 = pneg %p137
      %p228 = scmp.lt.s32.totalorder %s15, 1
      %s229 = scalar_select %p228, %s15, 1
      %s230 = smul.addr %s229, 8
      %s231 = scalar_lea.vmem %s4, %s230
      %p232 = scmp.lt.s32.totalorder %s15, 1
      %s233 = scalar_select %p232, %s15, 1
      %s234 = smul.addr %s233, 6
      %s235 = smul.addr %s234, 2
      %s236 = scalar_lea.vmem %s0, %s235
      %p237 = scmp.lt.s32.totalorder %s15, 1
      %s238 = scalar_select %p237, %s15, 1
      %s239 = smul.addr %s238, 6
      %s240 = smul.addr %s239, 2
      %s241 = scalar_lea.vmem %s1, %s240
      %p242 = scmp.lt.s32.totalorder %s15, 1
      %s243 = scalar_select %p242, %s15, 1
      %s244 = smul.addr %s243, 2
      %s245 = smul.addr %s244, 4
      %s246 = scalar_lea.vmem %s2, %s245
      %p247 = scmp.lt.s32.totalorder %s15, 1
      %s248 = scalar_select %p247, %s15, 1
      %s249 = smul.addr %s248, 2
      %s250 = smul.addr %s249, 4
      %s251 = scalar_lea.vmem %s3, %s250
      %p252 = scmp.lt.s32.totalorder %s15, 1
      %s253 = scalar_select %p252, %s15, 1
      %s254 = smul.addr %s253, 8
      %s255 = scalar_lea.vmem %s4, %s254
      %v256 = vld [vmem:[%s236] sm:$0x3]
      %v257 = vld [vmem:[%s236 + $0x2] sm:$0x3]
      %v258 = vld [vmem:[%s236 + $0x4] sm:$0x3]
      %v259 = vld [vmem:[%s236 + $0x6] sm:$0x3]
      %v260 = vld [vmem:[%s236 + $0x8] sm:$0x3]
      %v261 = vld [vmem:[%s236 + $0xa] sm:$0x3]
      %v262 = vunpack.c.l.bf16 %v256
      %v263 = vunpack.c.l.bf16 %v257
      %v264 = vunpack.c.l.bf16 %v258
      %v265 = vunpack.c.l.bf16 %v259
      %v266 = vunpack.c.l.bf16 %v260
      %v267 = vunpack.c.l.bf16 %v261
      %v268 = vld [vmem:[%s241] sm:$0x3]
      %v269 = vld [vmem:[%s241 + $0x2] sm:$0x3]
      %v270 = vld [vmem:[%s241 + $0x4] sm:$0x3]
      %v271 = vld [vmem:[%s241 + $0x6] sm:$0x3]
      %v272 = vld [vmem:[%s241 + $0x8] sm:$0x3]
      %v273 = vld [vmem:[%s241 + $0xa] sm:$0x3]
      %v274 = vunpack.c.l.bf16 %v268
      %v275 = vunpack.c.l.bf16 %v269
      %v276 = vunpack.c.l.bf16 %v270
      %v277 = vunpack.c.l.bf16 %v271
      %v278 = vunpack.c.l.bf16 %v272
      %v279 = vunpack.c.l.bf16 %v273
      %v280 = vld [vmem:[%s246] sm:$0xf]
      %v281 = vld [vmem:[%s246 + $0x4] sm:$0xf]
      %v282 = vld [vmem:[%s251] sm:$0xf]
      %v283 = vld [vmem:[%s251 + $0x4] sm:$0xf]
      %v284 = vlaneseq
      %v285 = vand.u32 %v284, 127
      %vm286 = vcmp.eq.s32.totalorder %v285, 0
      %vm287 = vcmp.eq.s32.totalorder %v285, 3
      %294 = vrot.lane.b32.xlu0 %v262, 125
      %v295 = vpop.permute.xlu0 %294
      %296 = vrot.lane.b32.xlu0 %v263, 125
      %v297 = vpop.permute.xlu0 %296
      %298 = vrot.lane.b32.xlu0 %v264, 125
      %v299 = vpop.permute.xlu0 %298
      %300 = vrot.lane.b32.xlu0 %v265, 125
      %v301 = vpop.permute.xlu0 %300
      %302 = vrot.lane.b32.xlu0 %v266, 125
      %v303 = vpop.permute.xlu0 %302
      %304 = vrot.lane.b32.xlu0 %v267, 125
      %v305 = vpop.permute.xlu0 %304
      %312 = vrot.lane.b32.xlu0 %v262, 1
      %v313 = vpop.permute.xlu0 %312
      %314 = vrot.lane.b32.xlu0 %v263, 1
      %v315 = vpop.permute.xlu0 %314
      %316 = vrot.lane.b32.xlu0 %v264, 1
      %v317 = vpop.permute.xlu0 %316
      %318 = vrot.lane.b32.xlu0 %v265, 1
      %v319 = vpop.permute.xlu0 %318
      %320 = vrot.lane.b32.xlu0 %v266, 1
      %v321 = vpop.permute.xlu0 %320
      %322 = vrot.lane.b32.xlu0 %v267, 1
      %v323 = vpop.permute.xlu0 %322
      %vm330 = vcmask 7168
      %v331 = vsel %vm330, %v295, %v313
      %v332 = vsel %vm330, %v297, %v315
      %v333 = vsel %vm330, %v299, %v317
      %v334 = vsel %vm330, %v301, %v319
      %v335 = vsel %vm330, %v303, %v321
      %v336 = vsel %vm330, %v305, %v323
      %v337 = vadd.f32 %v331, %v262
      %v338 = vadd.f32 %v332, %v263
      %v339 = vadd.f32 %v333, %v264
      %v340 = vadd.f32 %v334, %v265
      %v341 = vadd.f32 %v335, %v266
      %v342 = vadd.f32 %v336, %v267
      %343 = vrot.lane.b32.xlu0 %v262, 127
      %v344 = vpop.permute.xlu0 %343
      %345 = vrot.lane.b32.xlu0 %v263, 127
      %v346 = vpop.permute.xlu0 %345
      %347 = vrot.lane.b32.xlu0 %v264, 127
      %v348 = vpop.permute.xlu0 %347
      %349 = vrot.lane.b32.xlu0 %v265, 127
      %v350 = vpop.permute.xlu0 %349
      %351 = vrot.lane.b32.xlu0 %v266, 127
      %v352 = vpop.permute.xlu0 %351
      %353 = vrot.lane.b32.xlu0 %v267, 127
      %v354 = vpop.permute.xlu0 %353
      %361 = vrot.lane.b32.xlu0 %v262, 3
      %v362 = vpop.permute.xlu0 %361
      %363 = vrot.lane.b32.xlu0 %v263, 3
      %v364 = vpop.permute.xlu0 %363
      %365 = vrot.lane.b32.xlu0 %v264, 3
      %v366 = vpop.permute.xlu0 %365
      %367 = vrot.lane.b32.xlu0 %v265, 3
      %v368 = vpop.permute.xlu0 %367
      %369 = vrot.lane.b32.xlu0 %v266, 3
      %v370 = vpop.permute.xlu0 %369
      %371 = vrot.lane.b32.xlu0 %v267, 3
      %v372 = vpop.permute.xlu0 %371
      %vm379 = vcmask 23552
      %v380 = vsel %vm379, %v344, %v362
      %v381 = vsel %vm379, %v346, %v364
      %v382 = vsel %vm379, %v348, %v366
      %v383 = vsel %vm379, %v350, %v368
      %v384 = vsel %vm379, %v352, %v370
      %v385 = vsel %vm379, %v354, %v372
      %v386 = vadd.f32 %v337, %v380
      %v387 = vadd.f32 %v338, %v381
      %v388 = vadd.f32 %v339, %v382
      %v389 = vadd.f32 %v340, %v383
      %v390 = vadd.f32 %v341, %v384
      %v391 = vadd.f32 %v342, %v385
      %392 = vrot.lane.b32.xlu0 %v262, 126
      %v393 = vpop.permute.xlu0 %392
      %394 = vrot.lane.b32.xlu0 %v263, 126
      %v395 = vpop.permute.xlu0 %394
      %396 = vrot.lane.b32.xlu0 %v264, 126
      %v397 = vpop.permute.xlu0 %396
      %398 = vrot.lane.b32.xlu0 %v265, 126
      %v399 = vpop.permute.xlu0 %398
      %400 = vrot.lane.b32.xlu0 %v266, 126
      %v401 = vpop.permute.xlu0 %400
      %402 = vrot.lane.b32.xlu0 %v267, 126
      %v403 = vpop.permute.xlu0 %402
      %v410 = vsub.f32 %v262, %v393
      %v411 = vsub.f32 %v263, %v395
      %v412 = vsub.f32 %v264, %v397
      %v413 = vsub.f32 %v265, %v399
      %v414 = vsub.f32 %v266, %v401
      %v415 = vsub.f32 %v267, %v403
      %416 = vrot.lane.b32.xlu0 %v262, 2
      %v417 = vpop.permute.xlu0 %416
      %418 = vrot.lane.b32.xlu0 %v263, 2
      %v419 = vpop.permute.xlu0 %418
      %420 = vrot.lane.b32.xlu0 %v264, 2
      %v421 = vpop.permute.xlu0 %420
      %422 = vrot.lane.b32.xlu0 %v265, 2
      %v423 = vpop.permute.xlu0 %422
      %424 = vrot.lane.b32.xlu0 %v266, 2
      %v425 = vpop.permute.xlu0 %424
      %426 = vrot.lane.b32.xlu0 %v267, 2
      %v427 = vpop.permute.xlu0 %426
      %v434 = vsub.f32 %v262, %v417
      %v435 = vsub.f32 %v263, %v419
      %v436 = vsub.f32 %v264, %v421
      %v437 = vsub.f32 %v265, %v423
      %v438 = vsub.f32 %v266, %v425
      %v439 = vsub.f32 %v267, %v427
      %v440 = vsel %vm286, 1, 0
      %vm441 = vcmp.eq.s32.totalorder %v440, 1
      %443 = vset.pattern.permute.xlu0 1
      %444 = vperm.xlu0 %443, %v410
      %v445 = vpop.permute.xlu0 %444
      %v448 = vunpack.c.l.s4 839922192
      %v449 = vunpack.c.0.s8 %v448
      %v450 = vlaneseq
      %v451 = vshrl.u32 %v450, 7
      %v452 = vsub.s32 %v449, %v451
      %v453 = vrot.slane %v445, %v452
      %455 = vset.pattern.permute.xlu0 1
      %456 = vperm.xlu0 %455, %v411
      %v457 = vpop.permute.xlu0 %456
      %v460 = vunpack.c.l.s4 839922192
      %v461 = vunpack.c.0.s8 %v460
      %v462 = vlaneseq
      %v463 = vshrl.u32 %v462, 7
      %v464 = vsub.s32 %v461, %v463
      %v465 = vrot.slane %v457, %v464
      %467 = vset.pattern.permute.xlu0 1
      %468 = vperm.xlu0 %467, %v412
      %v469 = vpop.permute.xlu0 %468
      %v472 = vunpack.c.l.s4 839922192
      %v473 = vunpack.c.0.s8 %v472
      %v474 = vlaneseq
      %v475 = vshrl.u32 %v474, 7
      %v476 = vsub.s32 %v473, %v475
      %v477 = vrot.slane %v469, %v476
      %479 = vset.pattern.permute.xlu0 1
      %480 = vperm.xlu0 %479, %v413
      %v481 = vpop.permute.xlu0 %480
      %v484 = vunpack.c.l.s4 839922192
      %v485 = vunpack.c.0.s8 %v484
      %v486 = vlaneseq
      %v487 = vshrl.u32 %v486, 7
      %v488 = vsub.s32 %v485, %v487
      %v489 = vrot.slane %v481, %v488
      %491 = vset.pattern.permute.xlu0 1
      %492 = vperm.xlu0 %491, %v414
      %v493 = vpop.permute.xlu0 %492
      %v496 = vunpack.c.l.s4 839922192
      %v497 = vunpack.c.0.s8 %v496
      %v498 = vlaneseq
      %v499 = vshrl.u32 %v498, 7
      %v500 = vsub.s32 %v497, %v499
      %v501 = vrot.slane %v493, %v500
      %503 = vset.pattern.permute.xlu0 1
      %504 = vperm.xlu0 %503, %v415
      %v505 = vpop.permute.xlu0 %504
      %v508 = vunpack.c.l.s4 839922192
      %v509 = vunpack.c.0.s8 %v508
      %v510 = vlaneseq
      %v511 = vshrl.u32 %v510, 7
      %v512 = vsub.s32 %v509, %v511
      %v513 = vrot.slane %v505, %v512
      %v514 = vsel %vm441, %v453, 0.0
      %v515 = vsel %vm441, %v465, 0.0
      %v516 = vsel %vm441, %v477, 0.0
      %v517 = vsel %vm441, %v489, 0.0
      %v518 = vsel %vm441, %v501, 0.0
      %v519 = vsel %vm441, %v513, 0.0
      %v520 = vadd.f32 %v386, %v514
      %v521 = vadd.f32 %v387, %v515
      %v522 = vadd.f32 %v388, %v516
      %v523 = vadd.f32 %v389, %v517
      %v524 = vadd.f32 %v390, %v518
      %v525 = vadd.f32 %v391, %v519
      %v526 = vsel %vm287, 1, 0
      %vm527 = vcmp.eq.s32.totalorder %v526, 1
      %529 = vset.pattern.permute.xlu0 2
      %530 = vperm.xlu0 %529, %v434
      %v531 = vpop.permute.xlu0 %530
      %v534 = vunpack.c.l.s4 839922192
      %v535 = vunpack.c.0.s8 %v534
      %v536 = vlaneseq
      %v537 = vshrl.u32 %v536, 7
      %v538 = vsub.s32 %v535, %v537
      %v539 = vrot.slane %v531, %v538
      %541 = vset.pattern.permute.xlu0 2
      %542 = vperm.xlu0 %541, %v435
      %v543 = vpop.permute.xlu0 %542
      %v546 = vunpack.c.l.s4 839922192
      %v547 = vunpack.c.0.s8 %v546
      %v548 = vlaneseq
      %v549 = vshrl.u32 %v548, 7
      %v550 = vsub.s32 %v547, %v549
      %v551 = vrot.slane %v543, %v550
      %553 = vset.pattern.permute.xlu0 2
      %554 = vperm.xlu0 %553, %v436
      %v555 = vpop.permute.xlu0 %554
      %v558 = vunpack.c.l.s4 839922192
      %v559 = vunpack.c.0.s8 %v558
      %v560 = vlaneseq
      %v561 = vshrl.u32 %v560, 7
      %v562 = vsub.s32 %v559, %v561
      %v563 = vrot.slane %v555, %v562
      %565 = vset.pattern.permute.xlu0 2
      %566 = vperm.xlu0 %565, %v437
      %v567 = vpop.permute.xlu0 %566
      %v570 = vunpack.c.l.s4 839922192
      %v571 = vunpack.c.0.s8 %v570
      %v572 = vlaneseq
      %v573 = vshrl.u32 %v572, 7
      %v574 = vsub.s32 %v571, %v573
      %v575 = vrot.slane %v567, %v574
      %577 = vset.pattern.permute.xlu0 2
      %578 = vperm.xlu0 %577, %v438
      %v579 = vpop.permute.xlu0 %578
      %v582 = vunpack.c.l.s4 839922192
      %v583 = vunpack.c.0.s8 %v582
      %v584 = vlaneseq
      %v585 = vshrl.u32 %v584, 7
      %v586 = vsub.s32 %v583, %v585
      %v587 = vrot.slane %v579, %v586
      %589 = vset.pattern.permute.xlu0 2
      %590 = vperm.xlu0 %589, %v439
      %v591 = vpop.permute.xlu0 %590
      %v594 = vunpack.c.l.s4 839922192
      %v595 = vunpack.c.0.s8 %v594
      %v596 = vlaneseq
      %v597 = vshrl.u32 %v596, 7
      %v598 = vsub.s32 %v595, %v597
      %v599 = vrot.slane %v591, %v598
      %v600 = vsel %vm527, %v539, 0.0
      %v601 = vsel %vm527, %v551, 0.0
      %v602 = vsel %vm527, %v563, 0.0
      %v603 = vsel %vm527, %v575, 0.0
      %v604 = vsel %vm527, %v587, 0.0
      %v605 = vsel %vm527, %v599, 0.0
      %v606 = vadd.f32 %v520, %v600
      %v607 = vadd.f32 %v521, %v601
      %v608 = vadd.f32 %v522, %v602
      %v609 = vadd.f32 %v523, %v603
      %v610 = vadd.f32 %v524, %v604
      %v611 = vadd.f32 %v525, %v605
      %v612 = vmul.f32 %v606, 2.0
      %v613 = vmul.f32 %v607, 2.0
      %v614 = vmul.f32 %v608, 2.0
      %v615 = vmul.f32 %v609, 2.0
      %v616 = vmul.f32 %v610, 2.0
      %v617 = vmul.f32 %v611, 2.0
      %v624 = vrot.slane %v612, 1
      %v625 = vrot.slane %v613, 1
      %v626 = vrot.slane %v614, 1
      %v627 = vrot.slane %v615, 1
      %v628 = vrot.slane %v616, 1
      %v629 = vrot.slane %v617, 1
      %v636 = vadd.f32 %v606, %v624
      %v637 = vadd.f32 %v607, %v625
      %v638 = vadd.f32 %v608, %v626
      %v639 = vadd.f32 %v609, %v627
      %v640 = vadd.f32 %v610, %v628
      %v641 = vadd.f32 %v611, %v629
      %v642 = vrot.slane %v612, 7
      %v643 = vrot.slane %v613, 7
      %v644 = vrot.slane %v614, 7
      %v645 = vrot.slane %v615, 7
      %v646 = vrot.slane %v616, 7
      %v647 = vrot.slane %v617, 7
      %v654 = vadd.f32 %v606, %v642
      %v655 = vadd.f32 %v607, %v643
      %v656 = vadd.f32 %v608, %v644
      %v657 = vadd.f32 %v609, %v645
      %v658 = vadd.f32 %v610, %v646
      %v659 = vadd.f32 %v611, %v647
      %v666 = vrot.slane %v606, 1
      %v667 = vrot.slane %v607, 1
      %v668 = vrot.slane %v608, 1
      %v669 = vrot.slane %v609, 1
      %v670 = vrot.slane %v610, 1
      %v671 = vrot.slane %v611, 1
      %v678 = vadd.f32 %v606, %v666
      %v679 = vadd.f32 %v607, %v667
      %v680 = vadd.f32 %v608, %v668
      %v681 = vadd.f32 %v609, %v669
      %v682 = vadd.f32 %v610, %v670
      %v683 = vadd.f32 %v611, %v671
      %v684 = vrot.slane %v606, 2
      %v685 = vrot.slane %v607, 2
      %v686 = vrot.slane %v608, 2
      %v687 = vrot.slane %v609, 2
      %v688 = vrot.slane %v610, 2
      %v689 = vrot.slane %v611, 2
      %v696 = vadd.f32 %v678, %v684
      %v697 = vadd.f32 %v679, %v685
      %v698 = vadd.f32 %v680, %v686
      %v699 = vadd.f32 %v681, %v687
      %v700 = vadd.f32 %v682, %v688
      %v701 = vadd.f32 %v683, %v689
      %v708 = vrot.slane %v696, 7
      %v709 = vrot.slane %v697, 7
      %v710 = vrot.slane %v698, 7
      %v711 = vrot.slane %v699, 7
      %v712 = vrot.slane %v700, 7
      %v713 = vrot.slane %v701, 7
      %vm720 = vcmask 1040384
      %v721 = vsel %vm720, %v636, %v708
      %v722 = vsel %vm720, %v637, %v709
      %v723 = vsel %vm720, %v638, %v710
      %v724 = vsel %vm720, %v639, %v711
      %v725 = vsel %vm720, %v640, %v712
      %v726 = vsel %vm720, %v641, %v713
      %vm727 = vcmask 1042432
      %v728 = vsel %vm727, %v721, %v654
      %v729 = vsel %vm727, %v722, %v655
      %v730 = vsel %vm727, %v723, %v656
      %v731 = vsel %vm727, %v724, %v657
      %v732 = vsel %vm727, %v725, %v658
      %v733 = vsel %vm727, %v726, %v659
      %v734 = vmul.f32 %v728, 0.11111111
      %v735 = vmul.f32 %v729, 0.11111111
      %v736 = vmul.f32 %v730, 0.11111111
      %v737 = vmul.f32 %v731, 0.11111111
      %v738 = vmul.f32 %v732, 0.11111111
      %v739 = vmul.f32 %v733, 0.11111111
      %746 = vrot.lane.b32.xlu0 %v274, 125
      %v747 = vpop.permute.xlu0 %746
      %748 = vrot.lane.b32.xlu0 %v275, 125
      %v749 = vpop.permute.xlu0 %748
      %750 = vrot.lane.b32.xlu0 %v276, 125
      %v751 = vpop.permute.xlu0 %750
      %752 = vrot.lane.b32.xlu0 %v277, 125
      %v753 = vpop.permute.xlu0 %752
      %754 = vrot.lane.b32.xlu0 %v278, 125
      %v755 = vpop.permute.xlu0 %754
      %756 = vrot.lane.b32.xlu0 %v279, 125
      %v757 = vpop.permute.xlu0 %756
      %764 = vrot.lane.b32.xlu0 %v274, 1
      %v765 = vpop.permute.xlu0 %764
      %766 = vrot.lane.b32.xlu0 %v275, 1
      %v767 = vpop.permute.xlu0 %766
      %768 = vrot.lane.b32.xlu0 %v276, 1
      %v769 = vpop.permute.xlu0 %768
      %770 = vrot.lane.b32.xlu0 %v277, 1
      %v771 = vpop.permute.xlu0 %770
      %772 = vrot.lane.b32.xlu0 %v278, 1
      %v773 = vpop.permute.xlu0 %772
      %774 = vrot.lane.b32.xlu0 %v279, 1
      %v775 = vpop.permute.xlu0 %774
      %v782 = vsel %vm330, %v747, %v765
      %v783 = vsel %vm330, %v749, %v767
      %v784 = vsel %vm330, %v751, %v769
      %v785 = vsel %vm330, %v753, %v771
      %v786 = vsel %vm330, %v755, %v773
      %v787 = vsel %vm330, %v757, %v775
      %v788 = vadd.f32 %v782, %v274
      %v789 = vadd.f32 %v783, %v275
      %v790 = vadd.f32 %v784, %v276
      %v791 = vadd.f32 %v785, %v277
      %v792 = vadd.f32 %v786, %v278
      %v793 = vadd.f32 %v787, %v279
      %794 = vrot.lane.b32.xlu0 %v274, 127
      %v795 = vpop.permute.xlu0 %794
      %796 = vrot.lane.b32.xlu0 %v275, 127
      %v797 = vpop.permute.xlu0 %796
      %798 = vrot.lane.b32.xlu0 %v276, 127
      %v799 = vpop.permute.xlu0 %798
      %800 = vrot.lane.b32.xlu0 %v277, 127
      %v801 = vpop.permute.xlu0 %800
      %802 = vrot.lane.b32.xlu0 %v278, 127
      %v803 = vpop.permute.xlu0 %802
      %804 = vrot.lane.b32.xlu0 %v279, 127
      %v805 = vpop.permute.xlu0 %804
      %812 = vrot.lane.b32.xlu0 %v274, 3
      %v813 = vpop.permute.xlu0 %812
      %814 = vrot.lane.b32.xlu0 %v275, 3
      %v815 = vpop.permute.xlu0 %814
      %816 = vrot.lane.b32.xlu0 %v276, 3
      %v817 = vpop.permute.xlu0 %816
      %818 = vrot.lane.b32.xlu0 %v277, 3
      %v819 = vpop.permute.xlu0 %818
      %820 = vrot.lane.b32.xlu0 %v278, 3
      %v821 = vpop.permute.xlu0 %820
      %822 = vrot.lane.b32.xlu0 %v279, 3
      %v823 = vpop.permute.xlu0 %822
      %v830 = vsel %vm379, %v795, %v813
      %v831 = vsel %vm379, %v797, %v815
      %v832 = vsel %vm379, %v799, %v817
      %v833 = vsel %vm379, %v801, %v819
      %v834 = vsel %vm379, %v803, %v821
      %v835 = vsel %vm379, %v805, %v823
      %v836 = vadd.f32 %v788, %v830
      %v837 = vadd.f32 %v789, %v831
      %v838 = vadd.f32 %v790, %v832
      %v839 = vadd.f32 %v791, %v833
      %v840 = vadd.f32 %v792, %v834
      %v841 = vadd.f32 %v793, %v835
      %842 = vrot.lane.b32.xlu0 %v274, 126
      %v843 = vpop.permute.xlu0 %842
      %844 = vrot.lane.b32.xlu0 %v275, 126
      %v845 = vpop.permute.xlu0 %844
      %846 = vrot.lane.b32.xlu0 %v276, 126
      %v847 = vpop.permute.xlu0 %846
      %848 = vrot.lane.b32.xlu0 %v277, 126
      %v849 = vpop.permute.xlu0 %848
      %850 = vrot.lane.b32.xlu0 %v278, 126
      %v851 = vpop.permute.xlu0 %850
      %852 = vrot.lane.b32.xlu0 %v279, 126
      %v853 = vpop.permute.xlu0 %852
      %v860 = vsub.f32 %v274, %v843
      %v861 = vsub.f32 %v275, %v845
      %v862 = vsub.f32 %v276, %v847
      %v863 = vsub.f32 %v277, %v849
      %v864 = vsub.f32 %v278, %v851
      %v865 = vsub.f32 %v279, %v853
      %866 = vrot.lane.b32.xlu0 %v274, 2
      %v867 = vpop.permute.xlu0 %866
      %868 = vrot.lane.b32.xlu0 %v275, 2
      %v869 = vpop.permute.xlu0 %868
      %870 = vrot.lane.b32.xlu0 %v276, 2
      %v871 = vpop.permute.xlu0 %870
      %872 = vrot.lane.b32.xlu0 %v277, 2
      %v873 = vpop.permute.xlu0 %872
      %874 = vrot.lane.b32.xlu0 %v278, 2
      %v875 = vpop.permute.xlu0 %874
      %876 = vrot.lane.b32.xlu0 %v279, 2
      %v877 = vpop.permute.xlu0 %876
      %v884 = vsub.f32 %v274, %v867
      %v885 = vsub.f32 %v275, %v869
      %v886 = vsub.f32 %v276, %v871
      %v887 = vsub.f32 %v277, %v873
      %v888 = vsub.f32 %v278, %v875
      %v889 = vsub.f32 %v279, %v877
      %891 = vset.pattern.permute.xlu0 1
      %892 = vperm.xlu0 %891, %v860
      %v893 = vpop.permute.xlu0 %892
      %v896 = vunpack.c.l.s4 839922192
      %v897 = vunpack.c.0.s8 %v896
      %v898 = vlaneseq
      %v899 = vshrl.u32 %v898, 7
      %v900 = vsub.s32 %v897, %v899
      %v901 = vrot.slane %v893, %v900
      %903 = vset.pattern.permute.xlu0 1
      %904 = vperm.xlu0 %903, %v861
      %v905 = vpop.permute.xlu0 %904
      %v908 = vunpack.c.l.s4 839922192
      %v909 = vunpack.c.0.s8 %v908
      %v910 = vlaneseq
      %v911 = vshrl.u32 %v910, 7
      %v912 = vsub.s32 %v909, %v911
      %v913 = vrot.slane %v905, %v912
      %915 = vset.pattern.permute.xlu0 1
      %916 = vperm.xlu0 %915, %v862
      %v917 = vpop.permute.xlu0 %916
      %v920 = vunpack.c.l.s4 839922192
      %v921 = vunpack.c.0.s8 %v920
      %v922 = vlaneseq
      %v923 = vshrl.u32 %v922, 7
      %v924 = vsub.s32 %v921, %v923
      %v925 = vrot.slane %v917, %v924
      %927 = vset.pattern.permute.xlu0 1
      %928 = vperm.xlu0 %927, %v863
      %v929 = vpop.permute.xlu0 %928
      %v932 = vunpack.c.l.s4 839922192
      %v933 = vunpack.c.0.s8 %v932
      %v934 = vlaneseq
      %v935 = vshrl.u32 %v934, 7
      %v936 = vsub.s32 %v933, %v935
      %v937 = vrot.slane %v929, %v936
      %939 = vset.pattern.permute.xlu0 1
      %940 = vperm.xlu0 %939, %v864
      %v941 = vpop.permute.xlu0 %940
      %v944 = vunpack.c.l.s4 839922192
      %v945 = vunpack.c.0.s8 %v944
      %v946 = vlaneseq
      %v947 = vshrl.u32 %v946, 7
      %v948 = vsub.s32 %v945, %v947
      %v949 = vrot.slane %v941, %v948
      %951 = vset.pattern.permute.xlu0 1
      %952 = vperm.xlu0 %951, %v865
      %v953 = vpop.permute.xlu0 %952
      %v956 = vunpack.c.l.s4 839922192
      %v957 = vunpack.c.0.s8 %v956
      %v958 = vlaneseq
      %v959 = vshrl.u32 %v958, 7
      %v960 = vsub.s32 %v957, %v959
      %v961 = vrot.slane %v953, %v960
      %v962 = vsel %vm441, %v901, 0.0
      %v963 = vsel %vm441, %v913, 0.0
      %v964 = vsel %vm441, %v925, 0.0
      %v965 = vsel %vm441, %v937, 0.0
      %v966 = vsel %vm441, %v949, 0.0
      %v967 = vsel %vm441, %v961, 0.0
      %v968 = vadd.f32 %v836, %v962
      %v969 = vadd.f32 %v837, %v963
      %v970 = vadd.f32 %v838, %v964
      %v971 = vadd.f32 %v839, %v965
      %v972 = vadd.f32 %v840, %v966
      %v973 = vadd.f32 %v841, %v967
      %975 = vset.pattern.permute.xlu0 2
      %976 = vperm.xlu0 %975, %v884
      %v977 = vpop.permute.xlu0 %976
      %v980 = vunpack.c.l.s4 839922192
      %v981 = vunpack.c.0.s8 %v980
      %v982 = vlaneseq
      %v983 = vshrl.u32 %v982, 7
      %v984 = vsub.s32 %v981, %v983
      %v985 = vrot.slane %v977, %v984
      %987 = vset.pattern.permute.xlu0 2
      %988 = vperm.xlu0 %987, %v885
      %v989 = vpop.permute.xlu0 %988
      %v992 = vunpack.c.l.s4 839922192
      %v993 = vunpack.c.0.s8 %v992
      %v994 = vlaneseq
      %v995 = vshrl.u32 %v994, 7
      %v996 = vsub.s32 %v993, %v995
      %v997 = vrot.slane %v989, %v996
      %999 = vset.pattern.permute.xlu0 2
      %1000 = vperm.xlu0 %999, %v886
      %v1001 = vpop.permute.xlu0 %1000
      %v1004 = vunpack.c.l.s4 839922192
      %v1005 = vunpack.c.0.s8 %v1004
      %v1006 = vlaneseq
      %v1007 = vshrl.u32 %v1006, 7
      %v1008 = vsub.s32 %v1005, %v1007
      %v1009 = vrot.slane %v1001, %v1008
      %1011 = vset.pattern.permute.xlu0 2
      %1012 = vperm.xlu0 %1011, %v887
      %v1013 = vpop.permute.xlu0 %1012
      %v1016 = vunpack.c.l.s4 839922192
      %v1017 = vunpack.c.0.s8 %v1016
      %v1018 = vlaneseq
      %v1019 = vshrl.u32 %v1018, 7
      %v1020 = vsub.s32 %v1017, %v1019
      %v1021 = vrot.slane %v1013, %v1020
      %1023 = vset.pattern.permute.xlu0 2
      %1024 = vperm.xlu0 %1023, %v888
      %v1025 = vpop.permute.xlu0 %1024
      %v1028 = vunpack.c.l.s4 839922192
      %v1029 = vunpack.c.0.s8 %v1028
      %v1030 = vlaneseq
      %v1031 = vshrl.u32 %v1030, 7
      %v1032 = vsub.s32 %v1029, %v1031
      %v1033 = vrot.slane %v1025, %v1032
      %1035 = vset.pattern.permute.xlu0 2
      %1036 = vperm.xlu0 %1035, %v889
      %v1037 = vpop.permute.xlu0 %1036
      %v1040 = vunpack.c.l.s4 839922192
      %v1041 = vunpack.c.0.s8 %v1040
      %v1042 = vlaneseq
      %v1043 = vshrl.u32 %v1042, 7
      %v1044 = vsub.s32 %v1041, %v1043
      %v1045 = vrot.slane %v1037, %v1044
      %v1046 = vsel %vm527, %v985, 0.0
      %v1047 = vsel %vm527, %v997, 0.0
      %v1048 = vsel %vm527, %v1009, 0.0
      %v1049 = vsel %vm527, %v1021, 0.0
      %v1050 = vsel %vm527, %v1033, 0.0
      %v1051 = vsel %vm527, %v1045, 0.0
      %v1052 = vadd.f32 %v968, %v1046
      %v1053 = vadd.f32 %v969, %v1047
      %v1054 = vadd.f32 %v970, %v1048
      %v1055 = vadd.f32 %v971, %v1049
      %v1056 = vadd.f32 %v972, %v1050
      %v1057 = vadd.f32 %v973, %v1051
      %v1058 = vmul.f32 %v1052, 2.0
      %v1059 = vmul.f32 %v1053, 2.0
      %v1060 = vmul.f32 %v1054, 2.0
      %v1061 = vmul.f32 %v1055, 2.0
      %v1062 = vmul.f32 %v1056, 2.0
      %v1063 = vmul.f32 %v1057, 2.0
      %v1070 = vrot.slane %v1058, 1
      %v1071 = vrot.slane %v1059, 1
      %v1072 = vrot.slane %v1060, 1
      %v1073 = vrot.slane %v1061, 1
      %v1074 = vrot.slane %v1062, 1
      %v1075 = vrot.slane %v1063, 1
      %v1082 = vadd.f32 %v1052, %v1070
      %v1083 = vadd.f32 %v1053, %v1071
      %v1084 = vadd.f32 %v1054, %v1072
      %v1085 = vadd.f32 %v1055, %v1073
      %v1086 = vadd.f32 %v1056, %v1074
      %v1087 = vadd.f32 %v1057, %v1075
      %v1088 = vrot.slane %v1058, 7
      %v1089 = vrot.slane %v1059, 7
      %v1090 = vrot.slane %v1060, 7
      %v1091 = vrot.slane %v1061, 7
      %v1092 = vrot.slane %v1062, 7
      %v1093 = vrot.slane %v1063, 7
      %v1100 = vadd.f32 %v1052, %v1088
      %v1101 = vadd.f32 %v1053, %v1089
      %v1102 = vadd.f32 %v1054, %v1090
      %v1103 = vadd.f32 %v1055, %v1091
      %v1104 = vadd.f32 %v1056, %v1092
      %v1105 = vadd.f32 %v1057, %v1093
      %v1112 = vrot.slane %v1052, 1
      %v1113 = vrot.slane %v1053, 1
      %v1114 = vrot.slane %v1054, 1
      %v1115 = vrot.slane %v1055, 1
      %v1116 = vrot.slane %v1056, 1
      %v1117 = vrot.slane %v1057, 1
      %v1124 = vadd.f32 %v1052, %v1112
      %v1125 = vadd.f32 %v1053, %v1113
      %v1126 = vadd.f32 %v1054, %v1114
      %v1127 = vadd.f32 %v1055, %v1115
      %v1128 = vadd.f32 %v1056, %v1116
      %v1129 = vadd.f32 %v1057, %v1117
      %v1130 = vrot.slane %v1052, 2
      %v1131 = vrot.slane %v1053, 2
      %v1132 = vrot.slane %v1054, 2
      %v1133 = vrot.slane %v1055, 2
      %v1134 = vrot.slane %v1056, 2
      %v1135 = vrot.slane %v1057, 2
      %v1142 = vadd.f32 %v1124, %v1130
      %v1143 = vadd.f32 %v1125, %v1131
      %v1144 = vadd.f32 %v1126, %v1132
      %v1145 = vadd.f32 %v1127, %v1133
      %v1146 = vadd.f32 %v1128, %v1134
      %v1147 = vadd.f32 %v1129, %v1135
      %v1154 = vrot.slane %v1142, 7
      %v1155 = vrot.slane %v1143, 7
      %v1156 = vrot.slane %v1144, 7
      %v1157 = vrot.slane %v1145, 7
      %v1158 = vrot.slane %v1146, 7
      %v1159 = vrot.slane %v1147, 7
      %v1166 = vsel %vm720, %v1082, %v1154
      %v1167 = vsel %vm720, %v1083, %v1155
      %v1168 = vsel %vm720, %v1084, %v1156
      %v1169 = vsel %vm720, %v1085, %v1157
      %v1170 = vsel %vm720, %v1086, %v1158
      %v1171 = vsel %vm720, %v1087, %v1159
      %v1172 = vsel %vm727, %v1166, %v1100
      %v1173 = vsel %vm727, %v1167, %v1101
      %v1174 = vsel %vm727, %v1168, %v1102
      %v1175 = vsel %vm727, %v1169, %v1103
      %v1176 = vsel %vm727, %v1170, %v1104
      %v1177 = vsel %vm727, %v1171, %v1105
      %v1178 = vmul.f32 %v1172, 0.11111111
      %v1179 = vmul.f32 %v1173, 0.11111111
      %v1180 = vmul.f32 %v1174, 0.11111111
      %v1181 = vmul.f32 %v1175, 0.11111111
      %v1182 = vmul.f32 %v1176, 0.11111111
      %v1183 = vmul.f32 %v1177, 0.11111111
      %v1184 = vmul.f32 %v262, %v262
      %v1185 = vmul.f32 %v263, %v263
      %v1186 = vmul.f32 %v264, %v264
      %v1187 = vmul.f32 %v265, %v265
      %v1188 = vmul.f32 %v266, %v266
      %v1189 = vmul.f32 %v267, %v267
      %v1190 = vmul.f32 %v274, %v274
      %v1191 = vmul.f32 %v275, %v275
      %v1192 = vmul.f32 %v276, %v276
      %v1193 = vmul.f32 %v277, %v277
      %v1194 = vmul.f32 %v278, %v278
      %v1195 = vmul.f32 %v279, %v279
      %v1196 = vadd.f32 %v1184, %v1190
      %v1197 = vadd.f32 %v1185, %v1191
      %v1198 = vadd.f32 %v1186, %v1192
      %v1199 = vadd.f32 %v1187, %v1193
      %v1200 = vadd.f32 %v1188, %v1194
      %v1201 = vadd.f32 %v1189, %v1195
      %1208 = vrot.lane.b32.xlu0 %v1196, 125
      %v1209 = vpop.permute.xlu0 %1208
      %1210 = vrot.lane.b32.xlu0 %v1197, 125
      %v1211 = vpop.permute.xlu0 %1210
      %1212 = vrot.lane.b32.xlu0 %v1198, 125
      %v1213 = vpop.permute.xlu0 %1212
      %1214 = vrot.lane.b32.xlu0 %v1199, 125
      %v1215 = vpop.permute.xlu0 %1214
      %1216 = vrot.lane.b32.xlu0 %v1200, 125
      %v1217 = vpop.permute.xlu0 %1216
      %1218 = vrot.lane.b32.xlu0 %v1201, 125
      %v1219 = vpop.permute.xlu0 %1218
      %1226 = vrot.lane.b32.xlu0 %v1196, 1
      %v1227 = vpop.permute.xlu0 %1226
      %1228 = vrot.lane.b32.xlu0 %v1197, 1
      %v1229 = vpop.permute.xlu0 %1228
      %1230 = vrot.lane.b32.xlu0 %v1198, 1
      %v1231 = vpop.permute.xlu0 %1230
      %1232 = vrot.lane.b32.xlu0 %v1199, 1
      %v1233 = vpop.permute.xlu0 %1232
      %1234 = vrot.lane.b32.xlu0 %v1200, 1
      %v1235 = vpop.permute.xlu0 %1234
      %1236 = vrot.lane.b32.xlu0 %v1201, 1
      %v1237 = vpop.permute.xlu0 %1236
      %v1244 = vsel %vm330, %v1209, %v1227
      %v1245 = vsel %vm330, %v1211, %v1229
      %v1246 = vsel %vm330, %v1213, %v1231
      %v1247 = vsel %vm330, %v1215, %v1233
      %v1248 = vsel %vm330, %v1217, %v1235
      %v1249 = vsel %vm330, %v1219, %v1237
      %v1250 = vadd.f32 %v1244, %v1196
      %v1251 = vadd.f32 %v1245, %v1197
      %v1252 = vadd.f32 %v1246, %v1198
      %v1253 = vadd.f32 %v1247, %v1199
      %v1254 = vadd.f32 %v1248, %v1200
      %v1255 = vadd.f32 %v1249, %v1201
      %1256 = vrot.lane.b32.xlu0 %v1196, 127
      %v1257 = vpop.permute.xlu0 %1256
      %1258 = vrot.lane.b32.xlu0 %v1197, 127
      %v1259 = vpop.permute.xlu0 %1258
      %1260 = vrot.lane.b32.xlu0 %v1198, 127
      %v1261 = vpop.permute.xlu0 %1260
      %1262 = vrot.lane.b32.xlu0 %v1199, 127
      %v1263 = vpop.permute.xlu0 %1262
      %1264 = vrot.lane.b32.xlu0 %v1200, 127
      %v1265 = vpop.permute.xlu0 %1264
      %1266 = vrot.lane.b32.xlu0 %v1201, 127
      %v1267 = vpop.permute.xlu0 %1266
      %1274 = vrot.lane.b32.xlu0 %v1196, 3
      %v1275 = vpop.permute.xlu0 %1274
      %1276 = vrot.lane.b32.xlu0 %v1197, 3
      %v1277 = vpop.permute.xlu0 %1276
      %1278 = vrot.lane.b32.xlu0 %v1198, 3
      %v1279 = vpop.permute.xlu0 %1278
      %1280 = vrot.lane.b32.xlu0 %v1199, 3
      %v1281 = vpop.permute.xlu0 %1280
      %1282 = vrot.lane.b32.xlu0 %v1200, 3
      %v1283 = vpop.permute.xlu0 %1282
      %1284 = vrot.lane.b32.xlu0 %v1201, 3
      %v1285 = vpop.permute.xlu0 %1284
      %v1292 = vsel %vm379, %v1257, %v1275
      %v1293 = vsel %vm379, %v1259, %v1277
      %v1294 = vsel %vm379, %v1261, %v1279
      %v1295 = vsel %vm379, %v1263, %v1281
      %v1296 = vsel %vm379, %v1265, %v1283
      %v1297 = vsel %vm379, %v1267, %v1285
      %v1298 = vadd.f32 %v1250, %v1292
      %v1299 = vadd.f32 %v1251, %v1293
      %v1300 = vadd.f32 %v1252, %v1294
      %v1301 = vadd.f32 %v1253, %v1295
      %v1302 = vadd.f32 %v1254, %v1296
      %v1303 = vadd.f32 %v1255, %v1297
      %1304 = vrot.lane.b32.xlu0 %v1196, 126
      %v1305 = vpop.permute.xlu0 %1304
      %1306 = vrot.lane.b32.xlu0 %v1197, 126
      %v1307 = vpop.permute.xlu0 %1306
      %1308 = vrot.lane.b32.xlu0 %v1198, 126
      %v1309 = vpop.permute.xlu0 %1308
      %1310 = vrot.lane.b32.xlu0 %v1199, 126
      %v1311 = vpop.permute.xlu0 %1310
      %1312 = vrot.lane.b32.xlu0 %v1200, 126
      %v1313 = vpop.permute.xlu0 %1312
      %1314 = vrot.lane.b32.xlu0 %v1201, 126
      %v1315 = vpop.permute.xlu0 %1314
      %v1322 = vsub.f32 %v1196, %v1305
      %v1323 = vsub.f32 %v1197, %v1307
      %v1324 = vsub.f32 %v1198, %v1309
      %v1325 = vsub.f32 %v1199, %v1311
      %v1326 = vsub.f32 %v1200, %v1313
      %v1327 = vsub.f32 %v1201, %v1315
      %1328 = vrot.lane.b32.xlu0 %v1196, 2
      %v1329 = vpop.permute.xlu0 %1328
      %1330 = vrot.lane.b32.xlu0 %v1197, 2
      %v1331 = vpop.permute.xlu0 %1330
      %1332 = vrot.lane.b32.xlu0 %v1198, 2
      %v1333 = vpop.permute.xlu0 %1332
      %1334 = vrot.lane.b32.xlu0 %v1199, 2
      %v1335 = vpop.permute.xlu0 %1334
      %1336 = vrot.lane.b32.xlu0 %v1200, 2
      %v1337 = vpop.permute.xlu0 %1336
      %1338 = vrot.lane.b32.xlu0 %v1201, 2
      %v1339 = vpop.permute.xlu0 %1338
      %v1346 = vsub.f32 %v1196, %v1329
      %v1347 = vsub.f32 %v1197, %v1331
      %v1348 = vsub.f32 %v1198, %v1333
      %v1349 = vsub.f32 %v1199, %v1335
      %v1350 = vsub.f32 %v1200, %v1337
      %v1351 = vsub.f32 %v1201, %v1339
      %1353 = vset.pattern.permute.xlu0 1
      %1354 = vperm.xlu0 %1353, %v1322
      %v1355 = vpop.permute.xlu0 %1354
      %v1358 = vunpack.c.l.s4 839922192
      %v1359 = vunpack.c.0.s8 %v1358
      %v1360 = vlaneseq
      %v1361 = vshrl.u32 %v1360, 7
      %v1362 = vsub.s32 %v1359, %v1361
      %v1363 = vrot.slane %v1355, %v1362
      %1365 = vset.pattern.permute.xlu0 1
      %1366 = vperm.xlu0 %1365, %v1323
      %v1367 = vpop.permute.xlu0 %1366
      %v1370 = vunpack.c.l.s4 839922192
      %v1371 = vunpack.c.0.s8 %v1370
      %v1372 = vlaneseq
      %v1373 = vshrl.u32 %v1372, 7
      %v1374 = vsub.s32 %v1371, %v1373
      %v1375 = vrot.slane %v1367, %v1374
      %1377 = vset.pattern.permute.xlu0 1
      %1378 = vperm.xlu0 %1377, %v1324
      %v1379 = vpop.permute.xlu0 %1378
      %v1382 = vunpack.c.l.s4 839922192
      %v1383 = vunpack.c.0.s8 %v1382
      %v1384 = vlaneseq
      %v1385 = vshrl.u32 %v1384, 7
      %v1386 = vsub.s32 %v1383, %v1385
      %v1387 = vrot.slane %v1379, %v1386
      %1389 = vset.pattern.permute.xlu0 1
      %1390 = vperm.xlu0 %1389, %v1325
      %v1391 = vpop.permute.xlu0 %1390
      %v1394 = vunpack.c.l.s4 839922192
      %v1395 = vunpack.c.0.s8 %v1394
      %v1396 = vlaneseq
      %v1397 = vshrl.u32 %v1396, 7
      %v1398 = vsub.s32 %v1395, %v1397
      %v1399 = vrot.slane %v1391, %v1398
      %1401 = vset.pattern.permute.xlu0 1
      %1402 = vperm.xlu0 %1401, %v1326
      %v1403 = vpop.permute.xlu0 %1402
      %v1406 = vunpack.c.l.s4 839922192
      %v1407 = vunpack.c.0.s8 %v1406
      %v1408 = vlaneseq
      %v1409 = vshrl.u32 %v1408, 7
      %v1410 = vsub.s32 %v1407, %v1409
      %v1411 = vrot.slane %v1403, %v1410
      %1413 = vset.pattern.permute.xlu0 1
      %1414 = vperm.xlu0 %1413, %v1327
      %v1415 = vpop.permute.xlu0 %1414
      %v1418 = vunpack.c.l.s4 839922192
      %v1419 = vunpack.c.0.s8 %v1418
      %v1420 = vlaneseq
      %v1421 = vshrl.u32 %v1420, 7
      %v1422 = vsub.s32 %v1419, %v1421
      %v1423 = vrot.slane %v1415, %v1422
      %v1424 = vsel %vm441, %v1363, 0.0
      %v1425 = vsel %vm441, %v1375, 0.0
      %v1426 = vsel %vm441, %v1387, 0.0
      %v1427 = vsel %vm441, %v1399, 0.0
      %v1428 = vsel %vm441, %v1411, 0.0
      %v1429 = vsel %vm441, %v1423, 0.0
      %v1430 = vadd.f32 %v1298, %v1424
      %v1431 = vadd.f32 %v1299, %v1425
      %v1432 = vadd.f32 %v1300, %v1426
      %v1433 = vadd.f32 %v1301, %v1427
      %v1434 = vadd.f32 %v1302, %v1428
      %v1435 = vadd.f32 %v1303, %v1429
      %1437 = vset.pattern.permute.xlu0 2
      %1438 = vperm.xlu0 %1437, %v1346
      %v1439 = vpop.permute.xlu0 %1438
      %v1442 = vunpack.c.l.s4 839922192
      %v1443 = vunpack.c.0.s8 %v1442
      %v1444 = vlaneseq
      %v1445 = vshrl.u32 %v1444, 7
      %v1446 = vsub.s32 %v1443, %v1445
      %v1447 = vrot.slane %v1439, %v1446
      %1449 = vset.pattern.permute.xlu0 2
      %1450 = vperm.xlu0 %1449, %v1347
      %v1451 = vpop.permute.xlu0 %1450
      %v1454 = vunpack.c.l.s4 839922192
      %v1455 = vunpack.c.0.s8 %v1454
      %v1456 = vlaneseq
      %v1457 = vshrl.u32 %v1456, 7
      %v1458 = vsub.s32 %v1455, %v1457
      %v1459 = vrot.slane %v1451, %v1458
      %1461 = vset.pattern.permute.xlu0 2
      %1462 = vperm.xlu0 %1461, %v1348
      %v1463 = vpop.permute.xlu0 %1462
      %v1466 = vunpack.c.l.s4 839922192
      %v1467 = vunpack.c.0.s8 %v1466
      %v1468 = vlaneseq
      %v1469 = vshrl.u32 %v1468, 7
      %v1470 = vsub.s32 %v1467, %v1469
      %v1471 = vrot.slane %v1463, %v1470
      %1473 = vset.pattern.permute.xlu0 2
      %1474 = vperm.xlu0 %1473, %v1349
      %v1475 = vpop.permute.xlu0 %1474
      %v1478 = vunpack.c.l.s4 839922192
      %v1479 = vunpack.c.0.s8 %v1478
      %v1480 = vlaneseq
      %v1481 = vshrl.u32 %v1480, 7
      %v1482 = vsub.s32 %v1479, %v1481
      %v1483 = vrot.slane %v1475, %v1482
      %1485 = vset.pattern.permute.xlu0 2
      %1486 = vperm.xlu0 %1485, %v1350
      %v1487 = vpop.permute.xlu0 %1486
      %v1490 = vunpack.c.l.s4 839922192
      %v1491 = vunpack.c.0.s8 %v1490
      %v1492 = vlaneseq
      %v1493 = vshrl.u32 %v1492, 7
      %v1494 = vsub.s32 %v1491, %v1493
      %v1495 = vrot.slane %v1487, %v1494
      %1497 = vset.pattern.permute.xlu0 2
      %1498 = vperm.xlu0 %1497, %v1351
      %v1499 = vpop.permute.xlu0 %1498
      %v1502 = vunpack.c.l.s4 839922192
      %v1503 = vunpack.c.0.s8 %v1502
      %v1504 = vlaneseq
      %v1505 = vshrl.u32 %v1504, 7
      %v1506 = vsub.s32 %v1503, %v1505
      %v1507 = vrot.slane %v1499, %v1506
      %v1508 = vsel %vm527, %v1447, 0.0
      %v1509 = vsel %vm527, %v1459, 0.0
      %v1510 = vsel %vm527, %v1471, 0.0
      %v1511 = vsel %vm527, %v1483, 0.0
      %v1512 = vsel %vm527, %v1495, 0.0
      %v1513 = vsel %vm527, %v1507, 0.0
      %v1514 = vadd.f32 %v1430, %v1508
      %v1515 = vadd.f32 %v1431, %v1509
      %v1516 = vadd.f32 %v1432, %v1510
      %v1517 = vadd.f32 %v1433, %v1511
      %v1518 = vadd.f32 %v1434, %v1512
      %v1519 = vadd.f32 %v1435, %v1513
      %v1520 = vmul.f32 %v1514, 2.0
      %v1521 = vmul.f32 %v1515, 2.0
      %v1522 = vmul.f32 %v1516, 2.0
      %v1523 = vmul.f32 %v1517, 2.0
      %v1524 = vmul.f32 %v1518, 2.0
      %v1525 = vmul.f32 %v1519, 2.0
      %v1532 = vrot.slane %v1520, 1
      %v1533 = vrot.slane %v1521, 1
      %v1534 = vrot.slane %v1522, 1
      %v1535 = vrot.slane %v1523, 1
      %v1536 = vrot.slane %v1524, 1
      %v1537 = vrot.slane %v1525, 1
      %v1544 = vadd.f32 %v1514, %v1532
      %v1545 = vadd.f32 %v1515, %v1533
      %v1546 = vadd.f32 %v1516, %v1534
      %v1547 = vadd.f32 %v1517, %v1535
      %v1548 = vadd.f32 %v1518, %v1536
      %v1549 = vadd.f32 %v1519, %v1537
      %v1550 = vrot.slane %v1520, 7
      %v1551 = vrot.slane %v1521, 7
      %v1552 = vrot.slane %v1522, 7
      %v1553 = vrot.slane %v1523, 7
      %v1554 = vrot.slane %v1524, 7
      %v1555 = vrot.slane %v1525, 7
      %v1562 = vadd.f32 %v1514, %v1550
      %v1563 = vadd.f32 %v1515, %v1551
      %v1564 = vadd.f32 %v1516, %v1552
      %v1565 = vadd.f32 %v1517, %v1553
      %v1566 = vadd.f32 %v1518, %v1554
      %v1567 = vadd.f32 %v1519, %v1555
      %v1574 = vrot.slane %v1514, 1
      %v1575 = vrot.slane %v1515, 1
      %v1576 = vrot.slane %v1516, 1
      %v1577 = vrot.slane %v1517, 1
      %v1578 = vrot.slane %v1518, 1
      %v1579 = vrot.slane %v1519, 1
      %v1586 = vadd.f32 %v1514, %v1574
      %v1587 = vadd.f32 %v1515, %v1575
      %v1588 = vadd.f32 %v1516, %v1576
      %v1589 = vadd.f32 %v1517, %v1577
      %v1590 = vadd.f32 %v1518, %v1578
      %v1591 = vadd.f32 %v1519, %v1579
      %v1592 = vrot.slane %v1514, 2
      %v1593 = vrot.slane %v1515, 2
      %v1594 = vrot.slane %v1516, 2
      %v1595 = vrot.slane %v1517, 2
      %v1596 = vrot.slane %v1518, 2
      %v1597 = vrot.slane %v1519, 2
      %v1604 = vadd.f32 %v1586, %v1592
      %v1605 = vadd.f32 %v1587, %v1593
      %v1606 = vadd.f32 %v1588, %v1594
      %v1607 = vadd.f32 %v1589, %v1595
      %v1608 = vadd.f32 %v1590, %v1596
      %v1609 = vadd.f32 %v1591, %v1597
      %v1616 = vrot.slane %v1604, 7
      %v1617 = vrot.slane %v1605, 7
      %v1618 = vrot.slane %v1606, 7
      %v1619 = vrot.slane %v1607, 7
      %v1620 = vrot.slane %v1608, 7
      %v1621 = vrot.slane %v1609, 7
      %v1628 = vsel %vm720, %v1544, %v1616
      %v1629 = vsel %vm720, %v1545, %v1617
      %v1630 = vsel %vm720, %v1546, %v1618
      %v1631 = vsel %vm720, %v1547, %v1619
      %v1632 = vsel %vm720, %v1548, %v1620
      %v1633 = vsel %vm720, %v1549, %v1621
      %v1634 = vsel %vm727, %v1628, %v1562
      %v1635 = vsel %vm727, %v1629, %v1563
      %v1636 = vsel %vm727, %v1630, %v1564
      %v1637 = vsel %vm727, %v1631, %v1565
      %v1638 = vsel %vm727, %v1632, %v1566
      %v1639 = vsel %vm727, %v1633, %v1567
      %v1640 = vmul.f32 %v1634, 0.11111111
      %v1641 = vmul.f32 %v1635, 0.11111111
      %v1642 = vmul.f32 %v1636, 0.11111111
      %v1643 = vmul.f32 %v1637, 0.11111111
      %v1644 = vmul.f32 %v1638, 0.11111111
      %v1645 = vmul.f32 %v1639, 0.11111111
      %v1646 = vmul.f32 %v734, %v734
      %v1647 = vmul.f32 %v735, %v735
      %v1648 = vmul.f32 %v736, %v736
      %v1649 = vmul.f32 %v737, %v737
      %v1650 = vmul.f32 %v738, %v738
      %v1651 = vmul.f32 %v739, %v739
      %v1652 = vsub.f32 %v1640, %v1646
      %v1653 = vsub.f32 %v1641, %v1647
      %v1654 = vsub.f32 %v1642, %v1648
      %v1655 = vsub.f32 %v1643, %v1649
      %v1656 = vsub.f32 %v1644, %v1650
      %v1657 = vsub.f32 %v1645, %v1651
      %v1658 = vmul.f32 %v1178, %v1178
      %v1659 = vmul.f32 %v1179, %v1179
      %v1660 = vmul.f32 %v1180, %v1180
      %v1661 = vmul.f32 %v1181, %v1181
      %v1662 = vmul.f32 %v1182, %v1182
      %v1663 = vmul.f32 %v1183, %v1183
      %v1664 = vsub.f32 %v1652, %v1658
      %v1665 = vsub.f32 %v1653, %v1659
      %v1666 = vsub.f32 %v1654, %v1660
      %v1667 = vsub.f32 %v1655, %v1661
      %v1668 = vsub.f32 %v1656, %v1662
      %v1669 = vsub.f32 %v1657, %v1663
      %v1670 = vmul.f32 %v262, %v274
      %v1671 = vmul.f32 %v263, %v275
      %v1672 = vmul.f32 %v264, %v276
      %v1673 = vmul.f32 %v265, %v277
      %v1674 = vmul.f32 %v266, %v278
      %v1675 = vmul.f32 %v267, %v279
      %1682 = vrot.lane.b32.xlu0 %v1670, 125
      %v1683 = vpop.permute.xlu0 %1682
      %1684 = vrot.lane.b32.xlu0 %v1671, 125
      %v1685 = vpop.permute.xlu0 %1684
      %1686 = vrot.lane.b32.xlu0 %v1672, 125
      %v1687 = vpop.permute.xlu0 %1686
      %1688 = vrot.lane.b32.xlu0 %v1673, 125
      %v1689 = vpop.permute.xlu0 %1688
      %1690 = vrot.lane.b32.xlu0 %v1674, 125
      %v1691 = vpop.permute.xlu0 %1690
      %1692 = vrot.lane.b32.xlu0 %v1675, 125
      %v1693 = vpop.permute.xlu0 %1692
      %1700 = vrot.lane.b32.xlu0 %v1670, 1
      %v1701 = vpop.permute.xlu0 %1700
      %1702 = vrot.lane.b32.xlu0 %v1671, 1
      %v1703 = vpop.permute.xlu0 %1702
      %1704 = vrot.lane.b32.xlu0 %v1672, 1
      %v1705 = vpop.permute.xlu0 %1704
      %1706 = vrot.lane.b32.xlu0 %v1673, 1
      %v1707 = vpop.permute.xlu0 %1706
      %1708 = vrot.lane.b32.xlu0 %v1674, 1
      %v1709 = vpop.permute.xlu0 %1708
      %1710 = vrot.lane.b32.xlu0 %v1675, 1
      %v1711 = vpop.permute.xlu0 %1710
      %v1718 = vsel %vm330, %v1683, %v1701
      %v1719 = vsel %vm330, %v1685, %v1703
      %v1720 = vsel %vm330, %v1687, %v1705
      %v1721 = vsel %vm330, %v1689, %v1707
      %v1722 = vsel %vm330, %v1691, %v1709
      %v1723 = vsel %vm330, %v1693, %v1711
      %v1724 = vadd.f32 %v1718, %v1670
      %v1725 = vadd.f32 %v1719, %v1671
      %v1726 = vadd.f32 %v1720, %v1672
      %v1727 = vadd.f32 %v1721, %v1673
      %v1728 = vadd.f32 %v1722, %v1674
      %v1729 = vadd.f32 %v1723, %v1675
      %1730 = vrot.lane.b32.xlu0 %v1670, 127
      %v1731 = vpop.permute.xlu0 %1730
      %1732 = vrot.lane.b32.xlu0 %v1671, 127
      %v1733 = vpop.permute.xlu0 %1732
      %1734 = vrot.lane.b32.xlu0 %v1672, 127
      %v1735 = vpop.permute.xlu0 %1734
      %1736 = vrot.lane.b32.xlu0 %v1673, 127
      %v1737 = vpop.permute.xlu0 %1736
      %1738 = vrot.lane.b32.xlu0 %v1674, 127
      %v1739 = vpop.permute.xlu0 %1738
      %1740 = vrot.lane.b32.xlu0 %v1675, 127
      %v1741 = vpop.permute.xlu0 %1740
      %1748 = vrot.lane.b32.xlu0 %v1670, 3
      %v1749 = vpop.permute.xlu0 %1748
      %1750 = vrot.lane.b32.xlu0 %v1671, 3
      %v1751 = vpop.permute.xlu0 %1750
      %1752 = vrot.lane.b32.xlu0 %v1672, 3
      %v1753 = vpop.permute.xlu0 %1752
      %1754 = vrot.lane.b32.xlu0 %v1673, 3
      %v1755 = vpop.permute.xlu0 %1754
      %1756 = vrot.lane.b32.xlu0 %v1674, 3
      %v1757 = vpop.permute.xlu0 %1756
      %1758 = vrot.lane.b32.xlu0 %v1675, 3
      %v1759 = vpop.permute.xlu0 %1758
      %v1766 = vsel %vm379, %v1731, %v1749
      %v1767 = vsel %vm379, %v1733, %v1751
      %v1768 = vsel %vm379, %v1735, %v1753
      %v1769 = vsel %vm379, %v1737, %v1755
      %v1770 = vsel %vm379, %v1739, %v1757
      %v1771 = vsel %vm379, %v1741, %v1759
      %v1772 = vadd.f32 %v1724, %v1766
      %v1773 = vadd.f32 %v1725, %v1767
      %v1774 = vadd.f32 %v1726, %v1768
      %v1775 = vadd.f32 %v1727, %v1769
      %v1776 = vadd.f32 %v1728, %v1770
      %v1777 = vadd.f32 %v1729, %v1771
      %1778 = vrot.lane.b32.xlu0 %v1670, 126
      %v1779 = vpop.permute.xlu0 %1778
      %1780 = vrot.lane.b32.xlu0 %v1671, 126
      %v1781 = vpop.permute.xlu0 %1780
      %1782 = vrot.lane.b32.xlu0 %v1672, 126
      %v1783 = vpop.permute.xlu0 %1782
      %1784 = vrot.lane.b32.xlu0 %v1673, 126
      %v1785 = vpop.permute.xlu0 %1784
      %1786 = vrot.lane.b32.xlu0 %v1674, 126
      %v1787 = vpop.permute.xlu0 %1786
      %1788 = vrot.lane.b32.xlu0 %v1675, 126
      %v1789 = vpop.permute.xlu0 %1788
      %v1796 = vsub.f32 %v1670, %v1779
      %v1797 = vsub.f32 %v1671, %v1781
      %v1798 = vsub.f32 %v1672, %v1783
      %v1799 = vsub.f32 %v1673, %v1785
      %v1800 = vsub.f32 %v1674, %v1787
      %v1801 = vsub.f32 %v1675, %v1789
      %1802 = vrot.lane.b32.xlu0 %v1670, 2
      %v1803 = vpop.permute.xlu0 %1802
      %1804 = vrot.lane.b32.xlu0 %v1671, 2
      %v1805 = vpop.permute.xlu0 %1804
      %1806 = vrot.lane.b32.xlu0 %v1672, 2
      %v1807 = vpop.permute.xlu0 %1806
      %1808 = vrot.lane.b32.xlu0 %v1673, 2
      %v1809 = vpop.permute.xlu0 %1808
      %1810 = vrot.lane.b32.xlu0 %v1674, 2
      %v1811 = vpop.permute.xlu0 %1810
      %1812 = vrot.lane.b32.xlu0 %v1675, 2
      %v1813 = vpop.permute.xlu0 %1812
      %v1820 = vsub.f32 %v1670, %v1803
      %v1821 = vsub.f32 %v1671, %v1805
      %v1822 = vsub.f32 %v1672, %v1807
      %v1823 = vsub.f32 %v1673, %v1809
      %v1824 = vsub.f32 %v1674, %v1811
      %v1825 = vsub.f32 %v1675, %v1813
      %1827 = vset.pattern.permute.xlu0 1
      %1828 = vperm.xlu0 %1827, %v1796
      %v1829 = vpop.permute.xlu0 %1828
      %v1832 = vunpack.c.l.s4 839922192
      %v1833 = vunpack.c.0.s8 %v1832
      %v1834 = vlaneseq
      %v1835 = vshrl.u32 %v1834, 7
      %v1836 = vsub.s32 %v1833, %v1835
      %v1837 = vrot.slane %v1829, %v1836
      %1839 = vset.pattern.permute.xlu0 1
      %1840 = vperm.xlu0 %1839, %v1797
      %v1841 = vpop.permute.xlu0 %1840
      %v1844 = vunpack.c.l.s4 839922192
      %v1845 = vunpack.c.0.s8 %v1844
      %v1846 = vlaneseq
      %v1847 = vshrl.u32 %v1846, 7
      %v1848 = vsub.s32 %v1845, %v1847
      %v1849 = vrot.slane %v1841, %v1848
      %1851 = vset.pattern.permute.xlu0 1
      %1852 = vperm.xlu0 %1851, %v1798
      %v1853 = vpop.permute.xlu0 %1852
      %v1856 = vunpack.c.l.s4 839922192
      %v1857 = vunpack.c.0.s8 %v1856
      %v1858 = vlaneseq
      %v1859 = vshrl.u32 %v1858, 7
      %v1860 = vsub.s32 %v1857, %v1859
      %v1861 = vrot.slane %v1853, %v1860
      %1863 = vset.pattern.permute.xlu0 1
      %1864 = vperm.xlu0 %1863, %v1799
      %v1865 = vpop.permute.xlu0 %1864
      %v1868 = vunpack.c.l.s4 839922192
      %v1869 = vunpack.c.0.s8 %v1868
      %v1870 = vlaneseq
      %v1871 = vshrl.u32 %v1870, 7
      %v1872 = vsub.s32 %v1869, %v1871
      %v1873 = vrot.slane %v1865, %v1872
      %1875 = vset.pattern.permute.xlu0 1
      %1876 = vperm.xlu0 %1875, %v1800
      %v1877 = vpop.permute.xlu0 %1876
      %v1880 = vunpack.c.l.s4 839922192
      %v1881 = vunpack.c.0.s8 %v1880
      %v1882 = vlaneseq
      %v1883 = vshrl.u32 %v1882, 7
      %v1884 = vsub.s32 %v1881, %v1883
      %v1885 = vrot.slane %v1877, %v1884
      %1887 = vset.pattern.permute.xlu0 1
      %1888 = vperm.xlu0 %1887, %v1801
      %v1889 = vpop.permute.xlu0 %1888
      %v1892 = vunpack.c.l.s4 839922192
      %v1893 = vunpack.c.0.s8 %v1892
      %v1894 = vlaneseq
      %v1895 = vshrl.u32 %v1894, 7
      %v1896 = vsub.s32 %v1893, %v1895
      %v1897 = vrot.slane %v1889, %v1896
      %v1898 = vsel %vm441, %v1837, 0.0
      %v1899 = vsel %vm441, %v1849, 0.0
      %v1900 = vsel %vm441, %v1861, 0.0
      %v1901 = vsel %vm441, %v1873, 0.0
      %v1902 = vsel %vm441, %v1885, 0.0
      %v1903 = vsel %vm441, %v1897, 0.0
      %v1904 = vadd.f32 %v1772, %v1898
      %v1905 = vadd.f32 %v1773, %v1899
      %v1906 = vadd.f32 %v1774, %v1900
      %v1907 = vadd.f32 %v1775, %v1901
      %v1908 = vadd.f32 %v1776, %v1902
      %v1909 = vadd.f32 %v1777, %v1903
      %1911 = vset.pattern.permute.xlu0 2
      %1912 = vperm.xlu0 %1911, %v1820
      %v1913 = vpop.permute.xlu0 %1912
      %v1916 = vunpack.c.l.s4 839922192
      %v1917 = vunpack.c.0.s8 %v1916
      %v1918 = vlaneseq
      %v1919 = vshrl.u32 %v1918, 7
      %v1920 = vsub.s32 %v1917, %v1919
      %v1921 = vrot.slane %v1913, %v1920
      %1923 = vset.pattern.permute.xlu0 2
      %1924 = vperm.xlu0 %1923, %v1821
      %v1925 = vpop.permute.xlu0 %1924
      %v1928 = vunpack.c.l.s4 839922192
      %v1929 = vunpack.c.0.s8 %v1928
      %v1930 = vlaneseq
      %v1931 = vshrl.u32 %v1930, 7
      %v1932 = vsub.s32 %v1929, %v1931
      %v1933 = vrot.slane %v1925, %v1932
      %1935 = vset.pattern.permute.xlu0 2
      %1936 = vperm.xlu0 %1935, %v1822
      %v1937 = vpop.permute.xlu0 %1936
      %v1940 = vunpack.c.l.s4 839922192
      %v1941 = vunpack.c.0.s8 %v1940
      %v1942 = vlaneseq
      %v1943 = vshrl.u32 %v1942, 7
      %v1944 = vsub.s32 %v1941, %v1943
      %v1945 = vrot.slane %v1937, %v1944
      %1947 = vset.pattern.permute.xlu0 2
      %1948 = vperm.xlu0 %1947, %v1823
      %v1949 = vpop.permute.xlu0 %1948
      %v1952 = vunpack.c.l.s4 839922192
      %v1953 = vunpack.c.0.s8 %v1952
      %v1954 = vlaneseq
      %v1955 = vshrl.u32 %v1954, 7
      %v1956 = vsub.s32 %v1953, %v1955
      %v1957 = vrot.slane %v1949, %v1956
      %1959 = vset.pattern.permute.xlu0 2
      %1960 = vperm.xlu0 %1959, %v1824
      %v1961 = vpop.permute.xlu0 %1960
      %v1964 = vunpack.c.l.s4 839922192
      %v1965 = vunpack.c.0.s8 %v1964
      %v1966 = vlaneseq
      %v1967 = vshrl.u32 %v1966, 7
      %v1968 = vsub.s32 %v1965, %v1967
      %v1969 = vrot.slane %v1961, %v1968
      %1971 = vset.pattern.permute.xlu0 2
      %1972 = vperm.xlu0 %1971, %v1825
      %v1973 = vpop.permute.xlu0 %1972
      %v1976 = vunpack.c.l.s4 839922192
      %v1977 = vunpack.c.0.s8 %v1976
      %v1978 = vlaneseq
      %v1979 = vshrl.u32 %v1978, 7
      %v1980 = vsub.s32 %v1977, %v1979
      %v1981 = vrot.slane %v1973, %v1980
      %v1982 = vsel %vm527, %v1921, 0.0
      %v1983 = vsel %vm527, %v1933, 0.0
      %v1984 = vsel %vm527, %v1945, 0.0
      %v1985 = vsel %vm527, %v1957, 0.0
      %v1986 = vsel %vm527, %v1969, 0.0
      %v1987 = vsel %vm527, %v1981, 0.0
      %v1988 = vadd.f32 %v1904, %v1982
      %v1989 = vadd.f32 %v1905, %v1983
      %v1990 = vadd.f32 %v1906, %v1984
      %v1991 = vadd.f32 %v1907, %v1985
      %v1992 = vadd.f32 %v1908, %v1986
      %v1993 = vadd.f32 %v1909, %v1987
      %v1994 = vmul.f32 %v1988, 2.0
      %v1995 = vmul.f32 %v1989, 2.0
      %v1996 = vmul.f32 %v1990, 2.0
      %v1997 = vmul.f32 %v1991, 2.0
      %v1998 = vmul.f32 %v1992, 2.0
      %v1999 = vmul.f32 %v1993, 2.0
      %v2006 = vrot.slane %v1994, 1
      %v2007 = vrot.slane %v1995, 1
      %v2008 = vrot.slane %v1996, 1
      %v2009 = vrot.slane %v1997, 1
      %v2010 = vrot.slane %v1998, 1
      %v2011 = vrot.slane %v1999, 1
      %v2018 = vadd.f32 %v1988, %v2006
      %v2019 = vadd.f32 %v1989, %v2007
      %v2020 = vadd.f32 %v1990, %v2008
      %v2021 = vadd.f32 %v1991, %v2009
      %v2022 = vadd.f32 %v1992, %v2010
      %v2023 = vadd.f32 %v1993, %v2011
      %v2024 = vrot.slane %v1994, 7
      %v2025 = vrot.slane %v1995, 7
      %v2026 = vrot.slane %v1996, 7
      %v2027 = vrot.slane %v1997, 7
      %v2028 = vrot.slane %v1998, 7
      %v2029 = vrot.slane %v1999, 7
      %v2036 = vadd.f32 %v1988, %v2024
      %v2037 = vadd.f32 %v1989, %v2025
      %v2038 = vadd.f32 %v1990, %v2026
      %v2039 = vadd.f32 %v1991, %v2027
      %v2040 = vadd.f32 %v1992, %v2028
      %v2041 = vadd.f32 %v1993, %v2029
      %v2048 = vrot.slane %v1988, 1
      %v2049 = vrot.slane %v1989, 1
      %v2050 = vrot.slane %v1990, 1
      %v2051 = vrot.slane %v1991, 1
      %v2052 = vrot.slane %v1992, 1
      %v2053 = vrot.slane %v1993, 1
      %v2060 = vadd.f32 %v1988, %v2048
      %v2061 = vadd.f32 %v1989, %v2049
      %v2062 = vadd.f32 %v1990, %v2050
      %v2063 = vadd.f32 %v1991, %v2051
      %v2064 = vadd.f32 %v1992, %v2052
      %v2065 = vadd.f32 %v1993, %v2053
      %v2066 = vrot.slane %v1988, 2
      %v2067 = vrot.slane %v1989, 2
      %v2068 = vrot.slane %v1990, 2
      %v2069 = vrot.slane %v1991, 2
      %v2070 = vrot.slane %v1992, 2
      %v2071 = vrot.slane %v1993, 2
      %v2078 = vadd.f32 %v2060, %v2066
      %v2079 = vadd.f32 %v2061, %v2067
      %v2080 = vadd.f32 %v2062, %v2068
      %v2081 = vadd.f32 %v2063, %v2069
      %v2082 = vadd.f32 %v2064, %v2070
      %v2083 = vadd.f32 %v2065, %v2071
      %v2090 = vrot.slane %v2078, 7
      %v2091 = vrot.slane %v2079, 7
      %v2092 = vrot.slane %v2080, 7
      %v2093 = vrot.slane %v2081, 7
      %v2094 = vrot.slane %v2082, 7
      %v2095 = vrot.slane %v2083, 7
      %v2102 = vsel %vm720, %v2018, %v2090
      %v2103 = vsel %vm720, %v2019, %v2091
      %v2104 = vsel %vm720, %v2020, %v2092
      %v2105 = vsel %vm720, %v2021, %v2093
      %v2106 = vsel %vm720, %v2022, %v2094
      %v2107 = vsel %vm720, %v2023, %v2095
      %v2108 = vsel %vm727, %v2102, %v2036
      %v2109 = vsel %vm727, %v2103, %v2037
      %v2110 = vsel %vm727, %v2104, %v2038
      %v2111 = vsel %vm727, %v2105, %v2039
      %v2112 = vsel %vm727, %v2106, %v2040
      %v2113 = vsel %vm727, %v2107, %v2041
      %v2114 = vmul.f32 %v2108, 0.11111111
      %v2115 = vmul.f32 %v2109, 0.11111111
      %v2116 = vmul.f32 %v2110, 0.11111111
      %v2117 = vmul.f32 %v2111, 0.11111111
      %v2118 = vmul.f32 %v2112, 0.11111111
      %v2119 = vmul.f32 %v2113, 0.11111111
      %v2120 = vmul.f32 %v734, %v1178
      %v2121 = vmul.f32 %v735, %v1179
      %v2122 = vmul.f32 %v736, %v1180
      %v2123 = vmul.f32 %v737, %v1181
      %v2124 = vmul.f32 %v738, %v1182
      %v2125 = vmul.f32 %v739, %v1183
      %v2126 = vsub.f32 %v2114, %v2120
      %v2127 = vsub.f32 %v2115, %v2121
      %v2128 = vsub.f32 %v2116, %v2122
      %v2129 = vsub.f32 %v2117, %v2123
      %v2130 = vsub.f32 %v2118, %v2124
      %v2131 = vsub.f32 %v2119, %v2125
      %v2132 = vmul.f32 %v734, 2.0
      %v2133 = vmul.f32 %v735, 2.0
      %v2134 = vmul.f32 %v736, 2.0
      %v2135 = vmul.f32 %v737, 2.0
      %v2136 = vmul.f32 %v738, 2.0
      %v2137 = vmul.f32 %v739, 2.0
      %v2138 = vmul.f32 %v2132, %v1178
      %v2139 = vmul.f32 %v2133, %v1179
      %v2140 = vmul.f32 %v2134, %v1180
      %v2141 = vmul.f32 %v2135, %v1181
      %v2142 = vmul.f32 %v2136, %v1182
      %v2143 = vmul.f32 %v2137, %v1183
      %v2144 = vadd.f32 %v2138, 0.0001
      %v2145 = vadd.f32 %v2139, 0.0001
      %v2146 = vadd.f32 %v2140, 0.0001
      %v2147 = vadd.f32 %v2141, 0.0001
      %v2148 = vadd.f32 %v2142, 0.0001
      %v2149 = vadd.f32 %v2143, 0.0001
      %v2150 = vmul.f32 %v2126, 2.0
      %v2151 = vmul.f32 %v2127, 2.0
      %v2152 = vmul.f32 %v2128, 2.0
      %v2153 = vmul.f32 %v2129, 2.0
      %v2154 = vmul.f32 %v2130, 2.0
      %v2155 = vmul.f32 %v2131, 2.0
      %v2156 = vadd.f32 %v2150, 0.0009
      %v2157 = vadd.f32 %v2151, 0.0009
      %v2158 = vadd.f32 %v2152, 0.0009
      %v2159 = vadd.f32 %v2153, 0.0009
      %v2160 = vadd.f32 %v2154, 0.0009
      %v2161 = vadd.f32 %v2155, 0.0009
      %v2162 = vmul.f32 %v2144, %v2156
      %v2163 = vmul.f32 %v2145, %v2157
      %v2164 = vmul.f32 %v2146, %v2158
      %v2165 = vmul.f32 %v2147, %v2159
      %v2166 = vmul.f32 %v2148, %v2160
      %v2167 = vmul.f32 %v2149, %v2161
      %v2168 = vadd.f32 %v1646, %v1658
      %v2169 = vadd.f32 %v1647, %v1659
      %v2170 = vadd.f32 %v1648, %v1660
      %v2171 = vadd.f32 %v1649, %v1661
      %v2172 = vadd.f32 %v1650, %v1662
      %v2173 = vadd.f32 %v1651, %v1663
      %v2174 = vadd.f32 %v2168, 0.0001
      %v2175 = vadd.f32 %v2169, 0.0001
      %v2176 = vadd.f32 %v2170, 0.0001
      %v2177 = vadd.f32 %v2171, 0.0001
      %v2178 = vadd.f32 %v2172, 0.0001
      %v2179 = vadd.f32 %v2173, 0.0001
      %v2180 = vadd.f32 %v1664, 0.0009
      %v2181 = vadd.f32 %v1665, 0.0009
      %v2182 = vadd.f32 %v1666, 0.0009
      %v2183 = vadd.f32 %v1667, 0.0009
      %v2184 = vadd.f32 %v1668, 0.0009
      %v2185 = vadd.f32 %v1669, 0.0009
      %v2186 = vmul.f32 %v2174, %v2180
      %v2187 = vmul.f32 %v2175, %v2181
      %v2188 = vmul.f32 %v2176, %v2182
      %v2189 = vmul.f32 %v2177, %v2183
      %v2190 = vmul.f32 %v2178, %v2184
      %v2191 = vmul.f32 %v2179, %v2185
      %v2192 = vrcp.pop %v2186
      %v2193 = vrcp.pop %v2187
      %v2194 = vrcp.pop %v2188
      %v2195 = vrcp.pop %v2189
      %v2196 = vrcp.pop %v2190
      %v2197 = vrcp.pop %v2191
      %v2198 = vmul.f32 %v2162, %v2192
      %v2199 = vmul.f32 %v2163, %v2193
      %v2200 = vmul.f32 %v2164, %v2194
      %v2201 = vmul.f32 %v2165, %v2195
      %v2202 = vmul.f32 %v2166, %v2196
      %v2203 = vmul.f32 %v2167, %v2197
      %v2204 = vsub.f32 1.0, %v2198
      %v2205 = vsub.f32 1.0, %v2199
      %v2206 = vsub.f32 1.0, %v2200
      %v2207 = vsub.f32 1.0, %v2201
      %v2208 = vsub.f32 1.0, %v2202
      %v2209 = vsub.f32 1.0, %v2203
      %v2210 = vmul.f32 %v2204, 0.5
      %v2211 = vmul.f32 %v2205, 0.5
      %v2212 = vmul.f32 %v2206, 0.5
      %v2213 = vmul.f32 %v2207, 0.5
      %v2214 = vmul.f32 %v2208, 0.5
      %v2215 = vmul.f32 %v2209, 0.5
      %v2216 = vmax.f32 %v2210, 0.0
      %v2217 = vmax.f32 %v2211, 0.0
      %v2218 = vmax.f32 %v2212, 0.0
      %v2219 = vmax.f32 %v2213, 0.0
      %v2220 = vmax.f32 %v2214, 0.0
      %v2221 = vmax.f32 %v2215, 0.0
      %v2222 = vmin.f32 %v2216, 1.0
      %v2223 = vmin.f32 %v2217, 1.0
      %v2224 = vmin.f32 %v2218, 1.0
      %v2225 = vmin.f32 %v2219, 1.0
      %v2226 = vmin.f32 %v2220, 1.0
      %v2227 = vmin.f32 %v2221, 1.0
      %vm2228 = vcmask 27648
      %v2229 = vsel %vm2228, %v2222, 0.0
      %v2230 = vsel %vm2228, %v2223, 0.0
      %v2231 = vadd.f32 %v2229, %v2230
      %v2232 = vsel %vm2228, %v2224, 0.0
      %v2233 = vadd.f32 %v2231, %v2232
      %v2234 = vsel %vm2228, %v2225, 0.0
      %v2235 = vadd.f32 %v2233, %v2234
      %v2236 = vsel %vm2228, %v2226, 0.0
      %v2237 = vadd.f32 %v2235, %v2236
      %v2238 = vsel %vm2228, %v2227, 0.0
      %v2239 = vadd.f32 %v2237, %v2238
      %2240 = vadd.xlane.f32.xlu0 %v2239
      %v2241 = vpop.xlane.xlu0 %2240
      %v2242 = vrot.slane %v2241, 4
      %v2243 = vadd.f32 %v2241, %v2242
      %v2244 = vrot.slane %v2243, 2
      %v2245 = vadd.f32 %v2243, %v2244
      %v2246 = vrot.slane %v2245, 1
      %v2247 = vadd.f32 %v2245, %v2246
      %s2248 = vtos %v2247
      %v2249 = vrcp.pop 96.0
      %s2250 = vtos %v2249
      %s2251 = smul.f32 %s2248, %s2250
      %v2252 = vsub.f32 %v262, %v274
      %v2253 = vsub.f32 %v263, %v275
      %v2254 = vsub.f32 %v264, %v276
      %v2255 = vsub.f32 %v265, %v277
      %v2256 = vsub.f32 %v266, %v278
      %v2257 = vsub.f32 %v267, %v279
      %v2258 = vand.u32 2147483647, %v2252
      %v2259 = vand.u32 2147483647, %v2253
      %v2260 = vand.u32 2147483647, %v2254
      %v2261 = vand.u32 2147483647, %v2255
      %v2262 = vand.u32 2147483647, %v2256
      %v2263 = vand.u32 2147483647, %v2257
      %v2264 = vsel %vm2228, %v2258, 0.0
      %v2265 = vsel %vm2228, %v2259, 0.0
      %v2266 = vadd.f32 %v2264, %v2265
      %v2267 = vsel %vm2228, %v2260, 0.0
      %v2268 = vadd.f32 %v2266, %v2267
      %v2269 = vsel %vm2228, %v2261, 0.0
      %v2270 = vadd.f32 %v2268, %v2269
      %v2271 = vsel %vm2228, %v2262, 0.0
      %v2272 = vadd.f32 %v2270, %v2271
      %v2273 = vsel %vm2228, %v2263, 0.0
      %v2274 = vadd.f32 %v2272, %v2273
      %2275 = vadd.xlane.f32.xlu0 %v2274
      %v2276 = vpop.xlane.xlu0 %2275
      %v2277 = vrot.slane %v2276, 4
      %v2278 = vadd.f32 %v2276, %v2277
      %v2279 = vrot.slane %v2278, 2
      %v2280 = vadd.f32 %v2278, %v2279
      %v2281 = vrot.slane %v2280, 1
      %v2282 = vadd.f32 %v2280, %v2281
      %s2283 = vtos %v2282
      %v2284 = vrcp.pop 96.0
      %s2285 = vtos %v2284
      %s2286 = smul.f32 %s2283, %s2285
      %s2287 = sadd.f32 %s2286, 1e-12
      %v2288 = vstv %s2287
      %v2289 = vrcp.pop %v2288
      %s2290 = vtos %v2289
      %v2291 = vstv %s2290
      %v2292 = vmul.f32 %v2258, %v2291
      %v2293 = vmul.f32 %v2259, %v2291
      %v2294 = vmul.f32 %v2260, %v2291
      %v2295 = vmul.f32 %v2261, %v2291
      %v2296 = vmul.f32 %v2262, %v2291
      %v2297 = vmul.f32 %v2263, %v2291
      %v2298 = vsub.f32 1.0, %v2292
      %v2299 = vsub.f32 1.0, %v2293
      %v2300 = vsub.f32 1.0, %v2294
      %v2301 = vsub.f32 1.0, %v2295
      %v2302 = vsub.f32 1.0, %v2296
      %v2303 = vsub.f32 1.0, %v2297
      %v2304 = vmul.f32 %v2298, 2.0
      %v2305 = vmul.f32 %v2299, 2.0
      %v2306 = vmul.f32 %v2300, 2.0
      %v2307 = vmul.f32 %v2301, 2.0
      %v2308 = vmul.f32 %v2302, 2.0
      %v2309 = vmul.f32 %v2303, 2.0
      %v2310 = vmul.f32 %v2304, 1.442695
      %v2311 = vpow.pop %v2310
      %v2312 = vmul.f32 %v2305, 1.442695
      %v2313 = vpow.pop %v2312
      %v2314 = vmul.f32 %v2306, 1.442695
      %v2315 = vpow.pop %v2314
      %v2316 = vmul.f32 %v2307, 1.442695
      %v2317 = vpow.pop %v2316
      %v2318 = vmul.f32 %v2308, 1.442695
      %v2319 = vpow.pop %v2318
      %v2320 = vmul.f32 %v2309, 1.442695
      %v2321 = vpow.pop %v2320
      %v2322 = vsub.f32 %v282, %v280
      %v2323 = vsub.f32 %v283, %v281
      %v2324 = vand.u32 2147483647, %v2322
      %v2325 = vand.u32 2147483647, %v2323
      %v2326 = vmul.f32 %v2311, %v2324
      %v2327 = vmul.f32 %v2313, %v2324
      %v2328 = vmul.f32 %v2315, %v2324
      %v2329 = vmul.f32 %v2317, %v2325
      %v2330 = vmul.f32 %v2319, %v2325
      %v2331 = vmul.f32 %v2321, %v2325
      %v2332 = vsel %vm2228, %v2326, 0.0
      %v2333 = vsel %vm2228, %v2327, 0.0
      %v2334 = vadd.f32 %v2332, %v2333
      %v2335 = vsel %vm2228, %v2328, 0.0
      %v2336 = vadd.f32 %v2334, %v2335
      %v2337 = vsel %vm2228, %v2329, 0.0
      %v2338 = vadd.f32 %v2336, %v2337
      %v2339 = vsel %vm2228, %v2330, 0.0
      %v2340 = vadd.f32 %v2338, %v2339
      %v2341 = vsel %vm2228, %v2331, 0.0
      %v2342 = vadd.f32 %v2340, %v2341
      %2343 = vadd.xlane.f32.xlu0 %v2342
      %v2344 = vpop.xlane.xlu0 %2343
      %v2345 = vrot.slane %v2344, 4
      %v2346 = vadd.f32 %v2344, %v2345
      %v2347 = vrot.slane %v2346, 2
      %v2348 = vadd.f32 %v2346, %v2347
      %v2349 = vrot.slane %v2348, 1
      %v2350 = vadd.f32 %v2348, %v2349
      %s2351 = vtos %v2350
      %s2352 = smul.f32 %s2351, 0.010416667
      %2355 = vrot.lane.b32.xlu0 %v280, 127
      %v2356 = vpop.permute.xlu0 %2355
      %2357 = vrot.lane.b32.xlu0 %v281, 127
      %v2358 = vpop.permute.xlu0 %2357
      %2361 = vrot.lane.b32.xlu0 %v280, 3
      %v2362 = vpop.permute.xlu0 %2361
      %2363 = vrot.lane.b32.xlu0 %v281, 3
      %v2364 = vpop.permute.xlu0 %2363
      %v2367 = vsel %vm379, %v2356, %v2362
      %v2368 = vsel %vm379, %v2358, %v2364
      %v2369 = vsub.f32 %v274, %v830
      %v2370 = vsub.f32 %v275, %v831
      %v2371 = vsub.f32 %v276, %v832
      %v2372 = vsub.f32 %v277, %v833
      %v2373 = vsub.f32 %v278, %v834
      %v2374 = vsub.f32 %v279, %v835
      %v2375 = vand.u32 2147483647, %v2369
      %v2376 = vand.u32 2147483647, %v2370
      %v2377 = vand.u32 2147483647, %v2371
      %v2378 = vand.u32 2147483647, %v2372
      %v2379 = vand.u32 2147483647, %v2373
      %v2380 = vand.u32 2147483647, %v2374
      %v2381 = vadd.f32 %v2375, %v2376
      %v2382 = vadd.f32 %v2378, %v2379
      %v2383 = vadd.f32 %v2381, %v2377
      %v2384 = vadd.f32 %v2382, %v2380
      %v2385 = vmul.f32 %v2383, 0.33333334
      %v2386 = vmul.f32 %v2384, 0.33333334
      %v2387 = vsub.f32 0.0, %v2385
      %v2388 = vsub.f32 0.0, %v2386
      %v2389 = vmul.f32 %v2387, 1.442695
      %v2390 = vpow.pop %v2389
      %v2391 = vmul.f32 %v2388, 1.442695
      %v2392 = vpow.pop %v2391
      %v2393 = vsub.f32 %v280, %v2367
      %v2394 = vsub.f32 %v281, %v2368
      %v2395 = vand.u32 2147483647, %v2393
      %v2396 = vand.u32 2147483647, %v2394
      %v2397 = vmul.f32 %v2395, %v2390
      %v2398 = vmul.f32 %v2396, %v2392
      %v2399 = vsel %vm2228, %v2397, 0.0
      %v2400 = vsel %vm2228, %v2398, 0.0
      %v2401 = vadd.f32 %v2399, %v2400
      %2402 = vadd.xlane.f32.xlu0 %v2401
      %v2403 = vpop.xlane.xlu0 %2402
      %v2404 = vrot.slane %v2403, 4
      %v2405 = vadd.f32 %v2403, %v2404
      %v2406 = vrot.slane %v2405, 2
      %v2407 = vadd.f32 %v2405, %v2406
      %v2408 = vrot.slane %v2407, 1
      %v2409 = vadd.f32 %v2407, %v2408
      %s2410 = vtos %v2409
      %v2411 = vsub.f32 %v280, %v2362
      %v2412 = vsub.f32 %v281, %v2364
      %v2413 = vand.u32 2147483647, %v2411
      %v2414 = vand.u32 2147483647, %v2412
      %v2415 = vsub.f32 %v274, %v813
      %v2416 = vsub.f32 %v275, %v815
      %v2417 = vsub.f32 %v276, %v817
      %v2418 = vsub.f32 %v277, %v819
      %v2419 = vsub.f32 %v278, %v821
      %v2420 = vsub.f32 %v279, %v823
      %v2421 = vand.u32 2147483647, %v2415
      %v2422 = vand.u32 2147483647, %v2416
      %v2423 = vand.u32 2147483647, %v2417
      %v2424 = vand.u32 2147483647, %v2418
      %v2425 = vand.u32 2147483647, %v2419
      %v2426 = vand.u32 2147483647, %v2420
      %v2427 = vadd.f32 %v2421, %v2422
      %v2428 = vadd.f32 %v2424, %v2425
      %v2429 = vadd.f32 %v2427, %v2423
      %v2430 = vadd.f32 %v2428, %v2426
      %v2431 = vmul.f32 %v2429, 0.33333334
      %v2432 = vmul.f32 %v2430, 0.33333334
      %v2433 = vsub.f32 0.0, %v2431
      %v2434 = vsub.f32 0.0, %v2432
      %v2435 = vmul.f32 %v2433, 1.442695
      %v2436 = vpow.pop %v2435
      %v2437 = vmul.f32 %v2434, 1.442695
      %v2438 = vpow.pop %v2437
      %v2439 = vmul.f32 %v2413, %v2436
      %v2440 = vmul.f32 %v2414, %v2438
      %2443 = vrot.lane.b32.xlu0 %v2439, 125
      %v2444 = vpop.permute.xlu0 %2443
      %2445 = vrot.lane.b32.xlu0 %v2440, 125
      %v2446 = vpop.permute.xlu0 %2445
      %vm2449 = vcmask 3072
      %v2450 = vsel %vm2449, %v2444, 0.0
      %v2451 = vsel %vm2449, %v2446, 0.0
      %v2452 = vadd.f32 %v2450, %v2451
      %2453 = vadd.xlane.f32.xlu0 %v2452
      %v2454 = vpop.xlane.xlu0 %2453
      %v2455 = vrot.slane %v2454, 4
      %v2456 = vadd.f32 %v2454, %v2455
      %v2457 = vrot.slane %v2456, 2
      %v2458 = vadd.f32 %v2456, %v2457
      %v2459 = vrot.slane %v2458, 1
      %v2460 = vadd.f32 %v2458, %v2459
      %s2461 = vtos %v2460
      %s2462 = ssub.f32 %s2410, %s2461
      %s2463 = smul.f32 %s2462, 0.041666668
      %v2464 = vlaneseq
      %v2465 = vshrl.u32 %v2464, 7
      %vm2466 = vcmp.eq.s32.totalorder %v2465, 0
      %vm2467 = vmand %vm2466, %vm286
      %v2468 = vstv %s2251
      %v2469 = vsel %vm2467, %v2468, 0.0
      %vm2470 = vcmp.eq.s32.totalorder %v285, 1
      %vm2471 = vmand %vm2466, %vm2470
      %v2472 = vstv %s2286
      %v2473 = vsel %vm2471, %v2472, %v2469
      %vm2474 = vcmp.eq.s32.totalorder %v285, 2
      %vm2475 = vmand %vm2466, %vm2474
      %v2476 = vstv %s2352
      %v2477 = vsel %vm2475, %v2476, %v2473
      %vm2478 = vmand %vm2466, %vm287
      %v2479 = vstv %s2463
      %v2480 = vsel %vm2478, %v2479, %v2477
      %2481 = vst [vmem:[%s255] sm:$0xff] %v2480
      %p2482 = scmp.lt.s32.totalorder %s15, 1
      %s2483 = scalar_select %p2482, %s15, 1
      %s2484 = smul.addr %s2483, 8
      %s2485 = scalar_lea.vmem %s4, %s2484
      // Predicated region
      $region37: #{my_loss.6} parent=35 // pred_check
        %p2486 = pneg %p137
      $region38: #{my_loss.6} parent=35 // pred_check_branch
        %2488 = sbr.rel (%p2486) target = $region40
      $region39: #{my_loss.6} parent=35 // pred_region
        _
      $region40: #{my_loss.6} parent=35 // pred_fallthru
        _
    $region36: #{my_loss.6} parent=5 // pred_fallthru
      _
    %p2489 = scmp.le.s32.totalorder 2, %s10
    // Predicated region
    $region41: #{my_loss.6} parent=5 // pred_check
      %p2490 = pneg %p2489
    $region42: #{my_loss.6} parent=5 // pred_check_branch
      %2492 = sbr.rel (%p2490) target = $region44
    $region43: #{my_loss.6} parent=5 // pred_region
      %s2493 = ssub.s32 %s10, 2
      // Predicated region
      $region45: #{my_loss.6} parent=43 // pred_check
        %p2494 = pneg %p143
      $region46: #{my_loss.6} parent=43 // pred_check_branch
        %2496 = sbr.rel (%p2494) target = $region48
      $region47: #{my_loss.6} parent=43 // pred_region
        %p2497 = scmp.lt.s32.totalorder %s16, 1
        %s2498 = scalar_select %p2497, %s16, 1
        %s2499 = smul.addr %s2498, 8
        %s2500 = scalar_lea.vmem %s4, %s2499
      $region48: #{my_loss.6} parent=43 // pred_fallthru
        _
    $region44: #{my_loss.6} parent=5 // pred_fallthru
      _
  $region6: #{my_loss.6} parent=0 // loop_footer
    %s14 = sadd.s32 1, %s10
  $region7: #{my_loss.6} parent=0 // loop_footer_branch
    %9 = sbr.rel target = $region3
  $region8: #{my_loss.6} parent=0 // loop_exit
    _

// kernel: my_loss.7
$region0: #{my_loss.7}
  #allocation0 [shape = 'u32[]', space=smem, size = 0x4, offset = 0x4, fixed_abs, tag = 'smem constant byte address 0x4 - core index']
  #allocation1 [shape = 'u32[144,128]{1,0:T(1,128)}', space=vmem, size = 0x12000, scoped, tag = 'internal scratch']
  %s0 = inlined_call_operand.vmem [shape: bf16[2,2,3,2,2], index: 0, kind: input, shape index: {}]
  %s1 = inlined_call_operand.vmem [shape: bf16[2,2,3,2,2], index: 1, kind: input, shape index: {}]
  %s2 = inlined_call_operand.vmem [shape: f32[2,2,1,2,2], index: 2, kind: input, shape index: {}]
  %s3 = inlined_call_operand.vmem [shape: f32[2,2,1,2,2], index: 3, kind: input, shape index: {}]
  %s4 = inlined_call_operand.vmem [shape: f32[2,8,128], index: 4, kind: output, shape index: {}]
  %s5 = sld [smem:[#allocation0]]
  $region49: #{my_loss.7} parent=0
    _
  %s7 = ssub.s32 1, %s5
  %s8 = scalar_select 0, %s7, %s5
  loop: start=0, step=1, limit=4
  $region2: #{my_loss.7} parent=0 // loop_pre_header
    _
  $region3: #{my_loss.7} parent=0 // loop_header
    %s10 = sphi 0, %s14
    %p11 = scmp.ge.s32.totalorder %s10, 4
    %s20 = sphi 0, %s22
    %s23 = sphi 0, %s20
    %s24 = sphi 0, %s23
    %s40 = sphi 0, %s24
    %s46 = sphi 0, %s48
    %s49 = sphi 0, %s46
    %s50 = sphi 0, %s49
    %s66 = sphi 0, %s50
    %s72 = sphi 0, %s74
    %s75 = sphi 0, %s72
    %s76 = sphi 0, %s75
    %s92 = sphi 0, %s76
    %s98 = sphi 0, %s100
    %s101 = sphi 0, %s98
    %s102 = sphi 0, %s101
    %s118 = sphi 0, %s102
    %s124 = sphi 0, %s126
    %s127 = sphi 0, %s124
    %s128 = sphi 0, %s127
    %s144 = sphi 0, %s128
  $region4: #{my_loss.7} parent=0 // loop_header_branch
    %13 = sbr.rel (%p11) target = $region8
  $region5: #{my_loss.7} parent=0 // loop_body
    %s15 = ssub.s32 %s10, 1
    %s16 = ssub.s32 %s10, 2
    %s17 = sadd.s32 %s10, 1
    %s18 = ssub.s32 %s10, %s17
    %p19 = scmp.eq.s32.totalorder %s18, 0
    %s21 = sadd.s32 %s20, 1
    %s22 = scalar_select %p19, %s20, %s21
    %p25 = pneg %p19
    %p26 = scmp.eq.s32.totalorder %s10, 1
    %p27 = por %p25, %p26
    %p28 = scmp.ne.s32.totalorder %s20, %s23
    %p29 = scmp.eq.s32.totalorder %s10, 0
    %p30 = por %p28, %p29
    %p31 = scmp.ne.s32.totalorder %s20, %s23
    %p32 = scmp.eq.s32.totalorder %s15, 1
    %p33 = por %p31, %p32
    %p34 = scmp.ne.s32.totalorder %s23, %s24
    %p35 = scmp.eq.s32.totalorder %s15, 0
    %p36 = por %p34, %p35
    %p37 = scmp.ne.s32.totalorder %s23, %s24
    %p38 = scmp.eq.s32.totalorder %s16, 1
    %p39 = por %p37, %p38
    %p41 = scmp.ne.s32.totalorder %s24, %s40
    %p42 = scmp.eq.s32.totalorder %s16, 0
    %p43 = por %p41, %p42
    %s44 = ssub.s32 %s10, %s17
    %p45 = scmp.eq.s32.totalorder %s44, 0
    %s47 = sadd.s32 %s46, 1
    %s48 = scalar_select %p45, %s46, %s47
    %p51 = pneg %p45
    %p52 = scmp.eq.s32.totalorder %s10, 1
    %p53 = por %p51, %p52
    %p54 = scmp.ne.s32.totalorder %s46, %s49
    %p55 = scmp.eq.s32.totalorder %s10, 0
    %p56 = por %p54, %p55
    %p57 = scmp.ne.s32.totalorder %s46, %s49
    %p58 = scmp.eq.s32.totalorder %s15, 1
    %p59 = por %p57, %p58
    %p60 = scmp.ne.s32.totalorder %s49, %s50
    %p61 = scmp.eq.s32.totalorder %s15, 0
    %p62 = por %p60, %p61
    %p63 = scmp.ne.s32.totalorder %s49, %s50
    %p64 = scmp.eq.s32.totalorder %s16, 1
    %p65 = por %p63, %p64
    %p67 = scmp.ne.s32.totalorder %s50, %s66
    %p68 = scmp.eq.s32.totalorder %s16, 0
    %p69 = por %p67, %p68
    %s70 = ssub.s32 %s10, %s17
    %p71 = scmp.eq.s32.totalorder %s70, 0
    %s73 = sadd.s32 %s72, 1
    %s74 = scalar_select %p71, %s72, %s73
    %p77 = pneg %p71
    %p78 = scmp.eq.s32.totalorder %s10, 1
    %p79 = por %p77, %p78
    %p80 = scmp.ne.s32.totalorder %s72, %s75
    %p81 = scmp.eq.s32.totalorder %s10, 0
    %p82 = por %p80, %p81
    %p83 = scmp.ne.s32.totalorder %s72, %s75
    %p84 = scmp.eq.s32.totalorder %s15, 1
    %p85 = por %p83, %p84
    %p86 = scmp.ne.s32.totalorder %s75, %s76
    %p87 = scmp.eq.s32.totalorder %s15, 0
    %p88 = por %p86, %p87
    %p89 = scmp.ne.s32.totalorder %s75, %s76
    %p90 = scmp.eq.s32.totalorder %s16, 1
    %p91 = por %p89, %p90
    %p93 = scmp.ne.s32.totalorder %s76, %s92
    %p94 = scmp.eq.s32.totalorder %s16, 0
    %p95 = por %p93, %p94
    %s96 = ssub.s32 %s10, %s17
    %p97 = scmp.eq.s32.totalorder %s96, 0
    %s99 = sadd.s32 %s98, 1
    %s100 = scalar_select %p97, %s98, %s99
    %p103 = pneg %p97
    %p104 = scmp.eq.s32.totalorder %s10, 1
    %p105 = por %p103, %p104
    %p106 = scmp.ne.s32.totalorder %s98, %s101
    %p107 = scmp.eq.s32.totalorder %s10, 0
    %p108 = por %p106, %p107
    %p109 = scmp.ne.s32.totalorder %s98, %s101
    %p110 = scmp.eq.s32.totalorder %s15, 1
    %p111 = por %p109, %p110
    %p112 = scmp.ne.s32.totalorder %s101, %s102
    %p113 = scmp.eq.s32.totalorder %s15, 0
    %p114 = por %p112, %p113
    %p115 = scmp.ne.s32.totalorder %s101, %s102
    %p116 = scmp.eq.s32.totalorder %s16, 1
    %p117 = por %p115, %p116
    %p119 = scmp.ne.s32.totalorder %s102, %s118
    %p120 = scmp.eq.s32.totalorder %s16, 0
    %p121 = por %p119, %p120
    %s122 = ssub.s32 %s10, %s17
    %p123 = scmp.eq.s32.totalorder %s122, 0
    %s125 = sadd.s32 %s124, 1
    %s126 = scalar_select %p123, %s124, %s125
    %p129 = pneg %p123
    %p130 = scmp.eq.s32.totalorder %s10, 1
    %p131 = por %p129, %p130
    %p132 = scmp.ne.s32.totalorder %s124, %s127
    %p133 = scmp.eq.s32.totalorder %s10, 0
    %p134 = por %p132, %p133
    %p135 = scmp.ne.s32.totalorder %s124, %s127
    %p136 = scmp.eq.s32.totalorder %s15, 1
    %p137 = por %p135, %p136
    %p138 = scmp.ne.s32.totalorder %s127, %s128
    %p139 = scmp.eq.s32.totalorder %s15, 0
    %p140 = por %p138, %p139
    %p141 = scmp.ne.s32.totalorder %s127, %s128
    %p142 = scmp.eq.s32.totalorder %s16, 1
    %p143 = por %p141, %p142
    %p145 = scmp.ne.s32.totalorder %s128, %s144
    %p146 = scmp.eq.s32.totalorder %s16, 0
    %p147 = por %p145, %p146
    %p148 = scmp.le.s32.totalorder 1, %s10
    %p149 = scmp.lt.s32.totalorder %s10, 3
    %p150 = pnand %p148, %p149
    %p151 = pneg %p150
    // Predicated region
    $region9: #{my_loss.7} parent=5 // pred_check
      _
    $region10: #{my_loss.7} parent=5 // pred_check_branch
      %153 = sbr.rel (%p150) target = $region12
    $region11: #{my_loss.7} parent=5 // pred_region
      %s154 = ssub.s32 %s10, 1
    $region12: #{my_loss.7} parent=5 // pred_fallthru
      _
    %p155 = scmp.lt.s32.totalorder %s10, 2
    // Predicated region
    $region13: #{my_loss.7} parent=5 // pred_check
      %p156 = pneg %p155
    $region14: #{my_loss.7} parent=5 // pred_check_branch
      %158 = sbr.rel (%p156) target = $region16
    $region15: #{my_loss.7} parent=5 // pred_region
      // Predicated region
      $region17: #{my_loss.7} parent=15 // pred_check
        %p159 = pneg %p30
      $region18: #{my_loss.7} parent=15 // pred_check_branch
        %161 = sbr.rel (%p159) target = $region20
      $region19: #{my_loss.7} parent=15 // pred_region
        %p162 = scmp.lt.s32.totalorder %s10, 1
        %s163 = scalar_select %p162, %s10, 1
        %s164 = smul.addr %s163, 6
        %s165 = scalar_lea.vmem %s0, %s164
      $region20: #{my_loss.7} parent=15 // pred_fallthru
        _
      // Predicated region
      $region21: #{my_loss.7} parent=15 // pred_check
        %p166 = pneg %p56
      $region22: #{my_loss.7} parent=15 // pred_check_branch
        %168 = sbr.rel (%p166) target = $region24
      $region23: #{my_loss.7} parent=15 // pred_region
        %p169 = scmp.lt.s32.totalorder %s10, 1
        %s170 = scalar_select %p169, %s10, 1
        %s171 = smul.addr %s170, 6
        %s172 = scalar_lea.vmem %s1, %s171
      $region24: #{my_loss.7} parent=15 // pred_fallthru
        _
      // Predicated region
      $region25: #{my_loss.7} parent=15 // pred_check
        %p173 = pneg %p82
      $region26: #{my_loss.7} parent=15 // pred_check_branch
        %175 = sbr.rel (%p173) target = $region28
      $region27: #{my_loss.7} parent=15 // pred_region
        %p176 = scmp.lt.s32.totalorder %s10, 1
        %s177 = scalar_select %p176, %s10, 1
        %s178 = smul.addr %s177, 2
        %s179 = smul.addr %s178, 2
        %s180 = scalar_lea.vmem %s2, %s179
      $region28: #{my_loss.7} parent=15 // pred_fallthru
        _
      // Predicated region
      $region29: #{my_loss.7} parent=15 // pred_check
        %p181 = pneg %p108
      $region30: #{my_loss.7} parent=15 // pred_check_branch
        %183 = sbr.rel (%p181) target = $region32
      $region31: #{my_loss.7} parent=15 // pred_region
        %p184 = scmp.lt.s32.totalorder %s10, 1
        %s185 = scalar_select %p184, %s10, 1
        %s186 = smul.addr %s185, 2
        %s187 = smul.addr %s186, 2
        %s188 = scalar_lea.vmem %s3, %s187
      $region32: #{my_loss.7} parent=15 // pred_fallthru
        _
    $region16: #{my_loss.7} parent=5 // pred_fallthru
      _
    %p189 = scmp.le.s32.totalorder 1, %s10
    %p190 = scmp.lt.s32.totalorder %s10, 3
    %p191 = pnand %p189, %p190
    %p192 = pneg %p191
    // Predicated region
    $region33: #{my_loss.7} parent=5 // pred_check
      _
    $region34: #{my_loss.7} parent=5 // pred_check_branch
      %194 = sbr.rel (%p191) target = $region36
    $region35: #{my_loss.7} parent=5 // pred_region
      %s195 = ssub.s32 %s10, 1
      %p196 = scmp.lt.s32.totalorder %s15, 1
      %s197 = scalar_select %p196, %s15, 1
      %s198 = smul.addr %s197, 6
      %s199 = scalar_lea.vmem %s0, %s198
      %p200 = pneg %p36
      %p201 = pneg %p33
      %p202 = scmp.lt.s32.totalorder %s15, 1
      %s203 = scalar_select %p202, %s15, 1
      %s204 = smul.addr %s203, 6
      %s205 = scalar_lea.vmem %s1, %s204
      %p206 = pneg %p62
      %p207 = pneg %p59
      %p208 = scmp.lt.s32.totalorder %s15, 1
      %s209 = scalar_select %p208, %s15, 1
      %s210 = smul.addr %s209, 2
      %s211 = smul.addr %s210, 2
      %s212 = scalar_lea.vmem %s2, %s211
      %p213 = pneg %p88
      %p214 = pneg %p85
      %p215 = scmp.lt.s32.totalorder %s15, 1
      %s216 = scalar_select %p215, %s15, 1
      %s217 = smul.addr %s216, 2
      %s218 = smul.addr %s217, 2
      %s219 = scalar_lea.vmem %s3, %s218
      %p220 = pneg %p114
      %p221 = pneg %p111
      %p222 = pneg %p140
      %p223 = pneg %p137
      %p224 = scmp.lt.s32.totalorder %s15, 1
      %s225 = scalar_select %p224, %s15, 1
      %s226 = smul.addr %s225, 8
      %s227 = scalar_lea.vmem %s4, %s226
      %p228 = scmp.lt.s32.totalorder %s15, 1
      %s229 = scalar_select %p228, %s15, 1
      %s230 = smul.addr %s229, 6
      %s231 = scalar_lea.vmem %s0, %s230
      %p232 = scmp.lt.s32.totalorder %s15, 1
      %s233 = scalar_select %p232, %s15, 1
      %s234 = smul.addr %s233, 6
      %s235 = scalar_lea.vmem %s1, %s234
      %p236 = scmp.lt.s32.totalorder %s15, 1
      %s237 = scalar_select %p236, %s15, 1
      %s238 = smul.addr %s237, 2
      %s239 = smul.addr %s238, 2
      %s240 = scalar_lea.vmem %s2, %s239
      %p241 = scmp.lt.s32.totalorder %s15, 1
      %s242 = scalar_select %p241, %s15, 1
      %s243 = smul.addr %s242, 2
      %s244 = smul.addr %s243, 2
      %s245 = scalar_lea.vmem %s3, %s244
      %p246 = scmp.lt.s32.totalorder %s15, 1
      %s247 = scalar_select %p246, %s15, 1
      %s248 = smul.addr %s247, 8
      %s249 = scalar_lea.vmem %s4, %s248
      %v250 = vld [vmem:[%s231] sm:$0x1]
      %v251 = vld [vmem:[%s231 + $0x1] sm:$0x1]
      %v252 = vld [vmem:[%s231 + $0x2] sm:$0x1]
      %v253 = vld [vmem:[%s231 + $0x3] sm:$0x1]
      %v254 = vld [vmem:[%s231 + $0x4] sm:$0x1]
      %v255 = vld [vmem:[%s231 + $0x5] sm:$0x1]
      %v256 = vunpack.c.l.bf16 %v250
      %v257 = vunpack.c.l.bf16 %v251
      %v258 = vunpack.c.l.bf16 %v252
      %v259 = vunpack.c.l.bf16 %v253
      %v260 = vunpack.c.l.bf16 %v254
      %v261 = vunpack.c.l.bf16 %v255
      %v262 = vld [vmem:[%s235] sm:$0x1]
      %v263 = vld [vmem:[%s235 + $0x1] sm:$0x1]
      %v264 = vld [vmem:[%s235 + $0x2] sm:$0x1]
      %v265 = vld [vmem:[%s235 + $0x3] sm:$0x1]
      %v266 = vld [vmem:[%s235 + $0x4] sm:$0x1]
      %v267 = vld [vmem:[%s235 + $0x5] sm:$0x1]
      %v268 = vunpack.c.l.bf16 %v262
      %v269 = vunpack.c.l.bf16 %v263
      %v270 = vunpack.c.l.bf16 %v264
      %v271 = vunpack.c.l.bf16 %v265
      %v272 = vunpack.c.l.bf16 %v266
      %v273 = vunpack.c.l.bf16 %v267
      %v274 = vld [vmem:[%s240] sm:$0x3]
      %v275 = vld [vmem:[%s240 + $0x2] sm:$0x3]
      %v276 = vld [vmem:[%s245] sm:$0x3]
      %v277 = vld [vmem:[%s245 + $0x2] sm:$0x3]
      %v278 = vlaneseq
      %v279 = vand.u32 %v278, 127
      %vm280 = vcmp.eq.s32.totalorder %v279, 0
      %vm281 = vcmp.eq.s32.totalorder %v279, 1
      %v289 = vunpack.c.l.s4 1983009808
      %v290 = vunpack.c.0.s8 %v289
      %v291 = vlaneseq
      %v292 = vshrl.u32 %v291, 7
      %v293 = vsub.s32 %v290, %v292
      %v294 = vrot.slane %v256, %v293
      %v296 = vunpack.c.l.s4 1983009808
      %v297 = vunpack.c.0.s8 %v296
      %v298 = vlaneseq
      %v299 = vshrl.u32 %v298, 7
      %v300 = vsub.s32 %v297, %v299
      %v301 = vrot.slane %v257, %v300
      %v303 = vunpack.c.l.s4 1983009808
      %v304 = vunpack.c.0.s8 %v303
      %v305 = vlaneseq
      %v306 = vshrl.u32 %v305, 7
      %v307 = vsub.s32 %v304, %v306
      %v308 = vrot.slane %v258, %v307
      %v310 = vunpack.c.l.s4 1983009808
      %v311 = vunpack.c.0.s8 %v310
      %v312 = vlaneseq
      %v313 = vshrl.u32 %v312, 7
      %v314 = vsub.s32 %v311, %v313
      %v315 = vrot.slane %v259, %v314
      %v317 = vunpack.c.l.s4 1983009808
      %v318 = vunpack.c.0.s8 %v317
      %v319 = vlaneseq
      %v320 = vshrl.u32 %v319, 7
      %v321 = vsub.s32 %v318, %v320
      %v322 = vrot.slane %v260, %v321
      %v324 = vunpack.c.l.s4 1983009808
      %v325 = vunpack.c.0.s8 %v324
      %v326 = vlaneseq
      %v327 = vshrl.u32 %v326, 7
      %v328 = vsub.s32 %v325, %v327
      %v329 = vrot.slane %v261, %v328
      %330 = vrot.lane.b32.xlu0 %v294, 127
      %v331 = vpop.permute.xlu0 %330
      %332 = vrot.lane.b32.xlu0 %v301, 127
      %v333 = vpop.permute.xlu0 %332
      %334 = vrot.lane.b32.xlu0 %v308, 127
      %v335 = vpop.permute.xlu0 %334
      %336 = vrot.lane.b32.xlu0 %v315, 127
      %v337 = vpop.permute.xlu0 %336
      %338 = vrot.lane.b32.xlu0 %v322, 127
      %v339 = vpop.permute.xlu0 %338
      %340 = vrot.lane.b32.xlu0 %v329, 127
      %v341 = vpop.permute.xlu0 %340
      %348 = vrot.lane.b32.xlu0 %v294, 1
      %v349 = vpop.permute.xlu0 %348
      %350 = vrot.lane.b32.xlu0 %v301, 1
      %v351 = vpop.permute.xlu0 %350
      %352 = vrot.lane.b32.xlu0 %v308, 1
      %v353 = vpop.permute.xlu0 %352
      %354 = vrot.lane.b32.xlu0 %v315, 1
      %v355 = vpop.permute.xlu0 %354
      %356 = vrot.lane.b32.xlu0 %v322, 1
      %v357 = vpop.permute.xlu0 %356
      %358 = vrot.lane.b32.xlu0 %v329, 1
      %v359 = vpop.permute.xlu0 %358
      %vm366 = vcmask 7168
      %v367 = vsel %vm366, %v331, %v349
      %v368 = vsel %vm366, %v333, %v351
      %v369 = vsel %vm366, %v335, %v353
      %v370 = vsel %vm366, %v337, %v355
      %v371 = vsel %vm366, %v339, %v357
      %v372 = vsel %vm366, %v341, %v359
      %v373 = vadd.f32 %v367, %v256
      %v374 = vadd.f32 %v368, %v257
      %v375 = vadd.f32 %v369, %v258
      %v376 = vadd.f32 %v370, %v259
      %v377 = vadd.f32 %v371, %v260
      %v378 = vadd.f32 %v372, %v261
      %v379 = vadd.f32 %v373, %v367
      %v380 = vadd.f32 %v374, %v368
      %v381 = vadd.f32 %v375, %v369
      %v382 = vadd.f32 %v376, %v370
      %v383 = vadd.f32 %v377, %v371
      %v384 = vadd.f32 %v378, %v372
      %v385 = vsub.f32 %v256, %v256
      %v386 = vsub.f32 %v257, %v257
      %v387 = vsub.f32 %v258, %v258
      %v388 = vsub.f32 %v259, %v259
      %v389 = vsub.f32 %v260, %v260
      %v390 = vsub.f32 %v261, %v261
      %v391 = vsel %vm280, 1, 0
      %vm392 = vcmp.eq.s32.totalorder %v391, 1
      %394 = vset.pattern.permute.xlu0 1
      %395 = vperm.xlu0 %394, %v385
      %v396 = vpop.permute.xlu0 %395
      %v399 = vunpack.c.l.s4 269488144
      %v400 = vunpack.c.0.s8 %v399
      %v401 = vlaneseq
      %v402 = vshrl.u32 %v401, 7
      %v403 = vsub.s32 %v400, %v402
      %v404 = vrot.slane %v396, %v403
      %406 = vset.pattern.permute.xlu0 1
      %407 = vperm.xlu0 %406, %v386
      %v408 = vpop.permute.xlu0 %407
      %v411 = vunpack.c.l.s4 269488144
      %v412 = vunpack.c.0.s8 %v411
      %v413 = vlaneseq
      %v414 = vshrl.u32 %v413, 7
      %v415 = vsub.s32 %v412, %v414
      %v416 = vrot.slane %v408, %v415
      %418 = vset.pattern.permute.xlu0 1
      %419 = vperm.xlu0 %418, %v387
      %v420 = vpop.permute.xlu0 %419
      %v423 = vunpack.c.l.s4 269488144
      %v424 = vunpack.c.0.s8 %v423
      %v425 = vlaneseq
      %v426 = vshrl.u32 %v425, 7
      %v427 = vsub.s32 %v424, %v426
      %v428 = vrot.slane %v420, %v427
      %430 = vset.pattern.permute.xlu0 1
      %431 = vperm.xlu0 %430, %v388
      %v432 = vpop.permute.xlu0 %431
      %v435 = vunpack.c.l.s4 269488144
      %v436 = vunpack.c.0.s8 %v435
      %v437 = vlaneseq
      %v438 = vshrl.u32 %v437, 7
      %v439 = vsub.s32 %v436, %v438
      %v440 = vrot.slane %v432, %v439
      %442 = vset.pattern.permute.xlu0 1
      %443 = vperm.xlu0 %442, %v389
      %v444 = vpop.permute.xlu0 %443
      %v447 = vunpack.c.l.s4 269488144
      %v448 = vunpack.c.0.s8 %v447
      %v449 = vlaneseq
      %v450 = vshrl.u32 %v449, 7
      %v451 = vsub.s32 %v448, %v450
      %v452 = vrot.slane %v444, %v451
      %454 = vset.pattern.permute.xlu0 1
      %455 = vperm.xlu0 %454, %v390
      %v456 = vpop.permute.xlu0 %455
      %v459 = vunpack.c.l.s4 269488144
      %v460 = vunpack.c.0.s8 %v459
      %v461 = vlaneseq
      %v462 = vshrl.u32 %v461, 7
      %v463 = vsub.s32 %v460, %v462
      %v464 = vrot.slane %v456, %v463
      %v465 = vsel %vm392, %v404, 0.0
      %v466 = vsel %vm392, %v416, 0.0
      %v467 = vsel %vm392, %v428, 0.0
      %v468 = vsel %vm392, %v440, 0.0
      %v469 = vsel %vm392, %v452, 0.0
      %v470 = vsel %vm392, %v464, 0.0
      %v471 = vadd.f32 %v379, %v465
      %v472 = vadd.f32 %v380, %v466
      %v473 = vadd.f32 %v381, %v467
      %v474 = vadd.f32 %v382, %v468
      %v475 = vadd.f32 %v383, %v469
      %v476 = vadd.f32 %v384, %v470
      %v477 = vsel %vm281, 1, 0
      %vm478 = vcmp.eq.s32.totalorder %v477, 1
      %479 = vset.pattern.permute.xlu0 0
      %480 = vperm.xlu0 %479, %v385
      %v481 = vpop.permute.xlu0 %480
      %v484 = vunpack.c.l.s4 269488144
      %v485 = vunpack.c.0.s8 %v484
      %v486 = vlaneseq
      %v487 = vshrl.u32 %v486, 7
      %v488 = vsub.s32 %v485, %v487
      %v489 = vrot.slane %v481, %v488
      %490 = vset.pattern.permute.xlu0 0
      %491 = vperm.xlu0 %490, %v386
      %v492 = vpop.permute.xlu0 %491
      %v495 = vunpack.c.l.s4 269488144
      %v496 = vunpack.c.0.s8 %v495
      %v497 = vlaneseq
      %v498 = vshrl.u32 %v497, 7
      %v499 = vsub.s32 %v496, %v498
      %v500 = vrot.slane %v492, %v499
      %501 = vset.pattern.permute.xlu0 0
      %502 = vperm.xlu0 %501, %v387
      %v503 = vpop.permute.xlu0 %502
      %v506 = vunpack.c.l.s4 269488144
      %v507 = vunpack.c.0.s8 %v506
      %v508 = vlaneseq
      %v509 = vshrl.u32 %v508, 7
      %v510 = vsub.s32 %v507, %v509
      %v511 = vrot.slane %v503, %v510
      %512 = vset.pattern.permute.xlu0 0
      %513 = vperm.xlu0 %512, %v388
      %v514 = vpop.permute.xlu0 %513
      %v517 = vunpack.c.l.s4 269488144
      %v518 = vunpack.c.0.s8 %v517
      %v519 = vlaneseq
      %v520 = vshrl.u32 %v519, 7
      %v521 = vsub.s32 %v518, %v520
      %v522 = vrot.slane %v514, %v521
      %523 = vset.pattern.permute.xlu0 0
      %524 = vperm.xlu0 %523, %v389
      %v525 = vpop.permute.xlu0 %524
      %v528 = vunpack.c.l.s4 269488144
      %v529 = vunpack.c.0.s8 %v528
      %v530 = vlaneseq
      %v531 = vshrl.u32 %v530, 7
      %v532 = vsub.s32 %v529, %v531
      %v533 = vrot.slane %v525, %v532
      %534 = vset.pattern.permute.xlu0 0
      %535 = vperm.xlu0 %534, %v390
      %v536 = vpop.permute.xlu0 %535
      %v539 = vunpack.c.l.s4 269488144
      %v540 = vunpack.c.0.s8 %v539
      %v541 = vlaneseq
      %v542 = vshrl.u32 %v541, 7
      %v543 = vsub.s32 %v540, %v542
      %v544 = vrot.slane %v536, %v543
      %v545 = vsel %vm478, %v489, 0.0
      %v546 = vsel %vm478, %v500, 0.0
      %v547 = vsel %vm478, %v511, 0.0
      %v548 = vsel %vm478, %v522, 0.0
      %v549 = vsel %vm478, %v533, 0.0
      %v550 = vsel %vm478, %v544, 0.0
      %v551 = vadd.f32 %v471, %v545
      %v552 = vadd.f32 %v472, %v546
      %v553 = vadd.f32 %v473, %v547
      %v554 = vadd.f32 %v474, %v548
      %v555 = vadd.f32 %v475, %v549
      %v556 = vadd.f32 %v476, %v550
      %v557 = vmul.f32 %v551, 2.0
      %v558 = vmul.f32 %v552, 2.0
      %v559 = vmul.f32 %v553, 2.0
      %v560 = vmul.f32 %v554, 2.0
      %v561 = vmul.f32 %v555, 2.0
      %v562 = vmul.f32 %v556, 2.0
      %v569 = vrot.slane %v557, 1
      %v570 = vrot.slane %v558, 1
      %v571 = vrot.slane %v559, 1
      %v572 = vrot.slane %v560, 1
      %v573 = vrot.slane %v561, 1
      %v574 = vrot.slane %v562, 1
      %v581 = vadd.f32 %v551, %v569
      %v582 = vadd.f32 %v552, %v570
      %v583 = vadd.f32 %v553, %v571
      %v584 = vadd.f32 %v554, %v572
      %v585 = vadd.f32 %v555, %v573
      %v586 = vadd.f32 %v556, %v574
      %v587 = vrot.slane %v557, 7
      %v588 = vrot.slane %v558, 7
      %v589 = vrot.slane %v559, 7
      %v590 = vrot.slane %v560, 7
      %v591 = vrot.slane %v561, 7
      %v592 = vrot.slane %v562, 7
      %v599 = vadd.f32 %v551, %v587
      %v600 = vadd.f32 %v552, %v588
      %v601 = vadd.f32 %v553, %v589
      %v602 = vadd.f32 %v554, %v590
      %v603 = vadd.f32 %v555, %v591
      %v604 = vadd.f32 %v556, %v592
      %vm605 = vcmask 1040384
      %v606 = vsel %vm605, %v581, %v599
      %v607 = vsel %vm605, %v582, %v600
      %v608 = vsel %vm605, %v583, %v601
      %v609 = vsel %vm605, %v584, %v602
      %v610 = vsel %vm605, %v585, %v603
      %v611 = vsel %vm605, %v586, %v604
      %v612 = vmul.f32 %v606, 0.11111111
      %v613 = vmul.f32 %v607, 0.11111111
      %v614 = vmul.f32 %v608, 0.11111111
      %v615 = vmul.f32 %v609, 0.11111111
      %v616 = vmul.f32 %v610, 0.11111111
      %v617 = vmul.f32 %v611, 0.11111111
      %v625 = vunpack.c.l.s4 1983009808
      %v626 = vunpack.c.0.s8 %v625
      %v627 = vlaneseq
      %v628 = vshrl.u32 %v627, 7
      %v629 = vsub.s32 %v626, %v628
      %v630 = vrot.slane %v268, %v629
      %v632 = vunpack.c.l.s4 1983009808
      %v633 = vunpack.c.0.s8 %v632
      %v634 = vlaneseq
      %v635 = vshrl.u32 %v634, 7
      %v636 = vsub.s32 %v633, %v635
      %v637 = vrot.slane %v269, %v636
      %v639 = vunpack.c.l.s4 1983009808
      %v640 = vunpack.c.0.s8 %v639
      %v641 = vlaneseq
      %v642 = vshrl.u32 %v641, 7
      %v643 = vsub.s32 %v640, %v642
      %v644 = vrot.slane %v270, %v643
      %v646 = vunpack.c.l.s4 1983009808
      %v647 = vunpack.c.0.s8 %v646
      %v648 = vlaneseq
      %v649 = vshrl.u32 %v648, 7
      %v650 = vsub.s32 %v647, %v649
      %v651 = vrot.slane %v271, %v650
      %v653 = vunpack.c.l.s4 1983009808
      %v654 = vunpack.c.0.s8 %v653
      %v655 = vlaneseq
      %v656 = vshrl.u32 %v655, 7
      %v657 = vsub.s32 %v654, %v656
      %v658 = vrot.slane %v272, %v657
      %v660 = vunpack.c.l.s4 1983009808
      %v661 = vunpack.c.0.s8 %v660
      %v662 = vlaneseq
      %v663 = vshrl.u32 %v662, 7
      %v664 = vsub.s32 %v661, %v663
      %v665 = vrot.slane %v273, %v664
      %666 = vrot.lane.b32.xlu0 %v630, 127
      %v667 = vpop.permute.xlu0 %666
      %668 = vrot.lane.b32.xlu0 %v637, 127
      %v669 = vpop.permute.xlu0 %668
      %670 = vrot.lane.b32.xlu0 %v644, 127
      %v671 = vpop.permute.xlu0 %670
      %672 = vrot.lane.b32.xlu0 %v651, 127
      %v673 = vpop.permute.xlu0 %672
      %674 = vrot.lane.b32.xlu0 %v658, 127
      %v675 = vpop.permute.xlu0 %674
      %676 = vrot.lane.b32.xlu0 %v665, 127
      %v677 = vpop.permute.xlu0 %676
      %684 = vrot.lane.b32.xlu0 %v630, 1
      %v685 = vpop.permute.xlu0 %684
      %686 = vrot.lane.b32.xlu0 %v637, 1
      %v687 = vpop.permute.xlu0 %686
      %688 = vrot.lane.b32.xlu0 %v644, 1
      %v689 = vpop.permute.xlu0 %688
      %690 = vrot.lane.b32.xlu0 %v651, 1
      %v691 = vpop.permute.xlu0 %690
      %692 = vrot.lane.b32.xlu0 %v658, 1
      %v693 = vpop.permute.xlu0 %692
      %694 = vrot.lane.b32.xlu0 %v665, 1
      %v695 = vpop.permute.xlu0 %694
      %v702 = vsel %vm366, %v667, %v685
      %v703 = vsel %vm366, %v669, %v687
      %v704 = vsel %vm366, %v671, %v689
      %v705 = vsel %vm366, %v673, %v691
      %v706 = vsel %vm366, %v675, %v693
      %v707 = vsel %vm366, %v677, %v695
      %v708 = vadd.f32 %v702, %v268
      %v709 = vadd.f32 %v703, %v269
      %v710 = vadd.f32 %v704, %v270
      %v711 = vadd.f32 %v705, %v271
      %v712 = vadd.f32 %v706, %v272
      %v713 = vadd.f32 %v707, %v273
      %v714 = vadd.f32 %v708, %v702
      %v715 = vadd.f32 %v709, %v703
      %v716 = vadd.f32 %v710, %v704
      %v717 = vadd.f32 %v711, %v705
      %v718 = vadd.f32 %v712, %v706
      %v719 = vadd.f32 %v713, %v707
      %v720 = vsub.f32 %v268, %v268
      %v721 = vsub.f32 %v269, %v269
      %v722 = vsub.f32 %v270, %v270
      %v723 = vsub.f32 %v271, %v271
      %v724 = vsub.f32 %v272, %v272
      %v725 = vsub.f32 %v273, %v273
      %727 = vset.pattern.permute.xlu0 1
      %728 = vperm.xlu0 %727, %v720
      %v729 = vpop.permute.xlu0 %728
      %v732 = vunpack.c.l.s4 269488144
      %v733 = vunpack.c.0.s8 %v732
      %v734 = vlaneseq
      %v735 = vshrl.u32 %v734, 7
      %v736 = vsub.s32 %v733, %v735
      %v737 = vrot.slane %v729, %v736
      %739 = vset.pattern.permute.xlu0 1
      %740 = vperm.xlu0 %739, %v721
      %v741 = vpop.permute.xlu0 %740
      %v744 = vunpack.c.l.s4 269488144
      %v745 = vunpack.c.0.s8 %v744
      %v746 = vlaneseq
      %v747 = vshrl.u32 %v746, 7
      %v748 = vsub.s32 %v745, %v747
      %v749 = vrot.slane %v741, %v748
      %751 = vset.pattern.permute.xlu0 1
      %752 = vperm.xlu0 %751, %v722
      %v753 = vpop.permute.xlu0 %752
      %v756 = vunpack.c.l.s4 269488144
      %v757 = vunpack.c.0.s8 %v756
      %v758 = vlaneseq
      %v759 = vshrl.u32 %v758, 7
      %v760 = vsub.s32 %v757, %v759
      %v761 = vrot.slane %v753, %v760
      %763 = vset.pattern.permute.xlu0 1
      %764 = vperm.xlu0 %763, %v723
      %v765 = vpop.permute.xlu0 %764
      %v768 = vunpack.c.l.s4 269488144
      %v769 = vunpack.c.0.s8 %v768
      %v770 = vlaneseq
      %v771 = vshrl.u32 %v770, 7
      %v772 = vsub.s32 %v769, %v771
      %v773 = vrot.slane %v765, %v772
      %775 = vset.pattern.permute.xlu0 1
      %776 = vperm.xlu0 %775, %v724
      %v777 = vpop.permute.xlu0 %776
      %v780 = vunpack.c.l.s4 269488144
      %v781 = vunpack.c.0.s8 %v780
      %v782 = vlaneseq
      %v783 = vshrl.u32 %v782, 7
      %v784 = vsub.s32 %v781, %v783
      %v785 = vrot.slane %v777, %v784
      %787 = vset.pattern.permute.xlu0 1
      %788 = vperm.xlu0 %787, %v725
      %v789 = vpop.permute.xlu0 %788
      %v792 = vunpack.c.l.s4 269488144
      %v793 = vunpack.c.0.s8 %v792
      %v794 = vlaneseq
      %v795 = vshrl.u32 %v794, 7
      %v796 = vsub.s32 %v793, %v795
      %v797 = vrot.slane %v789, %v796
      %v798 = vsel %vm392, %v737, 0.0
      %v799 = vsel %vm392, %v749, 0.0
      %v800 = vsel %vm392, %v761, 0.0
      %v801 = vsel %vm392, %v773, 0.0
      %v802 = vsel %vm392, %v785, 0.0
      %v803 = vsel %vm392, %v797, 0.0
      %v804 = vadd.f32 %v714, %v798
      %v805 = vadd.f32 %v715, %v799
      %v806 = vadd.f32 %v716, %v800
      %v807 = vadd.f32 %v717, %v801
      %v808 = vadd.f32 %v718, %v802
      %v809 = vadd.f32 %v719, %v803
      %810 = vset.pattern.permute.xlu0 0
      %811 = vperm.xlu0 %810, %v720
      %v812 = vpop.permute.xlu0 %811
      %v815 = vunpack.c.l.s4 269488144
      %v816 = vunpack.c.0.s8 %v815
      %v817 = vlaneseq
      %v818 = vshrl.u32 %v817, 7
      %v819 = vsub.s32 %v816, %v818
      %v820 = vrot.slane %v812, %v819
      %821 = vset.pattern.permute.xlu0 0
      %822 = vperm.xlu0 %821, %v721
      %v823 = vpop.permute.xlu0 %822
      %v826 = vunpack.c.l.s4 269488144
      %v827 = vunpack.c.0.s8 %v826
      %v828 = vlaneseq
      %v829 = vshrl.u32 %v828, 7
      %v830 = vsub.s32 %v827, %v829
      %v831 = vrot.slane %v823, %v830
      %832 = vset.pattern.permute.xlu0 0
      %833 = vperm.xlu0 %832, %v722
      %v834 = vpop.permute.xlu0 %833
      %v837 = vunpack.c.l.s4 269488144
      %v838 = vunpack.c.0.s8 %v837
      %v839 = vlaneseq
      %v840 = vshrl.u32 %v839, 7
      %v841 = vsub.s32 %v838, %v840
      %v842 = vrot.slane %v834, %v841
      %843 = vset.pattern.permute.xlu0 0
      %844 = vperm.xlu0 %843, %v723
      %v845 = vpop.permute.xlu0 %844
      %v848 = vunpack.c.l.s4 269488144
      %v849 = vunpack.c.0.s8 %v848
      %v850 = vlaneseq
      %v851 = vshrl.u32 %v850, 7
      %v852 = vsub.s32 %v849, %v851
      %v853 = vrot.slane %v845, %v852
      %854 = vset.pattern.permute.xlu0 0
      %855 = vperm.xlu0 %854, %v724
      %v856 = vpop.permute.xlu0 %855
      %v859 = vunpack.c.l.s4 269488144
      %v860 = vunpack.c.0.s8 %v859
      %v861 = vlaneseq
      %v862 = vshrl.u32 %v861, 7
      %v863 = vsub.s32 %v860, %v862
      %v864 = vrot.slane %v856, %v863
      %865 = vset.pattern.permute.xlu0 0
      %866 = vperm.xlu0 %865, %v725
      %v867 = vpop.permute.xlu0 %866
      %v870 = vunpack.c.l.s4 269488144
      %v871 = vunpack.c.0.s8 %v870
      %v872 = vlaneseq
      %v873 = vshrl.u32 %v872, 7
      %v874 = vsub.s32 %v871, %v873
      %v875 = vrot.slane %v867, %v874
      %v876 = vsel %vm478, %v820, 0.0
      %v877 = vsel %vm478, %v831, 0.0
      %v878 = vsel %vm478, %v842, 0.0
      %v879 = vsel %vm478, %v853, 0.0
      %v880 = vsel %vm478, %v864, 0.0
      %v881 = vsel %vm478, %v875, 0.0
      %v882 = vadd.f32 %v804, %v876
      %v883 = vadd.f32 %v805, %v877
      %v884 = vadd.f32 %v806, %v878
      %v885 = vadd.f32 %v807, %v879
      %v886 = vadd.f32 %v808, %v880
      %v887 = vadd.f32 %v809, %v881
      %v888 = vmul.f32 %v882, 2.0
      %v889 = vmul.f32 %v883, 2.0
      %v890 = vmul.f32 %v884, 2.0
      %v891 = vmul.f32 %v885, 2.0
      %v892 = vmul.f32 %v886, 2.0
      %v893 = vmul.f32 %v887, 2.0
      %v900 = vrot.slane %v888, 1
      %v901 = vrot.slane %v889, 1
      %v902 = vrot.slane %v890, 1
      %v903 = vrot.slane %v891, 1
      %v904 = vrot.slane %v892, 1
      %v905 = vrot.slane %v893, 1
      %v912 = vadd.f32 %v882, %v900
      %v913 = vadd.f32 %v883, %v901
      %v914 = vadd.f32 %v884, %v902
      %v915 = vadd.f32 %v885, %v903
      %v916 = vadd.f32 %v886, %v904
      %v917 = vadd.f32 %v887, %v905
      %v918 = vrot.slane %v888, 7
      %v919 = vrot.slane %v889, 7
      %v920 = vrot.slane %v890, 7
      %v921 = vrot.slane %v891, 7
      %v922 = vrot.slane %v892, 7
      %v923 = vrot.slane %v893, 7
      %v930 = vadd.f32 %v882, %v918
      %v931 = vadd.f32 %v883, %v919
      %v932 = vadd.f32 %v884, %v920
      %v933 = vadd.f32 %v885, %v921
      %v934 = vadd.f32 %v886, %v922
      %v935 = vadd.f32 %v887, %v923
      %v936 = vsel %vm605, %v912, %v930
      %v937 = vsel %vm605, %v913, %v931
      %v938 = vsel %vm605, %v914, %v932
      %v939 = vsel %vm605, %v915, %v933
      %v940 = vsel %vm605, %v916, %v934
      %v941 = vsel %vm605, %v917, %v935
      %v942 = vmul.f32 %v936, 0.11111111
      %v943 = vmul.f32 %v937, 0.11111111
      %v944 = vmul.f32 %v938, 0.11111111
      %v945 = vmul.f32 %v939, 0.11111111
      %v946 = vmul.f32 %v940, 0.11111111
      %v947 = vmul.f32 %v941, 0.11111111
      %v948 = vmul.f32 %v256, %v256
      %v949 = vmul.f32 %v257, %v257
      %v950 = vmul.f32 %v258, %v258
      %v951 = vmul.f32 %v259, %v259
      %v952 = vmul.f32 %v260, %v260
      %v953 = vmul.f32 %v261, %v261
      %v954 = vmul.f32 %v268, %v268
      %v955 = vmul.f32 %v269, %v269
      %v956 = vmul.f32 %v270, %v270
      %v957 = vmul.f32 %v271, %v271
      %v958 = vmul.f32 %v272, %v272
      %v959 = vmul.f32 %v273, %v273
      %v960 = vadd.f32 %v948, %v954
      %v961 = vadd.f32 %v949, %v955
      %v962 = vadd.f32 %v950, %v956
      %v963 = vadd.f32 %v951, %v957
      %v964 = vadd.f32 %v952, %v958
      %v965 = vadd.f32 %v953, %v959
      %v973 = vunpack.c.l.s4 1983009808
      %v974 = vunpack.c.0.s8 %v973
      %v975 = vlaneseq
      %v976 = vshrl.u32 %v975, 7
      %v977 = vsub.s32 %v974, %v976
      %v978 = vrot.slane %v960, %v977
      %v980 = vunpack.c.l.s4 1983009808
      %v981 = vunpack.c.0.s8 %v980
      %v982 = vlaneseq
      %v983 = vshrl.u32 %v982, 7
      %v984 = vsub.s32 %v981, %v983
      %v985 = vrot.slane %v961, %v984
      %v987 = vunpack.c.l.s4 1983009808
      %v988 = vunpack.c.0.s8 %v987
      %v989 = vlaneseq
      %v990 = vshrl.u32 %v989, 7
      %v991 = vsub.s32 %v988, %v990
      %v992 = vrot.slane %v962, %v991
      %v994 = vunpack.c.l.s4 1983009808
      %v995 = vunpack.c.0.s8 %v994
      %v996 = vlaneseq
      %v997 = vshrl.u32 %v996, 7
      %v998 = vsub.s32 %v995, %v997
      %v999 = vrot.slane %v963, %v998
      %v1001 = vunpack.c.l.s4 1983009808
      %v1002 = vunpack.c.0.s8 %v1001
      %v1003 = vlaneseq
      %v1004 = vshrl.u32 %v1003, 7
      %v1005 = vsub.s32 %v1002, %v1004
      %v1006 = vrot.slane %v964, %v1005
      %v1008 = vunpack.c.l.s4 1983009808
      %v1009 = vunpack.c.0.s8 %v1008
      %v1010 = vlaneseq
      %v1011 = vshrl.u32 %v1010, 7
      %v1012 = vsub.s32 %v1009, %v1011
      %v1013 = vrot.slane %v965, %v1012
      %1014 = vrot.lane.b32.xlu0 %v978, 127
      %v1015 = vpop.permute.xlu0 %1014
      %1016 = vrot.lane.b32.xlu0 %v985, 127
      %v1017 = vpop.permute.xlu0 %1016
      %1018 = vrot.lane.b32.xlu0 %v992, 127
      %v1019 = vpop.permute.xlu0 %1018
      %1020 = vrot.lane.b32.xlu0 %v999, 127
      %v1021 = vpop.permute.xlu0 %1020
      %1022 = vrot.lane.b32.xlu0 %v1006, 127
      %v1023 = vpop.permute.xlu0 %1022
      %1024 = vrot.lane.b32.xlu0 %v1013, 127
      %v1025 = vpop.permute.xlu0 %1024
      %1032 = vrot.lane.b32.xlu0 %v978, 1
      %v1033 = vpop.permute.xlu0 %1032
      %1034 = vrot.lane.b32.xlu0 %v985, 1
      %v1035 = vpop.permute.xlu0 %1034
      %1036 = vrot.lane.b32.xlu0 %v992, 1
      %v1037 = vpop.permute.xlu0 %1036
      %1038 = vrot.lane.b32.xlu0 %v999, 1
      %v1039 = vpop.permute.xlu0 %1038
      %1040 = vrot.lane.b32.xlu0 %v1006, 1
      %v1041 = vpop.permute.xlu0 %1040
      %1042 = vrot.lane.b32.xlu0 %v1013, 1
      %v1043 = vpop.permute.xlu0 %1042
      %v1050 = vsel %vm366, %v1015, %v1033
      %v1051 = vsel %vm366, %v1017, %v1035
      %v1052 = vsel %vm366, %v1019, %v1037
      %v1053 = vsel %vm366, %v1021, %v1039
      %v1054 = vsel %vm366, %v1023, %v1041
      %v1055 = vsel %vm366, %v1025, %v1043
      %v1056 = vadd.f32 %v1050, %v960
      %v1057 = vadd.f32 %v1051, %v961
      %v1058 = vadd.f32 %v1052, %v962
      %v1059 = vadd.f32 %v1053, %v963
      %v1060 = vadd.f32 %v1054, %v964
      %v1061 = vadd.f32 %v1055, %v965
      %v1062 = vadd.f32 %v1056, %v1050
      %v1063 = vadd.f32 %v1057, %v1051
      %v1064 = vadd.f32 %v1058, %v1052
      %v1065 = vadd.f32 %v1059, %v1053
      %v1066 = vadd.f32 %v1060, %v1054
      %v1067 = vadd.f32 %v1061, %v1055
      %v1068 = vsub.f32 %v960, %v960
      %v1069 = vsub.f32 %v961, %v961
      %v1070 = vsub.f32 %v962, %v962
      %v1071 = vsub.f32 %v963, %v963
      %v1072 = vsub.f32 %v964, %v964
      %v1073 = vsub.f32 %v965, %v965
      %1075 = vset.pattern.permute.xlu0 1
      %1076 = vperm.xlu0 %1075, %v1068
      %v1077 = vpop.permute.xlu0 %1076
      %v1080 = vunpack.c.l.s4 269488144
      %v1081 = vunpack.c.0.s8 %v1080
      %v1082 = vlaneseq
      %v1083 = vshrl.u32 %v1082, 7
      %v1084 = vsub.s32 %v1081, %v1083
      %v1085 = vrot.slane %v1077, %v1084
      %1087 = vset.pattern.permute.xlu0 1
      %1088 = vperm.xlu0 %1087, %v1069
      %v1089 = vpop.permute.xlu0 %1088
      %v1092 = vunpack.c.l.s4 269488144
      %v1093 = vunpack.c.0.s8 %v1092
      %v1094 = vlaneseq
      %v1095 = vshrl.u32 %v1094, 7
      %v1096 = vsub.s32 %v1093, %v1095
      %v1097 = vrot.slane %v1089, %v1096
      %1099 = vset.pattern.permute.xlu0 1
      %1100 = vperm.xlu0 %1099, %v1070
      %v1101 = vpop.permute.xlu0 %1100
      %v1104 = vunpack.c.l.s4 269488144
      %v1105 = vunpack.c.0.s8 %v1104
      %v1106 = vlaneseq
      %v1107 = vshrl.u32 %v1106, 7
      %v1108 = vsub.s32 %v1105, %v1107
      %v1109 = vrot.slane %v1101, %v1108
      %1111 = vset.pattern.permute.xlu0 1
      %1112 = vperm.xlu0 %1111, %v1071
      %v1113 = vpop.permute.xlu0 %1112
      %v1116 = vunpack.c.l.s4 269488144
      %v1117 = vunpack.c.0.s8 %v1116
      %v1118 = vlaneseq
      %v1119 = vshrl.u32 %v1118, 7
      %v1120 = vsub.s32 %v1117, %v1119
      %v1121 = vrot.slane %v1113, %v1120
      %1123 = vset.pattern.permute.xlu0 1
      %1124 = vperm.xlu0 %1123, %v1072
      %v1125 = vpop.permute.xlu0 %1124
      %v1128 = vunpack.c.l.s4 269488144
      %v1129 = vunpack.c.0.s8 %v1128
      %v1130 = vlaneseq
      %v1131 = vshrl.u32 %v1130, 7
      %v1132 = vsub.s32 %v1129, %v1131
      %v1133 = vrot.slane %v1125, %v1132
      %1135 = vset.pattern.permute.xlu0 1
      %1136 = vperm.xlu0 %1135, %v1073
      %v1137 = vpop.permute.xlu0 %1136
      %v1140 = vunpack.c.l.s4 269488144
      %v1141 = vunpack.c.0.s8 %v1140
      %v1142 = vlaneseq
      %v1143 = vshrl.u32 %v1142, 7
      %v1144 = vsub.s32 %v1141, %v1143
      %v1145 = vrot.slane %v1137, %v1144
      %v1146 = vsel %vm392, %v1085, 0.0
      %v1147 = vsel %vm392, %v1097, 0.0
      %v1148 = vsel %vm392, %v1109, 0.0
      %v1149 = vsel %vm392, %v1121, 0.0
      %v1150 = vsel %vm392, %v1133, 0.0
      %v1151 = vsel %vm392, %v1145, 0.0
      %v1152 = vadd.f32 %v1062, %v1146
      %v1153 = vadd.f32 %v1063, %v1147
      %v1154 = vadd.f32 %v1064, %v1148
      %v1155 = vadd.f32 %v1065, %v1149
      %v1156 = vadd.f32 %v1066, %v1150
      %v1157 = vadd.f32 %v1067, %v1151
      %1158 = vset.pattern.permute.xlu0 0
      %1159 = vperm.xlu0 %1158, %v1068
      %v1160 = vpop.permute.xlu0 %1159
      %v1163 = vunpack.c.l.s4 269488144
      %v1164 = vunpack.c.0.s8 %v1163
      %v1165 = vlaneseq
      %v1166 = vshrl.u32 %v1165, 7
      %v1167 = vsub.s32 %v1164, %v1166
      %v1168 = vrot.slane %v1160, %v1167
      %1169 = vset.pattern.permute.xlu0 0
      %1170 = vperm.xlu0 %1169, %v1069
      %v1171 = vpop.permute.xlu0 %1170
      %v1174 = vunpack.c.l.s4 269488144
      %v1175 = vunpack.c.0.s8 %v1174
      %v1176 = vlaneseq
      %v1177 = vshrl.u32 %v1176, 7
      %v1178 = vsub.s32 %v1175, %v1177
      %v1179 = vrot.slane %v1171, %v1178
      %1180 = vset.pattern.permute.xlu0 0
      %1181 = vperm.xlu0 %1180, %v1070
      %v1182 = vpop.permute.xlu0 %1181
      %v1185 = vunpack.c.l.s4 269488144
      %v1186 = vunpack.c.0.s8 %v1185
      %v1187 = vlaneseq
      %v1188 = vshrl.u32 %v1187, 7
      %v1189 = vsub.s32 %v1186, %v1188
      %v1190 = vrot.slane %v1182, %v1189
      %1191 = vset.pattern.permute.xlu0 0
      %1192 = vperm.xlu0 %1191, %v1071
      %v1193 = vpop.permute.xlu0 %1192
      %v1196 = vunpack.c.l.s4 269488144
      %v1197 = vunpack.c.0.s8 %v1196
      %v1198 = vlaneseq
      %v1199 = vshrl.u32 %v1198, 7
      %v1200 = vsub.s32 %v1197, %v1199
      %v1201 = vrot.slane %v1193, %v1200
      %1202 = vset.pattern.permute.xlu0 0
      %1203 = vperm.xlu0 %1202, %v1072
      %v1204 = vpop.permute.xlu0 %1203
      %v1207 = vunpack.c.l.s4 269488144
      %v1208 = vunpack.c.0.s8 %v1207
      %v1209 = vlaneseq
      %v1210 = vshrl.u32 %v1209, 7
      %v1211 = vsub.s32 %v1208, %v1210
      %v1212 = vrot.slane %v1204, %v1211
      %1213 = vset.pattern.permute.xlu0 0
      %1214 = vperm.xlu0 %1213, %v1073
      %v1215 = vpop.permute.xlu0 %1214
      %v1218 = vunpack.c.l.s4 269488144
      %v1219 = vunpack.c.0.s8 %v1218
      %v1220 = vlaneseq
      %v1221 = vshrl.u32 %v1220, 7
      %v1222 = vsub.s32 %v1219, %v1221
      %v1223 = vrot.slane %v1215, %v1222
      %v1224 = vsel %vm478, %v1168, 0.0
      %v1225 = vsel %vm478, %v1179, 0.0
      %v1226 = vsel %vm478, %v1190, 0.0
      %v1227 = vsel %vm478, %v1201, 0.0
      %v1228 = vsel %vm478, %v1212, 0.0
      %v1229 = vsel %vm478, %v1223, 0.0
      %v1230 = vadd.f32 %v1152, %v1224
      %v1231 = vadd.f32 %v1153, %v1225
      %v1232 = vadd.f32 %v1154, %v1226
      %v1233 = vadd.f32 %v1155, %v1227
      %v1234 = vadd.f32 %v1156, %v1228
      %v1235 = vadd.f32 %v1157, %v1229
      %v1236 = vmul.f32 %v1230, 2.0
      %v1237 = vmul.f32 %v1231, 2.0
      %v1238 = vmul.f32 %v1232, 2.0
      %v1239 = vmul.f32 %v1233, 2.0
      %v1240 = vmul.f32 %v1234, 2.0
      %v1241 = vmul.f32 %v1235, 2.0
      %v1248 = vrot.slane %v1236, 1
      %v1249 = vrot.slane %v1237, 1
      %v1250 = vrot.slane %v1238, 1
      %v1251 = vrot.slane %v1239, 1
      %v1252 = vrot.slane %v1240, 1
      %v1253 = vrot.slane %v1241, 1
      %v1260 = vadd.f32 %v1230, %v1248
      %v1261 = vadd.f32 %v1231, %v1249
      %v1262 = vadd.f32 %v1232, %v1250
      %v1263 = vadd.f32 %v1233, %v1251
      %v1264 = vadd.f32 %v1234, %v1252
      %v1265 = vadd.f32 %v1235, %v1253
      %v1266 = vrot.slane %v1236, 7
      %v1267 = vrot.slane %v1237, 7
      %v1268 = vrot.slane %v1238, 7
      %v1269 = vrot.slane %v1239, 7
      %v1270 = vrot.slane %v1240, 7
      %v1271 = vrot.slane %v1241, 7
      %v1278 = vadd.f32 %v1230, %v1266
      %v1279 = vadd.f32 %v1231, %v1267
      %v1280 = vadd.f32 %v1232, %v1268
      %v1281 = vadd.f32 %v1233, %v1269
      %v1282 = vadd.f32 %v1234, %v1270
      %v1283 = vadd.f32 %v1235, %v1271
      %v1284 = vsel %vm605, %v1260, %v1278
      %v1285 = vsel %vm605, %v1261, %v1279
      %v1286 = vsel %vm605, %v1262, %v1280
      %v1287 = vsel %vm605, %v1263, %v1281
      %v1288 = vsel %vm605, %v1264, %v1282
      %v1289 = vsel %vm605, %v1265, %v1283
      %v1290 = vmul.f32 %v1284, 0.11111111
      %v1291 = vmul.f32 %v1285, 0.11111111
      %v1292 = vmul.f32 %v1286, 0.11111111
      %v1293 = vmul.f32 %v1287, 0.11111111
      %v1294 = vmul.f32 %v1288, 0.11111111
      %v1295 = vmul.f32 %v1289, 0.11111111
      %v1296 = vmul.f32 %v612, %v612
      %v1297 = vmul.f32 %v613, %v613
      %v1298 = vmul.f32 %v614, %v614
      %v1299 = vmul.f32 %v615, %v615
      %v1300 = vmul.f32 %v616, %v616
      %v1301 = vmul.f32 %v617, %v617
      %v1302 = vsub.f32 %v1290, %v1296
      %v1303 = vsub.f32 %v1291, %v1297
      %v1304 = vsub.f32 %v1292, %v1298
      %v1305 = vsub.f32 %v1293, %v1299
      %v1306 = vsub.f32 %v1294, %v1300
      %v1307 = vsub.f32 %v1295, %v1301
      %v1308 = vmul.f32 %v942, %v942
      %v1309 = vmul.f32 %v943, %v943
      %v1310 = vmul.f32 %v944, %v944
      %v1311 = vmul.f32 %v945, %v945
      %v1312 = vmul.f32 %v946, %v946
      %v1313 = vmul.f32 %v947, %v947
      %v1314 = vsub.f32 %v1302, %v1308
      %v1315 = vsub.f32 %v1303, %v1309
      %v1316 = vsub.f32 %v1304, %v1310
      %v1317 = vsub.f32 %v1305, %v1311
      %v1318 = vsub.f32 %v1306, %v1312
      %v1319 = vsub.f32 %v1307, %v1313
      %v1320 = vmul.f32 %v256, %v268
      %v1321 = vmul.f32 %v257, %v269
      %v1322 = vmul.f32 %v258, %v270
      %v1323 = vmul.f32 %v259, %v271
      %v1324 = vmul.f32 %v260, %v272
      %v1325 = vmul.f32 %v261, %v273
      %v1333 = vunpack.c.l.s4 1983009808
      %v1334 = vunpack.c.0.s8 %v1333
      %v1335 = vlaneseq
      %v1336 = vshrl.u32 %v1335, 7
      %v1337 = vsub.s32 %v1334, %v1336
      %v1338 = vrot.slane %v1320, %v1337
      %v1340 = vunpack.c.l.s4 1983009808
      %v1341 = vunpack.c.0.s8 %v1340
      %v1342 = vlaneseq
      %v1343 = vshrl.u32 %v1342, 7
      %v1344 = vsub.s32 %v1341, %v1343
      %v1345 = vrot.slane %v1321, %v1344
      %v1347 = vunpack.c.l.s4 1983009808
      %v1348 = vunpack.c.0.s8 %v1347
      %v1349 = vlaneseq
      %v1350 = vshrl.u32 %v1349, 7
      %v1351 = vsub.s32 %v1348, %v1350
      %v1352 = vrot.slane %v1322, %v1351
      %v1354 = vunpack.c.l.s4 1983009808
      %v1355 = vunpack.c.0.s8 %v1354
      %v1356 = vlaneseq
      %v1357 = vshrl.u32 %v1356, 7
      %v1358 = vsub.s32 %v1355, %v1357
      %v1359 = vrot.slane %v1323, %v1358
      %v1361 = vunpack.c.l.s4 1983009808
      %v1362 = vunpack.c.0.s8 %v1361
      %v1363 = vlaneseq
      %v1364 = vshrl.u32 %v1363, 7
      %v1365 = vsub.s32 %v1362, %v1364
      %v1366 = vrot.slane %v1324, %v1365
      %v1368 = vunpack.c.l.s4 1983009808
      %v1369 = vunpack.c.0.s8 %v1368
      %v1370 = vlaneseq
      %v1371 = vshrl.u32 %v1370, 7
      %v1372 = vsub.s32 %v1369, %v1371
      %v1373 = vrot.slane %v1325, %v1372
      %1374 = vrot.lane.b32.xlu0 %v1338, 127
      %v1375 = vpop.permute.xlu0 %1374
      %1376 = vrot.lane.b32.xlu0 %v1345, 127
      %v1377 = vpop.permute.xlu0 %1376
      %1378 = vrot.lane.b32.xlu0 %v1352, 127
      %v1379 = vpop.permute.xlu0 %1378
      %1380 = vrot.lane.b32.xlu0 %v1359, 127
      %v1381 = vpop.permute.xlu0 %1380
      %1382 = vrot.lane.b32.xlu0 %v1366, 127
      %v1383 = vpop.permute.xlu0 %1382
      %1384 = vrot.lane.b32.xlu0 %v1373, 127
      %v1385 = vpop.permute.xlu0 %1384
      %1392 = vrot.lane.b32.xlu0 %v1338, 1
      %v1393 = vpop.permute.xlu0 %1392
      %1394 = vrot.lane.b32.xlu0 %v1345, 1
      %v1395 = vpop.permute.xlu0 %1394
      %1396 = vrot.lane.b32.xlu0 %v1352, 1
      %v1397 = vpop.permute.xlu0 %1396
      %1398 = vrot.lane.b32.xlu0 %v1359, 1
      %v1399 = vpop.permute.xlu0 %1398
      %1400 = vrot.lane.b32.xlu0 %v1366, 1
      %v1401 = vpop.permute.xlu0 %1400
      %1402 = vrot.lane.b32.xlu0 %v1373, 1
      %v1403 = vpop.permute.xlu0 %1402
      %v1410 = vsel %vm366, %v1375, %v1393
      %v1411 = vsel %vm366, %v1377, %v1395
      %v1412 = vsel %vm366, %v1379, %v1397
      %v1413 = vsel %vm366, %v1381, %v1399
      %v1414 = vsel %vm366, %v1383, %v1401
      %v1415 = vsel %vm366, %v1385, %v1403
      %v1416 = vadd.f32 %v1410, %v1320
      %v1417 = vadd.f32 %v1411, %v1321
      %v1418 = vadd.f32 %v1412, %v1322
      %v1419 = vadd.f32 %v1413, %v1323
      %v1420 = vadd.f32 %v1414, %v1324
      %v1421 = vadd.f32 %v1415, %v1325
      %v1422 = vadd.f32 %v1416, %v1410
      %v1423 = vadd.f32 %v1417, %v1411
      %v1424 = vadd.f32 %v1418, %v1412
      %v1425 = vadd.f32 %v1419, %v1413
      %v1426 = vadd.f32 %v1420, %v1414
      %v1427 = vadd.f32 %v1421, %v1415
      %v1428 = vsub.f32 %v1320, %v1320
      %v1429 = vsub.f32 %v1321, %v1321
      %v1430 = vsub.f32 %v1322, %v1322
      %v1431 = vsub.f32 %v1323, %v1323
      %v1432 = vsub.f32 %v1324, %v1324
      %v1433 = vsub.f32 %v1325, %v1325
      %1435 = vset.pattern.permute.xlu0 1
      %1436 = vperm.xlu0 %1435, %v1428
      %v1437 = vpop.permute.xlu0 %1436
      %v1440 = vunpack.c.l.s4 269488144
      %v1441 = vunpack.c.0.s8 %v1440
      %v1442 = vlaneseq
      %v1443 = vshrl.u32 %v1442, 7
      %v1444 = vsub.s32 %v1441, %v1443
      %v1445 = vrot.slane %v1437, %v1444
      %1447 = vset.pattern.permute.xlu0 1
      %1448 = vperm.xlu0 %1447, %v1429
      %v1449 = vpop.permute.xlu0 %1448
      %v1452 = vunpack.c.l.s4 269488144
      %v1453 = vunpack.c.0.s8 %v1452
      %v1454 = vlaneseq
      %v1455 = vshrl.u32 %v1454, 7
      %v1456 = vsub.s32 %v1453, %v1455
      %v1457 = vrot.slane %v1449, %v1456
      %1459 = vset.pattern.permute.xlu0 1
      %1460 = vperm.xlu0 %1459, %v1430
      %v1461 = vpop.permute.xlu0 %1460
      %v1464 = vunpack.c.l.s4 269488144
      %v1465 = vunpack.c.0.s8 %v1464
      %v1466 = vlaneseq
      %v1467 = vshrl.u32 %v1466, 7
      %v1468 = vsub.s32 %v1465, %v1467
      %v1469 = vrot.slane %v1461, %v1468
      %1471 = vset.pattern.permute.xlu0 1
      %1472 = vperm.xlu0 %1471, %v1431
      %v1473 = vpop.permute.xlu0 %1472
      %v1476 = vunpack.c.l.s4 269488144
      %v1477 = vunpack.c.0.s8 %v1476
      %v1478 = vlaneseq
      %v1479 = vshrl.u32 %v1478, 7
      %v1480 = vsub.s32 %v1477, %v1479
      %v1481 = vrot.slane %v1473, %v1480
      %1483 = vset.pattern.permute.xlu0 1
      %1484 = vperm.xlu0 %1483, %v1432
      %v1485 = vpop.permute.xlu0 %1484
      %v1488 = vunpack.c.l.s4 269488144
      %v1489 = vunpack.c.0.s8 %v1488
      %v1490 = vlaneseq
      %v1491 = vshrl.u32 %v1490, 7
      %v1492 = vsub.s32 %v1489, %v1491
      %v1493 = vrot.slane %v1485, %v1492
      %1495 = vset.pattern.permute.xlu0 1
      %1496 = vperm.xlu0 %1495, %v1433
      %v1497 = vpop.permute.xlu0 %1496
      %v1500 = vunpack.c.l.s4 269488144
      %v1501 = vunpack.c.0.s8 %v1500
      %v1502 = vlaneseq
      %v1503 = vshrl.u32 %v1502, 7
      %v1504 = vsub.s32 %v1501, %v1503
      %v1505 = vrot.slane %v1497, %v1504
      %v1506 = vsel %vm392, %v1445, 0.0
      %v1507 = vsel %vm392, %v1457, 0.0
      %v1508 = vsel %vm392, %v1469, 0.0
      %v1509 = vsel %vm392, %v1481, 0.0
      %v1510 = vsel %vm392, %v1493, 0.0
      %v1511 = vsel %vm392, %v1505, 0.0
      %v1512 = vadd.f32 %v1422, %v1506
      %v1513 = vadd.f32 %v1423, %v1507
      %v1514 = vadd.f32 %v1424, %v1508
      %v1515 = vadd.f32 %v1425, %v1509
      %v1516 = vadd.f32 %v1426, %v1510
      %v1517 = vadd.f32 %v1427, %v1511
      %1518 = vset.pattern.permute.xlu0 0
      %1519 = vperm.xlu0 %1518, %v1428
      %v1520 = vpop.permute.xlu0 %1519
      %v1523 = vunpack.c.l.s4 269488144
      %v1524 = vunpack.c.0.s8 %v1523
      %v1525 = vlaneseq
      %v1526 = vshrl.u32 %v1525, 7
      %v1527 = vsub.s32 %v1524, %v1526
      %v1528 = vrot.slane %v1520, %v1527
      %1529 = vset.pattern.permute.xlu0 0
      %1530 = vperm.xlu0 %1529, %v1429
      %v1531 = vpop.permute.xlu0 %1530
      %v1534 = vunpack.c.l.s4 269488144
      %v1535 = vunpack.c.0.s8 %v1534
      %v1536 = vlaneseq
      %v1537 = vshrl.u32 %v1536, 7
      %v1538 = vsub.s32 %v1535, %v1537
      %v1539 = vrot.slane %v1531, %v1538
      %1540 = vset.pattern.permute.xlu0 0
      %1541 = vperm.xlu0 %1540, %v1430
      %v1542 = vpop.permute.xlu0 %1541
      %v1545 = vunpack.c.l.s4 269488144
      %v1546 = vunpack.c.0.s8 %v1545
      %v1547 = vlaneseq
      %v1548 = vshrl.u32 %v1547, 7
      %v1549 = vsub.s32 %v1546, %v1548
      %v1550 = vrot.slane %v1542, %v1549
      %1551 = vset.pattern.permute.xlu0 0
      %1552 = vperm.xlu0 %1551, %v1431
      %v1553 = vpop.permute.xlu0 %1552
      %v1556 = vunpack.c.l.s4 269488144
      %v1557 = vunpack.c.0.s8 %v1556
      %v1558 = vlaneseq
      %v1559 = vshrl.u32 %v1558, 7
      %v1560 = vsub.s32 %v1557, %v1559
      %v1561 = vrot.slane %v1553, %v1560
      %1562 = vset.pattern.permute.xlu0 0
      %1563 = vperm.xlu0 %1562, %v1432
      %v1564 = vpop.permute.xlu0 %1563
      %v1567 = vunpack.c.l.s4 269488144
      %v1568 = vunpack.c.0.s8 %v1567
      %v1569 = vlaneseq
      %v1570 = vshrl.u32 %v1569, 7
      %v1571 = vsub.s32 %v1568, %v1570
      %v1572 = vrot.slane %v1564, %v1571
      %1573 = vset.pattern.permute.xlu0 0
      %1574 = vperm.xlu0 %1573, %v1433
      %v1575 = vpop.permute.xlu0 %1574
      %v1578 = vunpack.c.l.s4 269488144
      %v1579 = vunpack.c.0.s8 %v1578
      %v1580 = vlaneseq
      %v1581 = vshrl.u32 %v1580, 7
      %v1582 = vsub.s32 %v1579, %v1581
      %v1583 = vrot.slane %v1575, %v1582
      %v1584 = vsel %vm478, %v1528, 0.0
      %v1585 = vsel %vm478, %v1539, 0.0
      %v1586 = vsel %vm478, %v1550, 0.0
      %v1587 = vsel %vm478, %v1561, 0.0
      %v1588 = vsel %vm478, %v1572, 0.0
      %v1589 = vsel %vm478, %v1583, 0.0
      %v1590 = vadd.f32 %v1512, %v1584
      %v1591 = vadd.f32 %v1513, %v1585
      %v1592 = vadd.f32 %v1514, %v1586
      %v1593 = vadd.f32 %v1515, %v1587
      %v1594 = vadd.f32 %v1516, %v1588
      %v1595 = vadd.f32 %v1517, %v1589
      %v1596 = vmul.f32 %v1590, 2.0
      %v1597 = vmul.f32 %v1591, 2.0
      %v1598 = vmul.f32 %v1592, 2.0
      %v1599 = vmul.f32 %v1593, 2.0
      %v1600 = vmul.f32 %v1594, 2.0
      %v1601 = vmul.f32 %v1595, 2.0
      %v1608 = vrot.slane %v1596, 1
      %v1609 = vrot.slane %v1597, 1
      %v1610 = vrot.slane %v1598, 1
      %v1611 = vrot.slane %v1599, 1
      %v1612 = vrot.slane %v1600, 1
      %v1613 = vrot.slane %v1601, 1
      %v1620 = vadd.f32 %v1590, %v1608
      %v1621 = vadd.f32 %v1591, %v1609
      %v1622 = vadd.f32 %v1592, %v1610
      %v1623 = vadd.f32 %v1593, %v1611
      %v1624 = vadd.f32 %v1594, %v1612
      %v1625 = vadd.f32 %v1595, %v1613
      %v1626 = vrot.slane %v1596, 7
      %v1627 = vrot.slane %v1597, 7
      %v1628 = vrot.slane %v1598, 7
      %v1629 = vrot.slane %v1599, 7
      %v1630 = vrot.slane %v1600, 7
      %v1631 = vrot.slane %v1601, 7
      %v1638 = vadd.f32 %v1590, %v1626
      %v1639 = vadd.f32 %v1591, %v1627
      %v1640 = vadd.f32 %v1592, %v1628
      %v1641 = vadd.f32 %v1593, %v1629
      %v1642 = vadd.f32 %v1594, %v1630
      %v1643 = vadd.f32 %v1595, %v1631
      %v1644 = vsel %vm605, %v1620, %v1638
      %v1645 = vsel %vm605, %v1621, %v1639
      %v1646 = vsel %vm605, %v1622, %v1640
      %v1647 = vsel %vm605, %v1623, %v1641
      %v1648 = vsel %vm605, %v1624, %v1642
      %v1649 = vsel %vm605, %v1625, %v1643
      %v1650 = vmul.f32 %v1644, 0.11111111
      %v1651 = vmul.f32 %v1645, 0.11111111
      %v1652 = vmul.f32 %v1646, 0.11111111
      %v1653 = vmul.f32 %v1647, 0.11111111
      %v1654 = vmul.f32 %v1648, 0.11111111
      %v1655 = vmul.f32 %v1649, 0.11111111
      %v1656 = vmul.f32 %v612, %v942
      %v1657 = vmul.f32 %v613, %v943
      %v1658 = vmul.f32 %v614, %v944
      %v1659 = vmul.f32 %v615, %v945
      %v1660 = vmul.f32 %v616, %v946
      %v1661 = vmul.f32 %v617, %v947
      %v1662 = vsub.f32 %v1650, %v1656
      %v1663 = vsub.f32 %v1651, %v1657
      %v1664 = vsub.f32 %v1652, %v1658
      %v1665 = vsub.f32 %v1653, %v1659
      %v1666 = vsub.f32 %v1654, %v1660
      %v1667 = vsub.f32 %v1655, %v1661
      %v1668 = vmul.f32 %v612, 2.0
      %v1669 = vmul.f32 %v613, 2.0
      %v1670 = vmul.f32 %v614, 2.0
      %v1671 = vmul.f32 %v615, 2.0
      %v1672 = vmul.f32 %v616, 2.0
      %v1673 = vmul.f32 %v617, 2.0
      %v1674 = vmul.f32 %v1668, %v942
      %v1675 = vmul.f32 %v1669, %v943
      %v1676 = vmul.f32 %v1670, %v944
      %v1677 = vmul.f32 %v1671, %v945
      %v1678 = vmul.f32 %v1672, %v946
      %v1679 = vmul.f32 %v1673, %v947
      %v1680 = vadd.f32 %v1674, 0.0001
      %v1681 = vadd.f32 %v1675, 0.0001
      %v1682 = vadd.f32 %v1676, 0.0001
      %v1683 = vadd.f32 %v1677, 0.0001
      %v1684 = vadd.f32 %v1678, 0.0001
      %v1685 = vadd.f32 %v1679, 0.0001
      %v1686 = vmul.f32 %v1662, 2.0
      %v1687 = vmul.f32 %v1663, 2.0
      %v1688 = vmul.f32 %v1664, 2.0
      %v1689 = vmul.f32 %v1665, 2.0
      %v1690 = vmul.f32 %v1666, 2.0
      %v1691 = vmul.f32 %v1667, 2.0
      %v1692 = vadd.f32 %v1686, 0.0009
      %v1693 = vadd.f32 %v1687, 0.0009
      %v1694 = vadd.f32 %v1688, 0.0009
      %v1695 = vadd.f32 %v1689, 0.0009
      %v1696 = vadd.f32 %v1690, 0.0009
      %v1697 = vadd.f32 %v1691, 0.0009
      %v1698 = vmul.f32 %v1680, %v1692
      %v1699 = vmul.f32 %v1681, %v1693
      %v1700 = vmul.f32 %v1682, %v1694
      %v1701 = vmul.f32 %v1683, %v1695
      %v1702 = vmul.f32 %v1684, %v1696
      %v1703 = vmul.f32 %v1685, %v1697
      %v1704 = vadd.f32 %v1296, %v1308
      %v1705 = vadd.f32 %v1297, %v1309
      %v1706 = vadd.f32 %v1298, %v1310
      %v1707 = vadd.f32 %v1299, %v1311
      %v1708 = vadd.f32 %v1300, %v1312
      %v1709 = vadd.f32 %v1301, %v1313
      %v1710 = vadd.f32 %v1704, 0.0001
      %v1711 = vadd.f32 %v1705, 0.0001
      %v1712 = vadd.f32 %v1706, 0.0001
      %v1713 = vadd.f32 %v1707, 0.0001
      %v1714 = vadd.f32 %v1708, 0.0001
      %v1715 = vadd.f32 %v1709, 0.0001
      %v1716 = vadd.f32 %v1314, 0.0009
      %v1717 = vadd.f32 %v1315, 0.0009
      %v1718 = vadd.f32 %v1316, 0.0009
      %v1719 = vadd.f32 %v1317, 0.0009
      %v1720 = vadd.f32 %v1318, 0.0009
      %v1721 = vadd.f32 %v1319, 0.0009
      %v1722 = vmul.f32 %v1710, %v1716
      %v1723 = vmul.f32 %v1711, %v1717
      %v1724 = vmul.f32 %v1712, %v1718
      %v1725 = vmul.f32 %v1713, %v1719
      %v1726 = vmul.f32 %v1714, %v1720
      %v1727 = vmul.f32 %v1715, %v1721
      %v1728 = vrcp.pop %v1722
      %v1729 = vrcp.pop %v1723
      %v1730 = vrcp.pop %v1724
      %v1731 = vrcp.pop %v1725
      %v1732 = vrcp.pop %v1726
      %v1733 = vrcp.pop %v1727
      %v1734 = vmul.f32 %v1698, %v1728
      %v1735 = vmul.f32 %v1699, %v1729
      %v1736 = vmul.f32 %v1700, %v1730
      %v1737 = vmul.f32 %v1701, %v1731
      %v1738 = vmul.f32 %v1702, %v1732
      %v1739 = vmul.f32 %v1703, %v1733
      %v1740 = vsub.f32 1.0, %v1734
      %v1741 = vsub.f32 1.0, %v1735
      %v1742 = vsub.f32 1.0, %v1736
      %v1743 = vsub.f32 1.0, %v1737
      %v1744 = vsub.f32 1.0, %v1738
      %v1745 = vsub.f32 1.0, %v1739
      %v1746 = vmul.f32 %v1740, 0.5
      %v1747 = vmul.f32 %v1741, 0.5
      %v1748 = vmul.f32 %v1742, 0.5
      %v1749 = vmul.f32 %v1743, 0.5
      %v1750 = vmul.f32 %v1744, 0.5
      %v1751 = vmul.f32 %v1745, 0.5
      %v1752 = vmax.f32 %v1746, 0.0
      %v1753 = vmax.f32 %v1747, 0.0
      %v1754 = vmax.f32 %v1748, 0.0
      %v1755 = vmax.f32 %v1749, 0.0
      %v1756 = vmax.f32 %v1750, 0.0
      %v1757 = vmax.f32 %v1751, 0.0
      %v1758 = vmin.f32 %v1752, 1.0
      %v1759 = vmin.f32 %v1753, 1.0
      %v1760 = vmin.f32 %v1754, 1.0
      %v1761 = vmin.f32 %v1755, 1.0
      %v1762 = vmin.f32 %v1756, 1.0
      %v1763 = vmin.f32 %v1757, 1.0
      %vm1764 = vcmask 9216
      %v1765 = vsel %vm1764, %v1758, 0.0
      %v1766 = vsel %vm1764, %v1759, 0.0
      %v1767 = vadd.f32 %v1765, %v1766
      %v1768 = vsel %vm1764, %v1760, 0.0
      %v1769 = vadd.f32 %v1767, %v1768
      %v1770 = vsel %vm1764, %v1761, 0.0
      %v1771 = vadd.f32 %v1769, %v1770
      %v1772 = vsel %vm1764, %v1762, 0.0
      %v1773 = vadd.f32 %v1771, %v1772
      %v1774 = vsel %vm1764, %v1763, 0.0
      %v1775 = vadd.f32 %v1773, %v1774
      %1776 = vadd.xlane.f32.xlu0 %v1775
      %v1777 = vpop.xlane.xlu0 %1776
      %v1778 = vrot.slane %v1777, 4
      %v1779 = vadd.f32 %v1777, %v1778
      %v1780 = vrot.slane %v1779, 2
      %v1781 = vadd.f32 %v1779, %v1780
      %v1782 = vrot.slane %v1781, 1
      %v1783 = vadd.f32 %v1781, %v1782
      %s1784 = vtos %v1783
      %v1785 = vrcp.pop 24.0
      %s1786 = vtos %v1785
      %s1787 = smul.f32 %s1784, %s1786
      %v1788 = vsub.f32 %v256, %v268
      %v1789 = vsub.f32 %v257, %v269
      %v1790 = vsub.f32 %v258, %v270
      %v1791 = vsub.f32 %v259, %v271
      %v1792 = vsub.f32 %v260, %v272
      %v1793 = vsub.f32 %v261, %v273
      %v1794 = vand.u32 2147483647, %v1788
      %v1795 = vand.u32 2147483647, %v1789
      %v1796 = vand.u32 2147483647, %v1790
      %v1797 = vand.u32 2147483647, %v1791
      %v1798 = vand.u32 2147483647, %v1792
      %v1799 = vand.u32 2147483647, %v1793
      %v1800 = vsel %vm1764, %v1794, 0.0
      %v1801 = vsel %vm1764, %v1795, 0.0
      %v1802 = vadd.f32 %v1800, %v1801
      %v1803 = vsel %vm1764, %v1796, 0.0
      %v1804 = vadd.f32 %v1802, %v1803
      %v1805 = vsel %vm1764, %v1797, 0.0
      %v1806 = vadd.f32 %v1804, %v1805
      %v1807 = vsel %vm1764, %v1798, 0.0
      %v1808 = vadd.f32 %v1806, %v1807
      %v1809 = vsel %vm1764, %v1799, 0.0
      %v1810 = vadd.f32 %v1808, %v1809
      %1811 = vadd.xlane.f32.xlu0 %v1810
      %v1812 = vpop.xlane.xlu0 %1811
      %v1813 = vrot.slane %v1812, 4
      %v1814 = vadd.f32 %v1812, %v1813
      %v1815 = vrot.slane %v1814, 2
      %v1816 = vadd.f32 %v1814, %v1815
      %v1817 = vrot.slane %v1816, 1
      %v1818 = vadd.f32 %v1816, %v1817
      %s1819 = vtos %v1818
      %v1820 = vrcp.pop 24.0
      %s1821 = vtos %v1820
      %s1822 = smul.f32 %s1819, %s1821
      %s1823 = sadd.f32 %s1822, 1e-12
      %v1824 = vstv %s1823
      %v1825 = vrcp.pop %v1824
      %s1826 = vtos %v1825
      %v1827 = vstv %s1826
      %v1828 = vmul.f32 %v1794, %v1827
      %v1829 = vmul.f32 %v1795, %v1827
      %v1830 = vmul.f32 %v1796, %v1827
      %v1831 = vmul.f32 %v1797, %v1827
      %v1832 = vmul.f32 %v1798, %v1827
      %v1833 = vmul.f32 %v1799, %v1827
      %v1834 = vsub.f32 1.0, %v1828
      %v1835 = vsub.f32 1.0, %v1829
      %v1836 = vsub.f32 1.0, %v1830
      %v1837 = vsub.f32 1.0, %v1831
      %v1838 = vsub.f32 1.0, %v1832
      %v1839 = vsub.f32 1.0, %v1833
      %v1840 = vmul.f32 %v1834, 2.0
      %v1841 = vmul.f32 %v1835, 2.0
      %v1842 = vmul.f32 %v1836, 2.0
      %v1843 = vmul.f32 %v1837, 2.0
      %v1844 = vmul.f32 %v1838, 2.0
      %v1845 = vmul.f32 %v1839, 2.0
      %v1846 = vmul.f32 %v1840, 1.442695
      %v1847 = vpow.pop %v1846
      %v1848 = vmul.f32 %v1841, 1.442695
      %v1849 = vpow.pop %v1848
      %v1850 = vmul.f32 %v1842, 1.442695
      %v1851 = vpow.pop %v1850
      %v1852 = vmul.f32 %v1843, 1.442695
      %v1853 = vpow.pop %v1852
      %v1854 = vmul.f32 %v1844, 1.442695
      %v1855 = vpow.pop %v1854
      %v1856 = vmul.f32 %v1845, 1.442695
      %v1857 = vpow.pop %v1856
      %v1858 = vsub.f32 %v276, %v274
      %v1859 = vsub.f32 %v277, %v275
      %v1860 = vand.u32 2147483647, %v1858
      %v1861 = vand.u32 2147483647, %v1859
      %v1862 = vmul.f32 %v1847, %v1860
      %v1863 = vmul.f32 %v1849, %v1860
      %v1864 = vmul.f32 %v1851, %v1860
      %v1865 = vmul.f32 %v1853, %v1861
      %v1866 = vmul.f32 %v1855, %v1861
      %v1867 = vmul.f32 %v1857, %v1861
      %v1868 = vsel %vm1764, %v1862, 0.0
      %v1869 = vsel %vm1764, %v1863, 0.0
      %v1870 = vadd.f32 %v1868, %v1869
      %v1871 = vsel %vm1764, %v1864, 0.0
      %v1872 = vadd.f32 %v1870, %v1871
      %v1873 = vsel %vm1764, %v1865, 0.0
      %v1874 = vadd.f32 %v1872, %v1873
      %v1875 = vsel %vm1764, %v1866, 0.0
      %v1876 = vadd.f32 %v1874, %v1875
      %v1877 = vsel %vm1764, %v1867, 0.0
      %v1878 = vadd.f32 %v1876, %v1877
      %1879 = vadd.xlane.f32.xlu0 %v1878
      %v1880 = vpop.xlane.xlu0 %1879
      %v1881 = vrot.slane %v1880, 4
      %v1882 = vadd.f32 %v1880, %v1881
      %v1883 = vrot.slane %v1882, 2
      %v1884 = vadd.f32 %v1882, %v1883
      %v1885 = vrot.slane %v1884, 1
      %v1886 = vadd.f32 %v1884, %v1885
      %s1887 = vtos %v1886
      %s1888 = smul.f32 %s1887, 0.041666668
      %1891 = vrot.lane.b32.xlu0 %v274, 127
      %v1892 = vpop.permute.xlu0 %1891
      %1893 = vrot.lane.b32.xlu0 %v275, 127
      %v1894 = vpop.permute.xlu0 %1893
      %1897 = vrot.lane.b32.xlu0 %v274, 1
      %v1898 = vpop.permute.xlu0 %1897
      %1899 = vrot.lane.b32.xlu0 %v275, 1
      %v1900 = vpop.permute.xlu0 %1899
      %v1903 = vsel %vm366, %v1892, %v1898
      %v1904 = vsel %vm366, %v1894, %v1900
      %v1905 = vsub.f32 %v268, %v702
      %v1906 = vsub.f32 %v269, %v703
      %v1907 = vsub.f32 %v270, %v704
      %v1908 = vsub.f32 %v271, %v705
      %v1909 = vsub.f32 %v272, %v706
      %v1910 = vsub.f32 %v273, %v707
      %v1911 = vand.u32 2147483647, %v1905
      %v1912 = vand.u32 2147483647, %v1906
      %v1913 = vand.u32 2147483647, %v1907
      %v1914 = vand.u32 2147483647, %v1908
      %v1915 = vand.u32 2147483647, %v1909
      %v1916 = vand.u32 2147483647, %v1910
      %v1917 = vadd.f32 %v1911, %v1912
      %v1918 = vadd.f32 %v1914, %v1915
      %v1919 = vadd.f32 %v1917, %v1913
      %v1920 = vadd.f32 %v1918, %v1916
      %v1921 = vmul.f32 %v1919, 0.33333334
      %v1922 = vmul.f32 %v1920, 0.33333334
      %v1923 = vsub.f32 0.0, %v1921
      %v1924 = vsub.f32 0.0, %v1922
      %v1925 = vmul.f32 %v1923, 1.442695
      %v1926 = vpow.pop %v1925
      %v1927 = vmul.f32 %v1924, 1.442695
      %v1928 = vpow.pop %v1927
      %v1929 = vsub.f32 %v274, %v1903
      %v1930 = vsub.f32 %v275, %v1904
      %v1931 = vand.u32 2147483647, %v1929
      %v1932 = vand.u32 2147483647, %v1930
      %v1933 = vmul.f32 %v1931, %v1926
      %v1934 = vmul.f32 %v1932, %v1928
      %v1935 = vsel %vm1764, %v1933, 0.0
      %v1936 = vsel %vm1764, %v1934, 0.0
      %v1937 = vadd.f32 %v1935, %v1936
      %1938 = vadd.xlane.f32.xlu0 %v1937
      %v1939 = vpop.xlane.xlu0 %1938
      %v1940 = vrot.slane %v1939, 4
      %v1941 = vadd.f32 %v1939, %v1940
      %v1942 = vrot.slane %v1941, 2
      %v1943 = vadd.f32 %v1941, %v1942
      %v1944 = vrot.slane %v1943, 1
      %v1945 = vadd.f32 %v1943, %v1944
      %s1946 = vtos %v1945
      %v1947 = vsub.f32 %v274, %v1898
      %v1948 = vsub.f32 %v275, %v1900
      %v1949 = vand.u32 2147483647, %v1947
      %v1950 = vand.u32 2147483647, %v1948
      %1951 = vrot.lane.b32.xlu0 %v268, 1
      %v1952 = vpop.permute.xlu0 %1951
      %1953 = vrot.lane.b32.xlu0 %v269, 1
      %v1954 = vpop.permute.xlu0 %1953
      %1955 = vrot.lane.b32.xlu0 %v270, 1
      %v1956 = vpop.permute.xlu0 %1955
      %1957 = vrot.lane.b32.xlu0 %v271, 1
      %v1958 = vpop.permute.xlu0 %1957
      %1959 = vrot.lane.b32.xlu0 %v272, 1
      %v1960 = vpop.permute.xlu0 %1959
      %1961 = vrot.lane.b32.xlu0 %v273, 1
      %v1962 = vpop.permute.xlu0 %1961
      %v1969 = vsub.f32 %v268, %v1952
      %v1970 = vsub.f32 %v269, %v1954
      %v1971 = vsub.f32 %v270, %v1956
      %v1972 = vsub.f32 %v271, %v1958
      %v1973 = vsub.f32 %v272, %v1960
      %v1974 = vsub.f32 %v273, %v1962
      %v1975 = vand.u32 2147483647, %v1969
      %v1976 = vand.u32 2147483647, %v1970
      %v1977 = vand.u32 2147483647, %v1971
      %v1978 = vand.u32 2147483647, %v1972
      %v1979 = vand.u32 2147483647, %v1973
      %v1980 = vand.u32 2147483647, %v1974
      %v1981 = vadd.f32 %v1975, %v1976
      %v1982 = vadd.f32 %v1978, %v1979
      %v1983 = vadd.f32 %v1981, %v1977
      %v1984 = vadd.f32 %v1982, %v1980
      %v1985 = vmul.f32 %v1983, 0.33333334
      %v1986 = vmul.f32 %v1984, 0.33333334
      %v1987 = vsub.f32 0.0, %v1985
      %v1988 = vsub.f32 0.0, %v1986
      %v1989 = vmul.f32 %v1987, 1.442695
      %v1990 = vpow.pop %v1989
      %v1991 = vmul.f32 %v1988, 1.442695
      %v1992 = vpow.pop %v1991
      %v1993 = vmul.f32 %v1949, %v1990
      %v1994 = vmul.f32 %v1950, %v1992
      %1997 = vrot.lane.b32.xlu0 %v1993, 127
      %v1998 = vpop.permute.xlu0 %1997
      %1999 = vrot.lane.b32.xlu0 %v1994, 127
      %v2000 = vpop.permute.xlu0 %1999
      %vm2003 = vcmask 1024
      %v2004 = vsel %vm2003, %v1998, 0.0
      %v2005 = vsel %vm2003, %v2000, 0.0
      %v2006 = vadd.f32 %v2004, %v2005
      %2007 = vadd.xlane.f32.xlu0 %v2006
      %v2008 = vpop.xlane.xlu0 %2007
      %v2009 = vrot.slane %v2008, 4
      %v2010 = vadd.f32 %v2008, %v2009
      %v2011 = vrot.slane %v2010, 2
      %v2012 = vadd.f32 %v2010, %v2011
      %v2013 = vrot.slane %v2012, 1
      %v2014 = vadd.f32 %v2012, %v2013
      %s2015 = vtos %v2014
      %s2016 = ssub.f32 %s1946, %s2015
      %s2017 = smul.f32 %s2016, 0.25
      %v2018 = vlaneseq
      %v2019 = vshrl.u32 %v2018, 7
      %vm2020 = vcmp.eq.s32.totalorder %v2019, 0
      %vm2021 = vmand %vm2020, %vm280
      %v2022 = vstv %s1787
      %v2023 = vsel %vm2021, %v2022, 0.0
      %vm2024 = vmand %vm2020, %vm281
      %v2025 = vstv %s1822
      %v2026 = vsel %vm2024, %v2025, %v2023
      %vm2027 = vcmp.eq.s32.totalorder %v279, 2
      %vm2028 = vmand %vm2020, %vm2027
      %v2029 = vstv %s1888
      %v2030 = vsel %vm2028, %v2029, %v2026
      %vm2031 = vcmp.eq.s32.totalorder %v279, 3
      %vm2032 = vmand %vm2020, %vm2031
      %v2033 = vstv %s2017
      %v2034 = vsel %vm2032, %v2033, %v2030
      %2035 = vst [vmem:[%s249] sm:$0xff] %v2034
      %p2036 = scmp.lt.s32.totalorder %s15, 1
      %s2037 = scalar_select %p2036, %s15, 1
      %s2038 = smul.addr %s2037, 8
      %s2039 = scalar_lea.vmem %s4, %s2038
      // Predicated region
      $region37: #{my_loss.7} parent=35 // pred_check
        %p2040 = pneg %p137
      $region38: #{my_loss.7} parent=35 // pred_check_branch
        %2042 = sbr.rel (%p2040) target = $region40
      $region39: #{my_loss.7} parent=35 // pred_region
        _
      $region40: #{my_loss.7} parent=35 // pred_fallthru
        _
    $region36: #{my_loss.7} parent=5 // pred_fallthru
      _
    %p2043 = scmp.le.s32.totalorder 2, %s10
    // Predicated region
    $region41: #{my_loss.7} parent=5 // pred_check
      %p2044 = pneg %p2043
    $region42: #{my_loss.7} parent=5 // pred_check_branch
      %2046 = sbr.rel (%p2044) target = $region44
    $region43: #{my_loss.7} parent=5 // pred_region
      %s2047 = ssub.s32 %s10, 2
      // Predicated region
      $region45: #{my_loss.7} parent=43 // pred_check
        %p2048 = pneg %p143
      $region46: #{my_loss.7} parent=43 // pred_check_branch
        %2050 = sbr.rel (%p2048) target = $region48
      $region47: #{my_loss.7} parent=43 // pred_region
        %p2051 = scmp.lt.s32.totalorder %s16, 1
        %s2052 = scalar_select %p2051, %s16, 1
        %s2053 = smul.addr %s2052, 8
        %s2054 = scalar_lea.vmem %s4, %s2053
      $region48: #{my_loss.7} parent=43 // pred_fallthru
        _
    $region44: #{my_loss.7} parent=5 // pred_fallthru
      _
  $region6: #{my_loss.7} parent=0 // loop_footer
    %s14 = sadd.s32 1, %s10
  $region7: #{my_loss.7} parent=0 // loop_footer_branch
    %9 = sbr.rel target = $region3
  $region8: #{my_loss.7} parent=0 // loop_exit
    _

</llo_original>
